<compile_context>
chip_gen: v5e
topology: v5e:2x2
jax: 0.10.0
libtpu: 0.0.40
codegen_flags: <defaults>
</compile_context>

<pallas_src>
import jax
import jax.numpy as jnp
from jax.experimental import pallas as pl
from jax.experimental.pallas import tpu as pltpu  # noqa: F401  (TPU backend assumed)

EPS = 1e-6            # matches nn.LayerNorm(n_dim, eps=1e-06)
HIDDEN_CHUNK = 512    # chunk width over the 4*D hidden dimension


def _layernorm_f32(x, gamma, beta):
    mean = jnp.mean(x, axis=-1, keepdims=True)
    var = jnp.mean(jnp.square(x - mean), axis=-1, keepdims=True)
    return (x - mean) * jax.lax.rsqrt(var + EPS) * gamma + beta


# ---------------------------------------------------------------- kernel ----

def my_gin_kernel(a_ref, x_ref, w1_ref, b1_ref, w2_ref, b2_ref, g_ref, be_ref, o_ref):
    B, N, D = x_ref.shape
    BN = B * N
    D4 = w1_ref.shape[1]

    # aggerate: per-graph A @ X in full f32 (tiny FLOP fraction, full precision).
    # Unrolled over the small batch; rows are concatenated so the MLP below sees
    # one flattened (B*N, D) LHS.
    agg_rows, res_rows = [], []
    for b in range(B):
        xb = x_ref[b]                                   # (N, D) f32
        ab = a_ref[b]                                   # (N, N) f32
        agg_rows.append(jnp.dot(ab, xb, preferred_element_type=jnp.float32))
        res_rows.append(xb)
    agg = jnp.concatenate(agg_rows, axis=0)             # (BN, D) f32
    resid = jnp.concatenate(res_rows, axis=0)           # (BN, D) f32

    agg_bf16 = agg.astype(jnp.bfloat16)                 # MXU operand for W1 matmul

    # nn1: Linear(D, 4D) -> ReLU -> Linear(4D, D).  Hidden dim chunked so the f32
    # (BN, 4D) intermediate never materializes; bias + ReLU + bf16 cast fused per chunk.
    y = jnp.zeros((BN, D), jnp.float32)
    for c in range(D4 // HIDDEN_CHUNK):
        lo, hi = c * HIDDEN_CHUNK, (c + 1) * HIDDEN_CHUNK
        h = jnp.dot(agg_bf16, w1_ref[:, lo:hi],
                    preferred_element_type=jnp.float32) + b1_ref[:, lo:hi]
        h = jnp.maximum(h, 0.0).astype(jnp.bfloat16)
        y = y + jnp.dot(h, w2_ref[lo:hi, :], preferred_element_type=jnp.float32)
    y = y + b2_ref[...]

    # layer_norm(residual + dropout(nn1(out)));  dropout == identity (eval mode).
    out = _layernorm_f32(resid + y, g_ref[...], be_ref[...]).astype(o_ref.dtype)
    for b in range(B):
        o_ref[b] = out[b * N:(b + 1) * N, :]


# --------------------------------------------------------------- wrapper ----

def my_gin_forward(params, data, index):
    """data: [B, N, D] float32, index: [B, N, N] float32 -> [B, N, D] float32."""
    B, N, D = data.shape
    D4 = params["w1"].shape[1]
    assert D4 % HIDDEN_CHUNK == 0, "hidden dim must be a multiple of HIDDEN_CHUNK"
    # No grid: one invocation, every operand single-buffered in VMEM (~4.3 MiB total,
    # well under every generation's default scoped VMEM), single TensorCore schedule.
    return pl.pallas_call(
        my_gin_kernel,
        out_shape=jax.ShapeDtypeStruct((B, N, D), jnp.float32),
    )(index, data, params["w1"], params["b1"], params["w2"], params["b2"],
      params["gamma"], params["beta"])


# ------------------------------------------------------------- reference ----

def my_gin_reference(params, data, index, *, match_kernel_precision):
    """Pure-JAX reference.

    match_kernel_precision=True mirrors the kernel's bf16 MLP-operand path.
    False computes the MLP fully in f32 (bf16-stored weights upcast), i.e. the original
    PyTorch f32 forward semantics up to bf16 weight storage.
    """
    hp = jax.lax.Precision.HIGHEST
    w1 = params["w1"].astype(jnp.float32)
    w2 = params["w2"].astype(jnp.float32)
    if match_kernel_precision:
        cast = lambda t: t.astype(jnp.bfloat16).astype(jnp.float32)
    else:
        cast = lambda t: t
    agg = jnp.einsum("bij,bjd->bid", index, data, precision=hp)
    h = jnp.einsum("bnd,df->bnf", cast(agg), w1, precision=hp) + params["b1"]
    h = jnp.maximum(h, 0.0)
    y = jnp.einsum("bnf,fd->bnd", cast(h), w2, precision=hp) + params["b2"]
    return _layernorm_f32(data + y, params["gamma"], params["beta"])


# -------------------------------------------------------------- params ------

def init_params(key, d_model, d_inner):
    k1, k2, k3, k4 = jax.random.split(key, 4)
    return {
        # Stored pre-transposed for x @ W; bf16 halves HBM->VMEM weight traffic
        # (the kernel is weight-DMA bound).
        "w1": (jax.random.normal(k1, (d_model, d_inner), jnp.float32)
               * d_model ** -0.5).astype(jnp.bfloat16),
        "b1": jax.random.normal(k2, (1, d_inner), jnp.float32) * 0.01,
        "w2": (jax.random.normal(k3, (d_inner, d_model), jnp.float32)
               * d_inner ** -0.5).astype(jnp.bfloat16),
        "b2": jax.random.normal(k4, (1, d_model), jnp.float32) * 0.01,
        "gamma": jnp.ones((1, d_model), jnp.float32),
        "beta": jnp.zeros((1, d_model), jnp.float32),
    }


# ---------------------------------------------------------------- main ------

if __name__ == "__main__":
    key = jax.random.PRNGKey(0)
    kp, kd, ka = jax.random.split(key, 3)

    # in_dim == n_dim == 512 (as used in F_CPI_GCN), hidden = 4 * 512.
    B, N, D = 2, 16, 512
    params = init_params(kp, D, 4 * D)

    data = jax.random.normal(kd, (B, N, D), jnp.float32)
    adj = (jax.random.uniform(ka, (B, N, N)) < 0.3).astype(jnp.float32)
    index = jnp.maximum(adj, jnp.swapaxes(adj, 1, 2))      # symmetric 0/1 adjacency

    out = jax.jit(my_gin_forward)(params, data, index)
    jax.block_until_ready(out)

    assert out.shape == (B, N, D)
    assert bool(jnp.all(jnp.isfinite(out)))

    # Tight check against a reference that mirrors the kernel's bf16 operand path.
    ref_matched = my_gin_reference(params, data, index, match_kernel_precision=True)
    err_matched = float(jnp.max(jnp.abs(out - ref_matched)))
    assert bool(jnp.allclose(out, ref_matched, rtol=2e-2, atol=2e-2)), err_matched

    # Documented bf16-operand tradeoff: stay within a loose bound of full-f32 compute.
    ref_f32 = my_gin_reference(params, data, index, match_kernel_precision=False)
    err_f32 = float(jnp.max(jnp.abs(out - ref_f32)))
    assert bool(jnp.allclose(out, ref_f32, rtol=1e-1, atol=1e-1)), err_f32

    print("KERNEL_OK")
</pallas_src>

<mosaic_0001>
module attributes {stable_mosaic.version = 11 : i64} {
  func.func @my_gin_kernel(%arg0: memref<2x16x16xf32, #tpu.memory_space<vmem>>, %arg1: memref<2x16x512xf32, #tpu.memory_space<vmem>>, %arg2: memref<512x2048xbf16, #tpu.memory_space<vmem>>, %arg3: memref<1x2048xf32, #tpu.memory_space<vmem>>, %arg4: memref<2048x512xbf16, #tpu.memory_space<vmem>>, %arg5: memref<1x512xf32, #tpu.memory_space<vmem>>, %arg6: memref<1x512xf32, #tpu.memory_space<vmem>>, %arg7: memref<1x512xf32, #tpu.memory_space<vmem>>, %arg8: memref<2x16x512xf32, #tpu.memory_space<vmem>>) attributes {dimension_semantics = [], scalar_prefetch = 0 : i64, scratch_operands = 0 : i64, tpu.core_type = #tpu.core_type<tc>} {
    %c0 = arith.constant 0 : index
    %c0_0 = arith.constant 0 : index
    %c0_1 = arith.constant 0 : index
    %0 = vector.load %arg1[%c0, %c0_0, %c0_1] : memref<2x16x512xf32, #tpu.memory_space<vmem>>, vector<1x16x512xf32>
    %1 = vector.shape_cast %0 : vector<1x16x512xf32> to vector<16x512xf32>
    %c0_2 = arith.constant 0 : index
    %c0_3 = arith.constant 0 : index
    %c0_4 = arith.constant 0 : index
    %2 = vector.load %arg0[%c0_2, %c0_3, %c0_4] : memref<2x16x16xf32, #tpu.memory_space<vmem>>, vector<1x16x16xf32>
    %3 = vector.shape_cast %2 : vector<1x16x16xf32> to vector<16x16xf32>
    %cst = arith.constant dense<0.000000e+00> : vector<16x512xf32>
    %4 = tpu.matmul %3, %1, %cst {dimension_numbers = #tpu.dot_dimension_numbers<[1], [0], [0], [1], [0, 0, 1, 1], [], []>} : vector<16x16xf32>, vector<16x512xf32>, vector<16x512xf32> -> vector<16x512xf32>
    %c1 = arith.constant 1 : index
    %c0_5 = arith.constant 0 : index
    %c0_6 = arith.constant 0 : index
    %5 = vector.load %arg1[%c1, %c0_5, %c0_6] : memref<2x16x512xf32, #tpu.memory_space<vmem>>, vector<1x16x512xf32>
    %6 = vector.shape_cast %5 : vector<1x16x512xf32> to vector<16x512xf32>
    %c1_7 = arith.constant 1 : index
    %c0_8 = arith.constant 0 : index
    %c0_9 = arith.constant 0 : index
    %7 = vector.load %arg0[%c1_7, %c0_8, %c0_9] : memref<2x16x16xf32, #tpu.memory_space<vmem>>, vector<1x16x16xf32>
    %8 = vector.shape_cast %7 : vector<1x16x16xf32> to vector<16x16xf32>
    %cst_10 = arith.constant dense<0.000000e+00> : vector<16x512xf32>
    %9 = tpu.matmul %8, %6, %cst_10 {dimension_numbers = #tpu.dot_dimension_numbers<[1], [0], [0], [1], [0, 0, 1, 1], [], []>} : vector<16x16xf32>, vector<16x512xf32>, vector<16x512xf32> -> vector<16x512xf32>
    %10 = tpu.concatenate %4, %9 in 0 : vector<16x512xf32>, vector<16x512xf32> -> vector<32x512xf32>
    %11 = tpu.concatenate %1, %6 in 0 : vector<16x512xf32>, vector<16x512xf32> -> vector<32x512xf32>
    %12 = arith.truncf %10 : vector<32x512xf32> to vector<32x512xbf16>
    %cst_11 = arith.constant 0.000000e+00 : f32
    %13 = vector.broadcast %cst_11 : f32 to vector<32x512xf32>
    %c0_12 = arith.constant 0 : index
    %c0_13 = arith.constant 0 : index
    %14 = vector.load %arg2[%c0_12, %c0_13] : memref<512x2048xbf16, #tpu.memory_space<vmem>>, vector<512x512xbf16>
    %cst_14 = arith.constant dense<0.000000e+00> : vector<32x512xf32>
    %15 = tpu.matmul %12, %14, %cst_14 {dimension_numbers = #tpu.dot_dimension_numbers<[1], [0], [0], [1], [0, 0, 1, 1], [], []>} : vector<32x512xbf16>, vector<512x512xbf16>, vector<32x512xf32> -> vector<32x512xf32>
    %c0_15 = arith.constant 0 : index
    %c0_16 = arith.constant 0 : index
    %16 = vector.load %arg3[%c0_15, %c0_16] : memref<1x2048xf32, #tpu.memory_space<vmem>>, vector<1x512xf32>
    %17 = vector.broadcast %16 : vector<1x512xf32> to vector<32x512xf32>
    %18 = arith.addf %15, %17 : vector<32x512xf32>
    %cst_17 = arith.constant 0.000000e+00 : f32
    %19 = vector.broadcast %cst_17 : f32 to vector<32x512xf32>
    %20 = arith.maximumf %18, %19 : vector<32x512xf32>
    %21 = arith.truncf %20 : vector<32x512xf32> to vector<32x512xbf16>
    %c0_18 = arith.constant 0 : index
    %c0_19 = arith.constant 0 : index
    %22 = vector.load %arg4[%c0_18, %c0_19] : memref<2048x512xbf16, #tpu.memory_space<vmem>>, vector<512x512xbf16>
    %cst_20 = arith.constant dense<0.000000e+00> : vector<32x512xf32>
    %23 = tpu.matmul %21, %22, %cst_20 {dimension_numbers = #tpu.dot_dimension_numbers<[1], [0], [0], [1], [0, 0, 1, 1], [], []>} : vector<32x512xbf16>, vector<512x512xbf16>, vector<32x512xf32> -> vector<32x512xf32>
    %24 = arith.addf %13, %23 : vector<32x512xf32>
    %c0_21 = arith.constant 0 : index
    %c512 = arith.constant 512 : index
    %25 = vector.load %arg2[%c0_21, %c512] : memref<512x2048xbf16, #tpu.memory_space<vmem>>, vector<512x512xbf16>
    %cst_22 = arith.constant dense<0.000000e+00> : vector<32x512xf32>
    %26 = tpu.matmul %12, %25, %cst_22 {dimension_numbers = #tpu.dot_dimension_numbers<[1], [0], [0], [1], [0, 0, 1, 1], [], []>} : vector<32x512xbf16>, vector<512x512xbf16>, vector<32x512xf32> -> vector<32x512xf32>
    %c0_23 = arith.constant 0 : index
    %c512_24 = arith.constant 512 : index
    %27 = vector.load %arg3[%c0_23, %c512_24] : memref<1x2048xf32, #tpu.memory_space<vmem>>, vector<1x512xf32>
    %28 = vector.broadcast %27 : vector<1x512xf32> to vector<32x512xf32>
    %29 = arith.addf %26, %28 : vector<32x512xf32>
    %cst_25 = arith.constant 0.000000e+00 : f32
    %30 = vector.broadcast %cst_25 : f32 to vector<32x512xf32>
    %31 = arith.maximumf %29, %30 : vector<32x512xf32>
    %32 = arith.truncf %31 : vector<32x512xf32> to vector<32x512xbf16>
    %c512_26 = arith.constant 512 : index
    %c0_27 = arith.constant 0 : index
    %33 = vector.load %arg4[%c512_26, %c0_27] : memref<2048x512xbf16, #tpu.memory_space<vmem>>, vector<512x512xbf16>
    %cst_28 = arith.constant dense<0.000000e+00> : vector<32x512xf32>
    %34 = tpu.matmul %32, %33, %cst_28 {dimension_numbers = #tpu.dot_dimension_numbers<[1], [0], [0], [1], [0, 0, 1, 1], [], []>} : vector<32x512xbf16>, vector<512x512xbf16>, vector<32x512xf32> -> vector<32x512xf32>
    %35 = arith.addf %24, %34 : vector<32x512xf32>
    %c0_29 = arith.constant 0 : index
    %c1024 = arith.constant 1024 : index
    %36 = vector.load %arg2[%c0_29, %c1024] : memref<512x2048xbf16, #tpu.memory_space<vmem>>, vector<512x512xbf16>
    %cst_30 = arith.constant dense<0.000000e+00> : vector<32x512xf32>
    %37 = tpu.matmul %12, %36, %cst_30 {dimension_numbers = #tpu.dot_dimension_numbers<[1], [0], [0], [1], [0, 0, 1, 1], [], []>} : vector<32x512xbf16>, vector<512x512xbf16>, vector<32x512xf32> -> vector<32x512xf32>
    %c0_31 = arith.constant 0 : index
    %c1024_32 = arith.constant 1024 : index
    %38 = vector.load %arg3[%c0_31, %c1024_32] : memref<1x2048xf32, #tpu.memory_space<vmem>>, vector<1x512xf32>
    %39 = vector.broadcast %38 : vector<1x512xf32> to vector<32x512xf32>
    %40 = arith.addf %37, %39 : vector<32x512xf32>
    %cst_33 = arith.constant 0.000000e+00 : f32
    %41 = vector.broadcast %cst_33 : f32 to vector<32x512xf32>
    %42 = arith.maximumf %40, %41 : vector<32x512xf32>
    %43 = arith.truncf %42 : vector<32x512xf32> to vector<32x512xbf16>
    %c1024_34 = arith.constant 1024 : index
    %c0_35 = arith.constant 0 : index
    %44 = vector.load %arg4[%c1024_34, %c0_35] : memref<2048x512xbf16, #tpu.memory_space<vmem>>, vector<512x512xbf16>
    %cst_36 = arith.constant dense<0.000000e+00> : vector<32x512xf32>
    %45 = tpu.matmul %43, %44, %cst_36 {dimension_numbers = #tpu.dot_dimension_numbers<[1], [0], [0], [1], [0, 0, 1, 1], [], []>} : vector<32x512xbf16>, vector<512x512xbf16>, vector<32x512xf32> -> vector<32x512xf32>
    %46 = arith.addf %35, %45 : vector<32x512xf32>
    %c0_37 = arith.constant 0 : index
    %c1536 = arith.constant 1536 : index
    %47 = vector.load %arg2[%c0_37, %c1536] : memref<512x2048xbf16, #tpu.memory_space<vmem>>, vector<512x512xbf16>
    %cst_38 = arith.constant dense<0.000000e+00> : vector<32x512xf32>
    %48 = tpu.matmul %12, %47, %cst_38 {dimension_numbers = #tpu.dot_dimension_numbers<[1], [0], [0], [1], [0, 0, 1, 1], [], []>} : vector<32x512xbf16>, vector<512x512xbf16>, vector<32x512xf32> -> vector<32x512xf32>
    %c0_39 = arith.constant 0 : index
    %c1536_40 = arith.constant 1536 : index
    %49 = vector.load %arg3[%c0_39, %c1536_40] : memref<1x2048xf32, #tpu.memory_space<vmem>>, vector<1x512xf32>
    %50 = vector.broadcast %49 : vector<1x512xf32> to vector<32x512xf32>
    %51 = arith.addf %48, %50 : vector<32x512xf32>
    %cst_41 = arith.constant 0.000000e+00 : f32
    %52 = vector.broadcast %cst_41 : f32 to vector<32x512xf32>
    %53 = arith.maximumf %51, %52 : vector<32x512xf32>
    %54 = arith.truncf %53 : vector<32x512xf32> to vector<32x512xbf16>
    %c1536_42 = arith.constant 1536 : index
    %c0_43 = arith.constant 0 : index
    %55 = vector.load %arg4[%c1536_42, %c0_43] : memref<2048x512xbf16, #tpu.memory_space<vmem>>, vector<512x512xbf16>
    %cst_44 = arith.constant dense<0.000000e+00> : vector<32x512xf32>
    %56 = tpu.matmul %54, %55, %cst_44 {dimension_numbers = #tpu.dot_dimension_numbers<[1], [0], [0], [1], [0, 0, 1, 1], [], []>} : vector<32x512xbf16>, vector<512x512xbf16>, vector<32x512xf32> -> vector<32x512xf32>
    %57 = arith.addf %46, %56 : vector<32x512xf32>
    %c0_45 = arith.constant 0 : index
    %c0_46 = arith.constant 0 : index
    %58 = vector.load %arg5[%c0_45, %c0_46] : memref<1x512xf32, #tpu.memory_space<vmem>>, vector<1x512xf32>
    %59 = vector.broadcast %58 : vector<1x512xf32> to vector<32x512xf32>
    %60 = arith.addf %57, %59 : vector<32x512xf32>
    %61 = arith.addf %11, %60 : vector<32x512xf32>
    %c0_47 = arith.constant 0 : index
    %c0_48 = arith.constant 0 : index
    %62 = vector.load %arg6[%c0_47, %c0_48] : memref<1x512xf32, #tpu.memory_space<vmem>>, vector<1x512xf32>
    %c0_49 = arith.constant 0 : index
    %c0_50 = arith.constant 0 : index
    %63 = vector.load %arg7[%c0_49, %c0_50] : memref<1x512xf32, #tpu.memory_space<vmem>>, vector<1x512xf32>
    %cst_51 = arith.constant dense<0.000000e+00> : vector<32xf32>
    %64 = vector.multi_reduction <add>, %61, %cst_51 [1] : vector<32x512xf32> to vector<32xf32>
    %65 = vector.shape_cast %64 : vector<32xf32> to vector<32x1xf32>
    %cst_52 = arith.constant 5.120000e+02 : f32
    %66 = vector.broadcast %cst_52 : f32 to vector<32x1xf32>
    %67 = arith.divf %65, %66 : vector<32x1xf32>
    %68 = vector.broadcast %67 : vector<32x1xf32> to vector<32x512xf32>
    %69 = arith.subf %61, %68 : vector<32x512xf32>
    %70 = arith.mulf %69, %69 : vector<32x512xf32>
    %cst_53 = arith.constant dense<0.000000e+00> : vector<32xf32>
    %71 = vector.multi_reduction <add>, %70, %cst_53 [1] : vector<32x512xf32> to vector<32xf32>
    %72 = vector.shape_cast %71 : vector<32xf32> to vector<32x1xf32>
    %cst_54 = arith.constant 5.120000e+02 : f32
    %73 = vector.broadcast %cst_54 : f32 to vector<32x1xf32>
    %74 = arith.divf %72, %73 : vector<32x1xf32>
    %75 = vector.broadcast %67 : vector<32x1xf32> to vector<32x512xf32>
    %76 = arith.subf %61, %75 : vector<32x512xf32>
    %cst_55 = arith.constant 9.99999997E-7 : f32
    %77 = vector.broadcast %cst_55 : f32 to vector<32x1xf32>
    %78 = arith.addf %74, %77 : vector<32x1xf32>
    %79 = math.rsqrt %78 : vector<32x1xf32>
    %80 = vector.broadcast %79 : vector<32x1xf32> to vector<32x512xf32>
    %81 = arith.mulf %76, %80 : vector<32x512xf32>
    %82 = vector.broadcast %62 : vector<1x512xf32> to vector<32x512xf32>
    %83 = arith.mulf %81, %82 : vector<32x512xf32>
    %84 = vector.broadcast %63 : vector<1x512xf32> to vector<32x512xf32>
    %85 = arith.addf %83, %84 : vector<32x512xf32>
    %86 = vector.extract_strided_slice %85 {offsets = [0, 0], sizes = [16, 512], strides = [1, 1]} : vector<32x512xf32> to vector<16x512xf32>
    %c0_56 = arith.constant 0 : index
    %c0_57 = arith.constant 0 : index
    %c0_58 = arith.constant 0 : index
    %87 = vector.load %arg8[%c0_56, %c0_57, %c0_58] : memref<2x16x512xf32, #tpu.memory_space<vmem>>, vector<1x16x512xf32>
    %88 = vector.shape_cast %87 : vector<1x16x512xf32> to vector<16x512xf32>
    %89 = vector.shape_cast %86 : vector<16x512xf32> to vector<1x16x512xf32>
    tpu.vector_store %arg8[%c0_56, %c0_57, %c0_58], %89 {strides = array<i32>} : memref<2x16x512xf32, #tpu.memory_space<vmem>>, vector<1x16x512xf32>,
    %90 = vector.extract_strided_slice %85 {offsets = [16, 0], sizes = [16, 512], strides = [1, 1]} : vector<32x512xf32> to vector<16x512xf32>
    %c1_59 = arith.constant 1 : index
    %c0_60 = arith.constant 0 : index
    %c0_61 = arith.constant 0 : index
    %91 = vector.load %arg8[%c1_59, %c0_60, %c0_61] : memref<2x16x512xf32, #tpu.memory_space<vmem>>, vector<1x16x512xf32>
    %92 = vector.shape_cast %91 : vector<1x16x512xf32> to vector<16x512xf32>
    %93 = vector.shape_cast %90 : vector<16x512xf32> to vector<1x16x512xf32>
    tpu.vector_store %arg8[%c1_59, %c0_60, %c0_61], %93 {strides = array<i32>} : memref<2x16x512xf32, #tpu.memory_space<vmem>>, vector<1x16x512xf32>,
    return
  }
}

</mosaic_0001>

<llo_original>
// kernel: my_gin_forward.1
$region0: #{my_gin_forward.1}
  #allocation0 [shape = 'u32[]', space=smem, size = 0x4, offset = 0x4, fixed_abs, tag = 'smem constant byte address 0x4 - core index']
  #allocation1 [shape = 'u32[72,128]{1,0:T(1,128)}', space=vmem, size = 0x9000, scoped, tag = 'internal scratch']
  %s0 = inlined_call_operand.hbm [shape: f32[2,16,16], index: 0, kind: input, shape index: {}]
  %s1 = inlined_call_operand.hbm [shape: f32[2,16,512], index: 1, kind: input, shape index: {}]
  %s2 = inlined_call_operand.hbm [shape: bf16[512,2048], index: 2, kind: input, shape index: {}]
  %s3 = inlined_call_operand.hbm [shape: f32[1,2048], index: 3, kind: input, shape index: {}]
  %s4 = inlined_call_operand.hbm [shape: bf16[2048,512], index: 4, kind: input, shape index: {}]
  %s5 = inlined_call_operand.hbm [shape: f32[1,512], index: 5, kind: input, shape index: {}]
  %s6 = inlined_call_operand.hbm [shape: f32[1,512], index: 6, kind: input, shape index: {}]
  %s7 = inlined_call_operand.hbm [shape: f32[1,512], index: 7, kind: input, shape index: {}]
  %s8 = inlined_call_operand.hbm [shape: f32[2,16,512], index: 8, kind: output, shape index: {}]
  %s9 = sld [smem:[#allocation0]]
  $region74: #{my_gin_forward.1} parent=0
    _
  %s11 = ssub.s32 1, %s9
  %s12 = scalar_select 0, %s11, %s9
  $region1: #{my_gin_forward.1} parent=0
    #allocation2 [shape = 'u8[16384]{0}', space=vmem, size = 0x4000, scoped, tag = 'input window, operand 0, single buffered']
    #allocation3 [shape = 's32[1]{0}', space=sflag, size = 0x4, scoped, tag = 'scoped memory for my_gin_forward.1']
    #allocation4 [shape = 's32[1]{0}', space=sflag, size = 0x4, scoped, tag = 'scoped memory for my_gin_forward.1']
    #allocation5 [shape = 'u8[65536]{0}', space=vmem, size = 0x10000, scoped, tag = 'input window, operand 1, single buffered']
    #allocation6 [shape = 's32[1]{0}', space=sflag, size = 0x4, scoped, tag = 'scoped memory for my_gin_forward.1']
    #allocation7 [shape = 'u8[2097152]{0}', space=vmem, size = 0x200000, scoped, tag = 'input window, operand 2, single buffered']
    #allocation8 [shape = 'u8[8192]{0}', space=vmem, size = 0x2000, scoped, tag = 'input window, operand 3, single buffered']
    #allocation9 [shape = 's32[1]{0}', space=sflag, size = 0x4, scoped, tag = 'scoped memory for my_gin_forward.1']
    #allocation10 [shape = 'u8[2097152]{0}', space=vmem, size = 0x200000, scoped, tag = 'input window, operand 4, single buffered']
    #allocation11 [shape = 'u8[2048]{0}', space=vmem, size = 0x800, scoped, tag = 'input window, operand 5, single buffered']
    #allocation12 [shape = 's32[1]{0}', space=sflag, size = 0x4, scoped, tag = 'scoped memory for my_gin_forward.1']
    #allocation13 [shape = 'u8[2048]{0}', space=vmem, size = 0x800, scoped, tag = 'input window, operand 6, single buffered']
    #allocation14 [shape = 'u8[2048]{0}', space=vmem, size = 0x800, scoped, tag = 'input window, operand 7, single buffered']
    #allocation15 [shape = 's32[1]{0}', space=sflag, size = 0x4, scoped, tag = 'scoped memory for my_gin_forward.1']
    #allocation16 [shape = 'u8[65536]{0}', space=vmem, size = 0x10000, scoped, tag = 'output window, operand 0, single buffered']
    %13 = vsyncpa [#allocation3], 0
    %14 = vsyncpa [#allocation6], 0
    %15 = vsyncpa [#allocation9], 0
    %16 = vsyncpa [#allocation12], 0
    %17 = vsyncpa [#allocation15], 0
    %18 = vsyncpa [#allocation4], 0
    // Predicated region
    $region2: #{my_gin_forward.1} parent=1 // pred_check
      _
    $region3: #{my_gin_forward.1} parent=1 // pred_check_branch
      %20 = sbr.rel (0) target = $region5
    $region4: #{my_gin_forward.1} parent=1 // pred_region
      %22 = vsyncadd [#allocation3], 0
      %s23 = sshll.u32 %s0, 4
      %s24 = int_to_ptr.hbm [resolvable:$true] %s23
      %s25 = sshll.u32 [#allocation2], 4
      %s26 = int_to_ptr.vmem [resolvable:$true] %s25
      %31 = dma.hbm_to_vmem [thread:$0]  %s24, 512, %s26, [#allocation3], 128, 128, 8
    $region5: #{my_gin_forward.1} parent=1 // pred_fallthru
      _
    // Predicated region
    $region6: #{my_gin_forward.1} parent=1 // pred_check
      _
    $region7: #{my_gin_forward.1} parent=1 // pred_check_branch
      %33 = sbr.rel (0) target = $region9
    $region8: #{my_gin_forward.1} parent=1 // pred_region
      %35 = vsyncadd [#allocation6], 0
      %s36 = sshll.u32 %s1, 4
      %s37 = int_to_ptr.hbm [resolvable:$true] %s36
      %s38 = sshll.u32 [#allocation5], 4
      %s39 = int_to_ptr.vmem [resolvable:$true] %s38
      %44 = dma.hbm_to_vmem [thread:$0]  %s37, 2048, %s39, [#allocation6], 512, 512, 32
    $region9: #{my_gin_forward.1} parent=1 // pred_fallthru
      _
    // Predicated region
    $region10: #{my_gin_forward.1} parent=1 // pred_check
      _
    $region11: #{my_gin_forward.1} parent=1 // pred_check_branch
      %46 = sbr.rel (0) target = $region13
    $region12: #{my_gin_forward.1} parent=1 // pred_region
      %48 = vsyncadd [#allocation6], 0
      %s49 = sshll.u32 %s2, 4
      %s50 = int_to_ptr.hbm [resolvable:$true] %s49
      %s51 = sshll.u32 [#allocation7], 4
      %s52 = int_to_ptr.vmem [resolvable:$true] %s51
      %57 = dma.hbm_to_vmem [thread:$0]  %s50, 65536, %s52, [#allocation6], 1024, 1024, 64
    $region13: #{my_gin_forward.1} parent=1 // pred_fallthru
      _
    // Predicated region
    $region14: #{my_gin_forward.1} parent=1 // pred_check
      _
    $region15: #{my_gin_forward.1} parent=1 // pred_check_branch
      %59 = sbr.rel (0) target = $region17
    $region16: #{my_gin_forward.1} parent=1 // pred_region
      %61 = vsyncadd [#allocation9], 0
      %s63 = sshll.u32 %s3, 4
      %s64 = int_to_ptr.hbm [resolvable:$true] %s63
      %s65 = sshll.u32 [#allocation8], 4
      %s66 = int_to_ptr.vmem [resolvable:$true] %s65
      %68 = dma.hbm_to_vmem [thread:$0]  %s64, 256, %s66, [#allocation9]
    $region17: #{my_gin_forward.1} parent=1 // pred_fallthru
      _
    // Predicated region
    $region18: #{my_gin_forward.1} parent=1 // pred_check
      _
    $region19: #{my_gin_forward.1} parent=1 // pred_check_branch
      %70 = sbr.rel (0) target = $region21
    $region20: #{my_gin_forward.1} parent=1 // pred_region
      %72 = vsyncadd [#allocation9], 0
      %s73 = sshll.u32 %s4, 4
      %s74 = int_to_ptr.hbm [resolvable:$true] %s73
      %s75 = sshll.u32 [#allocation10], 4
      %s76 = int_to_ptr.vmem [resolvable:$true] %s75
      %81 = dma.hbm_to_vmem [thread:$0]  %s74, 65536, %s76, [#allocation9], 256, 256, 16
    $region21: #{my_gin_forward.1} parent=1 // pred_fallthru
      _
    // Predicated region
    $region22: #{my_gin_forward.1} parent=1 // pred_check
      _
    $region23: #{my_gin_forward.1} parent=1 // pred_check_branch
      %83 = sbr.rel (0) target = $region25
    $region24: #{my_gin_forward.1} parent=1 // pred_region
      %85 = vsyncadd [#allocation12], 0
      %s87 = sshll.u32 %s5, 4
      %s88 = int_to_ptr.hbm [resolvable:$true] %s87
      %s89 = sshll.u32 [#allocation11], 4
      %s90 = int_to_ptr.vmem [resolvable:$true] %s89
      %92 = dma.hbm_to_vmem [thread:$0]  %s88, 64, %s90, [#allocation12]
    $region25: #{my_gin_forward.1} parent=1 // pred_fallthru
      _
    // Predicated region
    $region26: #{my_gin_forward.1} parent=1 // pred_check
      _
    $region27: #{my_gin_forward.1} parent=1 // pred_check_branch
      %94 = sbr.rel (0) target = $region29
    $region28: #{my_gin_forward.1} parent=1 // pred_region
      %96 = vsyncadd [#allocation12], 0
      %s98 = sshll.u32 %s6, 4
      %s99 = int_to_ptr.hbm [resolvable:$true] %s98
      %s100 = sshll.u32 [#allocation13], 4
      %s101 = int_to_ptr.vmem [resolvable:$true] %s100
      %103 = dma.hbm_to_vmem [thread:$0]  %s99, 64, %s101, [#allocation12]
    $region29: #{my_gin_forward.1} parent=1 // pred_fallthru
      _
    // Predicated region
    $region30: #{my_gin_forward.1} parent=1 // pred_check
      _
    $region31: #{my_gin_forward.1} parent=1 // pred_check_branch
      %105 = sbr.rel (0) target = $region33
    $region32: #{my_gin_forward.1} parent=1 // pred_region
      %107 = vsyncadd [#allocation15], 0
      %s109 = sshll.u32 %s7, 4
      %s110 = int_to_ptr.hbm [resolvable:$true] %s109
      %s111 = sshll.u32 [#allocation14], 4
      %s112 = int_to_ptr.vmem [resolvable:$true] %s111
      %114 = dma.hbm_to_vmem [thread:$0]  %s110, 64, %s112, [#allocation15]
    $region33: #{my_gin_forward.1} parent=1 // pred_fallthru
      _
    // Predicated region
    $region34: #{my_gin_forward.1} parent=1 // pred_check
      _
    $region35: #{my_gin_forward.1} parent=1 // pred_check_branch
      %116 = sbr.rel (0) target = $region37
    $region36: #{my_gin_forward.1} parent=1 // pred_region
      %118 = dma.done [#allocation3], 512
    $region37: #{my_gin_forward.1} parent=1 // pred_fallthru
      _
    // Predicated region
    $region38: #{my_gin_forward.1} parent=1 // pred_check
      _
    $region39: #{my_gin_forward.1} parent=1 // pred_check_branch
      %120 = sbr.rel (0) target = $region41
    $region40: #{my_gin_forward.1} parent=1 // pred_region
      %122 = dma.done [#allocation6], 2048
    $region41: #{my_gin_forward.1} parent=1 // pred_fallthru
      _
    // Predicated region
    $region42: #{my_gin_forward.1} parent=1 // pred_check
      _
    $region43: #{my_gin_forward.1} parent=1 // pred_check_branch
      %124 = sbr.rel (0) target = $region45
    $region44: #{my_gin_forward.1} parent=1 // pred_region
      %126 = dma.done [#allocation6], 65536
    $region45: #{my_gin_forward.1} parent=1 // pred_fallthru
      _
    // Predicated region
    $region46: #{my_gin_forward.1} parent=1 // pred_check
      _
    $region47: #{my_gin_forward.1} parent=1 // pred_check_branch
      %128 = sbr.rel (0) target = $region49
    $region48: #{my_gin_forward.1} parent=1 // pred_region
      %130 = dma.done [#allocation9], 256
    $region49: #{my_gin_forward.1} parent=1 // pred_fallthru
      _
    // Predicated region
    $region50: #{my_gin_forward.1} parent=1 // pred_check
      _
    $region51: #{my_gin_forward.1} parent=1 // pred_check_branch
      %132 = sbr.rel (0) target = $region53
    $region52: #{my_gin_forward.1} parent=1 // pred_region
      %134 = dma.done [#allocation9], 65536
    $region53: #{my_gin_forward.1} parent=1 // pred_fallthru
      _
    // Predicated region
    $region54: #{my_gin_forward.1} parent=1 // pred_check
      _
    $region55: #{my_gin_forward.1} parent=1 // pred_check_branch
      %136 = sbr.rel (0) target = $region57
    $region56: #{my_gin_forward.1} parent=1 // pred_region
      %138 = dma.done [#allocation12], 64
    $region57: #{my_gin_forward.1} parent=1 // pred_fallthru
      _
    // Predicated region
    $region58: #{my_gin_forward.1} parent=1 // pred_check
      _
    $region59: #{my_gin_forward.1} parent=1 // pred_check_branch
      %140 = sbr.rel (0) target = $region61
    $region60: #{my_gin_forward.1} parent=1 // pred_region
      %142 = dma.done [#allocation12], 64
    $region61: #{my_gin_forward.1} parent=1 // pred_fallthru
      _
    // Predicated region
    $region62: #{my_gin_forward.1} parent=1 // pred_check
      _
    $region63: #{my_gin_forward.1} parent=1 // pred_check_branch
      %144 = sbr.rel (0) target = $region65
    $region64: #{my_gin_forward.1} parent=1 // pred_region
      %146 = dma.done [#allocation15], 64
    $region65: #{my_gin_forward.1} parent=1 // pred_fallthru
      _
    %v147 = vld [vmem:[#allocation5] sm:$0xff]
    %v148 = vld [vmem:[#allocation5 + $0x8] sm:$0xff]
    %v149 = vld [vmem:[#allocation5 + $0x10] sm:$0xff]
    %v150 = vld [vmem:[#allocation5 + $0x18] sm:$0xff]
    %v151 = vld [vmem:[#allocation5 + $0x20] sm:$0xff]
    %v152 = vld [vmem:[#allocation5 + $0x28] sm:$0xff]
    %v153 = vld [vmem:[#allocation5 + $0x30] sm:$0xff]
    %v154 = vld [vmem:[#allocation5 + $0x38] sm:$0xff]
    %v155 = vld [vmem:[#allocation2] sm:$0xff]
    %v156 = vld [vmem:[#allocation2 + $0x8] sm:$0xff]
    %vm157 = vcmask 130048
    %v159 = vsel %vm157, %v155, 0
    %v162 = vsel %vm157, %v156, 0
    %164 = vmatpush.msra.mxu0 0.0
    %165 = vmatpush.msra.mxu0 0.0
    %166 = vmatpush.msra.mxu0 0.0
    %167 = vmatpush.msra.mxu0 0.0
    %168 = vmatpush.msra.mxu0 0.0
    %169 = vmatpush.msra.mxu0 0.0
    %170 = vmatpush.msra.mxu0 0.0
    %171 = vmatpush.msra.mxu0 0.0
    %172 = vmatpush.msra.mxu0 0.0
    %173 = vmatpush.msra.mxu0 0.0
    %174 = vmatpush.msra.mxu0 0.0
    %175 = vmatpush.msra.mxu0 0.0
    %176 = vmatpush.msra.mxu0 0.0
    %177 = vmatpush.msra.mxu0 0.0
    %178 = vmatpush.msra.mxu0 %v151
    %179 = vmatpush.msra.mxu0 %v147
    %180 = vmatmul.f32.gmra.mxu0 %v159
    %v181 = vpop.f32.mrf.mxu0
    %v182 = vadd.f32 0.0, %v181
    %183 = vmatmul.f32.gmra.mxu0 %v162
    %v184 = vpop.f32.mrf.mxu0
    %v185 = vadd.f32 0.0, %v184
    %186 = vdwg.mxu0
    %187 = vmatpush.msra.mxu0 0.0
    %188 = vmatpush.msra.mxu0 0.0
    %189 = vmatpush.msra.mxu0 0.0
    %190 = vmatpush.msra.mxu0 0.0
    %191 = vmatpush.msra.mxu0 0.0
    %192 = vmatpush.msra.mxu0 0.0
    %193 = vmatpush.msra.mxu0 0.0
    %194 = vmatpush.msra.mxu0 0.0
    %195 = vmatpush.msra.mxu0 0.0
    %196 = vmatpush.msra.mxu0 0.0
    %197 = vmatpush.msra.mxu0 0.0
    %198 = vmatpush.msra.mxu0 0.0
    %199 = vmatpush.msra.mxu0 0.0
    %200 = vmatpush.msra.mxu0 0.0
    %201 = vmatpush.msra.mxu0 %v152
    %202 = vmatpush.msra.mxu0 %v148
    %203 = vmatmul.f32.gmra.mxu0 %v159
    %v204 = vpop.f32.mrf.mxu0
    %v205 = vadd.f32 0.0, %v204
    %206 = vmatmul.f32.gmra.mxu0 %v162
    %v207 = vpop.f32.mrf.mxu0
    %v208 = vadd.f32 0.0, %v207
    %209 = vdwg.mxu0
    %210 = vmatpush.msra.mxu0 0.0
    %211 = vmatpush.msra.mxu0 0.0
    %212 = vmatpush.msra.mxu0 0.0
    %213 = vmatpush.msra.mxu0 0.0
    %214 = vmatpush.msra.mxu0 0.0
    %215 = vmatpush.msra.mxu0 0.0
    %216 = vmatpush.msra.mxu0 0.0
    %217 = vmatpush.msra.mxu0 0.0
    %218 = vmatpush.msra.mxu0 0.0
    %219 = vmatpush.msra.mxu0 0.0
    %220 = vmatpush.msra.mxu0 0.0
    %221 = vmatpush.msra.mxu0 0.0
    %222 = vmatpush.msra.mxu0 0.0
    %223 = vmatpush.msra.mxu0 0.0
    %224 = vmatpush.msra.mxu0 %v153
    %225 = vmatpush.msra.mxu0 %v149
    %226 = vmatmul.f32.gmra.mxu0 %v159
    %v227 = vpop.f32.mrf.mxu0
    %v228 = vadd.f32 0.0, %v227
    %229 = vmatmul.f32.gmra.mxu0 %v162
    %v230 = vpop.f32.mrf.mxu0
    %v231 = vadd.f32 0.0, %v230
    %232 = vdwg.mxu0
    %233 = vmatpush.msra.mxu0 0.0
    %234 = vmatpush.msra.mxu0 0.0
    %235 = vmatpush.msra.mxu0 0.0
    %236 = vmatpush.msra.mxu0 0.0
    %237 = vmatpush.msra.mxu0 0.0
    %238 = vmatpush.msra.mxu0 0.0
    %239 = vmatpush.msra.mxu0 0.0
    %240 = vmatpush.msra.mxu0 0.0
    %241 = vmatpush.msra.mxu0 0.0
    %242 = vmatpush.msra.mxu0 0.0
    %243 = vmatpush.msra.mxu0 0.0
    %244 = vmatpush.msra.mxu0 0.0
    %245 = vmatpush.msra.mxu0 0.0
    %246 = vmatpush.msra.mxu0 0.0
    %247 = vmatpush.msra.mxu0 %v154
    %248 = vmatpush.msra.mxu0 %v150
    %249 = vmatmul.f32.gmra.mxu0 %v159
    %v250 = vpop.f32.mrf.mxu0
    %v251 = vadd.f32 0.0, %v250
    %252 = vmatmul.f32.gmra.mxu0 %v162
    %v253 = vpop.f32.mrf.mxu0
    %v254 = vadd.f32 0.0, %v253
    %255 = vdwg.mxu0
    %s256 = scalar_lea.vmem [#allocation5], 64
    %v257 = vld [vmem:[%s256] sm:$0xff]
    %v258 = vld [vmem:[%s256 + $0x8] sm:$0xff]
    %v259 = vld [vmem:[%s256 + $0x10] sm:$0xff]
    %v260 = vld [vmem:[%s256 + $0x18] sm:$0xff]
    %v261 = vld [vmem:[%s256 + $0x20] sm:$0xff]
    %v262 = vld [vmem:[%s256 + $0x28] sm:$0xff]
    %v263 = vld [vmem:[%s256 + $0x30] sm:$0xff]
    %v264 = vld [vmem:[%s256 + $0x38] sm:$0xff]
    %s265 = scalar_lea.vmem [#allocation2], 16
    %v266 = vld [vmem:[%s265] sm:$0xff]
    %v267 = vld [vmem:[%s265 + $0x8] sm:$0xff]
    %v269 = vsel %vm157, %v266, 0
    %v272 = vsel %vm157, %v267, 0
    %274 = vmatpush.msra.mxu0 0.0
    %275 = vmatpush.msra.mxu0 0.0
    %276 = vmatpush.msra.mxu0 0.0
    %277 = vmatpush.msra.mxu0 0.0
    %278 = vmatpush.msra.mxu0 0.0
    %279 = vmatpush.msra.mxu0 0.0
    %280 = vmatpush.msra.mxu0 0.0
    %281 = vmatpush.msra.mxu0 0.0
    %282 = vmatpush.msra.mxu0 0.0
    %283 = vmatpush.msra.mxu0 0.0
    %284 = vmatpush.msra.mxu0 0.0
    %285 = vmatpush.msra.mxu0 0.0
    %286 = vmatpush.msra.mxu0 0.0
    %287 = vmatpush.msra.mxu0 0.0
    %288 = vmatpush.msra.mxu0 %v261
    %289 = vmatpush.msra.mxu0 %v257
    %290 = vmatmul.f32.gmra.mxu0 %v269
    %v291 = vpop.f32.mrf.mxu0
    %v292 = vadd.f32 0.0, %v291
    %293 = vmatmul.f32.gmra.mxu0 %v272
    %v294 = vpop.f32.mrf.mxu0
    %v295 = vadd.f32 0.0, %v294
    %296 = vdwg.mxu0
    %297 = vmatpush.msra.mxu0 0.0
    %298 = vmatpush.msra.mxu0 0.0
    %299 = vmatpush.msra.mxu0 0.0
    %300 = vmatpush.msra.mxu0 0.0
    %301 = vmatpush.msra.mxu0 0.0
    %302 = vmatpush.msra.mxu0 0.0
    %303 = vmatpush.msra.mxu0 0.0
    %304 = vmatpush.msra.mxu0 0.0
    %305 = vmatpush.msra.mxu0 0.0
    %306 = vmatpush.msra.mxu0 0.0
    %307 = vmatpush.msra.mxu0 0.0
    %308 = vmatpush.msra.mxu0 0.0
    %309 = vmatpush.msra.mxu0 0.0
    %310 = vmatpush.msra.mxu0 0.0
    %311 = vmatpush.msra.mxu0 %v262
    %312 = vmatpush.msra.mxu0 %v258
    %313 = vmatmul.f32.gmra.mxu0 %v269
    %v314 = vpop.f32.mrf.mxu0
    %v315 = vadd.f32 0.0, %v314
    %316 = vmatmul.f32.gmra.mxu0 %v272
    %v317 = vpop.f32.mrf.mxu0
    %v318 = vadd.f32 0.0, %v317
    %319 = vdwg.mxu0
    %320 = vmatpush.msra.mxu0 0.0
    %321 = vmatpush.msra.mxu0 0.0
    %322 = vmatpush.msra.mxu0 0.0
    %323 = vmatpush.msra.mxu0 0.0
    %324 = vmatpush.msra.mxu0 0.0
    %325 = vmatpush.msra.mxu0 0.0
    %326 = vmatpush.msra.mxu0 0.0
    %327 = vmatpush.msra.mxu0 0.0
    %328 = vmatpush.msra.mxu0 0.0
    %329 = vmatpush.msra.mxu0 0.0
    %330 = vmatpush.msra.mxu0 0.0
    %331 = vmatpush.msra.mxu0 0.0
    %332 = vmatpush.msra.mxu0 0.0
    %333 = vmatpush.msra.mxu0 0.0
    %334 = vmatpush.msra.mxu0 %v263
    %335 = vmatpush.msra.mxu0 %v259
    %336 = vmatmul.f32.gmra.mxu0 %v269
    %v337 = vpop.f32.mrf.mxu0
    %v338 = vadd.f32 0.0, %v337
    %339 = vmatmul.f32.gmra.mxu0 %v272
    %v340 = vpop.f32.mrf.mxu0
    %v341 = vadd.f32 0.0, %v340
    %342 = vdwg.mxu0
    %343 = vmatpush.msra.mxu0 0.0
    %344 = vmatpush.msra.mxu0 0.0
    %345 = vmatpush.msra.mxu0 0.0
    %346 = vmatpush.msra.mxu0 0.0
    %347 = vmatpush.msra.mxu0 0.0
    %348 = vmatpush.msra.mxu0 0.0
    %349 = vmatpush.msra.mxu0 0.0
    %350 = vmatpush.msra.mxu0 0.0
    %351 = vmatpush.msra.mxu0 0.0
    %352 = vmatpush.msra.mxu0 0.0
    %353 = vmatpush.msra.mxu0 0.0
    %354 = vmatpush.msra.mxu0 0.0
    %355 = vmatpush.msra.mxu0 0.0
    %356 = vmatpush.msra.mxu0 0.0
    %357 = vmatpush.msra.mxu0 %v264
    %358 = vmatpush.msra.mxu0 %v260
    %359 = vmatmul.f32.gmra.mxu0 %v269
    %v360 = vpop.f32.mrf.mxu0
    %v361 = vadd.f32 0.0, %v360
    %362 = vmatmul.f32.gmra.mxu0 %v272
    %v363 = vpop.f32.mrf.mxu0
    %v364 = vadd.f32 0.0, %v363
    %365 = vdwg.mxu0
    %v366 = vpack.c.bf16 %v185, %v182
    %v367 = vpack.c.bf16 %v208, %v205
    %v368 = vpack.c.bf16 %v231, %v228
    %v369 = vpack.c.bf16 %v254, %v251
    %v370 = vpack.c.bf16 %v295, %v292
    %v371 = vpack.c.bf16 %v318, %v315
    %v372 = vpack.c.bf16 %v341, %v338
    %v373 = vpack.c.bf16 %v364, %v361
    %v374 = vld [vmem:[#allocation7] sm:$0xff]
    %v375 = vld [vmem:[#allocation7 + $0x8] sm:$0xff]
    %v376 = vld [vmem:[#allocation7 + $0x40] sm:$0xff]
    %v377 = vld [vmem:[#allocation7 + $0x48] sm:$0xff]
    %v378 = vld [vmem:[#allocation7 + $0x80] sm:$0xff]
    %v379 = vld [vmem:[#allocation7 + $0x88] sm:$0xff]
    %v380 = vld [vmem:[#allocation7 + $0xc0] sm:$0xff]
    %v381 = vld [vmem:[#allocation7 + $0xc8] sm:$0xff]
    %v382 = vld [vmem:[#allocation7 + $0x100] sm:$0xff]
    %v383 = vld [vmem:[#allocation7 + $0x108] sm:$0xff]
    %v384 = vld [vmem:[#allocation7 + $0x140] sm:$0xff]
    %v385 = vld [vmem:[#allocation7 + $0x148] sm:$0xff]
    %v386 = vld [vmem:[#allocation7 + $0x180] sm:$0xff]
    %v387 = vld [vmem:[#allocation7 + $0x188] sm:$0xff]
    %v388 = vld [vmem:[#allocation7 + $0x1c0] sm:$0xff]
    %v389 = vld [vmem:[#allocation7 + $0x1c8] sm:$0xff]
    %v390 = vld [vmem:[#allocation7 + $0x200] sm:$0xff]
    %v391 = vld [vmem:[#allocation7 + $0x208] sm:$0xff]
    %v392 = vld [vmem:[#allocation7 + $0x240] sm:$0xff]
    %v393 = vld [vmem:[#allocation7 + $0x248] sm:$0xff]
    %v394 = vld [vmem:[#allocation7 + $0x280] sm:$0xff]
    %v395 = vld [vmem:[#allocation7 + $0x288] sm:$0xff]
    %v396 = vld [vmem:[#allocation7 + $0x2c0] sm:$0xff]
    %v397 = vld [vmem:[#allocation7 + $0x2c8] sm:$0xff]
    %v398 = vld [vmem:[#allocation7 + $0x300] sm:$0xff]
    %v399 = vld [vmem:[#allocation7 + $0x308] sm:$0xff]
    %v400 = vld [vmem:[#allocation7 + $0x340] sm:$0xff]
    %v401 = vld [vmem:[#allocation7 + $0x348] sm:$0xff]
    %v402 = vld [vmem:[#allocation7 + $0x380] sm:$0xff]
    %v403 = vld [vmem:[#allocation7 + $0x388] sm:$0xff]
    %v404 = vld [vmem:[#allocation7 + $0x3c0] sm:$0xff]
    %v405 = vld [vmem:[#allocation7 + $0x3c8] sm:$0xff]
    %v406 = vld [vmem:[#allocation7 + $0x400] sm:$0xff]
    %v407 = vld [vmem:[#allocation7 + $0x408] sm:$0xff]
    %v408 = vld [vmem:[#allocation7 + $0x440] sm:$0xff]
    %v409 = vld [vmem:[#allocation7 + $0x448] sm:$0xff]
    %v410 = vld [vmem:[#allocation7 + $0x480] sm:$0xff]
    %v411 = vld [vmem:[#allocation7 + $0x488] sm:$0xff]
    %v412 = vld [vmem:[#allocation7 + $0x4c0] sm:$0xff]
    %v413 = vld [vmem:[#allocation7 + $0x4c8] sm:$0xff]
    %v414 = vld [vmem:[#allocation7 + $0x500] sm:$0xff]
    %v415 = vld [vmem:[#allocation7 + $0x508] sm:$0xff]
    %v416 = vld [vmem:[#allocation7 + $0x540] sm:$0xff]
    %v417 = vld [vmem:[#allocation7 + $0x548] sm:$0xff]
    %v418 = vld [vmem:[#allocation7 + $0x580] sm:$0xff]
    %v419 = vld [vmem:[#allocation7 + $0x588] sm:$0xff]
    %v420 = vld [vmem:[#allocation7 + $0x5c0] sm:$0xff]
    %v421 = vld [vmem:[#allocation7 + $0x5c8] sm:$0xff]
    %v422 = vld [vmem:[#allocation7 + $0x600] sm:$0xff]
    %v423 = vld [vmem:[#allocation7 + $0x608] sm:$0xff]
    %v424 = vld [vmem:[#allocation7 + $0x640] sm:$0xff]
    %v425 = vld [vmem:[#allocation7 + $0x648] sm:$0xff]
    %v426 = vld [vmem:[#allocation7 + $0x680] sm:$0xff]
    %v427 = vld [vmem:[#allocation7 + $0x688] sm:$0xff]
    %v428 = vld [vmem:[#allocation7 + $0x6c0] sm:$0xff]
    %v429 = vld [vmem:[#allocation7 + $0x6c8] sm:$0xff]
    %v430 = vld [vmem:[#allocation7 + $0x700] sm:$0xff]
    %v431 = vld [vmem:[#allocation7 + $0x708] sm:$0xff]
    %v432 = vld [vmem:[#allocation7 + $0x740] sm:$0xff]
    %v433 = vld [vmem:[#allocation7 + $0x748] sm:$0xff]
    %v434 = vld [vmem:[#allocation7 + $0x780] sm:$0xff]
    %v435 = vld [vmem:[#allocation7 + $0x788] sm:$0xff]
    %v436 = vld [vmem:[#allocation7 + $0x7c0] sm:$0xff]
    %v437 = vld [vmem:[#allocation7 + $0x7c8] sm:$0xff]
    %v438 = vld [vmem:[#allocation7 + $0x800] sm:$0xff]
    %v439 = vld [vmem:[#allocation7 + $0x808] sm:$0xff]
    %v440 = vld [vmem:[#allocation7 + $0x840] sm:$0xff]
    %v441 = vld [vmem:[#allocation7 + $0x848] sm:$0xff]
    %v442 = vld [vmem:[#allocation7 + $0x880] sm:$0xff]
    %v443 = vld [vmem:[#allocation7 + $0x888] sm:$0xff]
    %v444 = vld [vmem:[#allocation7 + $0x8c0] sm:$0xff]
    %v445 = vld [vmem:[#allocation7 + $0x8c8] sm:$0xff]
    %v446 = vld [vmem:[#allocation7 + $0x900] sm:$0xff]
    %v447 = vld [vmem:[#allocation7 + $0x908] sm:$0xff]
    %v448 = vld [vmem:[#allocation7 + $0x940] sm:$0xff]
    %v449 = vld [vmem:[#allocation7 + $0x948] sm:$0xff]
    %v450 = vld [vmem:[#allocation7 + $0x980] sm:$0xff]
    %v451 = vld [vmem:[#allocation7 + $0x988] sm:$0xff]
    %v452 = vld [vmem:[#allocation7 + $0x9c0] sm:$0xff]
    %v453 = vld [vmem:[#allocation7 + $0x9c8] sm:$0xff]
    %v454 = vld [vmem:[#allocation7 + $0xa00] sm:$0xff]
    %v455 = vld [vmem:[#allocation7 + $0xa08] sm:$0xff]
    %v456 = vld [vmem:[#allocation7 + $0xa40] sm:$0xff]
    %v457 = vld [vmem:[#allocation7 + $0xa48] sm:$0xff]
    %v458 = vld [vmem:[#allocation7 + $0xa80] sm:$0xff]
    %v459 = vld [vmem:[#allocation7 + $0xa88] sm:$0xff]
    %v460 = vld [vmem:[#allocation7 + $0xac0] sm:$0xff]
    %v461 = vld [vmem:[#allocation7 + $0xac8] sm:$0xff]
    %v462 = vld [vmem:[#allocation7 + $0xb00] sm:$0xff]
    %v463 = vld [vmem:[#allocation7 + $0xb08] sm:$0xff]
    %v464 = vld [vmem:[#allocation7 + $0xb40] sm:$0xff]
    %v465 = vld [vmem:[#allocation7 + $0xb48] sm:$0xff]
    %v466 = vld [vmem:[#allocation7 + $0xb80] sm:$0xff]
    %v467 = vld [vmem:[#allocation7 + $0xb88] sm:$0xff]
    %v468 = vld [vmem:[#allocation7 + $0xbc0] sm:$0xff]
    %v469 = vld [vmem:[#allocation7 + $0xbc8] sm:$0xff]
    %v470 = vld [vmem:[#allocation7 + $0xc00] sm:$0xff]
    %v471 = vld [vmem:[#allocation7 + $0xc08] sm:$0xff]
    %v472 = vld [vmem:[#allocation7 + $0xc40] sm:$0xff]
    %v473 = vld [vmem:[#allocation7 + $0xc48] sm:$0xff]
    %v474 = vld [vmem:[#allocation7 + $0xc80] sm:$0xff]
    %v475 = vld [vmem:[#allocation7 + $0xc88] sm:$0xff]
    %v476 = vld [vmem:[#allocation7 + $0xcc0] sm:$0xff]
    %v477 = vld [vmem:[#allocation7 + $0xcc8] sm:$0xff]
    %v478 = vld [vmem:[#allocation7 + $0xd00] sm:$0xff]
    %v479 = vld [vmem:[#allocation7 + $0xd08] sm:$0xff]
    %v480 = vld [vmem:[#allocation7 + $0xd40] sm:$0xff]
    %v481 = vld [vmem:[#allocation7 + $0xd48] sm:$0xff]
    %v482 = vld [vmem:[#allocation7 + $0xd80] sm:$0xff]
    %v483 = vld [vmem:[#allocation7 + $0xd88] sm:$0xff]
    %v484 = vld [vmem:[#allocation7 + $0xdc0] sm:$0xff]
    %v485 = vld [vmem:[#allocation7 + $0xdc8] sm:$0xff]
    %v486 = vld [vmem:[#allocation7 + $0xe00] sm:$0xff]
    %v487 = vld [vmem:[#allocation7 + $0xe08] sm:$0xff]
    %v488 = vld [vmem:[#allocation7 + $0xe40] sm:$0xff]
    %v489 = vld [vmem:[#allocation7 + $0xe48] sm:$0xff]
    %v490 = vld [vmem:[#allocation7 + $0xe80] sm:$0xff]
    %v491 = vld [vmem:[#allocation7 + $0xe88] sm:$0xff]
    %v492 = vld [vmem:[#allocation7 + $0xec0] sm:$0xff]
    %v493 = vld [vmem:[#allocation7 + $0xec8] sm:$0xff]
    %v494 = vld [vmem:[#allocation7 + $0xf00] sm:$0xff]
    %v495 = vld [vmem:[#allocation7 + $0xf08] sm:$0xff]
    %v496 = vld [vmem:[#allocation7 + $0xf40] sm:$0xff]
    %v497 = vld [vmem:[#allocation7 + $0xf48] sm:$0xff]
    %v498 = vld [vmem:[#allocation7 + $0xf80] sm:$0xff]
    %v499 = vld [vmem:[#allocation7 + $0xf88] sm:$0xff]
    %v500 = vld [vmem:[#allocation7 + $0xfc0] sm:$0xff]
    %v501 = vld [vmem:[#allocation7 + $0xfc8] sm:$0xff]
    %v502 = vld [vmem:[#allocation8] sm:$0xf]
    %v504 = vperm.slane %v502, 0
    %v505 = vperm.slane %v502, 1
    %v506 = vperm.slane %v502, 2
    %v507 = vperm.slane %v502, 3
    %v640 = vunpack.c.l.b16 %v374
    %v641 = vunpack.c.h.b16 %v374
    %v642 = vunpack.c.l.b16 %v375
    %v643 = vunpack.c.h.b16 %v375
    %v644 = vunpack.c.l.b16 %v376
    %v645 = vunpack.c.h.b16 %v376
    %v646 = vunpack.c.l.b16 %v377
    %v647 = vunpack.c.h.b16 %v377
    %v648 = vunpack.c.l.b16 %v378
    %v649 = vunpack.c.h.b16 %v378
    %v650 = vunpack.c.l.b16 %v379
    %v651 = vunpack.c.h.b16 %v379
    %v652 = vunpack.c.l.b16 %v380
    %v653 = vunpack.c.h.b16 %v380
    %v654 = vunpack.c.l.b16 %v381
    %v655 = vunpack.c.h.b16 %v381
    %v656 = vunpack.c.l.b16 %v382
    %v657 = vunpack.c.h.b16 %v382
    %v658 = vunpack.c.l.b16 %v383
    %v659 = vunpack.c.h.b16 %v383
    %v660 = vunpack.c.l.b16 %v384
    %v661 = vunpack.c.h.b16 %v384
    %v662 = vunpack.c.l.b16 %v385
    %v663 = vunpack.c.h.b16 %v385
    %v664 = vunpack.c.l.b16 %v386
    %v665 = vunpack.c.h.b16 %v386
    %v666 = vunpack.c.l.b16 %v387
    %v667 = vunpack.c.h.b16 %v387
    %v668 = vunpack.c.l.b16 %v388
    %v669 = vunpack.c.h.b16 %v388
    %v670 = vunpack.c.l.b16 %v389
    %v671 = vunpack.c.h.b16 %v389
    %v672 = vunpack.c.l.b16 %v390
    %v673 = vunpack.c.h.b16 %v390
    %v674 = vunpack.c.l.b16 %v391
    %v675 = vunpack.c.h.b16 %v391
    %v676 = vunpack.c.l.b16 %v392
    %v677 = vunpack.c.h.b16 %v392
    %v678 = vunpack.c.l.b16 %v393
    %v679 = vunpack.c.h.b16 %v393
    %v680 = vunpack.c.l.b16 %v394
    %v681 = vunpack.c.h.b16 %v394
    %v682 = vunpack.c.l.b16 %v395
    %v683 = vunpack.c.h.b16 %v395
    %v684 = vunpack.c.l.b16 %v396
    %v685 = vunpack.c.h.b16 %v396
    %v686 = vunpack.c.l.b16 %v397
    %v687 = vunpack.c.h.b16 %v397
    %v688 = vunpack.c.l.b16 %v398
    %v689 = vunpack.c.h.b16 %v398
    %v690 = vunpack.c.l.b16 %v399
    %v691 = vunpack.c.h.b16 %v399
    %v692 = vunpack.c.l.b16 %v400
    %v693 = vunpack.c.h.b16 %v400
    %v694 = vunpack.c.l.b16 %v401
    %v695 = vunpack.c.h.b16 %v401
    %v696 = vunpack.c.l.b16 %v402
    %v697 = vunpack.c.h.b16 %v402
    %v698 = vunpack.c.l.b16 %v403
    %v699 = vunpack.c.h.b16 %v403
    %v700 = vunpack.c.l.b16 %v404
    %v701 = vunpack.c.h.b16 %v404
    %v702 = vunpack.c.l.b16 %v405
    %v703 = vunpack.c.h.b16 %v405
    %v704 = vunpack.c.l.b16 %v406
    %v705 = vunpack.c.h.b16 %v406
    %v706 = vunpack.c.l.b16 %v407
    %v707 = vunpack.c.h.b16 %v407
    %v708 = vunpack.c.l.b16 %v408
    %v709 = vunpack.c.h.b16 %v408
    %v710 = vunpack.c.l.b16 %v409
    %v711 = vunpack.c.h.b16 %v409
    %v712 = vunpack.c.l.b16 %v410
    %v713 = vunpack.c.h.b16 %v410
    %v714 = vunpack.c.l.b16 %v411
    %v715 = vunpack.c.h.b16 %v411
    %v716 = vunpack.c.l.b16 %v412
    %v717 = vunpack.c.h.b16 %v412
    %v718 = vunpack.c.l.b16 %v413
    %v719 = vunpack.c.h.b16 %v413
    %v720 = vunpack.c.l.b16 %v414
    %v721 = vunpack.c.h.b16 %v414
    %v722 = vunpack.c.l.b16 %v415
    %v723 = vunpack.c.h.b16 %v415
    %v724 = vunpack.c.l.b16 %v416
    %v725 = vunpack.c.h.b16 %v416
    %v726 = vunpack.c.l.b16 %v417
    %v727 = vunpack.c.h.b16 %v417
    %v728 = vunpack.c.l.b16 %v418
    %v729 = vunpack.c.h.b16 %v418
    %v730 = vunpack.c.l.b16 %v419
    %v731 = vunpack.c.h.b16 %v419
    %v732 = vunpack.c.l.b16 %v420
    %v733 = vunpack.c.h.b16 %v420
    %v734 = vunpack.c.l.b16 %v421
    %v735 = vunpack.c.h.b16 %v421
    %v736 = vunpack.c.l.b16 %v422
    %v737 = vunpack.c.h.b16 %v422
    %v738 = vunpack.c.l.b16 %v423
    %v739 = vunpack.c.h.b16 %v423
    %v740 = vunpack.c.l.b16 %v424
    %v741 = vunpack.c.h.b16 %v424
    %v742 = vunpack.c.l.b16 %v425
    %v743 = vunpack.c.h.b16 %v425
    %v744 = vunpack.c.l.b16 %v426
    %v745 = vunpack.c.h.b16 %v426
    %v746 = vunpack.c.l.b16 %v427
    %v747 = vunpack.c.h.b16 %v427
    %v748 = vunpack.c.l.b16 %v428
    %v749 = vunpack.c.h.b16 %v428
    %v750 = vunpack.c.l.b16 %v429
    %v751 = vunpack.c.h.b16 %v429
    %v752 = vunpack.c.l.b16 %v430
    %v753 = vunpack.c.h.b16 %v430
    %v754 = vunpack.c.l.b16 %v431
    %v755 = vunpack.c.h.b16 %v431
    %v756 = vunpack.c.l.b16 %v432
    %v757 = vunpack.c.h.b16 %v432
    %v758 = vunpack.c.l.b16 %v433
    %v759 = vunpack.c.h.b16 %v433
    %v760 = vunpack.c.l.b16 %v434
    %v761 = vunpack.c.h.b16 %v434
    %v762 = vunpack.c.l.b16 %v435
    %v763 = vunpack.c.h.b16 %v435
    %v764 = vunpack.c.l.b16 %v436
    %v765 = vunpack.c.h.b16 %v436
    %v766 = vunpack.c.l.b16 %v437
    %v767 = vunpack.c.h.b16 %v437
    %v768 = vunpack.c.l.b16 %v438
    %v769 = vunpack.c.h.b16 %v438
    %v770 = vunpack.c.l.b16 %v439
    %v771 = vunpack.c.h.b16 %v439
    %v772 = vunpack.c.l.b16 %v440
    %v773 = vunpack.c.h.b16 %v440
    %v774 = vunpack.c.l.b16 %v441
    %v775 = vunpack.c.h.b16 %v441
    %v776 = vunpack.c.l.b16 %v442
    %v777 = vunpack.c.h.b16 %v442
    %v778 = vunpack.c.l.b16 %v443
    %v779 = vunpack.c.h.b16 %v443
    %v780 = vunpack.c.l.b16 %v444
    %v781 = vunpack.c.h.b16 %v444
    %v782 = vunpack.c.l.b16 %v445
    %v783 = vunpack.c.h.b16 %v445
    %v784 = vunpack.c.l.b16 %v446
    %v785 = vunpack.c.h.b16 %v446
    %v786 = vunpack.c.l.b16 %v447
    %v787 = vunpack.c.h.b16 %v447
    %v788 = vunpack.c.l.b16 %v448
    %v789 = vunpack.c.h.b16 %v448
    %v790 = vunpack.c.l.b16 %v449
    %v791 = vunpack.c.h.b16 %v449
    %v792 = vunpack.c.l.b16 %v450
    %v793 = vunpack.c.h.b16 %v450
    %v794 = vunpack.c.l.b16 %v451
    %v795 = vunpack.c.h.b16 %v451
    %v796 = vunpack.c.l.b16 %v452
    %v797 = vunpack.c.h.b16 %v452
    %v798 = vunpack.c.l.b16 %v453
    %v799 = vunpack.c.h.b16 %v453
    %v800 = vunpack.c.l.b16 %v454
    %v801 = vunpack.c.h.b16 %v454
    %v802 = vunpack.c.l.b16 %v455
    %v803 = vunpack.c.h.b16 %v455
    %v804 = vunpack.c.l.b16 %v456
    %v805 = vunpack.c.h.b16 %v456
    %v806 = vunpack.c.l.b16 %v457
    %v807 = vunpack.c.h.b16 %v457
    %v808 = vunpack.c.l.b16 %v458
    %v809 = vunpack.c.h.b16 %v458
    %v810 = vunpack.c.l.b16 %v459
    %v811 = vunpack.c.h.b16 %v459
    %v812 = vunpack.c.l.b16 %v460
    %v813 = vunpack.c.h.b16 %v460
    %v814 = vunpack.c.l.b16 %v461
    %v815 = vunpack.c.h.b16 %v461
    %v816 = vunpack.c.l.b16 %v462
    %v817 = vunpack.c.h.b16 %v462
    %v818 = vunpack.c.l.b16 %v463
    %v819 = vunpack.c.h.b16 %v463
    %v820 = vunpack.c.l.b16 %v464
    %v821 = vunpack.c.h.b16 %v464
    %v822 = vunpack.c.l.b16 %v465
    %v823 = vunpack.c.h.b16 %v465
    %v824 = vunpack.c.l.b16 %v466
    %v825 = vunpack.c.h.b16 %v466
    %v826 = vunpack.c.l.b16 %v467
    %v827 = vunpack.c.h.b16 %v467
    %v828 = vunpack.c.l.b16 %v468
    %v829 = vunpack.c.h.b16 %v468
    %v830 = vunpack.c.l.b16 %v469
    %v831 = vunpack.c.h.b16 %v469
    %v832 = vunpack.c.l.b16 %v470
    %v833 = vunpack.c.h.b16 %v470
    %v834 = vunpack.c.l.b16 %v471
    %v835 = vunpack.c.h.b16 %v471
    %v836 = vunpack.c.l.b16 %v472
    %v837 = vunpack.c.h.b16 %v472
    %v838 = vunpack.c.l.b16 %v473
    %v839 = vunpack.c.h.b16 %v473
    %v840 = vunpack.c.l.b16 %v474
    %v841 = vunpack.c.h.b16 %v474
    %v842 = vunpack.c.l.b16 %v475
    %v843 = vunpack.c.h.b16 %v475
    %v844 = vunpack.c.l.b16 %v476
    %v845 = vunpack.c.h.b16 %v476
    %v846 = vunpack.c.l.b16 %v477
    %v847 = vunpack.c.h.b16 %v477
    %v848 = vunpack.c.l.b16 %v478
    %v849 = vunpack.c.h.b16 %v478
    %v850 = vunpack.c.l.b16 %v479
    %v851 = vunpack.c.h.b16 %v479
    %v852 = vunpack.c.l.b16 %v480
    %v853 = vunpack.c.h.b16 %v480
    %v854 = vunpack.c.l.b16 %v481
    %v855 = vunpack.c.h.b16 %v481
    %v856 = vunpack.c.l.b16 %v482
    %v857 = vunpack.c.h.b16 %v482
    %v858 = vunpack.c.l.b16 %v483
    %v859 = vunpack.c.h.b16 %v483
    %v860 = vunpack.c.l.b16 %v484
    %v861 = vunpack.c.h.b16 %v484
    %v862 = vunpack.c.l.b16 %v485
    %v863 = vunpack.c.h.b16 %v485
    %v864 = vunpack.c.l.b16 %v486
    %v865 = vunpack.c.h.b16 %v486
    %v866 = vunpack.c.l.b16 %v487
    %v867 = vunpack.c.h.b16 %v487
    %v868 = vunpack.c.l.b16 %v488
    %v869 = vunpack.c.h.b16 %v488
    %v870 = vunpack.c.l.b16 %v489
    %v871 = vunpack.c.h.b16 %v489
    %v872 = vunpack.c.l.b16 %v490
    %v873 = vunpack.c.h.b16 %v490
    %v874 = vunpack.c.l.b16 %v491
    %v875 = vunpack.c.h.b16 %v491
    %v876 = vunpack.c.l.b16 %v492
    %v877 = vunpack.c.h.b16 %v492
    %v878 = vunpack.c.l.b16 %v493
    %v879 = vunpack.c.h.b16 %v493
    %v880 = vunpack.c.l.b16 %v494
    %v881 = vunpack.c.h.b16 %v494
    %v882 = vunpack.c.l.b16 %v495
    %v883 = vunpack.c.h.b16 %v495
    %v884 = vunpack.c.l.b16 %v496
    %v885 = vunpack.c.h.b16 %v496
    %v886 = vunpack.c.l.b16 %v497
    %v887 = vunpack.c.h.b16 %v497
    %v888 = vunpack.c.l.b16 %v498
    %v889 = vunpack.c.h.b16 %v498
    %v890 = vunpack.c.l.b16 %v499
    %v891 = vunpack.c.h.b16 %v499
    %v892 = vunpack.c.l.b16 %v500
    %v893 = vunpack.c.h.b16 %v500
    %v894 = vunpack.c.l.b16 %v501
    %v895 = vunpack.c.h.b16 %v501
    %v896 = vpack.c.b16 %v644, %v640
    %v897 = vpack.c.b16 %v645, %v641
    %v898 = vpack.c.b16 %v646, %v642
    %v899 = vpack.c.b16 %v647, %v643
    %v900 = vpack.c.b16 %v652, %v648
    %v901 = vpack.c.b16 %v653, %v649
    %v902 = vpack.c.b16 %v654, %v650
    %v903 = vpack.c.b16 %v655, %v651
    %v904 = vpack.c.b16 %v660, %v656
    %v905 = vpack.c.b16 %v661, %v657
    %v906 = vpack.c.b16 %v662, %v658
    %v907 = vpack.c.b16 %v663, %v659
    %v908 = vpack.c.b16 %v668, %v664
    %v909 = vpack.c.b16 %v669, %v665
    %v910 = vpack.c.b16 %v670, %v666
    %v911 = vpack.c.b16 %v671, %v667
    %v912 = vpack.c.b16 %v676, %v672
    %v913 = vpack.c.b16 %v677, %v673
    %v914 = vpack.c.b16 %v678, %v674
    %v915 = vpack.c.b16 %v679, %v675
    %v916 = vpack.c.b16 %v684, %v680
    %v917 = vpack.c.b16 %v685, %v681
    %v918 = vpack.c.b16 %v686, %v682
    %v919 = vpack.c.b16 %v687, %v683
    %v920 = vpack.c.b16 %v692, %v688
    %v921 = vpack.c.b16 %v693, %v689
    %v922 = vpack.c.b16 %v694, %v690
    %v923 = vpack.c.b16 %v695, %v691
    %v924 = vpack.c.b16 %v700, %v696
    %v925 = vpack.c.b16 %v701, %v697
    %v926 = vpack.c.b16 %v702, %v698
    %v927 = vpack.c.b16 %v703, %v699
    %v928 = vpack.c.b16 %v708, %v704
    %v929 = vpack.c.b16 %v709, %v705
    %v930 = vpack.c.b16 %v710, %v706
    %v931 = vpack.c.b16 %v711, %v707
    %v932 = vpack.c.b16 %v716, %v712
    %v933 = vpack.c.b16 %v717, %v713
    %v934 = vpack.c.b16 %v718, %v714
    %v935 = vpack.c.b16 %v719, %v715
    %v936 = vpack.c.b16 %v724, %v720
    %v937 = vpack.c.b16 %v725, %v721
    %v938 = vpack.c.b16 %v726, %v722
    %v939 = vpack.c.b16 %v727, %v723
    %v940 = vpack.c.b16 %v732, %v728
    %v941 = vpack.c.b16 %v733, %v729
    %v942 = vpack.c.b16 %v734, %v730
    %v943 = vpack.c.b16 %v735, %v731
    %v944 = vpack.c.b16 %v740, %v736
    %v945 = vpack.c.b16 %v741, %v737
    %v946 = vpack.c.b16 %v742, %v738
    %v947 = vpack.c.b16 %v743, %v739
    %v948 = vpack.c.b16 %v748, %v744
    %v949 = vpack.c.b16 %v749, %v745
    %v950 = vpack.c.b16 %v750, %v746
    %v951 = vpack.c.b16 %v751, %v747
    %v952 = vpack.c.b16 %v756, %v752
    %v953 = vpack.c.b16 %v757, %v753
    %v954 = vpack.c.b16 %v758, %v754
    %v955 = vpack.c.b16 %v759, %v755
    %v956 = vpack.c.b16 %v764, %v760
    %v957 = vpack.c.b16 %v765, %v761
    %v958 = vpack.c.b16 %v766, %v762
    %v959 = vpack.c.b16 %v767, %v763
    %v960 = vpack.c.b16 %v772, %v768
    %v961 = vpack.c.b16 %v773, %v769
    %v962 = vpack.c.b16 %v774, %v770
    %v963 = vpack.c.b16 %v775, %v771
    %v964 = vpack.c.b16 %v780, %v776
    %v965 = vpack.c.b16 %v781, %v777
    %v966 = vpack.c.b16 %v782, %v778
    %v967 = vpack.c.b16 %v783, %v779
    %v968 = vpack.c.b16 %v788, %v784
    %v969 = vpack.c.b16 %v789, %v785
    %v970 = vpack.c.b16 %v790, %v786
    %v971 = vpack.c.b16 %v791, %v787
    %v972 = vpack.c.b16 %v796, %v792
    %v973 = vpack.c.b16 %v797, %v793
    %v974 = vpack.c.b16 %v798, %v794
    %v975 = vpack.c.b16 %v799, %v795
    %v976 = vpack.c.b16 %v804, %v800
    %v977 = vpack.c.b16 %v805, %v801
    %v978 = vpack.c.b16 %v806, %v802
    %v979 = vpack.c.b16 %v807, %v803
    %v980 = vpack.c.b16 %v812, %v808
    %v981 = vpack.c.b16 %v813, %v809
    %v982 = vpack.c.b16 %v814, %v810
    %v983 = vpack.c.b16 %v815, %v811
    %v984 = vpack.c.b16 %v820, %v816
    %v985 = vpack.c.b16 %v821, %v817
    %v986 = vpack.c.b16 %v822, %v818
    %v987 = vpack.c.b16 %v823, %v819
    %v988 = vpack.c.b16 %v828, %v824
    %v989 = vpack.c.b16 %v829, %v825
    %v990 = vpack.c.b16 %v830, %v826
    %v991 = vpack.c.b16 %v831, %v827
    %v992 = vpack.c.b16 %v836, %v832
    %v993 = vpack.c.b16 %v837, %v833
    %v994 = vpack.c.b16 %v838, %v834
    %v995 = vpack.c.b16 %v839, %v835
    %v996 = vpack.c.b16 %v844, %v840
    %v997 = vpack.c.b16 %v845, %v841
    %v998 = vpack.c.b16 %v846, %v842
    %v999 = vpack.c.b16 %v847, %v843
    %v1000 = vpack.c.b16 %v852, %v848
    %v1001 = vpack.c.b16 %v853, %v849
    %v1002 = vpack.c.b16 %v854, %v850
    %v1003 = vpack.c.b16 %v855, %v851
    %v1004 = vpack.c.b16 %v860, %v856
    %v1005 = vpack.c.b16 %v861, %v857
    %v1006 = vpack.c.b16 %v862, %v858
    %v1007 = vpack.c.b16 %v863, %v859
    %v1008 = vpack.c.b16 %v868, %v864
    %v1009 = vpack.c.b16 %v869, %v865
    %v1010 = vpack.c.b16 %v870, %v866
    %v1011 = vpack.c.b16 %v871, %v867
    %v1012 = vpack.c.b16 %v876, %v872
    %v1013 = vpack.c.b16 %v877, %v873
    %v1014 = vpack.c.b16 %v878, %v874
    %v1015 = vpack.c.b16 %v879, %v875
    %v1016 = vpack.c.b16 %v884, %v880
    %v1017 = vpack.c.b16 %v885, %v881
    %v1018 = vpack.c.b16 %v886, %v882
    %v1019 = vpack.c.b16 %v887, %v883
    %v1020 = vpack.c.b16 %v892, %v888
    %v1021 = vpack.c.b16 %v893, %v889
    %v1022 = vpack.c.b16 %v894, %v890
    %v1023 = vpack.c.b16 %v895, %v891
    %1152 = vmatpush.bf16.msra.mxu0 %v924
    %1153 = vmatpush.bf16.msra.mxu0 %v920
    %1154 = vmatpush.bf16.msra.mxu0 %v916
    %1155 = vmatpush.bf16.msra.mxu0 %v912
    %1156 = vmatpush.bf16.msra.mxu0 %v908
    %1157 = vmatpush.bf16.msra.mxu0 %v904
    %1158 = vmatpush.bf16.msra.mxu0 %v900
    %1159 = vmatpush.bf16.msra.mxu0 %v896
    %1160 = vmatmul.bf16.gmra.mxu0 %v366
    %v1161 = vpop.f32.mrf.mxu0
    %v1162 = vadd.f32 %v504, %v1161
    %v1163 = vpop.f32.mrf.mxu0
    %v1164 = vadd.f32 %v504, %v1163
    %1165 = vmatmul.bf16.gmra.mxu0 %v370
    %v1166 = vpop.f32.mrf.mxu0
    %v1167 = vadd.f32 %v504, %v1166
    %v1168 = vpop.f32.mrf.mxu0
    %v1169 = vadd.f32 %v504, %v1168
    %1170 = vdwg.mxu0
    %1171 = vmatpush.bf16.msra.mxu0 %v956
    %1172 = vmatpush.bf16.msra.mxu0 %v952
    %1173 = vmatpush.bf16.msra.mxu0 %v948
    %1174 = vmatpush.bf16.msra.mxu0 %v944
    %1175 = vmatpush.bf16.msra.mxu0 %v940
    %1176 = vmatpush.bf16.msra.mxu0 %v936
    %1177 = vmatpush.bf16.msra.mxu0 %v932
    %1178 = vmatpush.bf16.msra.mxu0 %v928
    %1179 = vmatmul.bf16.gmra.mxu0 %v367
    %v1180 = vpop.f32.mrf.mxu0
    %v1181 = vadd.f32 %v1162, %v1180
    %v1182 = vpop.f32.mrf.mxu0
    %v1183 = vadd.f32 %v1164, %v1182
    %1184 = vmatmul.bf16.gmra.mxu0 %v371
    %v1185 = vpop.f32.mrf.mxu0
    %v1186 = vadd.f32 %v1167, %v1185
    %v1187 = vpop.f32.mrf.mxu0
    %v1188 = vadd.f32 %v1169, %v1187
    %1189 = vdwg.mxu0
    %1190 = vmatpush.bf16.msra.mxu0 %v988
    %1191 = vmatpush.bf16.msra.mxu0 %v984
    %1192 = vmatpush.bf16.msra.mxu0 %v980
    %1193 = vmatpush.bf16.msra.mxu0 %v976
    %1194 = vmatpush.bf16.msra.mxu0 %v972
    %1195 = vmatpush.bf16.msra.mxu0 %v968
    %1196 = vmatpush.bf16.msra.mxu0 %v964
    %1197 = vmatpush.bf16.msra.mxu0 %v960
    %1198 = vmatmul.bf16.gmra.mxu0 %v368
    %v1199 = vpop.f32.mrf.mxu0
    %v1200 = vadd.f32 %v1181, %v1199
    %v1201 = vpop.f32.mrf.mxu0
    %v1202 = vadd.f32 %v1183, %v1201
    %1203 = vmatmul.bf16.gmra.mxu0 %v372
    %v1204 = vpop.f32.mrf.mxu0
    %v1205 = vadd.f32 %v1186, %v1204
    %v1206 = vpop.f32.mrf.mxu0
    %v1207 = vadd.f32 %v1188, %v1206
    %1208 = vdwg.mxu0
    %1209 = vmatpush.bf16.msra.mxu0 %v1020
    %1210 = vmatpush.bf16.msra.mxu0 %v1016
    %1211 = vmatpush.bf16.msra.mxu0 %v1012
    %1212 = vmatpush.bf16.msra.mxu0 %v1008
    %1213 = vmatpush.bf16.msra.mxu0 %v1004
    %1214 = vmatpush.bf16.msra.mxu0 %v1000
    %1215 = vmatpush.bf16.msra.mxu0 %v996
    %1216 = vmatpush.bf16.msra.mxu0 %v992
    %1217 = vmatmul.bf16.gmra.mxu0 %v369
    %v1218 = vpop.f32.mrf.mxu0
    %v1219 = vadd.f32 %v1200, %v1218
    %v1220 = vpop.f32.mrf.mxu0
    %v1221 = vadd.f32 %v1202, %v1220
    %1222 = vmatmul.bf16.gmra.mxu0 %v373
    %v1223 = vpop.f32.mrf.mxu0
    %v1224 = vadd.f32 %v1205, %v1223
    %v1225 = vpop.f32.mrf.mxu0
    %v1226 = vadd.f32 %v1207, %v1225
    %1227 = vdwg.mxu0
    %1228 = vmatpush.bf16.msra.mxu0 %v925
    %1229 = vmatpush.bf16.msra.mxu0 %v921
    %1230 = vmatpush.bf16.msra.mxu0 %v917
    %1231 = vmatpush.bf16.msra.mxu0 %v913
    %1232 = vmatpush.bf16.msra.mxu0 %v909
    %1233 = vmatpush.bf16.msra.mxu0 %v905
    %1234 = vmatpush.bf16.msra.mxu0 %v901
    %1235 = vmatpush.bf16.msra.mxu0 %v897
    %1236 = vmatmul.bf16.gmra.mxu0 %v366
    %v1237 = vpop.f32.mrf.mxu0
    %v1238 = vadd.f32 %v505, %v1237
    %v1239 = vpop.f32.mrf.mxu0
    %v1240 = vadd.f32 %v505, %v1239
    %1241 = vmatmul.bf16.gmra.mxu0 %v370
    %v1242 = vpop.f32.mrf.mxu0
    %v1243 = vadd.f32 %v505, %v1242
    %v1244 = vpop.f32.mrf.mxu0
    %v1245 = vadd.f32 %v505, %v1244
    %1246 = vdwg.mxu0
    %1247 = vmatpush.bf16.msra.mxu0 %v957
    %1248 = vmatpush.bf16.msra.mxu0 %v953
    %1249 = vmatpush.bf16.msra.mxu0 %v949
    %1250 = vmatpush.bf16.msra.mxu0 %v945
    %1251 = vmatpush.bf16.msra.mxu0 %v941
    %1252 = vmatpush.bf16.msra.mxu0 %v937
    %1253 = vmatpush.bf16.msra.mxu0 %v933
    %1254 = vmatpush.bf16.msra.mxu0 %v929
    %1255 = vmatmul.bf16.gmra.mxu0 %v367
    %v1256 = vpop.f32.mrf.mxu0
    %v1257 = vadd.f32 %v1238, %v1256
    %v1258 = vpop.f32.mrf.mxu0
    %v1259 = vadd.f32 %v1240, %v1258
    %1260 = vmatmul.bf16.gmra.mxu0 %v371
    %v1261 = vpop.f32.mrf.mxu0
    %v1262 = vadd.f32 %v1243, %v1261
    %v1263 = vpop.f32.mrf.mxu0
    %v1264 = vadd.f32 %v1245, %v1263
    %1265 = vdwg.mxu0
    %1266 = vmatpush.bf16.msra.mxu0 %v989
    %1267 = vmatpush.bf16.msra.mxu0 %v985
    %1268 = vmatpush.bf16.msra.mxu0 %v981
    %1269 = vmatpush.bf16.msra.mxu0 %v977
    %1270 = vmatpush.bf16.msra.mxu0 %v973
    %1271 = vmatpush.bf16.msra.mxu0 %v969
    %1272 = vmatpush.bf16.msra.mxu0 %v965
    %1273 = vmatpush.bf16.msra.mxu0 %v961
    %1274 = vmatmul.bf16.gmra.mxu0 %v368
    %v1275 = vpop.f32.mrf.mxu0
    %v1276 = vadd.f32 %v1257, %v1275
    %v1277 = vpop.f32.mrf.mxu0
    %v1278 = vadd.f32 %v1259, %v1277
    %1279 = vmatmul.bf16.gmra.mxu0 %v372
    %v1280 = vpop.f32.mrf.mxu0
    %v1281 = vadd.f32 %v1262, %v1280
    %v1282 = vpop.f32.mrf.mxu0
    %v1283 = vadd.f32 %v1264, %v1282
    %1284 = vdwg.mxu0
    %1285 = vmatpush.bf16.msra.mxu0 %v1021
    %1286 = vmatpush.bf16.msra.mxu0 %v1017
    %1287 = vmatpush.bf16.msra.mxu0 %v1013
    %1288 = vmatpush.bf16.msra.mxu0 %v1009
    %1289 = vmatpush.bf16.msra.mxu0 %v1005
    %1290 = vmatpush.bf16.msra.mxu0 %v1001
    %1291 = vmatpush.bf16.msra.mxu0 %v997
    %1292 = vmatpush.bf16.msra.mxu0 %v993
    %1293 = vmatmul.bf16.gmra.mxu0 %v369
    %v1294 = vpop.f32.mrf.mxu0
    %v1295 = vadd.f32 %v1276, %v1294
    %v1296 = vpop.f32.mrf.mxu0
    %v1297 = vadd.f32 %v1278, %v1296
    %1298 = vmatmul.bf16.gmra.mxu0 %v373
    %v1299 = vpop.f32.mrf.mxu0
    %v1300 = vadd.f32 %v1281, %v1299
    %v1301 = vpop.f32.mrf.mxu0
    %v1302 = vadd.f32 %v1283, %v1301
    %1303 = vdwg.mxu0
    %1304 = vmatpush.bf16.msra.mxu0 %v926
    %1305 = vmatpush.bf16.msra.mxu0 %v922
    %1306 = vmatpush.bf16.msra.mxu0 %v918
    %1307 = vmatpush.bf16.msra.mxu0 %v914
    %1308 = vmatpush.bf16.msra.mxu0 %v910
    %1309 = vmatpush.bf16.msra.mxu0 %v906
    %1310 = vmatpush.bf16.msra.mxu0 %v902
    %1311 = vmatpush.bf16.msra.mxu0 %v898
    %1312 = vmatmul.bf16.gmra.mxu0 %v366
    %v1313 = vpop.f32.mrf.mxu0
    %v1314 = vadd.f32 %v506, %v1313
    %v1315 = vpop.f32.mrf.mxu0
    %v1316 = vadd.f32 %v506, %v1315
    %1317 = vmatmul.bf16.gmra.mxu0 %v370
    %v1318 = vpop.f32.mrf.mxu0
    %v1319 = vadd.f32 %v506, %v1318
    %v1320 = vpop.f32.mrf.mxu0
    %v1321 = vadd.f32 %v506, %v1320
    %1322 = vdwg.mxu0
    %1323 = vmatpush.bf16.msra.mxu0 %v958
    %1324 = vmatpush.bf16.msra.mxu0 %v954
    %1325 = vmatpush.bf16.msra.mxu0 %v950
    %1326 = vmatpush.bf16.msra.mxu0 %v946
    %1327 = vmatpush.bf16.msra.mxu0 %v942
    %1328 = vmatpush.bf16.msra.mxu0 %v938
    %1329 = vmatpush.bf16.msra.mxu0 %v934
    %1330 = vmatpush.bf16.msra.mxu0 %v930
    %1331 = vmatmul.bf16.gmra.mxu0 %v367
    %v1332 = vpop.f32.mrf.mxu0
    %v1333 = vadd.f32 %v1314, %v1332
    %v1334 = vpop.f32.mrf.mxu0
    %v1335 = vadd.f32 %v1316, %v1334
    %1336 = vmatmul.bf16.gmra.mxu0 %v371
    %v1337 = vpop.f32.mrf.mxu0
    %v1338 = vadd.f32 %v1319, %v1337
    %v1339 = vpop.f32.mrf.mxu0
    %v1340 = vadd.f32 %v1321, %v1339
    %1341 = vdwg.mxu0
    %1342 = vmatpush.bf16.msra.mxu0 %v990
    %1343 = vmatpush.bf16.msra.mxu0 %v986
    %1344 = vmatpush.bf16.msra.mxu0 %v982
    %1345 = vmatpush.bf16.msra.mxu0 %v978
    %1346 = vmatpush.bf16.msra.mxu0 %v974
    %1347 = vmatpush.bf16.msra.mxu0 %v970
    %1348 = vmatpush.bf16.msra.mxu0 %v966
    %1349 = vmatpush.bf16.msra.mxu0 %v962
    %1350 = vmatmul.bf16.gmra.mxu0 %v368
    %v1351 = vpop.f32.mrf.mxu0
    %v1352 = vadd.f32 %v1333, %v1351
    %v1353 = vpop.f32.mrf.mxu0
    %v1354 = vadd.f32 %v1335, %v1353
    %1355 = vmatmul.bf16.gmra.mxu0 %v372
    %v1356 = vpop.f32.mrf.mxu0
    %v1357 = vadd.f32 %v1338, %v1356
    %v1358 = vpop.f32.mrf.mxu0
    %v1359 = vadd.f32 %v1340, %v1358
    %1360 = vdwg.mxu0
    %1361 = vmatpush.bf16.msra.mxu0 %v1022
    %1362 = vmatpush.bf16.msra.mxu0 %v1018
    %1363 = vmatpush.bf16.msra.mxu0 %v1014
    %1364 = vmatpush.bf16.msra.mxu0 %v1010
    %1365 = vmatpush.bf16.msra.mxu0 %v1006
    %1366 = vmatpush.bf16.msra.mxu0 %v1002
    %1367 = vmatpush.bf16.msra.mxu0 %v998
    %1368 = vmatpush.bf16.msra.mxu0 %v994
    %1369 = vmatmul.bf16.gmra.mxu0 %v369
    %v1370 = vpop.f32.mrf.mxu0
    %v1371 = vadd.f32 %v1352, %v1370
    %v1372 = vpop.f32.mrf.mxu0
    %v1373 = vadd.f32 %v1354, %v1372
    %1374 = vmatmul.bf16.gmra.mxu0 %v373
    %v1375 = vpop.f32.mrf.mxu0
    %v1376 = vadd.f32 %v1357, %v1375
    %v1377 = vpop.f32.mrf.mxu0
    %v1378 = vadd.f32 %v1359, %v1377
    %1379 = vdwg.mxu0
    %1380 = vmatpush.bf16.msra.mxu0 %v927
    %1381 = vmatpush.bf16.msra.mxu0 %v923
    %1382 = vmatpush.bf16.msra.mxu0 %v919
    %1383 = vmatpush.bf16.msra.mxu0 %v915
    %1384 = vmatpush.bf16.msra.mxu0 %v911
    %1385 = vmatpush.bf16.msra.mxu0 %v907
    %1386 = vmatpush.bf16.msra.mxu0 %v903
    %1387 = vmatpush.bf16.msra.mxu0 %v899
    %1388 = vmatmul.bf16.gmra.mxu0 %v366
    %v1389 = vpop.f32.mrf.mxu0
    %v1390 = vadd.f32 %v507, %v1389
    %v1391 = vpop.f32.mrf.mxu0
    %v1392 = vadd.f32 %v507, %v1391
    %1393 = vmatmul.bf16.gmra.mxu0 %v370
    %v1394 = vpop.f32.mrf.mxu0
    %v1395 = vadd.f32 %v507, %v1394
    %v1396 = vpop.f32.mrf.mxu0
    %v1397 = vadd.f32 %v507, %v1396
    %1398 = vdwg.mxu0
    %1399 = vmatpush.bf16.msra.mxu0 %v959
    %1400 = vmatpush.bf16.msra.mxu0 %v955
    %1401 = vmatpush.bf16.msra.mxu0 %v951
    %1402 = vmatpush.bf16.msra.mxu0 %v947
    %1403 = vmatpush.bf16.msra.mxu0 %v943
    %1404 = vmatpush.bf16.msra.mxu0 %v939
    %1405 = vmatpush.bf16.msra.mxu0 %v935
    %1406 = vmatpush.bf16.msra.mxu0 %v931
    %1407 = vmatmul.bf16.gmra.mxu0 %v367
    %v1408 = vpop.f32.mrf.mxu0
    %v1409 = vadd.f32 %v1390, %v1408
    %v1410 = vpop.f32.mrf.mxu0
    %v1411 = vadd.f32 %v1392, %v1410
    %1412 = vmatmul.bf16.gmra.mxu0 %v371
    %v1413 = vpop.f32.mrf.mxu0
    %v1414 = vadd.f32 %v1395, %v1413
    %v1415 = vpop.f32.mrf.mxu0
    %v1416 = vadd.f32 %v1397, %v1415
    %1417 = vdwg.mxu0
    %1418 = vmatpush.bf16.msra.mxu0 %v991
    %1419 = vmatpush.bf16.msra.mxu0 %v987
    %1420 = vmatpush.bf16.msra.mxu0 %v983
    %1421 = vmatpush.bf16.msra.mxu0 %v979
    %1422 = vmatpush.bf16.msra.mxu0 %v975
    %1423 = vmatpush.bf16.msra.mxu0 %v971
    %1424 = vmatpush.bf16.msra.mxu0 %v967
    %1425 = vmatpush.bf16.msra.mxu0 %v963
    %1426 = vmatmul.bf16.gmra.mxu0 %v368
    %v1427 = vpop.f32.mrf.mxu0
    %v1428 = vadd.f32 %v1409, %v1427
    %v1429 = vpop.f32.mrf.mxu0
    %v1430 = vadd.f32 %v1411, %v1429
    %1431 = vmatmul.bf16.gmra.mxu0 %v372
    %v1432 = vpop.f32.mrf.mxu0
    %v1433 = vadd.f32 %v1414, %v1432
    %v1434 = vpop.f32.mrf.mxu0
    %v1435 = vadd.f32 %v1416, %v1434
    %1436 = vdwg.mxu0
    %1437 = vmatpush.bf16.msra.mxu0 %v1023
    %1438 = vmatpush.bf16.msra.mxu0 %v1019
    %1439 = vmatpush.bf16.msra.mxu0 %v1015
    %1440 = vmatpush.bf16.msra.mxu0 %v1011
    %1441 = vmatpush.bf16.msra.mxu0 %v1007
    %1442 = vmatpush.bf16.msra.mxu0 %v1003
    %1443 = vmatpush.bf16.msra.mxu0 %v999
    %1444 = vmatpush.bf16.msra.mxu0 %v995
    %1445 = vmatmul.bf16.gmra.mxu0 %v369
    %v1446 = vpop.f32.mrf.mxu0
    %v1447 = vadd.f32 %v1428, %v1446
    %v1448 = vpop.f32.mrf.mxu0
    %v1449 = vadd.f32 %v1430, %v1448
    %1450 = vmatmul.bf16.gmra.mxu0 %v373
    %v1451 = vpop.f32.mrf.mxu0
    %v1452 = vadd.f32 %v1433, %v1451
    %v1453 = vpop.f32.mrf.mxu0
    %v1454 = vadd.f32 %v1435, %v1453
    %1455 = vdwg.mxu0
    %v1456 = vmax.f32 %v1219, 0.0
    %v1457 = vmax.f32 %v1295, 0.0
    %v1458 = vmax.f32 %v1371, 0.0
    %v1459 = vmax.f32 %v1447, 0.0
    %v1460 = vmax.f32 %v1221, 0.0
    %v1461 = vmax.f32 %v1297, 0.0
    %v1462 = vmax.f32 %v1373, 0.0
    %v1463 = vmax.f32 %v1449, 0.0
    %v1464 = vmax.f32 %v1224, 0.0
    %v1465 = vmax.f32 %v1300, 0.0
    %v1466 = vmax.f32 %v1376, 0.0
    %v1467 = vmax.f32 %v1452, 0.0
    %v1468 = vmax.f32 %v1226, 0.0
    %v1469 = vmax.f32 %v1302, 0.0
    %v1470 = vmax.f32 %v1378, 0.0
    %v1471 = vmax.f32 %v1454, 0.0
    %v1472 = vpack.c.bf16 %v1460, %v1456
    %v1473 = vpack.c.bf16 %v1461, %v1457
    %v1474 = vpack.c.bf16 %v1462, %v1458
    %v1475 = vpack.c.bf16 %v1463, %v1459
    %v1476 = vpack.c.bf16 %v1468, %v1464
    %v1477 = vpack.c.bf16 %v1469, %v1465
    %v1478 = vpack.c.bf16 %v1470, %v1466
    %v1479 = vpack.c.bf16 %v1471, %v1467
    %v1480 = vld [vmem:[#allocation10] sm:$0xff]
    %v1481 = vld [vmem:[#allocation10 + $0x8] sm:$0xff]
    %v1482 = vld [vmem:[#allocation10 + $0x10] sm:$0xff]
    %v1483 = vld [vmem:[#allocation10 + $0x18] sm:$0xff]
    %v1484 = vld [vmem:[#allocation10 + $0x20] sm:$0xff]
    %v1485 = vld [vmem:[#allocation10 + $0x28] sm:$0xff]
    %v1486 = vld [vmem:[#allocation10 + $0x30] sm:$0xff]
    %v1487 = vld [vmem:[#allocation10 + $0x38] sm:$0xff]
    %v1488 = vld [vmem:[#allocation10 + $0x40] sm:$0xff]
    %v1489 = vld [vmem:[#allocation10 + $0x48] sm:$0xff]
    %v1490 = vld [vmem:[#allocation10 + $0x50] sm:$0xff]
    %v1491 = vld [vmem:[#allocation10 + $0x58] sm:$0xff]
    %v1492 = vld [vmem:[#allocation10 + $0x60] sm:$0xff]
    %v1493 = vld [vmem:[#allocation10 + $0x68] sm:$0xff]
    %v1494 = vld [vmem:[#allocation10 + $0x70] sm:$0xff]
    %v1495 = vld [vmem:[#allocation10 + $0x78] sm:$0xff]
    %v1496 = vld [vmem:[#allocation10 + $0x80] sm:$0xff]
    %v1497 = vld [vmem:[#allocation10 + $0x88] sm:$0xff]
    %v1498 = vld [vmem:[#allocation10 + $0x90] sm:$0xff]
    %v1499 = vld [vmem:[#allocation10 + $0x98] sm:$0xff]
    %v1500 = vld [vmem:[#allocation10 + $0xa0] sm:$0xff]
    %v1501 = vld [vmem:[#allocation10 + $0xa8] sm:$0xff]
    %v1502 = vld [vmem:[#allocation10 + $0xb0] sm:$0xff]
    %v1503 = vld [vmem:[#allocation10 + $0xb8] sm:$0xff]
    %v1504 = vld [vmem:[#allocation10 + $0xc0] sm:$0xff]
    %v1505 = vld [vmem:[#allocation10 + $0xc8] sm:$0xff]
    %v1506 = vld [vmem:[#allocation10 + $0xd0] sm:$0xff]
    %v1507 = vld [vmem:[#allocation10 + $0xd8] sm:$0xff]
    %v1508 = vld [vmem:[#allocation10 + $0xe0] sm:$0xff]
    %v1509 = vld [vmem:[#allocation10 + $0xe8] sm:$0xff]
    %v1510 = vld [vmem:[#allocation10 + $0xf0] sm:$0xff]
    %v1511 = vld [vmem:[#allocation10 + $0xf8] sm:$0xff]
    %v1512 = vld [vmem:[#allocation10 + $0x100] sm:$0xff]
    %v1513 = vld [vmem:[#allocation10 + $0x108] sm:$0xff]
    %v1514 = vld [vmem:[#allocation10 + $0x110] sm:$0xff]
    %v1515 = vld [vmem:[#allocation10 + $0x118] sm:$0xff]
    %v1516 = vld [vmem:[#allocation10 + $0x120] sm:$0xff]
    %v1517 = vld [vmem:[#allocation10 + $0x128] sm:$0xff]
    %v1518 = vld [vmem:[#allocation10 + $0x130] sm:$0xff]
    %v1519 = vld [vmem:[#allocation10 + $0x138] sm:$0xff]
    %v1520 = vld [vmem:[#allocation10 + $0x140] sm:$0xff]
    %v1521 = vld [vmem:[#allocation10 + $0x148] sm:$0xff]
    %v1522 = vld [vmem:[#allocation10 + $0x150] sm:$0xff]
    %v1523 = vld [vmem:[#allocation10 + $0x158] sm:$0xff]
    %v1524 = vld [vmem:[#allocation10 + $0x160] sm:$0xff]
    %v1525 = vld [vmem:[#allocation10 + $0x168] sm:$0xff]
    %v1526 = vld [vmem:[#allocation10 + $0x170] sm:$0xff]
    %v1527 = vld [vmem:[#allocation10 + $0x178] sm:$0xff]
    %v1528 = vld [vmem:[#allocation10 + $0x180] sm:$0xff]
    %v1529 = vld [vmem:[#allocation10 + $0x188] sm:$0xff]
    %v1530 = vld [vmem:[#allocation10 + $0x190] sm:$0xff]
    %v1531 = vld [vmem:[#allocation10 + $0x198] sm:$0xff]
    %v1532 = vld [vmem:[#allocation10 + $0x1a0] sm:$0xff]
    %v1533 = vld [vmem:[#allocation10 + $0x1a8] sm:$0xff]
    %v1534 = vld [vmem:[#allocation10 + $0x1b0] sm:$0xff]
    %v1535 = vld [vmem:[#allocation10 + $0x1b8] sm:$0xff]
    %v1536 = vld [vmem:[#allocation10 + $0x1c0] sm:$0xff]
    %v1537 = vld [vmem:[#allocation10 + $0x1c8] sm:$0xff]
    %v1538 = vld [vmem:[#allocation10 + $0x1d0] sm:$0xff]
    %v1539 = vld [vmem:[#allocation10 + $0x1d8] sm:$0xff]
    %v1540 = vld [vmem:[#allocation10 + $0x1e0] sm:$0xff]
    %v1541 = vld [vmem:[#allocation10 + $0x1e8] sm:$0xff]
    %v1542 = vld [vmem:[#allocation10 + $0x1f0] sm:$0xff]
    %v1543 = vld [vmem:[#allocation10 + $0x1f8] sm:$0xff]
    %v1544 = vld [vmem:[#allocation10 + $0x200] sm:$0xff]
    %v1545 = vld [vmem:[#allocation10 + $0x208] sm:$0xff]
    %v1546 = vld [vmem:[#allocation10 + $0x210] sm:$0xff]
    %v1547 = vld [vmem:[#allocation10 + $0x218] sm:$0xff]
    %v1548 = vld [vmem:[#allocation10 + $0x220] sm:$0xff]
    %v1549 = vld [vmem:[#allocation10 + $0x228] sm:$0xff]
    %v1550 = vld [vmem:[#allocation10 + $0x230] sm:$0xff]
    %v1551 = vld [vmem:[#allocation10 + $0x238] sm:$0xff]
    %v1552 = vld [vmem:[#allocation10 + $0x240] sm:$0xff]
    %v1553 = vld [vmem:[#allocation10 + $0x248] sm:$0xff]
    %v1554 = vld [vmem:[#allocation10 + $0x250] sm:$0xff]
    %v1555 = vld [vmem:[#allocation10 + $0x258] sm:$0xff]
    %v1556 = vld [vmem:[#allocation10 + $0x260] sm:$0xff]
    %v1557 = vld [vmem:[#allocation10 + $0x268] sm:$0xff]
    %v1558 = vld [vmem:[#allocation10 + $0x270] sm:$0xff]
    %v1559 = vld [vmem:[#allocation10 + $0x278] sm:$0xff]
    %v1560 = vld [vmem:[#allocation10 + $0x280] sm:$0xff]
    %v1561 = vld [vmem:[#allocation10 + $0x288] sm:$0xff]
    %v1562 = vld [vmem:[#allocation10 + $0x290] sm:$0xff]
    %v1563 = vld [vmem:[#allocation10 + $0x298] sm:$0xff]
    %v1564 = vld [vmem:[#allocation10 + $0x2a0] sm:$0xff]
    %v1565 = vld [vmem:[#allocation10 + $0x2a8] sm:$0xff]
    %v1566 = vld [vmem:[#allocation10 + $0x2b0] sm:$0xff]
    %v1567 = vld [vmem:[#allocation10 + $0x2b8] sm:$0xff]
    %v1568 = vld [vmem:[#allocation10 + $0x2c0] sm:$0xff]
    %v1569 = vld [vmem:[#allocation10 + $0x2c8] sm:$0xff]
    %v1570 = vld [vmem:[#allocation10 + $0x2d0] sm:$0xff]
    %v1571 = vld [vmem:[#allocation10 + $0x2d8] sm:$0xff]
    %v1572 = vld [vmem:[#allocation10 + $0x2e0] sm:$0xff]
    %v1573 = vld [vmem:[#allocation10 + $0x2e8] sm:$0xff]
    %v1574 = vld [vmem:[#allocation10 + $0x2f0] sm:$0xff]
    %v1575 = vld [vmem:[#allocation10 + $0x2f8] sm:$0xff]
    %v1576 = vld [vmem:[#allocation10 + $0x300] sm:$0xff]
    %v1577 = vld [vmem:[#allocation10 + $0x308] sm:$0xff]
    %v1578 = vld [vmem:[#allocation10 + $0x310] sm:$0xff]
    %v1579 = vld [vmem:[#allocation10 + $0x318] sm:$0xff]
    %v1580 = vld [vmem:[#allocation10 + $0x320] sm:$0xff]
    %v1581 = vld [vmem:[#allocation10 + $0x328] sm:$0xff]
    %v1582 = vld [vmem:[#allocation10 + $0x330] sm:$0xff]
    %v1583 = vld [vmem:[#allocation10 + $0x338] sm:$0xff]
    %v1584 = vld [vmem:[#allocation10 + $0x340] sm:$0xff]
    %v1585 = vld [vmem:[#allocation10 + $0x348] sm:$0xff]
    %v1586 = vld [vmem:[#allocation10 + $0x350] sm:$0xff]
    %v1587 = vld [vmem:[#allocation10 + $0x358] sm:$0xff]
    %v1588 = vld [vmem:[#allocation10 + $0x360] sm:$0xff]
    %v1589 = vld [vmem:[#allocation10 + $0x368] sm:$0xff]
    %v1590 = vld [vmem:[#allocation10 + $0x370] sm:$0xff]
    %v1591 = vld [vmem:[#allocation10 + $0x378] sm:$0xff]
    %v1592 = vld [vmem:[#allocation10 + $0x380] sm:$0xff]
    %v1593 = vld [vmem:[#allocation10 + $0x388] sm:$0xff]
    %v1594 = vld [vmem:[#allocation10 + $0x390] sm:$0xff]
    %v1595 = vld [vmem:[#allocation10 + $0x398] sm:$0xff]
    %v1596 = vld [vmem:[#allocation10 + $0x3a0] sm:$0xff]
    %v1597 = vld [vmem:[#allocation10 + $0x3a8] sm:$0xff]
    %v1598 = vld [vmem:[#allocation10 + $0x3b0] sm:$0xff]
    %v1599 = vld [vmem:[#allocation10 + $0x3b8] sm:$0xff]
    %v1600 = vld [vmem:[#allocation10 + $0x3c0] sm:$0xff]
    %v1601 = vld [vmem:[#allocation10 + $0x3c8] sm:$0xff]
    %v1602 = vld [vmem:[#allocation10 + $0x3d0] sm:$0xff]
    %v1603 = vld [vmem:[#allocation10 + $0x3d8] sm:$0xff]
    %v1604 = vld [vmem:[#allocation10 + $0x3e0] sm:$0xff]
    %v1605 = vld [vmem:[#allocation10 + $0x3e8] sm:$0xff]
    %v1606 = vld [vmem:[#allocation10 + $0x3f0] sm:$0xff]
    %v1607 = vld [vmem:[#allocation10 + $0x3f8] sm:$0xff]
    %v1608 = vld [vmem:[#allocation7 + $0x10] sm:$0xff]
    %v1609 = vld [vmem:[#allocation7 + $0x18] sm:$0xff]
    %v1610 = vld [vmem:[#allocation7 + $0x50] sm:$0xff]
    %v1611 = vld [vmem:[#allocation7 + $0x58] sm:$0xff]
    %v1612 = vld [vmem:[#allocation7 + $0x90] sm:$0xff]
    %v1613 = vld [vmem:[#allocation7 + $0x98] sm:$0xff]
    %v1614 = vld [vmem:[#allocation7 + $0xd0] sm:$0xff]
    %v1615 = vld [vmem:[#allocation7 + $0xd8] sm:$0xff]
    %v1616 = vld [vmem:[#allocation7 + $0x110] sm:$0xff]
    %v1617 = vld [vmem:[#allocation7 + $0x118] sm:$0xff]
    %v1618 = vld [vmem:[#allocation7 + $0x150] sm:$0xff]
    %v1619 = vld [vmem:[#allocation7 + $0x158] sm:$0xff]
    %v1620 = vld [vmem:[#allocation7 + $0x190] sm:$0xff]
    %v1621 = vld [vmem:[#allocation7 + $0x198] sm:$0xff]
    %v1622 = vld [vmem:[#allocation7 + $0x1d0] sm:$0xff]
    %v1623 = vld [vmem:[#allocation7 + $0x1d8] sm:$0xff]
    %v1624 = vld [vmem:[#allocation7 + $0x210] sm:$0xff]
    %v1625 = vld [vmem:[#allocation7 + $0x218] sm:$0xff]
    %v1626 = vld [vmem:[#allocation7 + $0x250] sm:$0xff]
    %v1627 = vld [vmem:[#allocation7 + $0x258] sm:$0xff]
    %v1628 = vld [vmem:[#allocation7 + $0x290] sm:$0xff]
    %v1629 = vld [vmem:[#allocation7 + $0x298] sm:$0xff]
    %v1630 = vld [vmem:[#allocation7 + $0x2d0] sm:$0xff]
    %v1631 = vld [vmem:[#allocation7 + $0x2d8] sm:$0xff]
    %v1632 = vld [vmem:[#allocation7 + $0x310] sm:$0xff]
    %v1633 = vld [vmem:[#allocation7 + $0x318] sm:$0xff]
    %v1634 = vld [vmem:[#allocation7 + $0x350] sm:$0xff]
    %v1635 = vld [vmem:[#allocation7 + $0x358] sm:$0xff]
    %v1636 = vld [vmem:[#allocation7 + $0x390] sm:$0xff]
    %v1637 = vld [vmem:[#allocation7 + $0x398] sm:$0xff]
    %v1638 = vld [vmem:[#allocation7 + $0x3d0] sm:$0xff]
    %v1639 = vld [vmem:[#allocation7 + $0x3d8] sm:$0xff]
    %v1640 = vld [vmem:[#allocation7 + $0x410] sm:$0xff]
    %v1641 = vld [vmem:[#allocation7 + $0x418] sm:$0xff]
    %v1642 = vld [vmem:[#allocation7 + $0x450] sm:$0xff]
    %v1643 = vld [vmem:[#allocation7 + $0x458] sm:$0xff]
    %v1644 = vld [vmem:[#allocation7 + $0x490] sm:$0xff]
    %v1645 = vld [vmem:[#allocation7 + $0x498] sm:$0xff]
    %v1646 = vld [vmem:[#allocation7 + $0x4d0] sm:$0xff]
    %v1647 = vld [vmem:[#allocation7 + $0x4d8] sm:$0xff]
    %v1648 = vld [vmem:[#allocation7 + $0x510] sm:$0xff]
    %v1649 = vld [vmem:[#allocation7 + $0x518] sm:$0xff]
    %v1650 = vld [vmem:[#allocation7 + $0x550] sm:$0xff]
    %v1651 = vld [vmem:[#allocation7 + $0x558] sm:$0xff]
    %v1652 = vld [vmem:[#allocation7 + $0x590] sm:$0xff]
    %v1653 = vld [vmem:[#allocation7 + $0x598] sm:$0xff]
    %v1654 = vld [vmem:[#allocation7 + $0x5d0] sm:$0xff]
    %v1655 = vld [vmem:[#allocation7 + $0x5d8] sm:$0xff]
    %v1656 = vld [vmem:[#allocation7 + $0x610] sm:$0xff]
    %v1657 = vld [vmem:[#allocation7 + $0x618] sm:$0xff]
    %v1658 = vld [vmem:[#allocation7 + $0x650] sm:$0xff]
    %v1659 = vld [vmem:[#allocation7 + $0x658] sm:$0xff]
    %v1660 = vld [vmem:[#allocation7 + $0x690] sm:$0xff]
    %v1661 = vld [vmem:[#allocation7 + $0x698] sm:$0xff]
    %v1662 = vld [vmem:[#allocation7 + $0x6d0] sm:$0xff]
    %v1663 = vld [vmem:[#allocation7 + $0x6d8] sm:$0xff]
    %v1664 = vld [vmem:[#allocation7 + $0x710] sm:$0xff]
    %v1665 = vld [vmem:[#allocation7 + $0x718] sm:$0xff]
    %v1666 = vld [vmem:[#allocation7 + $0x750] sm:$0xff]
    %v1667 = vld [vmem:[#allocation7 + $0x758] sm:$0xff]
    %v1668 = vld [vmem:[#allocation7 + $0x790] sm:$0xff]
    %v1669 = vld [vmem:[#allocation7 + $0x798] sm:$0xff]
    %v1670 = vld [vmem:[#allocation7 + $0x7d0] sm:$0xff]
    %v1671 = vld [vmem:[#allocation7 + $0x7d8] sm:$0xff]
    %v1672 = vld [vmem:[#allocation7 + $0x810] sm:$0xff]
    %v1673 = vld [vmem:[#allocation7 + $0x818] sm:$0xff]
    %v1674 = vld [vmem:[#allocation7 + $0x850] sm:$0xff]
    %v1675 = vld [vmem:[#allocation7 + $0x858] sm:$0xff]
    %v1676 = vld [vmem:[#allocation7 + $0x890] sm:$0xff]
    %v1677 = vld [vmem:[#allocation7 + $0x898] sm:$0xff]
    %v1678 = vld [vmem:[#allocation7 + $0x8d0] sm:$0xff]
    %v1679 = vld [vmem:[#allocation7 + $0x8d8] sm:$0xff]
    %v1680 = vld [vmem:[#allocation7 + $0x910] sm:$0xff]
    %v1681 = vld [vmem:[#allocation7 + $0x918] sm:$0xff]
    %v1682 = vld [vmem:[#allocation7 + $0x950] sm:$0xff]
    %v1683 = vld [vmem:[#allocation7 + $0x958] sm:$0xff]
    %v1684 = vld [vmem:[#allocation7 + $0x990] sm:$0xff]
    %v1685 = vld [vmem:[#allocation7 + $0x998] sm:$0xff]
    %v1686 = vld [vmem:[#allocation7 + $0x9d0] sm:$0xff]
    %v1687 = vld [vmem:[#allocation7 + $0x9d8] sm:$0xff]
    %v1688 = vld [vmem:[#allocation7 + $0xa10] sm:$0xff]
    %v1689 = vld [vmem:[#allocation7 + $0xa18] sm:$0xff]
    %v1690 = vld [vmem:[#allocation7 + $0xa50] sm:$0xff]
    %v1691 = vld [vmem:[#allocation7 + $0xa58] sm:$0xff]
    %v1692 = vld [vmem:[#allocation7 + $0xa90] sm:$0xff]
    %v1693 = vld [vmem:[#allocation7 + $0xa98] sm:$0xff]
    %v1694 = vld [vmem:[#allocation7 + $0xad0] sm:$0xff]
    %v1695 = vld [vmem:[#allocation7 + $0xad8] sm:$0xff]
    %v1696 = vld [vmem:[#allocation7 + $0xb10] sm:$0xff]
    %v1697 = vld [vmem:[#allocation7 + $0xb18] sm:$0xff]
    %v1698 = vld [vmem:[#allocation7 + $0xb50] sm:$0xff]
    %v1699 = vld [vmem:[#allocation7 + $0xb58] sm:$0xff]
    %v1700 = vld [vmem:[#allocation7 + $0xb90] sm:$0xff]
    %v1701 = vld [vmem:[#allocation7 + $0xb98] sm:$0xff]
    %v1702 = vld [vmem:[#allocation7 + $0xbd0] sm:$0xff]
    %v1703 = vld [vmem:[#allocation7 + $0xbd8] sm:$0xff]
    %v1704 = vld [vmem:[#allocation7 + $0xc10] sm:$0xff]
    %v1705 = vld [vmem:[#allocation7 + $0xc18] sm:$0xff]
    %v1706 = vld [vmem:[#allocation7 + $0xc50] sm:$0xff]
    %v1707 = vld [vmem:[#allocation7 + $0xc58] sm:$0xff]
    %v1708 = vld [vmem:[#allocation7 + $0xc90] sm:$0xff]
    %v1709 = vld [vmem:[#allocation7 + $0xc98] sm:$0xff]
    %v1710 = vld [vmem:[#allocation7 + $0xcd0] sm:$0xff]
    %v1711 = vld [vmem:[#allocation7 + $0xcd8] sm:$0xff]
    %v1712 = vld [vmem:[#allocation7 + $0xd10] sm:$0xff]
    %v1713 = vld [vmem:[#allocation7 + $0xd18] sm:$0xff]
    %v1714 = vld [vmem:[#allocation7 + $0xd50] sm:$0xff]
    %v1715 = vld [vmem:[#allocation7 + $0xd58] sm:$0xff]
    %v1716 = vld [vmem:[#allocation7 + $0xd90] sm:$0xff]
    %v1717 = vld [vmem:[#allocation7 + $0xd98] sm:$0xff]
    %v1718 = vld [vmem:[#allocation7 + $0xdd0] sm:$0xff]
    %v1719 = vld [vmem:[#allocation7 + $0xdd8] sm:$0xff]
    %v1720 = vld [vmem:[#allocation7 + $0xe10] sm:$0xff]
    %v1721 = vld [vmem:[#allocation7 + $0xe18] sm:$0xff]
    %v1722 = vld [vmem:[#allocation7 + $0xe50] sm:$0xff]
    %v1723 = vld [vmem:[#allocation7 + $0xe58] sm:$0xff]
    %v1724 = vld [vmem:[#allocation7 + $0xe90] sm:$0xff]
    %v1725 = vld [vmem:[#allocation7 + $0xe98] sm:$0xff]
    %v1726 = vld [vmem:[#allocation7 + $0xed0] sm:$0xff]
    %v1727 = vld [vmem:[#allocation7 + $0xed8] sm:$0xff]
    %v1728 = vld [vmem:[#allocation7 + $0xf10] sm:$0xff]
    %v1729 = vld [vmem:[#allocation7 + $0xf18] sm:$0xff]
    %v1730 = vld [vmem:[#allocation7 + $0xf50] sm:$0xff]
    %v1731 = vld [vmem:[#allocation7 + $0xf58] sm:$0xff]
    %v1732 = vld [vmem:[#allocation7 + $0xf90] sm:$0xff]
    %v1733 = vld [vmem:[#allocation7 + $0xf98] sm:$0xff]
    %v1734 = vld [vmem:[#allocation7 + $0xfd0] sm:$0xff]
    %v1735 = vld [vmem:[#allocation7 + $0xfd8] sm:$0xff]
    %v1736 = vld [vmem:[#allocation8 + $0x4] sm:$0xf]
    %v1738 = vperm.slane %v1736, 0
    %v1739 = vperm.slane %v1736, 1
    %v1740 = vperm.slane %v1736, 2
    %v1741 = vperm.slane %v1736, 3
    %v1874 = vunpack.c.l.b16 %v1608
    %v1875 = vunpack.c.h.b16 %v1608
    %v1876 = vunpack.c.l.b16 %v1609
    %v1877 = vunpack.c.h.b16 %v1609
    %v1878 = vunpack.c.l.b16 %v1610
    %v1879 = vunpack.c.h.b16 %v1610
    %v1880 = vunpack.c.l.b16 %v1611
    %v1881 = vunpack.c.h.b16 %v1611
    %v1882 = vunpack.c.l.b16 %v1612
    %v1883 = vunpack.c.h.b16 %v1612
    %v1884 = vunpack.c.l.b16 %v1613
    %v1885 = vunpack.c.h.b16 %v1613
    %v1886 = vunpack.c.l.b16 %v1614
    %v1887 = vunpack.c.h.b16 %v1614
    %v1888 = vunpack.c.l.b16 %v1615
    %v1889 = vunpack.c.h.b16 %v1615
    %v1890 = vunpack.c.l.b16 %v1616
    %v1891 = vunpack.c.h.b16 %v1616
    %v1892 = vunpack.c.l.b16 %v1617
    %v1893 = vunpack.c.h.b16 %v1617
    %v1894 = vunpack.c.l.b16 %v1618
    %v1895 = vunpack.c.h.b16 %v1618
    %v1896 = vunpack.c.l.b16 %v1619
    %v1897 = vunpack.c.h.b16 %v1619
    %v1898 = vunpack.c.l.b16 %v1620
    %v1899 = vunpack.c.h.b16 %v1620
    %v1900 = vunpack.c.l.b16 %v1621
    %v1901 = vunpack.c.h.b16 %v1621
    %v1902 = vunpack.c.l.b16 %v1622
    %v1903 = vunpack.c.h.b16 %v1622
    %v1904 = vunpack.c.l.b16 %v1623
    %v1905 = vunpack.c.h.b16 %v1623
    %v1906 = vunpack.c.l.b16 %v1624
    %v1907 = vunpack.c.h.b16 %v1624
    %v1908 = vunpack.c.l.b16 %v1625
    %v1909 = vunpack.c.h.b16 %v1625
    %v1910 = vunpack.c.l.b16 %v1626
    %v1911 = vunpack.c.h.b16 %v1626
    %v1912 = vunpack.c.l.b16 %v1627
    %v1913 = vunpack.c.h.b16 %v1627
    %v1914 = vunpack.c.l.b16 %v1628
    %v1915 = vunpack.c.h.b16 %v1628
    %v1916 = vunpack.c.l.b16 %v1629
    %v1917 = vunpack.c.h.b16 %v1629
    %v1918 = vunpack.c.l.b16 %v1630
    %v1919 = vunpack.c.h.b16 %v1630
    %v1920 = vunpack.c.l.b16 %v1631
    %v1921 = vunpack.c.h.b16 %v1631
    %v1922 = vunpack.c.l.b16 %v1632
    %v1923 = vunpack.c.h.b16 %v1632
    %v1924 = vunpack.c.l.b16 %v1633
    %v1925 = vunpack.c.h.b16 %v1633
    %v1926 = vunpack.c.l.b16 %v1634
    %v1927 = vunpack.c.h.b16 %v1634
    %v1928 = vunpack.c.l.b16 %v1635
    %v1929 = vunpack.c.h.b16 %v1635
    %v1930 = vunpack.c.l.b16 %v1636
    %v1931 = vunpack.c.h.b16 %v1636
    %v1932 = vunpack.c.l.b16 %v1637
    %v1933 = vunpack.c.h.b16 %v1637
    %v1934 = vunpack.c.l.b16 %v1638
    %v1935 = vunpack.c.h.b16 %v1638
    %v1936 = vunpack.c.l.b16 %v1639
    %v1937 = vunpack.c.h.b16 %v1639
    %v1938 = vunpack.c.l.b16 %v1640
    %v1939 = vunpack.c.h.b16 %v1640
    %v1940 = vunpack.c.l.b16 %v1641
    %v1941 = vunpack.c.h.b16 %v1641
    %v1942 = vunpack.c.l.b16 %v1642
    %v1943 = vunpack.c.h.b16 %v1642
    %v1944 = vunpack.c.l.b16 %v1643
    %v1945 = vunpack.c.h.b16 %v1643
    %v1946 = vunpack.c.l.b16 %v1644
    %v1947 = vunpack.c.h.b16 %v1644
    %v1948 = vunpack.c.l.b16 %v1645
    %v1949 = vunpack.c.h.b16 %v1645
    %v1950 = vunpack.c.l.b16 %v1646
    %v1951 = vunpack.c.h.b16 %v1646
    %v1952 = vunpack.c.l.b16 %v1647
    %v1953 = vunpack.c.h.b16 %v1647
    %v1954 = vunpack.c.l.b16 %v1648
    %v1955 = vunpack.c.h.b16 %v1648
    %v1956 = vunpack.c.l.b16 %v1649
    %v1957 = vunpack.c.h.b16 %v1649
    %v1958 = vunpack.c.l.b16 %v1650
    %v1959 = vunpack.c.h.b16 %v1650
    %v1960 = vunpack.c.l.b16 %v1651
    %v1961 = vunpack.c.h.b16 %v1651
    %v1962 = vunpack.c.l.b16 %v1652
    %v1963 = vunpack.c.h.b16 %v1652
    %v1964 = vunpack.c.l.b16 %v1653
    %v1965 = vunpack.c.h.b16 %v1653
    %v1966 = vunpack.c.l.b16 %v1654
    %v1967 = vunpack.c.h.b16 %v1654
    %v1968 = vunpack.c.l.b16 %v1655
    %v1969 = vunpack.c.h.b16 %v1655
    %v1970 = vunpack.c.l.b16 %v1656
    %v1971 = vunpack.c.h.b16 %v1656
    %v1972 = vunpack.c.l.b16 %v1657
    %v1973 = vunpack.c.h.b16 %v1657
    %v1974 = vunpack.c.l.b16 %v1658
    %v1975 = vunpack.c.h.b16 %v1658
    %v1976 = vunpack.c.l.b16 %v1659
    %v1977 = vunpack.c.h.b16 %v1659
    %v1978 = vunpack.c.l.b16 %v1660
    %v1979 = vunpack.c.h.b16 %v1660
    %v1980 = vunpack.c.l.b16 %v1661
    %v1981 = vunpack.c.h.b16 %v1661
    %v1982 = vunpack.c.l.b16 %v1662
    %v1983 = vunpack.c.h.b16 %v1662
    %v1984 = vunpack.c.l.b16 %v1663
    %v1985 = vunpack.c.h.b16 %v1663
    %v1986 = vunpack.c.l.b16 %v1664
    %v1987 = vunpack.c.h.b16 %v1664
    %v1988 = vunpack.c.l.b16 %v1665
    %v1989 = vunpack.c.h.b16 %v1665
    %v1990 = vunpack.c.l.b16 %v1666
    %v1991 = vunpack.c.h.b16 %v1666
    %v1992 = vunpack.c.l.b16 %v1667
    %v1993 = vunpack.c.h.b16 %v1667
    %v1994 = vunpack.c.l.b16 %v1668
    %v1995 = vunpack.c.h.b16 %v1668
    %v1996 = vunpack.c.l.b16 %v1669
    %v1997 = vunpack.c.h.b16 %v1669
    %v1998 = vunpack.c.l.b16 %v1670
    %v1999 = vunpack.c.h.b16 %v1670
    %v2000 = vunpack.c.l.b16 %v1671
    %v2001 = vunpack.c.h.b16 %v1671
    %v2002 = vunpack.c.l.b16 %v1672
    %v2003 = vunpack.c.h.b16 %v1672
    %v2004 = vunpack.c.l.b16 %v1673
    %v2005 = vunpack.c.h.b16 %v1673
    %v2006 = vunpack.c.l.b16 %v1674
    %v2007 = vunpack.c.h.b16 %v1674
    %v2008 = vunpack.c.l.b16 %v1675
    %v2009 = vunpack.c.h.b16 %v1675
    %v2010 = vunpack.c.l.b16 %v1676
    %v2011 = vunpack.c.h.b16 %v1676
    %v2012 = vunpack.c.l.b16 %v1677
    %v2013 = vunpack.c.h.b16 %v1677
    %v2014 = vunpack.c.l.b16 %v1678
    %v2015 = vunpack.c.h.b16 %v1678
    %v2016 = vunpack.c.l.b16 %v1679
    %v2017 = vunpack.c.h.b16 %v1679
    %v2018 = vunpack.c.l.b16 %v1680
    %v2019 = vunpack.c.h.b16 %v1680
    %v2020 = vunpack.c.l.b16 %v1681
    %v2021 = vunpack.c.h.b16 %v1681
    %v2022 = vunpack.c.l.b16 %v1682
    %v2023 = vunpack.c.h.b16 %v1682
    %v2024 = vunpack.c.l.b16 %v1683
    %v2025 = vunpack.c.h.b16 %v1683
    %v2026 = vunpack.c.l.b16 %v1684
    %v2027 = vunpack.c.h.b16 %v1684
    %v2028 = vunpack.c.l.b16 %v1685
    %v2029 = vunpack.c.h.b16 %v1685
    %v2030 = vunpack.c.l.b16 %v1686
    %v2031 = vunpack.c.h.b16 %v1686
    %v2032 = vunpack.c.l.b16 %v1687
    %v2033 = vunpack.c.h.b16 %v1687
    %v2034 = vunpack.c.l.b16 %v1688
    %v2035 = vunpack.c.h.b16 %v1688
    %v2036 = vunpack.c.l.b16 %v1689
    %v2037 = vunpack.c.h.b16 %v1689
    %v2038 = vunpack.c.l.b16 %v1690
    %v2039 = vunpack.c.h.b16 %v1690
    %v2040 = vunpack.c.l.b16 %v1691
    %v2041 = vunpack.c.h.b16 %v1691
    %v2042 = vunpack.c.l.b16 %v1692
    %v2043 = vunpack.c.h.b16 %v1692
    %v2044 = vunpack.c.l.b16 %v1693
    %v2045 = vunpack.c.h.b16 %v1693
    %v2046 = vunpack.c.l.b16 %v1694
    %v2047 = vunpack.c.h.b16 %v1694
    %v2048 = vunpack.c.l.b16 %v1695
    %v2049 = vunpack.c.h.b16 %v1695
    %v2050 = vunpack.c.l.b16 %v1696
    %v2051 = vunpack.c.h.b16 %v1696
    %v2052 = vunpack.c.l.b16 %v1697
    %v2053 = vunpack.c.h.b16 %v1697
    %v2054 = vunpack.c.l.b16 %v1698
    %v2055 = vunpack.c.h.b16 %v1698
    %v2056 = vunpack.c.l.b16 %v1699
    %v2057 = vunpack.c.h.b16 %v1699
    %v2058 = vunpack.c.l.b16 %v1700
    %v2059 = vunpack.c.h.b16 %v1700
    %v2060 = vunpack.c.l.b16 %v1701
    %v2061 = vunpack.c.h.b16 %v1701
    %v2062 = vunpack.c.l.b16 %v1702
    %v2063 = vunpack.c.h.b16 %v1702
    %v2064 = vunpack.c.l.b16 %v1703
    %v2065 = vunpack.c.h.b16 %v1703
    %v2066 = vunpack.c.l.b16 %v1704
    %v2067 = vunpack.c.h.b16 %v1704
    %v2068 = vunpack.c.l.b16 %v1705
    %v2069 = vunpack.c.h.b16 %v1705
    %v2070 = vunpack.c.l.b16 %v1706
    %v2071 = vunpack.c.h.b16 %v1706
    %v2072 = vunpack.c.l.b16 %v1707
    %v2073 = vunpack.c.h.b16 %v1707
    %v2074 = vunpack.c.l.b16 %v1708
    %v2075 = vunpack.c.h.b16 %v1708
    %v2076 = vunpack.c.l.b16 %v1709
    %v2077 = vunpack.c.h.b16 %v1709
    %v2078 = vunpack.c.l.b16 %v1710
    %v2079 = vunpack.c.h.b16 %v1710
    %v2080 = vunpack.c.l.b16 %v1711
    %v2081 = vunpack.c.h.b16 %v1711
    %v2082 = vunpack.c.l.b16 %v1712
    %v2083 = vunpack.c.h.b16 %v1712
    %v2084 = vunpack.c.l.b16 %v1713
    %v2085 = vunpack.c.h.b16 %v1713
    %v2086 = vunpack.c.l.b16 %v1714
    %v2087 = vunpack.c.h.b16 %v1714
    %v2088 = vunpack.c.l.b16 %v1715
    %v2089 = vunpack.c.h.b16 %v1715
    %v2090 = vunpack.c.l.b16 %v1716
    %v2091 = vunpack.c.h.b16 %v1716
    %v2092 = vunpack.c.l.b16 %v1717
    %v2093 = vunpack.c.h.b16 %v1717
    %v2094 = vunpack.c.l.b16 %v1718
    %v2095 = vunpack.c.h.b16 %v1718
    %v2096 = vunpack.c.l.b16 %v1719
    %v2097 = vunpack.c.h.b16 %v1719
    %v2098 = vunpack.c.l.b16 %v1720
    %v2099 = vunpack.c.h.b16 %v1720
    %v2100 = vunpack.c.l.b16 %v1721
    %v2101 = vunpack.c.h.b16 %v1721
    %v2102 = vunpack.c.l.b16 %v1722
    %v2103 = vunpack.c.h.b16 %v1722
    %v2104 = vunpack.c.l.b16 %v1723
    %v2105 = vunpack.c.h.b16 %v1723
    %v2106 = vunpack.c.l.b16 %v1724
    %v2107 = vunpack.c.h.b16 %v1724
    %v2108 = vunpack.c.l.b16 %v1725
    %v2109 = vunpack.c.h.b16 %v1725
    %v2110 = vunpack.c.l.b16 %v1726
    %v2111 = vunpack.c.h.b16 %v1726
    %v2112 = vunpack.c.l.b16 %v1727
    %v2113 = vunpack.c.h.b16 %v1727
    %v2114 = vunpack.c.l.b16 %v1728
    %v2115 = vunpack.c.h.b16 %v1728
    %v2116 = vunpack.c.l.b16 %v1729
    %v2117 = vunpack.c.h.b16 %v1729
    %v2118 = vunpack.c.l.b16 %v1730
    %v2119 = vunpack.c.h.b16 %v1730
    %v2120 = vunpack.c.l.b16 %v1731
    %v2121 = vunpack.c.h.b16 %v1731
    %v2122 = vunpack.c.l.b16 %v1732
    %v2123 = vunpack.c.h.b16 %v1732
    %v2124 = vunpack.c.l.b16 %v1733
    %v2125 = vunpack.c.h.b16 %v1733
    %v2126 = vunpack.c.l.b16 %v1734
    %v2127 = vunpack.c.h.b16 %v1734
    %v2128 = vunpack.c.l.b16 %v1735
    %v2129 = vunpack.c.h.b16 %v1735
    %v2130 = vpack.c.b16 %v1878, %v1874
    %v2131 = vpack.c.b16 %v1879, %v1875
    %v2132 = vpack.c.b16 %v1880, %v1876
    %v2133 = vpack.c.b16 %v1881, %v1877
    %v2134 = vpack.c.b16 %v1886, %v1882
    %v2135 = vpack.c.b16 %v1887, %v1883
    %v2136 = vpack.c.b16 %v1888, %v1884
    %v2137 = vpack.c.b16 %v1889, %v1885
    %v2138 = vpack.c.b16 %v1894, %v1890
    %v2139 = vpack.c.b16 %v1895, %v1891
    %v2140 = vpack.c.b16 %v1896, %v1892
    %v2141 = vpack.c.b16 %v1897, %v1893
    %v2142 = vpack.c.b16 %v1902, %v1898
    %v2143 = vpack.c.b16 %v1903, %v1899
    %v2144 = vpack.c.b16 %v1904, %v1900
    %v2145 = vpack.c.b16 %v1905, %v1901
    %v2146 = vpack.c.b16 %v1910, %v1906
    %v2147 = vpack.c.b16 %v1911, %v1907
    %v2148 = vpack.c.b16 %v1912, %v1908
    %v2149 = vpack.c.b16 %v1913, %v1909
    %v2150 = vpack.c.b16 %v1918, %v1914
    %v2151 = vpack.c.b16 %v1919, %v1915
    %v2152 = vpack.c.b16 %v1920, %v1916
    %v2153 = vpack.c.b16 %v1921, %v1917
    %v2154 = vpack.c.b16 %v1926, %v1922
    %v2155 = vpack.c.b16 %v1927, %v1923
    %v2156 = vpack.c.b16 %v1928, %v1924
    %v2157 = vpack.c.b16 %v1929, %v1925
    %v2158 = vpack.c.b16 %v1934, %v1930
    %v2159 = vpack.c.b16 %v1935, %v1931
    %v2160 = vpack.c.b16 %v1936, %v1932
    %v2161 = vpack.c.b16 %v1937, %v1933
    %v2162 = vpack.c.b16 %v1942, %v1938
    %v2163 = vpack.c.b16 %v1943, %v1939
    %v2164 = vpack.c.b16 %v1944, %v1940
    %v2165 = vpack.c.b16 %v1945, %v1941
    %v2166 = vpack.c.b16 %v1950, %v1946
    %v2167 = vpack.c.b16 %v1951, %v1947
    %v2168 = vpack.c.b16 %v1952, %v1948
    %v2169 = vpack.c.b16 %v1953, %v1949
    %v2170 = vpack.c.b16 %v1958, %v1954
    %v2171 = vpack.c.b16 %v1959, %v1955
    %v2172 = vpack.c.b16 %v1960, %v1956
    %v2173 = vpack.c.b16 %v1961, %v1957
    %v2174 = vpack.c.b16 %v1966, %v1962
    %v2175 = vpack.c.b16 %v1967, %v1963
    %v2176 = vpack.c.b16 %v1968, %v1964
    %v2177 = vpack.c.b16 %v1969, %v1965
    %v2178 = vpack.c.b16 %v1974, %v1970
    %v2179 = vpack.c.b16 %v1975, %v1971
    %v2180 = vpack.c.b16 %v1976, %v1972
    %v2181 = vpack.c.b16 %v1977, %v1973
    %v2182 = vpack.c.b16 %v1982, %v1978
    %v2183 = vpack.c.b16 %v1983, %v1979
    %v2184 = vpack.c.b16 %v1984, %v1980
    %v2185 = vpack.c.b16 %v1985, %v1981
    %v2186 = vpack.c.b16 %v1990, %v1986
    %v2187 = vpack.c.b16 %v1991, %v1987
    %v2188 = vpack.c.b16 %v1992, %v1988
    %v2189 = vpack.c.b16 %v1993, %v1989
    %v2190 = vpack.c.b16 %v1998, %v1994
    %v2191 = vpack.c.b16 %v1999, %v1995
    %v2192 = vpack.c.b16 %v2000, %v1996
    %v2193 = vpack.c.b16 %v2001, %v1997
    %v2194 = vpack.c.b16 %v2006, %v2002
    %v2195 = vpack.c.b16 %v2007, %v2003
    %v2196 = vpack.c.b16 %v2008, %v2004
    %v2197 = vpack.c.b16 %v2009, %v2005
    %v2198 = vpack.c.b16 %v2014, %v2010
    %v2199 = vpack.c.b16 %v2015, %v2011
    %v2200 = vpack.c.b16 %v2016, %v2012
    %v2201 = vpack.c.b16 %v2017, %v2013
    %v2202 = vpack.c.b16 %v2022, %v2018
    %v2203 = vpack.c.b16 %v2023, %v2019
    %v2204 = vpack.c.b16 %v2024, %v2020
    %v2205 = vpack.c.b16 %v2025, %v2021
    %v2206 = vpack.c.b16 %v2030, %v2026
    %v2207 = vpack.c.b16 %v2031, %v2027
    %v2208 = vpack.c.b16 %v2032, %v2028
    %v2209 = vpack.c.b16 %v2033, %v2029
    %v2210 = vpack.c.b16 %v2038, %v2034
    %v2211 = vpack.c.b16 %v2039, %v2035
    %v2212 = vpack.c.b16 %v2040, %v2036
    %v2213 = vpack.c.b16 %v2041, %v2037
    %v2214 = vpack.c.b16 %v2046, %v2042
    %v2215 = vpack.c.b16 %v2047, %v2043
    %v2216 = vpack.c.b16 %v2048, %v2044
    %v2217 = vpack.c.b16 %v2049, %v2045
    %v2218 = vpack.c.b16 %v2054, %v2050
    %v2219 = vpack.c.b16 %v2055, %v2051
    %v2220 = vpack.c.b16 %v2056, %v2052
    %v2221 = vpack.c.b16 %v2057, %v2053
    %v2222 = vpack.c.b16 %v2062, %v2058
    %v2223 = vpack.c.b16 %v2063, %v2059
    %v2224 = vpack.c.b16 %v2064, %v2060
    %v2225 = vpack.c.b16 %v2065, %v2061
    %v2226 = vpack.c.b16 %v2070, %v2066
    %v2227 = vpack.c.b16 %v2071, %v2067
    %v2228 = vpack.c.b16 %v2072, %v2068
    %v2229 = vpack.c.b16 %v2073, %v2069
    %v2230 = vpack.c.b16 %v2078, %v2074
    %v2231 = vpack.c.b16 %v2079, %v2075
    %v2232 = vpack.c.b16 %v2080, %v2076
    %v2233 = vpack.c.b16 %v2081, %v2077
    %v2234 = vpack.c.b16 %v2086, %v2082
    %v2235 = vpack.c.b16 %v2087, %v2083
    %v2236 = vpack.c.b16 %v2088, %v2084
    %v2237 = vpack.c.b16 %v2089, %v2085
    %v2238 = vpack.c.b16 %v2094, %v2090
    %v2239 = vpack.c.b16 %v2095, %v2091
    %v2240 = vpack.c.b16 %v2096, %v2092
    %v2241 = vpack.c.b16 %v2097, %v2093
    %v2242 = vpack.c.b16 %v2102, %v2098
    %v2243 = vpack.c.b16 %v2103, %v2099
    %v2244 = vpack.c.b16 %v2104, %v2100
    %v2245 = vpack.c.b16 %v2105, %v2101
    %v2246 = vpack.c.b16 %v2110, %v2106
    %v2247 = vpack.c.b16 %v2111, %v2107
    %v2248 = vpack.c.b16 %v2112, %v2108
    %v2249 = vpack.c.b16 %v2113, %v2109
    %v2250 = vpack.c.b16 %v2118, %v2114
    %v2251 = vpack.c.b16 %v2119, %v2115
    %v2252 = vpack.c.b16 %v2120, %v2116
    %v2253 = vpack.c.b16 %v2121, %v2117
    %v2254 = vpack.c.b16 %v2126, %v2122
    %v2255 = vpack.c.b16 %v2127, %v2123
    %v2256 = vpack.c.b16 %v2128, %v2124
    %v2257 = vpack.c.b16 %v2129, %v2125
    %2386 = vmatpush.bf16.msra.mxu0 %v2158
    %2387 = vmatpush.bf16.msra.mxu0 %v2154
    %2388 = vmatpush.bf16.msra.mxu0 %v2150
    %2389 = vmatpush.bf16.msra.mxu0 %v2146
    %2390 = vmatpush.bf16.msra.mxu0 %v2142
    %2391 = vmatpush.bf16.msra.mxu0 %v2138
    %2392 = vmatpush.bf16.msra.mxu0 %v2134
    %2393 = vmatpush.bf16.msra.mxu0 %v2130
    %2394 = vmatmul.bf16.gmra.mxu0 %v366
    %v2395 = vpop.f32.mrf.mxu0
    %v2396 = vadd.f32 %v1738, %v2395
    %v2397 = vpop.f32.mrf.mxu0
    %v2398 = vadd.f32 %v1738, %v2397
    %2399 = vmatmul.bf16.gmra.mxu0 %v370
    %v2400 = vpop.f32.mrf.mxu0
    %v2401 = vadd.f32 %v1738, %v2400
    %v2402 = vpop.f32.mrf.mxu0
    %v2403 = vadd.f32 %v1738, %v2402
    %2404 = vdwg.mxu0
    %2405 = vmatpush.bf16.msra.mxu0 %v2190
    %2406 = vmatpush.bf16.msra.mxu0 %v2186
    %2407 = vmatpush.bf16.msra.mxu0 %v2182
    %2408 = vmatpush.bf16.msra.mxu0 %v2178
    %2409 = vmatpush.bf16.msra.mxu0 %v2174
    %2410 = vmatpush.bf16.msra.mxu0 %v2170
    %2411 = vmatpush.bf16.msra.mxu0 %v2166
    %2412 = vmatpush.bf16.msra.mxu0 %v2162
    %2413 = vmatmul.bf16.gmra.mxu0 %v367
    %v2414 = vpop.f32.mrf.mxu0
    %v2415 = vadd.f32 %v2396, %v2414
    %v2416 = vpop.f32.mrf.mxu0
    %v2417 = vadd.f32 %v2398, %v2416
    %2418 = vmatmul.bf16.gmra.mxu0 %v371
    %v2419 = vpop.f32.mrf.mxu0
    %v2420 = vadd.f32 %v2401, %v2419
    %v2421 = vpop.f32.mrf.mxu0
    %v2422 = vadd.f32 %v2403, %v2421
    %2423 = vdwg.mxu0
    %2424 = vmatpush.bf16.msra.mxu0 %v2222
    %2425 = vmatpush.bf16.msra.mxu0 %v2218
    %2426 = vmatpush.bf16.msra.mxu0 %v2214
    %2427 = vmatpush.bf16.msra.mxu0 %v2210
    %2428 = vmatpush.bf16.msra.mxu0 %v2206
    %2429 = vmatpush.bf16.msra.mxu0 %v2202
    %2430 = vmatpush.bf16.msra.mxu0 %v2198
    %2431 = vmatpush.bf16.msra.mxu0 %v2194
    %2432 = vmatmul.bf16.gmra.mxu0 %v368
    %v2433 = vpop.f32.mrf.mxu0
    %v2434 = vadd.f32 %v2415, %v2433
    %v2435 = vpop.f32.mrf.mxu0
    %v2436 = vadd.f32 %v2417, %v2435
    %2437 = vmatmul.bf16.gmra.mxu0 %v372
    %v2438 = vpop.f32.mrf.mxu0
    %v2439 = vadd.f32 %v2420, %v2438
    %v2440 = vpop.f32.mrf.mxu0
    %v2441 = vadd.f32 %v2422, %v2440
    %2442 = vdwg.mxu0
    %2443 = vmatpush.bf16.msra.mxu0 %v2254
    %2444 = vmatpush.bf16.msra.mxu0 %v2250
    %2445 = vmatpush.bf16.msra.mxu0 %v2246
    %2446 = vmatpush.bf16.msra.mxu0 %v2242
    %2447 = vmatpush.bf16.msra.mxu0 %v2238
    %2448 = vmatpush.bf16.msra.mxu0 %v2234
    %2449 = vmatpush.bf16.msra.mxu0 %v2230
    %2450 = vmatpush.bf16.msra.mxu0 %v2226
    %2451 = vmatmul.bf16.gmra.mxu0 %v369
    %v2452 = vpop.f32.mrf.mxu0
    %v2453 = vadd.f32 %v2434, %v2452
    %v2454 = vpop.f32.mrf.mxu0
    %v2455 = vadd.f32 %v2436, %v2454
    %2456 = vmatmul.bf16.gmra.mxu0 %v373
    %v2457 = vpop.f32.mrf.mxu0
    %v2458 = vadd.f32 %v2439, %v2457
    %v2459 = vpop.f32.mrf.mxu0
    %v2460 = vadd.f32 %v2441, %v2459
    %2461 = vdwg.mxu0
    %2462 = vmatpush.bf16.msra.mxu0 %v2159
    %2463 = vmatpush.bf16.msra.mxu0 %v2155
    %2464 = vmatpush.bf16.msra.mxu0 %v2151
    %2465 = vmatpush.bf16.msra.mxu0 %v2147
    %2466 = vmatpush.bf16.msra.mxu0 %v2143
    %2467 = vmatpush.bf16.msra.mxu0 %v2139
    %2468 = vmatpush.bf16.msra.mxu0 %v2135
    %2469 = vmatpush.bf16.msra.mxu0 %v2131
    %2470 = vmatmul.bf16.gmra.mxu0 %v366
    %v2471 = vpop.f32.mrf.mxu0
    %v2472 = vadd.f32 %v1739, %v2471
    %v2473 = vpop.f32.mrf.mxu0
    %v2474 = vadd.f32 %v1739, %v2473
    %2475 = vmatmul.bf16.gmra.mxu0 %v370
    %v2476 = vpop.f32.mrf.mxu0
    %v2477 = vadd.f32 %v1739, %v2476
    %v2478 = vpop.f32.mrf.mxu0
    %v2479 = vadd.f32 %v1739, %v2478
    %2480 = vdwg.mxu0
    %2481 = vmatpush.bf16.msra.mxu0 %v2191
    %2482 = vmatpush.bf16.msra.mxu0 %v2187
    %2483 = vmatpush.bf16.msra.mxu0 %v2183
    %2484 = vmatpush.bf16.msra.mxu0 %v2179
    %2485 = vmatpush.bf16.msra.mxu0 %v2175
    %2486 = vmatpush.bf16.msra.mxu0 %v2171
    %2487 = vmatpush.bf16.msra.mxu0 %v2167
    %2488 = vmatpush.bf16.msra.mxu0 %v2163
    %2489 = vmatmul.bf16.gmra.mxu0 %v367
    %v2490 = vpop.f32.mrf.mxu0
    %v2491 = vadd.f32 %v2472, %v2490
    %v2492 = vpop.f32.mrf.mxu0
    %v2493 = vadd.f32 %v2474, %v2492
    %2494 = vmatmul.bf16.gmra.mxu0 %v371
    %v2495 = vpop.f32.mrf.mxu0
    %v2496 = vadd.f32 %v2477, %v2495
    %v2497 = vpop.f32.mrf.mxu0
    %v2498 = vadd.f32 %v2479, %v2497
    %2499 = vdwg.mxu0
    %2500 = vmatpush.bf16.msra.mxu0 %v2223
    %2501 = vmatpush.bf16.msra.mxu0 %v2219
    %2502 = vmatpush.bf16.msra.mxu0 %v2215
    %2503 = vmatpush.bf16.msra.mxu0 %v2211
    %2504 = vmatpush.bf16.msra.mxu0 %v2207
    %2505 = vmatpush.bf16.msra.mxu0 %v2203
    %2506 = vmatpush.bf16.msra.mxu0 %v2199
    %2507 = vmatpush.bf16.msra.mxu0 %v2195
    %2508 = vmatmul.bf16.gmra.mxu0 %v368
    %v2509 = vpop.f32.mrf.mxu0
    %v2510 = vadd.f32 %v2491, %v2509
    %v2511 = vpop.f32.mrf.mxu0
    %v2512 = vadd.f32 %v2493, %v2511
    %2513 = vmatmul.bf16.gmra.mxu0 %v372
    %v2514 = vpop.f32.mrf.mxu0
    %v2515 = vadd.f32 %v2496, %v2514
    %v2516 = vpop.f32.mrf.mxu0
    %v2517 = vadd.f32 %v2498, %v2516
    %2518 = vdwg.mxu0
    %2519 = vmatpush.bf16.msra.mxu0 %v2255
    %2520 = vmatpush.bf16.msra.mxu0 %v2251
    %2521 = vmatpush.bf16.msra.mxu0 %v2247
    %2522 = vmatpush.bf16.msra.mxu0 %v2243
    %2523 = vmatpush.bf16.msra.mxu0 %v2239
    %2524 = vmatpush.bf16.msra.mxu0 %v2235
    %2525 = vmatpush.bf16.msra.mxu0 %v2231
    %2526 = vmatpush.bf16.msra.mxu0 %v2227
    %2527 = vmatmul.bf16.gmra.mxu0 %v369
    %v2528 = vpop.f32.mrf.mxu0
    %v2529 = vadd.f32 %v2510, %v2528
    %v2530 = vpop.f32.mrf.mxu0
    %v2531 = vadd.f32 %v2512, %v2530
    %2532 = vmatmul.bf16.gmra.mxu0 %v373
    %v2533 = vpop.f32.mrf.mxu0
    %v2534 = vadd.f32 %v2515, %v2533
    %v2535 = vpop.f32.mrf.mxu0
    %v2536 = vadd.f32 %v2517, %v2535
    %2537 = vdwg.mxu0
    %2538 = vmatpush.bf16.msra.mxu0 %v2160
    %2539 = vmatpush.bf16.msra.mxu0 %v2156
    %2540 = vmatpush.bf16.msra.mxu0 %v2152
    %2541 = vmatpush.bf16.msra.mxu0 %v2148
    %2542 = vmatpush.bf16.msra.mxu0 %v2144
    %2543 = vmatpush.bf16.msra.mxu0 %v2140
    %2544 = vmatpush.bf16.msra.mxu0 %v2136
    %2545 = vmatpush.bf16.msra.mxu0 %v2132
    %2546 = vmatmul.bf16.gmra.mxu0 %v366
    %v2547 = vpop.f32.mrf.mxu0
    %v2548 = vadd.f32 %v1740, %v2547
    %v2549 = vpop.f32.mrf.mxu0
    %v2550 = vadd.f32 %v1740, %v2549
    %2551 = vmatmul.bf16.gmra.mxu0 %v370
    %v2552 = vpop.f32.mrf.mxu0
    %v2553 = vadd.f32 %v1740, %v2552
    %v2554 = vpop.f32.mrf.mxu0
    %v2555 = vadd.f32 %v1740, %v2554
    %2556 = vdwg.mxu0
    %2557 = vmatpush.bf16.msra.mxu0 %v2192
    %2558 = vmatpush.bf16.msra.mxu0 %v2188
    %2559 = vmatpush.bf16.msra.mxu0 %v2184
    %2560 = vmatpush.bf16.msra.mxu0 %v2180
    %2561 = vmatpush.bf16.msra.mxu0 %v2176
    %2562 = vmatpush.bf16.msra.mxu0 %v2172
    %2563 = vmatpush.bf16.msra.mxu0 %v2168
    %2564 = vmatpush.bf16.msra.mxu0 %v2164
    %2565 = vmatmul.bf16.gmra.mxu0 %v367
    %v2566 = vpop.f32.mrf.mxu0
    %v2567 = vadd.f32 %v2548, %v2566
    %v2568 = vpop.f32.mrf.mxu0
    %v2569 = vadd.f32 %v2550, %v2568
    %2570 = vmatmul.bf16.gmra.mxu0 %v371
    %v2571 = vpop.f32.mrf.mxu0
    %v2572 = vadd.f32 %v2553, %v2571
    %v2573 = vpop.f32.mrf.mxu0
    %v2574 = vadd.f32 %v2555, %v2573
    %2575 = vdwg.mxu0
    %2576 = vmatpush.bf16.msra.mxu0 %v2224
    %2577 = vmatpush.bf16.msra.mxu0 %v2220
    %2578 = vmatpush.bf16.msra.mxu0 %v2216
    %2579 = vmatpush.bf16.msra.mxu0 %v2212
    %2580 = vmatpush.bf16.msra.mxu0 %v2208
    %2581 = vmatpush.bf16.msra.mxu0 %v2204
    %2582 = vmatpush.bf16.msra.mxu0 %v2200
    %2583 = vmatpush.bf16.msra.mxu0 %v2196
    %2584 = vmatmul.bf16.gmra.mxu0 %v368
    %v2585 = vpop.f32.mrf.mxu0
    %v2586 = vadd.f32 %v2567, %v2585
    %v2587 = vpop.f32.mrf.mxu0
    %v2588 = vadd.f32 %v2569, %v2587
    %2589 = vmatmul.bf16.gmra.mxu0 %v372
    %v2590 = vpop.f32.mrf.mxu0
    %v2591 = vadd.f32 %v2572, %v2590
    %v2592 = vpop.f32.mrf.mxu0
    %v2593 = vadd.f32 %v2574, %v2592
    %2594 = vdwg.mxu0
    %2595 = vmatpush.bf16.msra.mxu0 %v2256
    %2596 = vmatpush.bf16.msra.mxu0 %v2252
    %2597 = vmatpush.bf16.msra.mxu0 %v2248
    %2598 = vmatpush.bf16.msra.mxu0 %v2244
    %2599 = vmatpush.bf16.msra.mxu0 %v2240
    %2600 = vmatpush.bf16.msra.mxu0 %v2236
    %2601 = vmatpush.bf16.msra.mxu0 %v2232
    %2602 = vmatpush.bf16.msra.mxu0 %v2228
    %2603 = vmatmul.bf16.gmra.mxu0 %v369
    %v2604 = vpop.f32.mrf.mxu0
    %v2605 = vadd.f32 %v2586, %v2604
    %v2606 = vpop.f32.mrf.mxu0
    %v2607 = vadd.f32 %v2588, %v2606
    %2608 = vmatmul.bf16.gmra.mxu0 %v373
    %v2609 = vpop.f32.mrf.mxu0
    %v2610 = vadd.f32 %v2591, %v2609
    %v2611 = vpop.f32.mrf.mxu0
    %v2612 = vadd.f32 %v2593, %v2611
    %2613 = vdwg.mxu0
    %2614 = vmatpush.bf16.msra.mxu0 %v2161
    %2615 = vmatpush.bf16.msra.mxu0 %v2157
    %2616 = vmatpush.bf16.msra.mxu0 %v2153
    %2617 = vmatpush.bf16.msra.mxu0 %v2149
    %2618 = vmatpush.bf16.msra.mxu0 %v2145
    %2619 = vmatpush.bf16.msra.mxu0 %v2141
    %2620 = vmatpush.bf16.msra.mxu0 %v2137
    %2621 = vmatpush.bf16.msra.mxu0 %v2133
    %2622 = vmatmul.bf16.gmra.mxu0 %v366
    %v2623 = vpop.f32.mrf.mxu0
    %v2624 = vadd.f32 %v1741, %v2623
    %v2625 = vpop.f32.mrf.mxu0
    %v2626 = vadd.f32 %v1741, %v2625
    %2627 = vmatmul.bf16.gmra.mxu0 %v370
    %v2628 = vpop.f32.mrf.mxu0
    %v2629 = vadd.f32 %v1741, %v2628
    %v2630 = vpop.f32.mrf.mxu0
    %v2631 = vadd.f32 %v1741, %v2630
    %2632 = vdwg.mxu0
    %2633 = vmatpush.bf16.msra.mxu0 %v2193
    %2634 = vmatpush.bf16.msra.mxu0 %v2189
    %2635 = vmatpush.bf16.msra.mxu0 %v2185
    %2636 = vmatpush.bf16.msra.mxu0 %v2181
    %2637 = vmatpush.bf16.msra.mxu0 %v2177
    %2638 = vmatpush.bf16.msra.mxu0 %v2173
    %2639 = vmatpush.bf16.msra.mxu0 %v2169
    %2640 = vmatpush.bf16.msra.mxu0 %v2165
    %2641 = vmatmul.bf16.gmra.mxu0 %v367
    %v2642 = vpop.f32.mrf.mxu0
    %v2643 = vadd.f32 %v2624, %v2642
    %v2644 = vpop.f32.mrf.mxu0
    %v2645 = vadd.f32 %v2626, %v2644
    %2646 = vmatmul.bf16.gmra.mxu0 %v371
    %v2647 = vpop.f32.mrf.mxu0
    %v2648 = vadd.f32 %v2629, %v2647
    %v2649 = vpop.f32.mrf.mxu0
    %v2650 = vadd.f32 %v2631, %v2649
    %2651 = vdwg.mxu0
    %2652 = vmatpush.bf16.msra.mxu0 %v2225
    %2653 = vmatpush.bf16.msra.mxu0 %v2221
    %2654 = vmatpush.bf16.msra.mxu0 %v2217
    %2655 = vmatpush.bf16.msra.mxu0 %v2213
    %2656 = vmatpush.bf16.msra.mxu0 %v2209
    %2657 = vmatpush.bf16.msra.mxu0 %v2205
    %2658 = vmatpush.bf16.msra.mxu0 %v2201
    %2659 = vmatpush.bf16.msra.mxu0 %v2197
    %2660 = vmatmul.bf16.gmra.mxu0 %v368
    %v2661 = vpop.f32.mrf.mxu0
    %v2662 = vadd.f32 %v2643, %v2661
    %v2663 = vpop.f32.mrf.mxu0
    %v2664 = vadd.f32 %v2645, %v2663
    %2665 = vmatmul.bf16.gmra.mxu0 %v372
    %v2666 = vpop.f32.mrf.mxu0
    %v2667 = vadd.f32 %v2648, %v2666
    %v2668 = vpop.f32.mrf.mxu0
    %v2669 = vadd.f32 %v2650, %v2668
    %2670 = vdwg.mxu0
    %2671 = vmatpush.bf16.msra.mxu0 %v2257
    %2672 = vmatpush.bf16.msra.mxu0 %v2253
    %2673 = vmatpush.bf16.msra.mxu0 %v2249
    %2674 = vmatpush.bf16.msra.mxu0 %v2245
    %2675 = vmatpush.bf16.msra.mxu0 %v2241
    %2676 = vmatpush.bf16.msra.mxu0 %v2237
    %2677 = vmatpush.bf16.msra.mxu0 %v2233
    %2678 = vmatpush.bf16.msra.mxu0 %v2229
    %2679 = vmatmul.bf16.gmra.mxu0 %v369
    %v2680 = vpop.f32.mrf.mxu0
    %v2681 = vadd.f32 %v2662, %v2680
    %v2682 = vpop.f32.mrf.mxu0
    %v2683 = vadd.f32 %v2664, %v2682
    %2684 = vmatmul.bf16.gmra.mxu0 %v373
    %v2685 = vpop.f32.mrf.mxu0
    %v2686 = vadd.f32 %v2667, %v2685
    %v2687 = vpop.f32.mrf.mxu0
    %v2688 = vadd.f32 %v2669, %v2687
    %2689 = vdwg.mxu0
    %v2690 = vmax.f32 %v2453, 0.0
    %v2691 = vmax.f32 %v2529, 0.0
    %v2692 = vmax.f32 %v2605, 0.0
    %v2693 = vmax.f32 %v2681, 0.0
    %v2694 = vmax.f32 %v2455, 0.0
    %v2695 = vmax.f32 %v2531, 0.0
    %v2696 = vmax.f32 %v2607, 0.0
    %v2697 = vmax.f32 %v2683, 0.0
    %v2698 = vmax.f32 %v2458, 0.0
    %v2699 = vmax.f32 %v2534, 0.0
    %v2700 = vmax.f32 %v2610, 0.0
    %v2701 = vmax.f32 %v2686, 0.0
    %v2702 = vmax.f32 %v2460, 0.0
    %v2703 = vmax.f32 %v2536, 0.0
    %v2704 = vmax.f32 %v2612, 0.0
    %v2705 = vmax.f32 %v2688, 0.0
    %v2706 = vpack.c.bf16 %v2694, %v2690
    %v2707 = vpack.c.bf16 %v2695, %v2691
    %v2708 = vpack.c.bf16 %v2696, %v2692
    %v2709 = vpack.c.bf16 %v2697, %v2693
    %v2710 = vpack.c.bf16 %v2702, %v2698
    %v2711 = vpack.c.bf16 %v2703, %v2699
    %v2712 = vpack.c.bf16 %v2704, %v2700
    %v2713 = vpack.c.bf16 %v2705, %v2701
    %v2714 = vld [vmem:[#allocation10 + $0x400] sm:$0xff]
    %v2715 = vld [vmem:[#allocation10 + $0x408] sm:$0xff]
    %v2716 = vld [vmem:[#allocation10 + $0x410] sm:$0xff]
    %v2717 = vld [vmem:[#allocation10 + $0x418] sm:$0xff]
    %v2718 = vld [vmem:[#allocation10 + $0x420] sm:$0xff]
    %v2719 = vld [vmem:[#allocation10 + $0x428] sm:$0xff]
    %v2720 = vld [vmem:[#allocation10 + $0x430] sm:$0xff]
    %v2721 = vld [vmem:[#allocation10 + $0x438] sm:$0xff]
    %v2722 = vld [vmem:[#allocation10 + $0x440] sm:$0xff]
    %v2723 = vld [vmem:[#allocation10 + $0x448] sm:$0xff]
    %v2724 = vld [vmem:[#allocation10 + $0x450] sm:$0xff]
    %v2725 = vld [vmem:[#allocation10 + $0x458] sm:$0xff]
    %v2726 = vld [vmem:[#allocation10 + $0x460] sm:$0xff]
    %v2727 = vld [vmem:[#allocation10 + $0x468] sm:$0xff]
    %v2728 = vld [vmem:[#allocation10 + $0x470] sm:$0xff]
    %v2729 = vld [vmem:[#allocation10 + $0x478] sm:$0xff]
    %v2730 = vld [vmem:[#allocation10 + $0x480] sm:$0xff]
    %v2731 = vld [vmem:[#allocation10 + $0x488] sm:$0xff]
    %v2732 = vld [vmem:[#allocation10 + $0x490] sm:$0xff]
    %v2733 = vld [vmem:[#allocation10 + $0x498] sm:$0xff]
    %v2734 = vld [vmem:[#allocation10 + $0x4a0] sm:$0xff]
    %v2735 = vld [vmem:[#allocation10 + $0x4a8] sm:$0xff]
    %v2736 = vld [vmem:[#allocation10 + $0x4b0] sm:$0xff]
    %v2737 = vld [vmem:[#allocation10 + $0x4b8] sm:$0xff]
    %v2738 = vld [vmem:[#allocation10 + $0x4c0] sm:$0xff]
    %v2739 = vld [vmem:[#allocation10 + $0x4c8] sm:$0xff]
    %v2740 = vld [vmem:[#allocation10 + $0x4d0] sm:$0xff]
    %v2741 = vld [vmem:[#allocation10 + $0x4d8] sm:$0xff]
    %v2742 = vld [vmem:[#allocation10 + $0x4e0] sm:$0xff]
    %v2743 = vld [vmem:[#allocation10 + $0x4e8] sm:$0xff]
    %v2744 = vld [vmem:[#allocation10 + $0x4f0] sm:$0xff]
    %v2745 = vld [vmem:[#allocation10 + $0x4f8] sm:$0xff]
    %v2746 = vld [vmem:[#allocation10 + $0x500] sm:$0xff]
    %v2747 = vld [vmem:[#allocation10 + $0x508] sm:$0xff]
    %v2748 = vld [vmem:[#allocation10 + $0x510] sm:$0xff]
    %v2749 = vld [vmem:[#allocation10 + $0x518] sm:$0xff]
    %v2750 = vld [vmem:[#allocation10 + $0x520] sm:$0xff]
    %v2751 = vld [vmem:[#allocation10 + $0x528] sm:$0xff]
    %v2752 = vld [vmem:[#allocation10 + $0x530] sm:$0xff]
    %v2753 = vld [vmem:[#allocation10 + $0x538] sm:$0xff]
    %v2754 = vld [vmem:[#allocation10 + $0x540] sm:$0xff]
    %v2755 = vld [vmem:[#allocation10 + $0x548] sm:$0xff]
    %v2756 = vld [vmem:[#allocation10 + $0x550] sm:$0xff]
    %v2757 = vld [vmem:[#allocation10 + $0x558] sm:$0xff]
    %v2758 = vld [vmem:[#allocation10 + $0x560] sm:$0xff]
    %v2759 = vld [vmem:[#allocation10 + $0x568] sm:$0xff]
    %v2760 = vld [vmem:[#allocation10 + $0x570] sm:$0xff]
    %v2761 = vld [vmem:[#allocation10 + $0x578] sm:$0xff]
    %v2762 = vld [vmem:[#allocation10 + $0x580] sm:$0xff]
    %v2763 = vld [vmem:[#allocation10 + $0x588] sm:$0xff]
    %v2764 = vld [vmem:[#allocation10 + $0x590] sm:$0xff]
    %v2765 = vld [vmem:[#allocation10 + $0x598] sm:$0xff]
    %v2766 = vld [vmem:[#allocation10 + $0x5a0] sm:$0xff]
    %v2767 = vld [vmem:[#allocation10 + $0x5a8] sm:$0xff]
    %v2768 = vld [vmem:[#allocation10 + $0x5b0] sm:$0xff]
    %v2769 = vld [vmem:[#allocation10 + $0x5b8] sm:$0xff]
    %v2770 = vld [vmem:[#allocation10 + $0x5c0] sm:$0xff]
    %v2771 = vld [vmem:[#allocation10 + $0x5c8] sm:$0xff]
    %v2772 = vld [vmem:[#allocation10 + $0x5d0] sm:$0xff]
    %v2773 = vld [vmem:[#allocation10 + $0x5d8] sm:$0xff]
    %v2774 = vld [vmem:[#allocation10 + $0x5e0] sm:$0xff]
    %v2775 = vld [vmem:[#allocation10 + $0x5e8] sm:$0xff]
    %v2776 = vld [vmem:[#allocation10 + $0x5f0] sm:$0xff]
    %v2777 = vld [vmem:[#allocation10 + $0x5f8] sm:$0xff]
    %v2778 = vld [vmem:[#allocation10 + $0x600] sm:$0xff]
    %v2779 = vld [vmem:[#allocation10 + $0x608] sm:$0xff]
    %v2780 = vld [vmem:[#allocation10 + $0x610] sm:$0xff]
    %v2781 = vld [vmem:[#allocation10 + $0x618] sm:$0xff]
    %v2782 = vld [vmem:[#allocation10 + $0x620] sm:$0xff]
    %v2783 = vld [vmem:[#allocation10 + $0x628] sm:$0xff]
    %v2784 = vld [vmem:[#allocation10 + $0x630] sm:$0xff]
    %v2785 = vld [vmem:[#allocation10 + $0x638] sm:$0xff]
    %v2786 = vld [vmem:[#allocation10 + $0x640] sm:$0xff]
    %v2787 = vld [vmem:[#allocation10 + $0x648] sm:$0xff]
    %v2788 = vld [vmem:[#allocation10 + $0x650] sm:$0xff]
    %v2789 = vld [vmem:[#allocation10 + $0x658] sm:$0xff]
    %v2790 = vld [vmem:[#allocation10 + $0x660] sm:$0xff]
    %v2791 = vld [vmem:[#allocation10 + $0x668] sm:$0xff]
    %v2792 = vld [vmem:[#allocation10 + $0x670] sm:$0xff]
    %v2793 = vld [vmem:[#allocation10 + $0x678] sm:$0xff]
    %v2794 = vld [vmem:[#allocation10 + $0x680] sm:$0xff]
    %v2795 = vld [vmem:[#allocation10 + $0x688] sm:$0xff]
    %v2796 = vld [vmem:[#allocation10 + $0x690] sm:$0xff]
    %v2797 = vld [vmem:[#allocation10 + $0x698] sm:$0xff]
    %v2798 = vld [vmem:[#allocation10 + $0x6a0] sm:$0xff]
    %v2799 = vld [vmem:[#allocation10 + $0x6a8] sm:$0xff]
    %v2800 = vld [vmem:[#allocation10 + $0x6b0] sm:$0xff]
    %v2801 = vld [vmem:[#allocation10 + $0x6b8] sm:$0xff]
    %v2802 = vld [vmem:[#allocation10 + $0x6c0] sm:$0xff]
    %v2803 = vld [vmem:[#allocation10 + $0x6c8] sm:$0xff]
    %v2804 = vld [vmem:[#allocation10 + $0x6d0] sm:$0xff]
    %v2805 = vld [vmem:[#allocation10 + $0x6d8] sm:$0xff]
    %v2806 = vld [vmem:[#allocation10 + $0x6e0] sm:$0xff]
    %v2807 = vld [vmem:[#allocation10 + $0x6e8] sm:$0xff]
    %v2808 = vld [vmem:[#allocation10 + $0x6f0] sm:$0xff]
    %v2809 = vld [vmem:[#allocation10 + $0x6f8] sm:$0xff]
    %v2810 = vld [vmem:[#allocation10 + $0x700] sm:$0xff]
    %v2811 = vld [vmem:[#allocation10 + $0x708] sm:$0xff]
    %v2812 = vld [vmem:[#allocation10 + $0x710] sm:$0xff]
    %v2813 = vld [vmem:[#allocation10 + $0x718] sm:$0xff]
    %v2814 = vld [vmem:[#allocation10 + $0x720] sm:$0xff]
    %v2815 = vld [vmem:[#allocation10 + $0x728] sm:$0xff]
    %v2816 = vld [vmem:[#allocation10 + $0x730] sm:$0xff]
    %v2817 = vld [vmem:[#allocation10 + $0x738] sm:$0xff]
    %v2818 = vld [vmem:[#allocation10 + $0x740] sm:$0xff]
    %v2819 = vld [vmem:[#allocation10 + $0x748] sm:$0xff]
    %v2820 = vld [vmem:[#allocation10 + $0x750] sm:$0xff]
    %v2821 = vld [vmem:[#allocation10 + $0x758] sm:$0xff]
    %v2822 = vld [vmem:[#allocation10 + $0x760] sm:$0xff]
    %v2823 = vld [vmem:[#allocation10 + $0x768] sm:$0xff]
    %v2824 = vld [vmem:[#allocation10 + $0x770] sm:$0xff]
    %v2825 = vld [vmem:[#allocation10 + $0x778] sm:$0xff]
    %v2826 = vld [vmem:[#allocation10 + $0x780] sm:$0xff]
    %v2827 = vld [vmem:[#allocation10 + $0x788] sm:$0xff]
    %v2828 = vld [vmem:[#allocation10 + $0x790] sm:$0xff]
    %v2829 = vld [vmem:[#allocation10 + $0x798] sm:$0xff]
    %v2830 = vld [vmem:[#allocation10 + $0x7a0] sm:$0xff]
    %v2831 = vld [vmem:[#allocation10 + $0x7a8] sm:$0xff]
    %v2832 = vld [vmem:[#allocation10 + $0x7b0] sm:$0xff]
    %v2833 = vld [vmem:[#allocation10 + $0x7b8] sm:$0xff]
    %v2834 = vld [vmem:[#allocation10 + $0x7c0] sm:$0xff]
    %v2835 = vld [vmem:[#allocation10 + $0x7c8] sm:$0xff]
    %v2836 = vld [vmem:[#allocation10 + $0x7d0] sm:$0xff]
    %v2837 = vld [vmem:[#allocation10 + $0x7d8] sm:$0xff]
    %v2838 = vld [vmem:[#allocation10 + $0x7e0] sm:$0xff]
    %v2839 = vld [vmem:[#allocation10 + $0x7e8] sm:$0xff]
    %v2840 = vld [vmem:[#allocation10 + $0x7f0] sm:$0xff]
    %v2841 = vld [vmem:[#allocation10 + $0x7f8] sm:$0xff]
    %v2970 = vunpack.c.l.b16 %v2714
    %v2971 = vunpack.c.h.b16 %v2714
    %v2972 = vunpack.c.l.b16 %v2715
    %v2973 = vunpack.c.h.b16 %v2715
    %v2974 = vunpack.c.l.b16 %v2716
    %v2975 = vunpack.c.h.b16 %v2716
    %v2976 = vunpack.c.l.b16 %v2717
    %v2977 = vunpack.c.h.b16 %v2717
    %v2978 = vunpack.c.l.b16 %v2718
    %v2979 = vunpack.c.h.b16 %v2718
    %v2980 = vunpack.c.l.b16 %v2719
    %v2981 = vunpack.c.h.b16 %v2719
    %v2982 = vunpack.c.l.b16 %v2720
    %v2983 = vunpack.c.h.b16 %v2720
    %v2984 = vunpack.c.l.b16 %v2721
    %v2985 = vunpack.c.h.b16 %v2721
    %v2986 = vunpack.c.l.b16 %v2722
    %v2987 = vunpack.c.h.b16 %v2722
    %v2988 = vunpack.c.l.b16 %v2723
    %v2989 = vunpack.c.h.b16 %v2723
    %v2990 = vunpack.c.l.b16 %v2724
    %v2991 = vunpack.c.h.b16 %v2724
    %v2992 = vunpack.c.l.b16 %v2725
    %v2993 = vunpack.c.h.b16 %v2725
    %v2994 = vunpack.c.l.b16 %v2726
    %v2995 = vunpack.c.h.b16 %v2726
    %v2996 = vunpack.c.l.b16 %v2727
    %v2997 = vunpack.c.h.b16 %v2727
    %v2998 = vunpack.c.l.b16 %v2728
    %v2999 = vunpack.c.h.b16 %v2728
    %v3000 = vunpack.c.l.b16 %v2729
    %v3001 = vunpack.c.h.b16 %v2729
    %v3002 = vunpack.c.l.b16 %v2730
    %v3003 = vunpack.c.h.b16 %v2730
    %v3004 = vunpack.c.l.b16 %v2731
    %v3005 = vunpack.c.h.b16 %v2731
    %v3006 = vunpack.c.l.b16 %v2732
    %v3007 = vunpack.c.h.b16 %v2732
    %v3008 = vunpack.c.l.b16 %v2733
    %v3009 = vunpack.c.h.b16 %v2733
    %v3010 = vunpack.c.l.b16 %v2734
    %v3011 = vunpack.c.h.b16 %v2734
    %v3012 = vunpack.c.l.b16 %v2735
    %v3013 = vunpack.c.h.b16 %v2735
    %v3014 = vunpack.c.l.b16 %v2736
    %v3015 = vunpack.c.h.b16 %v2736
    %v3016 = vunpack.c.l.b16 %v2737
    %v3017 = vunpack.c.h.b16 %v2737
    %v3018 = vunpack.c.l.b16 %v2738
    %v3019 = vunpack.c.h.b16 %v2738
    %v3020 = vunpack.c.l.b16 %v2739
    %v3021 = vunpack.c.h.b16 %v2739
    %v3022 = vunpack.c.l.b16 %v2740
    %v3023 = vunpack.c.h.b16 %v2740
    %v3024 = vunpack.c.l.b16 %v2741
    %v3025 = vunpack.c.h.b16 %v2741
    %v3026 = vunpack.c.l.b16 %v2742
    %v3027 = vunpack.c.h.b16 %v2742
    %v3028 = vunpack.c.l.b16 %v2743
    %v3029 = vunpack.c.h.b16 %v2743
    %v3030 = vunpack.c.l.b16 %v2744
    %v3031 = vunpack.c.h.b16 %v2744
    %v3032 = vunpack.c.l.b16 %v2745
    %v3033 = vunpack.c.h.b16 %v2745
    %v3034 = vunpack.c.l.b16 %v2746
    %v3035 = vunpack.c.h.b16 %v2746
    %v3036 = vunpack.c.l.b16 %v2747
    %v3037 = vunpack.c.h.b16 %v2747
    %v3038 = vunpack.c.l.b16 %v2748
    %v3039 = vunpack.c.h.b16 %v2748
    %v3040 = vunpack.c.l.b16 %v2749
    %v3041 = vunpack.c.h.b16 %v2749
    %v3042 = vunpack.c.l.b16 %v2750
    %v3043 = vunpack.c.h.b16 %v2750
    %v3044 = vunpack.c.l.b16 %v2751
    %v3045 = vunpack.c.h.b16 %v2751
    %v3046 = vunpack.c.l.b16 %v2752
    %v3047 = vunpack.c.h.b16 %v2752
    %v3048 = vunpack.c.l.b16 %v2753
    %v3049 = vunpack.c.h.b16 %v2753
    %v3050 = vunpack.c.l.b16 %v2754
    %v3051 = vunpack.c.h.b16 %v2754
    %v3052 = vunpack.c.l.b16 %v2755
    %v3053 = vunpack.c.h.b16 %v2755
    %v3054 = vunpack.c.l.b16 %v2756
    %v3055 = vunpack.c.h.b16 %v2756
    %v3056 = vunpack.c.l.b16 %v2757
    %v3057 = vunpack.c.h.b16 %v2757
    %v3058 = vunpack.c.l.b16 %v2758
    %v3059 = vunpack.c.h.b16 %v2758
    %v3060 = vunpack.c.l.b16 %v2759
    %v3061 = vunpack.c.h.b16 %v2759
    %v3062 = vunpack.c.l.b16 %v2760
    %v3063 = vunpack.c.h.b16 %v2760
    %v3064 = vunpack.c.l.b16 %v2761
    %v3065 = vunpack.c.h.b16 %v2761
    %v3066 = vunpack.c.l.b16 %v2762
    %v3067 = vunpack.c.h.b16 %v2762
    %v3068 = vunpack.c.l.b16 %v2763
    %v3069 = vunpack.c.h.b16 %v2763
    %v3070 = vunpack.c.l.b16 %v2764
    %v3071 = vunpack.c.h.b16 %v2764
    %v3072 = vunpack.c.l.b16 %v2765
    %v3073 = vunpack.c.h.b16 %v2765
    %v3074 = vunpack.c.l.b16 %v2766
    %v3075 = vunpack.c.h.b16 %v2766
    %v3076 = vunpack.c.l.b16 %v2767
    %v3077 = vunpack.c.h.b16 %v2767
    %v3078 = vunpack.c.l.b16 %v2768
    %v3079 = vunpack.c.h.b16 %v2768
    %v3080 = vunpack.c.l.b16 %v2769
    %v3081 = vunpack.c.h.b16 %v2769
    %v3082 = vunpack.c.l.b16 %v2770
    %v3083 = vunpack.c.h.b16 %v2770
    %v3084 = vunpack.c.l.b16 %v2771
    %v3085 = vunpack.c.h.b16 %v2771
    %v3086 = vunpack.c.l.b16 %v2772
    %v3087 = vunpack.c.h.b16 %v2772
    %v3088 = vunpack.c.l.b16 %v2773
    %v3089 = vunpack.c.h.b16 %v2773
    %v3090 = vunpack.c.l.b16 %v2774
    %v3091 = vunpack.c.h.b16 %v2774
    %v3092 = vunpack.c.l.b16 %v2775
    %v3093 = vunpack.c.h.b16 %v2775
    %v3094 = vunpack.c.l.b16 %v2776
    %v3095 = vunpack.c.h.b16 %v2776
    %v3096 = vunpack.c.l.b16 %v2777
    %v3097 = vunpack.c.h.b16 %v2777
    %v3098 = vunpack.c.l.b16 %v2778
    %v3099 = vunpack.c.h.b16 %v2778
    %v3100 = vunpack.c.l.b16 %v2779
    %v3101 = vunpack.c.h.b16 %v2779
    %v3102 = vunpack.c.l.b16 %v2780
    %v3103 = vunpack.c.h.b16 %v2780
    %v3104 = vunpack.c.l.b16 %v2781
    %v3105 = vunpack.c.h.b16 %v2781
    %v3106 = vunpack.c.l.b16 %v2782
    %v3107 = vunpack.c.h.b16 %v2782
    %v3108 = vunpack.c.l.b16 %v2783
    %v3109 = vunpack.c.h.b16 %v2783
    %v3110 = vunpack.c.l.b16 %v2784
    %v3111 = vunpack.c.h.b16 %v2784
    %v3112 = vunpack.c.l.b16 %v2785
    %v3113 = vunpack.c.h.b16 %v2785
    %v3114 = vunpack.c.l.b16 %v2786
    %v3115 = vunpack.c.h.b16 %v2786
    %v3116 = vunpack.c.l.b16 %v2787
    %v3117 = vunpack.c.h.b16 %v2787
    %v3118 = vunpack.c.l.b16 %v2788
    %v3119 = vunpack.c.h.b16 %v2788
    %v3120 = vunpack.c.l.b16 %v2789
    %v3121 = vunpack.c.h.b16 %v2789
    %v3122 = vunpack.c.l.b16 %v2790
    %v3123 = vunpack.c.h.b16 %v2790
    %v3124 = vunpack.c.l.b16 %v2791
    %v3125 = vunpack.c.h.b16 %v2791
    %v3126 = vunpack.c.l.b16 %v2792
    %v3127 = vunpack.c.h.b16 %v2792
    %v3128 = vunpack.c.l.b16 %v2793
    %v3129 = vunpack.c.h.b16 %v2793
    %v3130 = vunpack.c.l.b16 %v2794
    %v3131 = vunpack.c.h.b16 %v2794
    %v3132 = vunpack.c.l.b16 %v2795
    %v3133 = vunpack.c.h.b16 %v2795
    %v3134 = vunpack.c.l.b16 %v2796
    %v3135 = vunpack.c.h.b16 %v2796
    %v3136 = vunpack.c.l.b16 %v2797
    %v3137 = vunpack.c.h.b16 %v2797
    %v3138 = vunpack.c.l.b16 %v2798
    %v3139 = vunpack.c.h.b16 %v2798
    %v3140 = vunpack.c.l.b16 %v2799
    %v3141 = vunpack.c.h.b16 %v2799
    %v3142 = vunpack.c.l.b16 %v2800
    %v3143 = vunpack.c.h.b16 %v2800
    %v3144 = vunpack.c.l.b16 %v2801
    %v3145 = vunpack.c.h.b16 %v2801
    %v3146 = vunpack.c.l.b16 %v2802
    %v3147 = vunpack.c.h.b16 %v2802
    %v3148 = vunpack.c.l.b16 %v2803
    %v3149 = vunpack.c.h.b16 %v2803
    %v3150 = vunpack.c.l.b16 %v2804
    %v3151 = vunpack.c.h.b16 %v2804
    %v3152 = vunpack.c.l.b16 %v2805
    %v3153 = vunpack.c.h.b16 %v2805
    %v3154 = vunpack.c.l.b16 %v2806
    %v3155 = vunpack.c.h.b16 %v2806
    %v3156 = vunpack.c.l.b16 %v2807
    %v3157 = vunpack.c.h.b16 %v2807
    %v3158 = vunpack.c.l.b16 %v2808
    %v3159 = vunpack.c.h.b16 %v2808
    %v3160 = vunpack.c.l.b16 %v2809
    %v3161 = vunpack.c.h.b16 %v2809
    %v3162 = vunpack.c.l.b16 %v2810
    %v3163 = vunpack.c.h.b16 %v2810
    %v3164 = vunpack.c.l.b16 %v2811
    %v3165 = vunpack.c.h.b16 %v2811
    %v3166 = vunpack.c.l.b16 %v2812
    %v3167 = vunpack.c.h.b16 %v2812
    %v3168 = vunpack.c.l.b16 %v2813
    %v3169 = vunpack.c.h.b16 %v2813
    %v3170 = vunpack.c.l.b16 %v2814
    %v3171 = vunpack.c.h.b16 %v2814
    %v3172 = vunpack.c.l.b16 %v2815
    %v3173 = vunpack.c.h.b16 %v2815
    %v3174 = vunpack.c.l.b16 %v2816
    %v3175 = vunpack.c.h.b16 %v2816
    %v3176 = vunpack.c.l.b16 %v2817
    %v3177 = vunpack.c.h.b16 %v2817
    %v3178 = vunpack.c.l.b16 %v2818
    %v3179 = vunpack.c.h.b16 %v2818
    %v3180 = vunpack.c.l.b16 %v2819
    %v3181 = vunpack.c.h.b16 %v2819
    %v3182 = vunpack.c.l.b16 %v2820
    %v3183 = vunpack.c.h.b16 %v2820
    %v3184 = vunpack.c.l.b16 %v2821
    %v3185 = vunpack.c.h.b16 %v2821
    %v3186 = vunpack.c.l.b16 %v2822
    %v3187 = vunpack.c.h.b16 %v2822
    %v3188 = vunpack.c.l.b16 %v2823
    %v3189 = vunpack.c.h.b16 %v2823
    %v3190 = vunpack.c.l.b16 %v2824
    %v3191 = vunpack.c.h.b16 %v2824
    %v3192 = vunpack.c.l.b16 %v2825
    %v3193 = vunpack.c.h.b16 %v2825
    %v3194 = vunpack.c.l.b16 %v2826
    %v3195 = vunpack.c.h.b16 %v2826
    %v3196 = vunpack.c.l.b16 %v2827
    %v3197 = vunpack.c.h.b16 %v2827
    %v3198 = vunpack.c.l.b16 %v2828
    %v3199 = vunpack.c.h.b16 %v2828
    %v3200 = vunpack.c.l.b16 %v2829
    %v3201 = vunpack.c.h.b16 %v2829
    %v3202 = vunpack.c.l.b16 %v2830
    %v3203 = vunpack.c.h.b16 %v2830
    %v3204 = vunpack.c.l.b16 %v2831
    %v3205 = vunpack.c.h.b16 %v2831
    %v3206 = vunpack.c.l.b16 %v2832
    %v3207 = vunpack.c.h.b16 %v2832
    %v3208 = vunpack.c.l.b16 %v2833
    %v3209 = vunpack.c.h.b16 %v2833
    %v3210 = vunpack.c.l.b16 %v2834
    %v3211 = vunpack.c.h.b16 %v2834
    %v3212 = vunpack.c.l.b16 %v2835
    %v3213 = vunpack.c.h.b16 %v2835
    %v3214 = vunpack.c.l.b16 %v2836
    %v3215 = vunpack.c.h.b16 %v2836
    %v3216 = vunpack.c.l.b16 %v2837
    %v3217 = vunpack.c.h.b16 %v2837
    %v3218 = vunpack.c.l.b16 %v2838
    %v3219 = vunpack.c.h.b16 %v2838
    %v3220 = vunpack.c.l.b16 %v2839
    %v3221 = vunpack.c.h.b16 %v2839
    %v3222 = vunpack.c.l.b16 %v2840
    %v3223 = vunpack.c.h.b16 %v2840
    %v3224 = vunpack.c.l.b16 %v2841
    %v3225 = vunpack.c.h.b16 %v2841
    %v3226 = vpack.c.b16 %v2974, %v2970
    %v3227 = vpack.c.b16 %v2975, %v2971
    %v3228 = vpack.c.b16 %v2976, %v2972
    %v3229 = vpack.c.b16 %v2977, %v2973
    %v3230 = vpack.c.b16 %v2982, %v2978
    %v3231 = vpack.c.b16 %v2983, %v2979
    %v3232 = vpack.c.b16 %v2984, %v2980
    %v3233 = vpack.c.b16 %v2985, %v2981
    %v3234 = vpack.c.b16 %v2990, %v2986
    %v3235 = vpack.c.b16 %v2991, %v2987
    %v3236 = vpack.c.b16 %v2992, %v2988
    %v3237 = vpack.c.b16 %v2993, %v2989
    %v3238 = vpack.c.b16 %v2998, %v2994
    %v3239 = vpack.c.b16 %v2999, %v2995
    %v3240 = vpack.c.b16 %v3000, %v2996
    %v3241 = vpack.c.b16 %v3001, %v2997
    %v3242 = vpack.c.b16 %v3006, %v3002
    %v3243 = vpack.c.b16 %v3007, %v3003
    %v3244 = vpack.c.b16 %v3008, %v3004
    %v3245 = vpack.c.b16 %v3009, %v3005
    %v3246 = vpack.c.b16 %v3014, %v3010
    %v3247 = vpack.c.b16 %v3015, %v3011
    %v3248 = vpack.c.b16 %v3016, %v3012
    %v3249 = vpack.c.b16 %v3017, %v3013
    %v3250 = vpack.c.b16 %v3022, %v3018
    %v3251 = vpack.c.b16 %v3023, %v3019
    %v3252 = vpack.c.b16 %v3024, %v3020
    %v3253 = vpack.c.b16 %v3025, %v3021
    %v3254 = vpack.c.b16 %v3030, %v3026
    %v3255 = vpack.c.b16 %v3031, %v3027
    %v3256 = vpack.c.b16 %v3032, %v3028
    %v3257 = vpack.c.b16 %v3033, %v3029
    %v3258 = vpack.c.b16 %v3038, %v3034
    %v3259 = vpack.c.b16 %v3039, %v3035
    %v3260 = vpack.c.b16 %v3040, %v3036
    %v3261 = vpack.c.b16 %v3041, %v3037
    %v3262 = vpack.c.b16 %v3046, %v3042
    %v3263 = vpack.c.b16 %v3047, %v3043
    %v3264 = vpack.c.b16 %v3048, %v3044
    %v3265 = vpack.c.b16 %v3049, %v3045
    %v3266 = vpack.c.b16 %v3054, %v3050
    %v3267 = vpack.c.b16 %v3055, %v3051
    %v3268 = vpack.c.b16 %v3056, %v3052
    %v3269 = vpack.c.b16 %v3057, %v3053
    %v3270 = vpack.c.b16 %v3062, %v3058
    %v3271 = vpack.c.b16 %v3063, %v3059
    %v3272 = vpack.c.b16 %v3064, %v3060
    %v3273 = vpack.c.b16 %v3065, %v3061
    %v3274 = vpack.c.b16 %v3070, %v3066
    %v3275 = vpack.c.b16 %v3071, %v3067
    %v3276 = vpack.c.b16 %v3072, %v3068
    %v3277 = vpack.c.b16 %v3073, %v3069
    %v3278 = vpack.c.b16 %v3078, %v3074
    %v3279 = vpack.c.b16 %v3079, %v3075
    %v3280 = vpack.c.b16 %v3080, %v3076
    %v3281 = vpack.c.b16 %v3081, %v3077
    %v3282 = vpack.c.b16 %v3086, %v3082
    %v3283 = vpack.c.b16 %v3087, %v3083
    %v3284 = vpack.c.b16 %v3088, %v3084
    %v3285 = vpack.c.b16 %v3089, %v3085
    %v3286 = vpack.c.b16 %v3094, %v3090
    %v3287 = vpack.c.b16 %v3095, %v3091
    %v3288 = vpack.c.b16 %v3096, %v3092
    %v3289 = vpack.c.b16 %v3097, %v3093
    %v3290 = vpack.c.b16 %v3102, %v3098
    %v3291 = vpack.c.b16 %v3103, %v3099
    %v3292 = vpack.c.b16 %v3104, %v3100
    %v3293 = vpack.c.b16 %v3105, %v3101
    %v3294 = vpack.c.b16 %v3110, %v3106
    %v3295 = vpack.c.b16 %v3111, %v3107
    %v3296 = vpack.c.b16 %v3112, %v3108
    %v3297 = vpack.c.b16 %v3113, %v3109
    %v3298 = vpack.c.b16 %v3118, %v3114
    %v3299 = vpack.c.b16 %v3119, %v3115
    %v3300 = vpack.c.b16 %v3120, %v3116
    %v3301 = vpack.c.b16 %v3121, %v3117
    %v3302 = vpack.c.b16 %v3126, %v3122
    %v3303 = vpack.c.b16 %v3127, %v3123
    %v3304 = vpack.c.b16 %v3128, %v3124
    %v3305 = vpack.c.b16 %v3129, %v3125
    %v3306 = vpack.c.b16 %v3134, %v3130
    %v3307 = vpack.c.b16 %v3135, %v3131
    %v3308 = vpack.c.b16 %v3136, %v3132
    %v3309 = vpack.c.b16 %v3137, %v3133
    %v3310 = vpack.c.b16 %v3142, %v3138
    %v3311 = vpack.c.b16 %v3143, %v3139
    %v3312 = vpack.c.b16 %v3144, %v3140
    %v3313 = vpack.c.b16 %v3145, %v3141
    %v3314 = vpack.c.b16 %v3150, %v3146
    %v3315 = vpack.c.b16 %v3151, %v3147
    %v3316 = vpack.c.b16 %v3152, %v3148
    %v3317 = vpack.c.b16 %v3153, %v3149
    %v3318 = vpack.c.b16 %v3158, %v3154
    %v3319 = vpack.c.b16 %v3159, %v3155
    %v3320 = vpack.c.b16 %v3160, %v3156
    %v3321 = vpack.c.b16 %v3161, %v3157
    %v3322 = vpack.c.b16 %v3166, %v3162
    %v3323 = vpack.c.b16 %v3167, %v3163
    %v3324 = vpack.c.b16 %v3168, %v3164
    %v3325 = vpack.c.b16 %v3169, %v3165
    %v3326 = vpack.c.b16 %v3174, %v3170
    %v3327 = vpack.c.b16 %v3175, %v3171
    %v3328 = vpack.c.b16 %v3176, %v3172
    %v3329 = vpack.c.b16 %v3177, %v3173
    %v3330 = vpack.c.b16 %v3182, %v3178
    %v3331 = vpack.c.b16 %v3183, %v3179
    %v3332 = vpack.c.b16 %v3184, %v3180
    %v3333 = vpack.c.b16 %v3185, %v3181
    %v3334 = vpack.c.b16 %v3190, %v3186
    %v3335 = vpack.c.b16 %v3191, %v3187
    %v3336 = vpack.c.b16 %v3192, %v3188
    %v3337 = vpack.c.b16 %v3193, %v3189
    %v3338 = vpack.c.b16 %v3198, %v3194
    %v3339 = vpack.c.b16 %v3199, %v3195
    %v3340 = vpack.c.b16 %v3200, %v3196
    %v3341 = vpack.c.b16 %v3201, %v3197
    %v3342 = vpack.c.b16 %v3206, %v3202
    %v3343 = vpack.c.b16 %v3207, %v3203
    %v3344 = vpack.c.b16 %v3208, %v3204
    %v3345 = vpack.c.b16 %v3209, %v3205
    %v3346 = vpack.c.b16 %v3214, %v3210
    %v3347 = vpack.c.b16 %v3215, %v3211
    %v3348 = vpack.c.b16 %v3216, %v3212
    %v3349 = vpack.c.b16 %v3217, %v3213
    %v3350 = vpack.c.b16 %v3222, %v3218
    %v3351 = vpack.c.b16 %v3223, %v3219
    %v3352 = vpack.c.b16 %v3224, %v3220
    %v3353 = vpack.c.b16 %v3225, %v3221
    %3482 = vmatpush.bf16.msra.mxu0 %v3254
    %3483 = vmatpush.bf16.msra.mxu0 %v3250
    %3484 = vmatpush.bf16.msra.mxu0 %v3246
    %3485 = vmatpush.bf16.msra.mxu0 %v3242
    %3486 = vmatpush.bf16.msra.mxu0 %v3238
    %3487 = vmatpush.bf16.msra.mxu0 %v3234
    %3488 = vmatpush.bf16.msra.mxu0 %v3230
    %3489 = vmatpush.bf16.msra.mxu0 %v3226
    %3490 = vmatmul.bf16.gmra.mxu0 %v2706
    %v3491 = vpop.f32.mrf.mxu0
    %v3492 = vadd.f32 0.0, %v3491
    %v3493 = vpop.f32.mrf.mxu0
    %v3494 = vadd.f32 0.0, %v3493
    %3495 = vmatmul.bf16.gmra.mxu0 %v2710
    %v3496 = vpop.f32.mrf.mxu0
    %v3497 = vadd.f32 0.0, %v3496
    %v3498 = vpop.f32.mrf.mxu0
    %v3499 = vadd.f32 0.0, %v3498
    %3500 = vdwg.mxu0
    %3501 = vmatpush.bf16.msra.mxu0 %v3286
    %3502 = vmatpush.bf16.msra.mxu0 %v3282
    %3503 = vmatpush.bf16.msra.mxu0 %v3278
    %3504 = vmatpush.bf16.msra.mxu0 %v3274
    %3505 = vmatpush.bf16.msra.mxu0 %v3270
    %3506 = vmatpush.bf16.msra.mxu0 %v3266
    %3507 = vmatpush.bf16.msra.mxu0 %v3262
    %3508 = vmatpush.bf16.msra.mxu0 %v3258
    %3509 = vmatmul.bf16.gmra.mxu0 %v2707
    %v3510 = vpop.f32.mrf.mxu0
    %v3511 = vadd.f32 %v3492, %v3510
    %v3512 = vpop.f32.mrf.mxu0
    %v3513 = vadd.f32 %v3494, %v3512
    %3514 = vmatmul.bf16.gmra.mxu0 %v2711
    %v3515 = vpop.f32.mrf.mxu0
    %v3516 = vadd.f32 %v3497, %v3515
    %v3517 = vpop.f32.mrf.mxu0
    %v3518 = vadd.f32 %v3499, %v3517
    %3519 = vdwg.mxu0
    %3520 = vmatpush.bf16.msra.mxu0 %v3318
    %3521 = vmatpush.bf16.msra.mxu0 %v3314
    %3522 = vmatpush.bf16.msra.mxu0 %v3310
    %3523 = vmatpush.bf16.msra.mxu0 %v3306
    %3524 = vmatpush.bf16.msra.mxu0 %v3302
    %3525 = vmatpush.bf16.msra.mxu0 %v3298
    %3526 = vmatpush.bf16.msra.mxu0 %v3294
    %3527 = vmatpush.bf16.msra.mxu0 %v3290
    %3528 = vmatmul.bf16.gmra.mxu0 %v2708
    %v3529 = vpop.f32.mrf.mxu0
    %v3530 = vadd.f32 %v3511, %v3529
    %v3531 = vpop.f32.mrf.mxu0
    %v3532 = vadd.f32 %v3513, %v3531
    %3533 = vmatmul.bf16.gmra.mxu0 %v2712
    %v3534 = vpop.f32.mrf.mxu0
    %v3535 = vadd.f32 %v3516, %v3534
    %v3536 = vpop.f32.mrf.mxu0
    %v3537 = vadd.f32 %v3518, %v3536
    %3538 = vdwg.mxu0
    %3539 = vmatpush.bf16.msra.mxu0 %v3350
    %3540 = vmatpush.bf16.msra.mxu0 %v3346
    %3541 = vmatpush.bf16.msra.mxu0 %v3342
    %3542 = vmatpush.bf16.msra.mxu0 %v3338
    %3543 = vmatpush.bf16.msra.mxu0 %v3334
    %3544 = vmatpush.bf16.msra.mxu0 %v3330
    %3545 = vmatpush.bf16.msra.mxu0 %v3326
    %3546 = vmatpush.bf16.msra.mxu0 %v3322
    %3547 = vmatmul.bf16.gmra.mxu0 %v2709
    %v3548 = vpop.f32.mrf.mxu0
    %v3549 = vadd.f32 %v3530, %v3548
    %v3550 = vpop.f32.mrf.mxu0
    %v3551 = vadd.f32 %v3532, %v3550
    %3552 = vmatmul.bf16.gmra.mxu0 %v2713
    %v3553 = vpop.f32.mrf.mxu0
    %v3554 = vadd.f32 %v3535, %v3553
    %v3555 = vpop.f32.mrf.mxu0
    %v3556 = vadd.f32 %v3537, %v3555
    %3557 = vdwg.mxu0
    %3558 = vmatpush.bf16.msra.mxu0 %v3255
    %3559 = vmatpush.bf16.msra.mxu0 %v3251
    %3560 = vmatpush.bf16.msra.mxu0 %v3247
    %3561 = vmatpush.bf16.msra.mxu0 %v3243
    %3562 = vmatpush.bf16.msra.mxu0 %v3239
    %3563 = vmatpush.bf16.msra.mxu0 %v3235
    %3564 = vmatpush.bf16.msra.mxu0 %v3231
    %3565 = vmatpush.bf16.msra.mxu0 %v3227
    %3566 = vmatmul.bf16.gmra.mxu0 %v2706
    %v3567 = vpop.f32.mrf.mxu0
    %v3568 = vadd.f32 0.0, %v3567
    %v3569 = vpop.f32.mrf.mxu0
    %v3570 = vadd.f32 0.0, %v3569
    %3571 = vmatmul.bf16.gmra.mxu0 %v2710
    %v3572 = vpop.f32.mrf.mxu0
    %v3573 = vadd.f32 0.0, %v3572
    %v3574 = vpop.f32.mrf.mxu0
    %v3575 = vadd.f32 0.0, %v3574
    %3576 = vdwg.mxu0
    %3577 = vmatpush.bf16.msra.mxu0 %v3287
    %3578 = vmatpush.bf16.msra.mxu0 %v3283
    %3579 = vmatpush.bf16.msra.mxu0 %v3279
    %3580 = vmatpush.bf16.msra.mxu0 %v3275
    %3581 = vmatpush.bf16.msra.mxu0 %v3271
    %3582 = vmatpush.bf16.msra.mxu0 %v3267
    %3583 = vmatpush.bf16.msra.mxu0 %v3263
    %3584 = vmatpush.bf16.msra.mxu0 %v3259
    %3585 = vmatmul.bf16.gmra.mxu0 %v2707
    %v3586 = vpop.f32.mrf.mxu0
    %v3587 = vadd.f32 %v3568, %v3586
    %v3588 = vpop.f32.mrf.mxu0
    %v3589 = vadd.f32 %v3570, %v3588
    %3590 = vmatmul.bf16.gmra.mxu0 %v2711
    %v3591 = vpop.f32.mrf.mxu0
    %v3592 = vadd.f32 %v3573, %v3591
    %v3593 = vpop.f32.mrf.mxu0
    %v3594 = vadd.f32 %v3575, %v3593
    %3595 = vdwg.mxu0
    %3596 = vmatpush.bf16.msra.mxu0 %v3319
    %3597 = vmatpush.bf16.msra.mxu0 %v3315
    %3598 = vmatpush.bf16.msra.mxu0 %v3311
    %3599 = vmatpush.bf16.msra.mxu0 %v3307
    %3600 = vmatpush.bf16.msra.mxu0 %v3303
    %3601 = vmatpush.bf16.msra.mxu0 %v3299
    %3602 = vmatpush.bf16.msra.mxu0 %v3295
    %3603 = vmatpush.bf16.msra.mxu0 %v3291
    %3604 = vmatmul.bf16.gmra.mxu0 %v2708
    %v3605 = vpop.f32.mrf.mxu0
    %v3606 = vadd.f32 %v3587, %v3605
    %v3607 = vpop.f32.mrf.mxu0
    %v3608 = vadd.f32 %v3589, %v3607
    %3609 = vmatmul.bf16.gmra.mxu0 %v2712
    %v3610 = vpop.f32.mrf.mxu0
    %v3611 = vadd.f32 %v3592, %v3610
    %v3612 = vpop.f32.mrf.mxu0
    %v3613 = vadd.f32 %v3594, %v3612
    %3614 = vdwg.mxu0
    %3615 = vmatpush.bf16.msra.mxu0 %v3351
    %3616 = vmatpush.bf16.msra.mxu0 %v3347
    %3617 = vmatpush.bf16.msra.mxu0 %v3343
    %3618 = vmatpush.bf16.msra.mxu0 %v3339
    %3619 = vmatpush.bf16.msra.mxu0 %v3335
    %3620 = vmatpush.bf16.msra.mxu0 %v3331
    %3621 = vmatpush.bf16.msra.mxu0 %v3327
    %3622 = vmatpush.bf16.msra.mxu0 %v3323
    %3623 = vmatmul.bf16.gmra.mxu0 %v2709
    %v3624 = vpop.f32.mrf.mxu0
    %v3625 = vadd.f32 %v3606, %v3624
    %v3626 = vpop.f32.mrf.mxu0
    %v3627 = vadd.f32 %v3608, %v3626
    %3628 = vmatmul.bf16.gmra.mxu0 %v2713
    %v3629 = vpop.f32.mrf.mxu0
    %v3630 = vadd.f32 %v3611, %v3629
    %v3631 = vpop.f32.mrf.mxu0
    %v3632 = vadd.f32 %v3613, %v3631
    %3633 = vdwg.mxu0
    %3634 = vmatpush.bf16.msra.mxu0 %v3256
    %3635 = vmatpush.bf16.msra.mxu0 %v3252
    %3636 = vmatpush.bf16.msra.mxu0 %v3248
    %3637 = vmatpush.bf16.msra.mxu0 %v3244
    %3638 = vmatpush.bf16.msra.mxu0 %v3240
    %3639 = vmatpush.bf16.msra.mxu0 %v3236
    %3640 = vmatpush.bf16.msra.mxu0 %v3232
    %3641 = vmatpush.bf16.msra.mxu0 %v3228
    %3642 = vmatmul.bf16.gmra.mxu0 %v2706
    %v3643 = vpop.f32.mrf.mxu0
    %v3644 = vadd.f32 0.0, %v3643
    %v3645 = vpop.f32.mrf.mxu0
    %v3646 = vadd.f32 0.0, %v3645
    %3647 = vmatmul.bf16.gmra.mxu0 %v2710
    %v3648 = vpop.f32.mrf.mxu0
    %v3649 = vadd.f32 0.0, %v3648
    %v3650 = vpop.f32.mrf.mxu0
    %v3651 = vadd.f32 0.0, %v3650
    %3652 = vdwg.mxu0
    %3653 = vmatpush.bf16.msra.mxu0 %v3288
    %3654 = vmatpush.bf16.msra.mxu0 %v3284
    %3655 = vmatpush.bf16.msra.mxu0 %v3280
    %3656 = vmatpush.bf16.msra.mxu0 %v3276
    %3657 = vmatpush.bf16.msra.mxu0 %v3272
    %3658 = vmatpush.bf16.msra.mxu0 %v3268
    %3659 = vmatpush.bf16.msra.mxu0 %v3264
    %3660 = vmatpush.bf16.msra.mxu0 %v3260
    %3661 = vmatmul.bf16.gmra.mxu0 %v2707
    %v3662 = vpop.f32.mrf.mxu0
    %v3663 = vadd.f32 %v3644, %v3662
    %v3664 = vpop.f32.mrf.mxu0
    %v3665 = vadd.f32 %v3646, %v3664
    %3666 = vmatmul.bf16.gmra.mxu0 %v2711
    %v3667 = vpop.f32.mrf.mxu0
    %v3668 = vadd.f32 %v3649, %v3667
    %v3669 = vpop.f32.mrf.mxu0
    %v3670 = vadd.f32 %v3651, %v3669
    %3671 = vdwg.mxu0
    %3672 = vmatpush.bf16.msra.mxu0 %v3320
    %3673 = vmatpush.bf16.msra.mxu0 %v3316
    %3674 = vmatpush.bf16.msra.mxu0 %v3312
    %3675 = vmatpush.bf16.msra.mxu0 %v3308
    %3676 = vmatpush.bf16.msra.mxu0 %v3304
    %3677 = vmatpush.bf16.msra.mxu0 %v3300
    %3678 = vmatpush.bf16.msra.mxu0 %v3296
    %3679 = vmatpush.bf16.msra.mxu0 %v3292
    %3680 = vmatmul.bf16.gmra.mxu0 %v2708
    %v3681 = vpop.f32.mrf.mxu0
    %v3682 = vadd.f32 %v3663, %v3681
    %v3683 = vpop.f32.mrf.mxu0
    %v3684 = vadd.f32 %v3665, %v3683
    %3685 = vmatmul.bf16.gmra.mxu0 %v2712
    %v3686 = vpop.f32.mrf.mxu0
    %v3687 = vadd.f32 %v3668, %v3686
    %v3688 = vpop.f32.mrf.mxu0
    %v3689 = vadd.f32 %v3670, %v3688
    %3690 = vdwg.mxu0
    %3691 = vmatpush.bf16.msra.mxu0 %v3352
    %3692 = vmatpush.bf16.msra.mxu0 %v3348
    %3693 = vmatpush.bf16.msra.mxu0 %v3344
    %3694 = vmatpush.bf16.msra.mxu0 %v3340
    %3695 = vmatpush.bf16.msra.mxu0 %v3336
    %3696 = vmatpush.bf16.msra.mxu0 %v3332
    %3697 = vmatpush.bf16.msra.mxu0 %v3328
    %3698 = vmatpush.bf16.msra.mxu0 %v3324
    %3699 = vmatmul.bf16.gmra.mxu0 %v2709
    %v3700 = vpop.f32.mrf.mxu0
    %v3701 = vadd.f32 %v3682, %v3700
    %v3702 = vpop.f32.mrf.mxu0
    %v3703 = vadd.f32 %v3684, %v3702
    %3704 = vmatmul.bf16.gmra.mxu0 %v2713
    %v3705 = vpop.f32.mrf.mxu0
    %v3706 = vadd.f32 %v3687, %v3705
    %v3707 = vpop.f32.mrf.mxu0
    %v3708 = vadd.f32 %v3689, %v3707
    %3709 = vdwg.mxu0
    %3710 = vmatpush.bf16.msra.mxu0 %v3257
    %3711 = vmatpush.bf16.msra.mxu0 %v3253
    %3712 = vmatpush.bf16.msra.mxu0 %v3249
    %3713 = vmatpush.bf16.msra.mxu0 %v3245
    %3714 = vmatpush.bf16.msra.mxu0 %v3241
    %3715 = vmatpush.bf16.msra.mxu0 %v3237
    %3716 = vmatpush.bf16.msra.mxu0 %v3233
    %3717 = vmatpush.bf16.msra.mxu0 %v3229
    %3718 = vmatmul.bf16.gmra.mxu0 %v2706
    %v3719 = vpop.f32.mrf.mxu0
    %v3720 = vadd.f32 0.0, %v3719
    %v3721 = vpop.f32.mrf.mxu0
    %v3722 = vadd.f32 0.0, %v3721
    %3723 = vmatmul.bf16.gmra.mxu0 %v2710
    %v3724 = vpop.f32.mrf.mxu0
    %v3725 = vadd.f32 0.0, %v3724
    %v3726 = vpop.f32.mrf.mxu0
    %v3727 = vadd.f32 0.0, %v3726
    %3728 = vdwg.mxu0
    %3729 = vmatpush.bf16.msra.mxu0 %v3289
    %3730 = vmatpush.bf16.msra.mxu0 %v3285
    %3731 = vmatpush.bf16.msra.mxu0 %v3281
    %3732 = vmatpush.bf16.msra.mxu0 %v3277
    %3733 = vmatpush.bf16.msra.mxu0 %v3273
    %3734 = vmatpush.bf16.msra.mxu0 %v3269
    %3735 = vmatpush.bf16.msra.mxu0 %v3265
    %3736 = vmatpush.bf16.msra.mxu0 %v3261
    %3737 = vmatmul.bf16.gmra.mxu0 %v2707
    %v3738 = vpop.f32.mrf.mxu0
    %v3739 = vadd.f32 %v3720, %v3738
    %v3740 = vpop.f32.mrf.mxu0
    %v3741 = vadd.f32 %v3722, %v3740
    %3742 = vmatmul.bf16.gmra.mxu0 %v2711
    %v3743 = vpop.f32.mrf.mxu0
    %v3744 = vadd.f32 %v3725, %v3743
    %v3745 = vpop.f32.mrf.mxu0
    %v3746 = vadd.f32 %v3727, %v3745
    %3747 = vdwg.mxu0
    %3748 = vmatpush.bf16.msra.mxu0 %v3321
    %3749 = vmatpush.bf16.msra.mxu0 %v3317
    %3750 = vmatpush.bf16.msra.mxu0 %v3313
    %3751 = vmatpush.bf16.msra.mxu0 %v3309
    %3752 = vmatpush.bf16.msra.mxu0 %v3305
    %3753 = vmatpush.bf16.msra.mxu0 %v3301
    %3754 = vmatpush.bf16.msra.mxu0 %v3297
    %3755 = vmatpush.bf16.msra.mxu0 %v3293
    %3756 = vmatmul.bf16.gmra.mxu0 %v2708
    %v3757 = vpop.f32.mrf.mxu0
    %v3758 = vadd.f32 %v3739, %v3757
    %v3759 = vpop.f32.mrf.mxu0
    %v3760 = vadd.f32 %v3741, %v3759
    %3761 = vmatmul.bf16.gmra.mxu0 %v2712
    %v3762 = vpop.f32.mrf.mxu0
    %v3763 = vadd.f32 %v3744, %v3762
    %v3764 = vpop.f32.mrf.mxu0
    %v3765 = vadd.f32 %v3746, %v3764
    %3766 = vdwg.mxu0
    %3767 = vmatpush.bf16.msra.mxu0 %v3353
    %3768 = vmatpush.bf16.msra.mxu0 %v3349
    %3769 = vmatpush.bf16.msra.mxu0 %v3345
    %3770 = vmatpush.bf16.msra.mxu0 %v3341
    %3771 = vmatpush.bf16.msra.mxu0 %v3337
    %3772 = vmatpush.bf16.msra.mxu0 %v3333
    %3773 = vmatpush.bf16.msra.mxu0 %v3329
    %3774 = vmatpush.bf16.msra.mxu0 %v3325
    %3775 = vmatmul.bf16.gmra.mxu0 %v2709
    %v3776 = vpop.f32.mrf.mxu0
    %v3777 = vadd.f32 %v3758, %v3776
    %v3778 = vpop.f32.mrf.mxu0
    %v3779 = vadd.f32 %v3760, %v3778
    %3780 = vmatmul.bf16.gmra.mxu0 %v2713
    %v3781 = vpop.f32.mrf.mxu0
    %v3782 = vadd.f32 %v3763, %v3781
    %v3783 = vpop.f32.mrf.mxu0
    %v3784 = vadd.f32 %v3765, %v3783
    %3785 = vdwg.mxu0
    %v3914 = vunpack.c.l.b16 %v1480
    %v3915 = vunpack.c.h.b16 %v1480
    %v3916 = vunpack.c.l.b16 %v1481
    %v3917 = vunpack.c.h.b16 %v1481
    %v3918 = vunpack.c.l.b16 %v1482
    %v3919 = vunpack.c.h.b16 %v1482
    %v3920 = vunpack.c.l.b16 %v1483
    %v3921 = vunpack.c.h.b16 %v1483
    %v3922 = vunpack.c.l.b16 %v1484
    %v3923 = vunpack.c.h.b16 %v1484
    %v3924 = vunpack.c.l.b16 %v1485
    %v3925 = vunpack.c.h.b16 %v1485
    %v3926 = vunpack.c.l.b16 %v1486
    %v3927 = vunpack.c.h.b16 %v1486
    %v3928 = vunpack.c.l.b16 %v1487
    %v3929 = vunpack.c.h.b16 %v1487
    %v3930 = vunpack.c.l.b16 %v1488
    %v3931 = vunpack.c.h.b16 %v1488
    %v3932 = vunpack.c.l.b16 %v1489
    %v3933 = vunpack.c.h.b16 %v1489
    %v3934 = vunpack.c.l.b16 %v1490
    %v3935 = vunpack.c.h.b16 %v1490
    %v3936 = vunpack.c.l.b16 %v1491
    %v3937 = vunpack.c.h.b16 %v1491
    %v3938 = vunpack.c.l.b16 %v1492
    %v3939 = vunpack.c.h.b16 %v1492
    %v3940 = vunpack.c.l.b16 %v1493
    %v3941 = vunpack.c.h.b16 %v1493
    %v3942 = vunpack.c.l.b16 %v1494
    %v3943 = vunpack.c.h.b16 %v1494
    %v3944 = vunpack.c.l.b16 %v1495
    %v3945 = vunpack.c.h.b16 %v1495
    %v3946 = vunpack.c.l.b16 %v1496
    %v3947 = vunpack.c.h.b16 %v1496
    %v3948 = vunpack.c.l.b16 %v1497
    %v3949 = vunpack.c.h.b16 %v1497
    %v3950 = vunpack.c.l.b16 %v1498
    %v3951 = vunpack.c.h.b16 %v1498
    %v3952 = vunpack.c.l.b16 %v1499
    %v3953 = vunpack.c.h.b16 %v1499
    %v3954 = vunpack.c.l.b16 %v1500
    %v3955 = vunpack.c.h.b16 %v1500
    %v3956 = vunpack.c.l.b16 %v1501
    %v3957 = vunpack.c.h.b16 %v1501
    %v3958 = vunpack.c.l.b16 %v1502
    %v3959 = vunpack.c.h.b16 %v1502
    %v3960 = vunpack.c.l.b16 %v1503
    %v3961 = vunpack.c.h.b16 %v1503
    %v3962 = vunpack.c.l.b16 %v1504
    %v3963 = vunpack.c.h.b16 %v1504
    %v3964 = vunpack.c.l.b16 %v1505
    %v3965 = vunpack.c.h.b16 %v1505
    %v3966 = vunpack.c.l.b16 %v1506
    %v3967 = vunpack.c.h.b16 %v1506
    %v3968 = vunpack.c.l.b16 %v1507
    %v3969 = vunpack.c.h.b16 %v1507
    %v3970 = vunpack.c.l.b16 %v1508
    %v3971 = vunpack.c.h.b16 %v1508
    %v3972 = vunpack.c.l.b16 %v1509
    %v3973 = vunpack.c.h.b16 %v1509
    %v3974 = vunpack.c.l.b16 %v1510
    %v3975 = vunpack.c.h.b16 %v1510
    %v3976 = vunpack.c.l.b16 %v1511
    %v3977 = vunpack.c.h.b16 %v1511
    %v3978 = vunpack.c.l.b16 %v1512
    %v3979 = vunpack.c.h.b16 %v1512
    %v3980 = vunpack.c.l.b16 %v1513
    %v3981 = vunpack.c.h.b16 %v1513
    %v3982 = vunpack.c.l.b16 %v1514
    %v3983 = vunpack.c.h.b16 %v1514
    %v3984 = vunpack.c.l.b16 %v1515
    %v3985 = vunpack.c.h.b16 %v1515
    %v3986 = vunpack.c.l.b16 %v1516
    %v3987 = vunpack.c.h.b16 %v1516
    %v3988 = vunpack.c.l.b16 %v1517
    %v3989 = vunpack.c.h.b16 %v1517
    %v3990 = vunpack.c.l.b16 %v1518
    %v3991 = vunpack.c.h.b16 %v1518
    %v3992 = vunpack.c.l.b16 %v1519
    %v3993 = vunpack.c.h.b16 %v1519
    %v3994 = vunpack.c.l.b16 %v1520
    %v3995 = vunpack.c.h.b16 %v1520
    %v3996 = vunpack.c.l.b16 %v1521
    %v3997 = vunpack.c.h.b16 %v1521
    %v3998 = vunpack.c.l.b16 %v1522
    %v3999 = vunpack.c.h.b16 %v1522
    %v4000 = vunpack.c.l.b16 %v1523
    %v4001 = vunpack.c.h.b16 %v1523
    %v4002 = vunpack.c.l.b16 %v1524
    %v4003 = vunpack.c.h.b16 %v1524
    %v4004 = vunpack.c.l.b16 %v1525
    %v4005 = vunpack.c.h.b16 %v1525
    %v4006 = vunpack.c.l.b16 %v1526
    %v4007 = vunpack.c.h.b16 %v1526
    %v4008 = vunpack.c.l.b16 %v1527
    %v4009 = vunpack.c.h.b16 %v1527
    %v4010 = vunpack.c.l.b16 %v1528
    %v4011 = vunpack.c.h.b16 %v1528
    %v4012 = vunpack.c.l.b16 %v1529
    %v4013 = vunpack.c.h.b16 %v1529
    %v4014 = vunpack.c.l.b16 %v1530
    %v4015 = vunpack.c.h.b16 %v1530
    %v4016 = vunpack.c.l.b16 %v1531
    %v4017 = vunpack.c.h.b16 %v1531
    %v4018 = vunpack.c.l.b16 %v1532
    %v4019 = vunpack.c.h.b16 %v1532
    %v4020 = vunpack.c.l.b16 %v1533
    %v4021 = vunpack.c.h.b16 %v1533
    %v4022 = vunpack.c.l.b16 %v1534
    %v4023 = vunpack.c.h.b16 %v1534
    %v4024 = vunpack.c.l.b16 %v1535
    %v4025 = vunpack.c.h.b16 %v1535
    %v4026 = vunpack.c.l.b16 %v1536
    %v4027 = vunpack.c.h.b16 %v1536
    %v4028 = vunpack.c.l.b16 %v1537
    %v4029 = vunpack.c.h.b16 %v1537
    %v4030 = vunpack.c.l.b16 %v1538
    %v4031 = vunpack.c.h.b16 %v1538
    %v4032 = vunpack.c.l.b16 %v1539
    %v4033 = vunpack.c.h.b16 %v1539
    %v4034 = vunpack.c.l.b16 %v1540
    %v4035 = vunpack.c.h.b16 %v1540
    %v4036 = vunpack.c.l.b16 %v1541
    %v4037 = vunpack.c.h.b16 %v1541
    %v4038 = vunpack.c.l.b16 %v1542
    %v4039 = vunpack.c.h.b16 %v1542
    %v4040 = vunpack.c.l.b16 %v1543
    %v4041 = vunpack.c.h.b16 %v1543
    %v4042 = vunpack.c.l.b16 %v1544
    %v4043 = vunpack.c.h.b16 %v1544
    %v4044 = vunpack.c.l.b16 %v1545
    %v4045 = vunpack.c.h.b16 %v1545
    %v4046 = vunpack.c.l.b16 %v1546
    %v4047 = vunpack.c.h.b16 %v1546
    %v4048 = vunpack.c.l.b16 %v1547
    %v4049 = vunpack.c.h.b16 %v1547
    %v4050 = vunpack.c.l.b16 %v1548
    %v4051 = vunpack.c.h.b16 %v1548
    %v4052 = vunpack.c.l.b16 %v1549
    %v4053 = vunpack.c.h.b16 %v1549
    %v4054 = vunpack.c.l.b16 %v1550
    %v4055 = vunpack.c.h.b16 %v1550
    %v4056 = vunpack.c.l.b16 %v1551
    %v4057 = vunpack.c.h.b16 %v1551
    %v4058 = vunpack.c.l.b16 %v1552
    %v4059 = vunpack.c.h.b16 %v1552
    %v4060 = vunpack.c.l.b16 %v1553
    %v4061 = vunpack.c.h.b16 %v1553
    %v4062 = vunpack.c.l.b16 %v1554
    %v4063 = vunpack.c.h.b16 %v1554
    %v4064 = vunpack.c.l.b16 %v1555
    %v4065 = vunpack.c.h.b16 %v1555
    %v4066 = vunpack.c.l.b16 %v1556
    %v4067 = vunpack.c.h.b16 %v1556
    %v4068 = vunpack.c.l.b16 %v1557
    %v4069 = vunpack.c.h.b16 %v1557
    %v4070 = vunpack.c.l.b16 %v1558
    %v4071 = vunpack.c.h.b16 %v1558
    %v4072 = vunpack.c.l.b16 %v1559
    %v4073 = vunpack.c.h.b16 %v1559
    %v4074 = vunpack.c.l.b16 %v1560
    %v4075 = vunpack.c.h.b16 %v1560
    %v4076 = vunpack.c.l.b16 %v1561
    %v4077 = vunpack.c.h.b16 %v1561
    %v4078 = vunpack.c.l.b16 %v1562
    %v4079 = vunpack.c.h.b16 %v1562
    %v4080 = vunpack.c.l.b16 %v1563
    %v4081 = vunpack.c.h.b16 %v1563
    %v4082 = vunpack.c.l.b16 %v1564
    %v4083 = vunpack.c.h.b16 %v1564
    %v4084 = vunpack.c.l.b16 %v1565
    %v4085 = vunpack.c.h.b16 %v1565
    %v4086 = vunpack.c.l.b16 %v1566
    %v4087 = vunpack.c.h.b16 %v1566
    %v4088 = vunpack.c.l.b16 %v1567
    %v4089 = vunpack.c.h.b16 %v1567
    %v4090 = vunpack.c.l.b16 %v1568
    %v4091 = vunpack.c.h.b16 %v1568
    %v4092 = vunpack.c.l.b16 %v1569
    %v4093 = vunpack.c.h.b16 %v1569
    %v4094 = vunpack.c.l.b16 %v1570
    %v4095 = vunpack.c.h.b16 %v1570
    %v4096 = vunpack.c.l.b16 %v1571
    %v4097 = vunpack.c.h.b16 %v1571
    %v4098 = vunpack.c.l.b16 %v1572
    %v4099 = vunpack.c.h.b16 %v1572
    %v4100 = vunpack.c.l.b16 %v1573
    %v4101 = vunpack.c.h.b16 %v1573
    %v4102 = vunpack.c.l.b16 %v1574
    %v4103 = vunpack.c.h.b16 %v1574
    %v4104 = vunpack.c.l.b16 %v1575
    %v4105 = vunpack.c.h.b16 %v1575
    %v4106 = vunpack.c.l.b16 %v1576
    %v4107 = vunpack.c.h.b16 %v1576
    %v4108 = vunpack.c.l.b16 %v1577
    %v4109 = vunpack.c.h.b16 %v1577
    %v4110 = vunpack.c.l.b16 %v1578
    %v4111 = vunpack.c.h.b16 %v1578
    %v4112 = vunpack.c.l.b16 %v1579
    %v4113 = vunpack.c.h.b16 %v1579
    %v4114 = vunpack.c.l.b16 %v1580
    %v4115 = vunpack.c.h.b16 %v1580
    %v4116 = vunpack.c.l.b16 %v1581
    %v4117 = vunpack.c.h.b16 %v1581
    %v4118 = vunpack.c.l.b16 %v1582
    %v4119 = vunpack.c.h.b16 %v1582
    %v4120 = vunpack.c.l.b16 %v1583
    %v4121 = vunpack.c.h.b16 %v1583
    %v4122 = vunpack.c.l.b16 %v1584
    %v4123 = vunpack.c.h.b16 %v1584
    %v4124 = vunpack.c.l.b16 %v1585
    %v4125 = vunpack.c.h.b16 %v1585
    %v4126 = vunpack.c.l.b16 %v1586
    %v4127 = vunpack.c.h.b16 %v1586
    %v4128 = vunpack.c.l.b16 %v1587
    %v4129 = vunpack.c.h.b16 %v1587
    %v4130 = vunpack.c.l.b16 %v1588
    %v4131 = vunpack.c.h.b16 %v1588
    %v4132 = vunpack.c.l.b16 %v1589
    %v4133 = vunpack.c.h.b16 %v1589
    %v4134 = vunpack.c.l.b16 %v1590
    %v4135 = vunpack.c.h.b16 %v1590
    %v4136 = vunpack.c.l.b16 %v1591
    %v4137 = vunpack.c.h.b16 %v1591
    %v4138 = vunpack.c.l.b16 %v1592
    %v4139 = vunpack.c.h.b16 %v1592
    %v4140 = vunpack.c.l.b16 %v1593
    %v4141 = vunpack.c.h.b16 %v1593
    %v4142 = vunpack.c.l.b16 %v1594
    %v4143 = vunpack.c.h.b16 %v1594
    %v4144 = vunpack.c.l.b16 %v1595
    %v4145 = vunpack.c.h.b16 %v1595
    %v4146 = vunpack.c.l.b16 %v1596
    %v4147 = vunpack.c.h.b16 %v1596
    %v4148 = vunpack.c.l.b16 %v1597
    %v4149 = vunpack.c.h.b16 %v1597
    %v4150 = vunpack.c.l.b16 %v1598
    %v4151 = vunpack.c.h.b16 %v1598
    %v4152 = vunpack.c.l.b16 %v1599
    %v4153 = vunpack.c.h.b16 %v1599
    %v4154 = vunpack.c.l.b16 %v1600
    %v4155 = vunpack.c.h.b16 %v1600
    %v4156 = vunpack.c.l.b16 %v1601
    %v4157 = vunpack.c.h.b16 %v1601
    %v4158 = vunpack.c.l.b16 %v1602
    %v4159 = vunpack.c.h.b16 %v1602
    %v4160 = vunpack.c.l.b16 %v1603
    %v4161 = vunpack.c.h.b16 %v1603
    %v4162 = vunpack.c.l.b16 %v1604
    %v4163 = vunpack.c.h.b16 %v1604
    %v4164 = vunpack.c.l.b16 %v1605
    %v4165 = vunpack.c.h.b16 %v1605
    %v4166 = vunpack.c.l.b16 %v1606
    %v4167 = vunpack.c.h.b16 %v1606
    %v4168 = vunpack.c.l.b16 %v1607
    %v4169 = vunpack.c.h.b16 %v1607
    %v4170 = vpack.c.b16 %v3918, %v3914
    %v4171 = vpack.c.b16 %v3919, %v3915
    %v4172 = vpack.c.b16 %v3920, %v3916
    %v4173 = vpack.c.b16 %v3921, %v3917
    %v4174 = vpack.c.b16 %v3926, %v3922
    %v4175 = vpack.c.b16 %v3927, %v3923
    %v4176 = vpack.c.b16 %v3928, %v3924
    %v4177 = vpack.c.b16 %v3929, %v3925
    %v4178 = vpack.c.b16 %v3934, %v3930
    %v4179 = vpack.c.b16 %v3935, %v3931
    %v4180 = vpack.c.b16 %v3936, %v3932
    %v4181 = vpack.c.b16 %v3937, %v3933
    %v4182 = vpack.c.b16 %v3942, %v3938
    %v4183 = vpack.c.b16 %v3943, %v3939
    %v4184 = vpack.c.b16 %v3944, %v3940
    %v4185 = vpack.c.b16 %v3945, %v3941
    %v4186 = vpack.c.b16 %v3950, %v3946
    %v4187 = vpack.c.b16 %v3951, %v3947
    %v4188 = vpack.c.b16 %v3952, %v3948
    %v4189 = vpack.c.b16 %v3953, %v3949
    %v4190 = vpack.c.b16 %v3958, %v3954
    %v4191 = vpack.c.b16 %v3959, %v3955
    %v4192 = vpack.c.b16 %v3960, %v3956
    %v4193 = vpack.c.b16 %v3961, %v3957
    %v4194 = vpack.c.b16 %v3966, %v3962
    %v4195 = vpack.c.b16 %v3967, %v3963
    %v4196 = vpack.c.b16 %v3968, %v3964
    %v4197 = vpack.c.b16 %v3969, %v3965
    %v4198 = vpack.c.b16 %v3974, %v3970
    %v4199 = vpack.c.b16 %v3975, %v3971
    %v4200 = vpack.c.b16 %v3976, %v3972
    %v4201 = vpack.c.b16 %v3977, %v3973
    %v4202 = vpack.c.b16 %v3982, %v3978
    %v4203 = vpack.c.b16 %v3983, %v3979
    %v4204 = vpack.c.b16 %v3984, %v3980
    %v4205 = vpack.c.b16 %v3985, %v3981
    %v4206 = vpack.c.b16 %v3990, %v3986
    %v4207 = vpack.c.b16 %v3991, %v3987
    %v4208 = vpack.c.b16 %v3992, %v3988
    %v4209 = vpack.c.b16 %v3993, %v3989
    %v4210 = vpack.c.b16 %v3998, %v3994
    %v4211 = vpack.c.b16 %v3999, %v3995
    %v4212 = vpack.c.b16 %v4000, %v3996
    %v4213 = vpack.c.b16 %v4001, %v3997
    %v4214 = vpack.c.b16 %v4006, %v4002
    %v4215 = vpack.c.b16 %v4007, %v4003
    %v4216 = vpack.c.b16 %v4008, %v4004
    %v4217 = vpack.c.b16 %v4009, %v4005
    %v4218 = vpack.c.b16 %v4014, %v4010
    %v4219 = vpack.c.b16 %v4015, %v4011
    %v4220 = vpack.c.b16 %v4016, %v4012
    %v4221 = vpack.c.b16 %v4017, %v4013
    %v4222 = vpack.c.b16 %v4022, %v4018
    %v4223 = vpack.c.b16 %v4023, %v4019
    %v4224 = vpack.c.b16 %v4024, %v4020
    %v4225 = vpack.c.b16 %v4025, %v4021
    %v4226 = vpack.c.b16 %v4030, %v4026
    %v4227 = vpack.c.b16 %v4031, %v4027
    %v4228 = vpack.c.b16 %v4032, %v4028
    %v4229 = vpack.c.b16 %v4033, %v4029
    %v4230 = vpack.c.b16 %v4038, %v4034
    %v4231 = vpack.c.b16 %v4039, %v4035
    %v4232 = vpack.c.b16 %v4040, %v4036
    %v4233 = vpack.c.b16 %v4041, %v4037
    %v4234 = vpack.c.b16 %v4046, %v4042
    %v4235 = vpack.c.b16 %v4047, %v4043
    %v4236 = vpack.c.b16 %v4048, %v4044
    %v4237 = vpack.c.b16 %v4049, %v4045
    %v4238 = vpack.c.b16 %v4054, %v4050
    %v4239 = vpack.c.b16 %v4055, %v4051
    %v4240 = vpack.c.b16 %v4056, %v4052
    %v4241 = vpack.c.b16 %v4057, %v4053
    %v4242 = vpack.c.b16 %v4062, %v4058
    %v4243 = vpack.c.b16 %v4063, %v4059
    %v4244 = vpack.c.b16 %v4064, %v4060
    %v4245 = vpack.c.b16 %v4065, %v4061
    %v4246 = vpack.c.b16 %v4070, %v4066
    %v4247 = vpack.c.b16 %v4071, %v4067
    %v4248 = vpack.c.b16 %v4072, %v4068
    %v4249 = vpack.c.b16 %v4073, %v4069
    %v4250 = vpack.c.b16 %v4078, %v4074
    %v4251 = vpack.c.b16 %v4079, %v4075
    %v4252 = vpack.c.b16 %v4080, %v4076
    %v4253 = vpack.c.b16 %v4081, %v4077
    %v4254 = vpack.c.b16 %v4086, %v4082
    %v4255 = vpack.c.b16 %v4087, %v4083
    %v4256 = vpack.c.b16 %v4088, %v4084
    %v4257 = vpack.c.b16 %v4089, %v4085
    %v4258 = vpack.c.b16 %v4094, %v4090
    %v4259 = vpack.c.b16 %v4095, %v4091
    %v4260 = vpack.c.b16 %v4096, %v4092
    %v4261 = vpack.c.b16 %v4097, %v4093
    %v4262 = vpack.c.b16 %v4102, %v4098
    %v4263 = vpack.c.b16 %v4103, %v4099
    %v4264 = vpack.c.b16 %v4104, %v4100
    %v4265 = vpack.c.b16 %v4105, %v4101
    %v4266 = vpack.c.b16 %v4110, %v4106
    %v4267 = vpack.c.b16 %v4111, %v4107
    %v4268 = vpack.c.b16 %v4112, %v4108
    %v4269 = vpack.c.b16 %v4113, %v4109
    %v4270 = vpack.c.b16 %v4118, %v4114
    %v4271 = vpack.c.b16 %v4119, %v4115
    %v4272 = vpack.c.b16 %v4120, %v4116
    %v4273 = vpack.c.b16 %v4121, %v4117
    %v4274 = vpack.c.b16 %v4126, %v4122
    %v4275 = vpack.c.b16 %v4127, %v4123
    %v4276 = vpack.c.b16 %v4128, %v4124
    %v4277 = vpack.c.b16 %v4129, %v4125
    %v4278 = vpack.c.b16 %v4134, %v4130
    %v4279 = vpack.c.b16 %v4135, %v4131
    %v4280 = vpack.c.b16 %v4136, %v4132
    %v4281 = vpack.c.b16 %v4137, %v4133
    %v4282 = vpack.c.b16 %v4142, %v4138
    %v4283 = vpack.c.b16 %v4143, %v4139
    %v4284 = vpack.c.b16 %v4144, %v4140
    %v4285 = vpack.c.b16 %v4145, %v4141
    %v4286 = vpack.c.b16 %v4150, %v4146
    %v4287 = vpack.c.b16 %v4151, %v4147
    %v4288 = vpack.c.b16 %v4152, %v4148
    %v4289 = vpack.c.b16 %v4153, %v4149
    %v4290 = vpack.c.b16 %v4158, %v4154
    %v4291 = vpack.c.b16 %v4159, %v4155
    %v4292 = vpack.c.b16 %v4160, %v4156
    %v4293 = vpack.c.b16 %v4161, %v4157
    %v4294 = vpack.c.b16 %v4166, %v4162
    %v4295 = vpack.c.b16 %v4167, %v4163
    %v4296 = vpack.c.b16 %v4168, %v4164
    %v4297 = vpack.c.b16 %v4169, %v4165
    %4426 = vmatpush.bf16.msra.mxu0 %v4198
    %4427 = vmatpush.bf16.msra.mxu0 %v4194
    %4428 = vmatpush.bf16.msra.mxu0 %v4190
    %4429 = vmatpush.bf16.msra.mxu0 %v4186
    %4430 = vmatpush.bf16.msra.mxu0 %v4182
    %4431 = vmatpush.bf16.msra.mxu0 %v4178
    %4432 = vmatpush.bf16.msra.mxu0 %v4174
    %4433 = vmatpush.bf16.msra.mxu0 %v4170
    %4434 = vmatmul.bf16.gmra.mxu0 %v1472
    %v4435 = vpop.f32.mrf.mxu0
    %v4436 = vadd.f32 %v3549, %v4435
    %v4437 = vpop.f32.mrf.mxu0
    %v4438 = vadd.f32 %v3551, %v4437
    %4439 = vmatmul.bf16.gmra.mxu0 %v1476
    %v4440 = vpop.f32.mrf.mxu0
    %v4441 = vadd.f32 %v3554, %v4440
    %v4442 = vpop.f32.mrf.mxu0
    %v4443 = vadd.f32 %v3556, %v4442
    %4444 = vdwg.mxu0
    %4445 = vmatpush.bf16.msra.mxu0 %v4230
    %4446 = vmatpush.bf16.msra.mxu0 %v4226
    %4447 = vmatpush.bf16.msra.mxu0 %v4222
    %4448 = vmatpush.bf16.msra.mxu0 %v4218
    %4449 = vmatpush.bf16.msra.mxu0 %v4214
    %4450 = vmatpush.bf16.msra.mxu0 %v4210
    %4451 = vmatpush.bf16.msra.mxu0 %v4206
    %4452 = vmatpush.bf16.msra.mxu0 %v4202
    %4453 = vmatmul.bf16.gmra.mxu0 %v1473
    %v4454 = vpop.f32.mrf.mxu0
    %v4455 = vadd.f32 %v4436, %v4454
    %v4456 = vpop.f32.mrf.mxu0
    %v4457 = vadd.f32 %v4438, %v4456
    %4458 = vmatmul.bf16.gmra.mxu0 %v1477
    %v4459 = vpop.f32.mrf.mxu0
    %v4460 = vadd.f32 %v4441, %v4459
    %v4461 = vpop.f32.mrf.mxu0
    %v4462 = vadd.f32 %v4443, %v4461
    %4463 = vdwg.mxu0
    %4464 = vmatpush.bf16.msra.mxu0 %v4262
    %4465 = vmatpush.bf16.msra.mxu0 %v4258
    %4466 = vmatpush.bf16.msra.mxu0 %v4254
    %4467 = vmatpush.bf16.msra.mxu0 %v4250
    %4468 = vmatpush.bf16.msra.mxu0 %v4246
    %4469 = vmatpush.bf16.msra.mxu0 %v4242
    %4470 = vmatpush.bf16.msra.mxu0 %v4238
    %4471 = vmatpush.bf16.msra.mxu0 %v4234
    %4472 = vmatmul.bf16.gmra.mxu0 %v1474
    %v4473 = vpop.f32.mrf.mxu0
    %v4474 = vadd.f32 %v4455, %v4473
    %v4475 = vpop.f32.mrf.mxu0
    %v4476 = vadd.f32 %v4457, %v4475
    %4477 = vmatmul.bf16.gmra.mxu0 %v1478
    %v4478 = vpop.f32.mrf.mxu0
    %v4479 = vadd.f32 %v4460, %v4478
    %v4480 = vpop.f32.mrf.mxu0
    %v4481 = vadd.f32 %v4462, %v4480
    %4482 = vdwg.mxu0
    %4483 = vmatpush.bf16.msra.mxu0 %v4294
    %4484 = vmatpush.bf16.msra.mxu0 %v4290
    %4485 = vmatpush.bf16.msra.mxu0 %v4286
    %4486 = vmatpush.bf16.msra.mxu0 %v4282
    %4487 = vmatpush.bf16.msra.mxu0 %v4278
    %4488 = vmatpush.bf16.msra.mxu0 %v4274
    %4489 = vmatpush.bf16.msra.mxu0 %v4270
    %4490 = vmatpush.bf16.msra.mxu0 %v4266
    %4491 = vmatmul.bf16.gmra.mxu0 %v1475
    %v4492 = vpop.f32.mrf.mxu0
    %v4493 = vadd.f32 %v4474, %v4492
    %v4494 = vpop.f32.mrf.mxu0
    %v4495 = vadd.f32 %v4476, %v4494
    %4496 = vmatmul.bf16.gmra.mxu0 %v1479
    %v4497 = vpop.f32.mrf.mxu0
    %v4498 = vadd.f32 %v4479, %v4497
    %v4499 = vpop.f32.mrf.mxu0
    %v4500 = vadd.f32 %v4481, %v4499
    %4501 = vdwg.mxu0
    %4502 = vmatpush.bf16.msra.mxu0 %v4199
    %4503 = vmatpush.bf16.msra.mxu0 %v4195
    %4504 = vmatpush.bf16.msra.mxu0 %v4191
    %4505 = vmatpush.bf16.msra.mxu0 %v4187
    %4506 = vmatpush.bf16.msra.mxu0 %v4183
    %4507 = vmatpush.bf16.msra.mxu0 %v4179
    %4508 = vmatpush.bf16.msra.mxu0 %v4175
    %4509 = vmatpush.bf16.msra.mxu0 %v4171
    %4510 = vmatmul.bf16.gmra.mxu0 %v1472
    %v4511 = vpop.f32.mrf.mxu0
    %v4512 = vadd.f32 %v3625, %v4511
    %v4513 = vpop.f32.mrf.mxu0
    %v4514 = vadd.f32 %v3627, %v4513
    %4515 = vmatmul.bf16.gmra.mxu0 %v1476
    %v4516 = vpop.f32.mrf.mxu0
    %v4517 = vadd.f32 %v3630, %v4516
    %v4518 = vpop.f32.mrf.mxu0
    %v4519 = vadd.f32 %v3632, %v4518
    %4520 = vdwg.mxu0
    %4521 = vmatpush.bf16.msra.mxu0 %v4231
    %4522 = vmatpush.bf16.msra.mxu0 %v4227
    %4523 = vmatpush.bf16.msra.mxu0 %v4223
    %4524 = vmatpush.bf16.msra.mxu0 %v4219
    %4525 = vmatpush.bf16.msra.mxu0 %v4215
    %4526 = vmatpush.bf16.msra.mxu0 %v4211
    %4527 = vmatpush.bf16.msra.mxu0 %v4207
    %4528 = vmatpush.bf16.msra.mxu0 %v4203
    %4529 = vmatmul.bf16.gmra.mxu0 %v1473
    %v4530 = vpop.f32.mrf.mxu0
    %v4531 = vadd.f32 %v4512, %v4530
    %v4532 = vpop.f32.mrf.mxu0
    %v4533 = vadd.f32 %v4514, %v4532
    %4534 = vmatmul.bf16.gmra.mxu0 %v1477
    %v4535 = vpop.f32.mrf.mxu0
    %v4536 = vadd.f32 %v4517, %v4535
    %v4537 = vpop.f32.mrf.mxu0
    %v4538 = vadd.f32 %v4519, %v4537
    %4539 = vdwg.mxu0
    %4540 = vmatpush.bf16.msra.mxu0 %v4263
    %4541 = vmatpush.bf16.msra.mxu0 %v4259
    %4542 = vmatpush.bf16.msra.mxu0 %v4255
    %4543 = vmatpush.bf16.msra.mxu0 %v4251
    %4544 = vmatpush.bf16.msra.mxu0 %v4247
    %4545 = vmatpush.bf16.msra.mxu0 %v4243
    %4546 = vmatpush.bf16.msra.mxu0 %v4239
    %4547 = vmatpush.bf16.msra.mxu0 %v4235
    %4548 = vmatmul.bf16.gmra.mxu0 %v1474
    %v4549 = vpop.f32.mrf.mxu0
    %v4550 = vadd.f32 %v4531, %v4549
    %v4551 = vpop.f32.mrf.mxu0
    %v4552 = vadd.f32 %v4533, %v4551
    %4553 = vmatmul.bf16.gmra.mxu0 %v1478
    %v4554 = vpop.f32.mrf.mxu0
    %v4555 = vadd.f32 %v4536, %v4554
    %v4556 = vpop.f32.mrf.mxu0
    %v4557 = vadd.f32 %v4538, %v4556
    %4558 = vdwg.mxu0
    %4559 = vmatpush.bf16.msra.mxu0 %v4295
    %4560 = vmatpush.bf16.msra.mxu0 %v4291
    %4561 = vmatpush.bf16.msra.mxu0 %v4287
    %4562 = vmatpush.bf16.msra.mxu0 %v4283
    %4563 = vmatpush.bf16.msra.mxu0 %v4279
    %4564 = vmatpush.bf16.msra.mxu0 %v4275
    %4565 = vmatpush.bf16.msra.mxu0 %v4271
    %4566 = vmatpush.bf16.msra.mxu0 %v4267
    %4567 = vmatmul.bf16.gmra.mxu0 %v1475
    %v4568 = vpop.f32.mrf.mxu0
    %v4569 = vadd.f32 %v4550, %v4568
    %v4570 = vpop.f32.mrf.mxu0
    %v4571 = vadd.f32 %v4552, %v4570
    %4572 = vmatmul.bf16.gmra.mxu0 %v1479
    %v4573 = vpop.f32.mrf.mxu0
    %v4574 = vadd.f32 %v4555, %v4573
    %v4575 = vpop.f32.mrf.mxu0
    %v4576 = vadd.f32 %v4557, %v4575
    %4577 = vdwg.mxu0
    %4578 = vmatpush.bf16.msra.mxu0 %v4200
    %4579 = vmatpush.bf16.msra.mxu0 %v4196
    %4580 = vmatpush.bf16.msra.mxu0 %v4192
    %4581 = vmatpush.bf16.msra.mxu0 %v4188
    %4582 = vmatpush.bf16.msra.mxu0 %v4184
    %4583 = vmatpush.bf16.msra.mxu0 %v4180
    %4584 = vmatpush.bf16.msra.mxu0 %v4176
    %4585 = vmatpush.bf16.msra.mxu0 %v4172
    %4586 = vmatmul.bf16.gmra.mxu0 %v1472
    %v4587 = vpop.f32.mrf.mxu0
    %v4588 = vadd.f32 %v3701, %v4587
    %v4589 = vpop.f32.mrf.mxu0
    %v4590 = vadd.f32 %v3703, %v4589
    %4591 = vmatmul.bf16.gmra.mxu0 %v1476
    %v4592 = vpop.f32.mrf.mxu0
    %v4593 = vadd.f32 %v3706, %v4592
    %v4594 = vpop.f32.mrf.mxu0
    %v4595 = vadd.f32 %v3708, %v4594
    %4596 = vdwg.mxu0
    %4597 = vmatpush.bf16.msra.mxu0 %v4232
    %4598 = vmatpush.bf16.msra.mxu0 %v4228
    %4599 = vmatpush.bf16.msra.mxu0 %v4224
    %4600 = vmatpush.bf16.msra.mxu0 %v4220
    %4601 = vmatpush.bf16.msra.mxu0 %v4216
    %4602 = vmatpush.bf16.msra.mxu0 %v4212
    %4603 = vmatpush.bf16.msra.mxu0 %v4208
    %4604 = vmatpush.bf16.msra.mxu0 %v4204
    %4605 = vmatmul.bf16.gmra.mxu0 %v1473
    %v4606 = vpop.f32.mrf.mxu0
    %v4607 = vadd.f32 %v4588, %v4606
    %v4608 = vpop.f32.mrf.mxu0
    %v4609 = vadd.f32 %v4590, %v4608
    %4610 = vmatmul.bf16.gmra.mxu0 %v1477
    %v4611 = vpop.f32.mrf.mxu0
    %v4612 = vadd.f32 %v4593, %v4611
    %v4613 = vpop.f32.mrf.mxu0
    %v4614 = vadd.f32 %v4595, %v4613
    %4615 = vdwg.mxu0
    %4616 = vmatpush.bf16.msra.mxu0 %v4264
    %4617 = vmatpush.bf16.msra.mxu0 %v4260
    %4618 = vmatpush.bf16.msra.mxu0 %v4256
    %4619 = vmatpush.bf16.msra.mxu0 %v4252
    %4620 = vmatpush.bf16.msra.mxu0 %v4248
    %4621 = vmatpush.bf16.msra.mxu0 %v4244
    %4622 = vmatpush.bf16.msra.mxu0 %v4240
    %4623 = vmatpush.bf16.msra.mxu0 %v4236
    %4624 = vmatmul.bf16.gmra.mxu0 %v1474
    %v4625 = vpop.f32.mrf.mxu0
    %v4626 = vadd.f32 %v4607, %v4625
    %v4627 = vpop.f32.mrf.mxu0
    %v4628 = vadd.f32 %v4609, %v4627
    %4629 = vmatmul.bf16.gmra.mxu0 %v1478
    %v4630 = vpop.f32.mrf.mxu0
    %v4631 = vadd.f32 %v4612, %v4630
    %v4632 = vpop.f32.mrf.mxu0
    %v4633 = vadd.f32 %v4614, %v4632
    %4634 = vdwg.mxu0
    %4635 = vmatpush.bf16.msra.mxu0 %v4296
    %4636 = vmatpush.bf16.msra.mxu0 %v4292
    %4637 = vmatpush.bf16.msra.mxu0 %v4288
    %4638 = vmatpush.bf16.msra.mxu0 %v4284
    %4639 = vmatpush.bf16.msra.mxu0 %v4280
    %4640 = vmatpush.bf16.msra.mxu0 %v4276
    %4641 = vmatpush.bf16.msra.mxu0 %v4272
    %4642 = vmatpush.bf16.msra.mxu0 %v4268
    %4643 = vmatmul.bf16.gmra.mxu0 %v1475
    %v4644 = vpop.f32.mrf.mxu0
    %v4645 = vadd.f32 %v4626, %v4644
    %v4646 = vpop.f32.mrf.mxu0
    %v4647 = vadd.f32 %v4628, %v4646
    %4648 = vmatmul.bf16.gmra.mxu0 %v1479
    %v4649 = vpop.f32.mrf.mxu0
    %v4650 = vadd.f32 %v4631, %v4649
    %v4651 = vpop.f32.mrf.mxu0
    %v4652 = vadd.f32 %v4633, %v4651
    %4653 = vdwg.mxu0
    %4654 = vmatpush.bf16.msra.mxu0 %v4201
    %4655 = vmatpush.bf16.msra.mxu0 %v4197
    %4656 = vmatpush.bf16.msra.mxu0 %v4193
    %4657 = vmatpush.bf16.msra.mxu0 %v4189
    %4658 = vmatpush.bf16.msra.mxu0 %v4185
    %4659 = vmatpush.bf16.msra.mxu0 %v4181
    %4660 = vmatpush.bf16.msra.mxu0 %v4177
    %4661 = vmatpush.bf16.msra.mxu0 %v4173
    %4662 = vmatmul.bf16.gmra.mxu0 %v1472
    %v4663 = vpop.f32.mrf.mxu0
    %v4664 = vadd.f32 %v3777, %v4663
    %v4665 = vpop.f32.mrf.mxu0
    %v4666 = vadd.f32 %v3779, %v4665
    %4667 = vmatmul.bf16.gmra.mxu0 %v1476
    %v4668 = vpop.f32.mrf.mxu0
    %v4669 = vadd.f32 %v3782, %v4668
    %v4670 = vpop.f32.mrf.mxu0
    %v4671 = vadd.f32 %v3784, %v4670
    %4672 = vdwg.mxu0
    %4673 = vmatpush.bf16.msra.mxu0 %v4233
    %4674 = vmatpush.bf16.msra.mxu0 %v4229
    %4675 = vmatpush.bf16.msra.mxu0 %v4225
    %4676 = vmatpush.bf16.msra.mxu0 %v4221
    %4677 = vmatpush.bf16.msra.mxu0 %v4217
    %4678 = vmatpush.bf16.msra.mxu0 %v4213
    %4679 = vmatpush.bf16.msra.mxu0 %v4209
    %4680 = vmatpush.bf16.msra.mxu0 %v4205
    %4681 = vmatmul.bf16.gmra.mxu0 %v1473
    %v4682 = vpop.f32.mrf.mxu0
    %v4683 = vadd.f32 %v4664, %v4682
    %v4684 = vpop.f32.mrf.mxu0
    %v4685 = vadd.f32 %v4666, %v4684
    %4686 = vmatmul.bf16.gmra.mxu0 %v1477
    %v4687 = vpop.f32.mrf.mxu0
    %v4688 = vadd.f32 %v4669, %v4687
    %v4689 = vpop.f32.mrf.mxu0
    %v4690 = vadd.f32 %v4671, %v4689
    %4691 = vdwg.mxu0
    %4692 = vmatpush.bf16.msra.mxu0 %v4265
    %4693 = vmatpush.bf16.msra.mxu0 %v4261
    %4694 = vmatpush.bf16.msra.mxu0 %v4257
    %4695 = vmatpush.bf16.msra.mxu0 %v4253
    %4696 = vmatpush.bf16.msra.mxu0 %v4249
    %4697 = vmatpush.bf16.msra.mxu0 %v4245
    %4698 = vmatpush.bf16.msra.mxu0 %v4241
    %4699 = vmatpush.bf16.msra.mxu0 %v4237
    %4700 = vmatmul.bf16.gmra.mxu0 %v1474
    %v4701 = vpop.f32.mrf.mxu0
    %v4702 = vadd.f32 %v4683, %v4701
    %v4703 = vpop.f32.mrf.mxu0
    %v4704 = vadd.f32 %v4685, %v4703
    %4705 = vmatmul.bf16.gmra.mxu0 %v1478
    %v4706 = vpop.f32.mrf.mxu0
    %v4707 = vadd.f32 %v4688, %v4706
    %v4708 = vpop.f32.mrf.mxu0
    %v4709 = vadd.f32 %v4690, %v4708
    %4710 = vdwg.mxu0
    %4711 = vmatpush.bf16.msra.mxu0 %v4297
    %4712 = vmatpush.bf16.msra.mxu0 %v4293
    %4713 = vmatpush.bf16.msra.mxu0 %v4289
    %4714 = vmatpush.bf16.msra.mxu0 %v4285
    %4715 = vmatpush.bf16.msra.mxu0 %v4281
    %4716 = vmatpush.bf16.msra.mxu0 %v4277
    %4717 = vmatpush.bf16.msra.mxu0 %v4273
    %4718 = vmatpush.bf16.msra.mxu0 %v4269
    %4719 = vmatmul.bf16.gmra.mxu0 %v1475
    %v4720 = vpop.f32.mrf.mxu0
    %v4721 = vadd.f32 %v4702, %v4720
    %v4722 = vpop.f32.mrf.mxu0
    %v4723 = vadd.f32 %v4704, %v4722
    %4724 = vmatmul.bf16.gmra.mxu0 %v1479
    %v4725 = vpop.f32.mrf.mxu0
    %v4726 = vadd.f32 %v4707, %v4725
    %v4727 = vpop.f32.mrf.mxu0
    %v4728 = vadd.f32 %v4709, %v4727
    %4729 = vdwg.mxu0
    %v4730 = vld [vmem:[#allocation7 + $0x20] sm:$0xff]
    %v4731 = vld [vmem:[#allocation7 + $0x28] sm:$0xff]
    %v4732 = vld [vmem:[#allocation7 + $0x60] sm:$0xff]
    %v4733 = vld [vmem:[#allocation7 + $0x68] sm:$0xff]
    %v4734 = vld [vmem:[#allocation7 + $0xa0] sm:$0xff]
    %v4735 = vld [vmem:[#allocation7 + $0xa8] sm:$0xff]
    %v4736 = vld [vmem:[#allocation7 + $0xe0] sm:$0xff]
    %v4737 = vld [vmem:[#allocation7 + $0xe8] sm:$0xff]
    %v4738 = vld [vmem:[#allocation7 + $0x120] sm:$0xff]
    %v4739 = vld [vmem:[#allocation7 + $0x128] sm:$0xff]
    %v4740 = vld [vmem:[#allocation7 + $0x160] sm:$0xff]
    %v4741 = vld [vmem:[#allocation7 + $0x168] sm:$0xff]
    %v4742 = vld [vmem:[#allocation7 + $0x1a0] sm:$0xff]
    %v4743 = vld [vmem:[#allocation7 + $0x1a8] sm:$0xff]
    %v4744 = vld [vmem:[#allocation7 + $0x1e0] sm:$0xff]
    %v4745 = vld [vmem:[#allocation7 + $0x1e8] sm:$0xff]
    %v4746 = vld [vmem:[#allocation7 + $0x220] sm:$0xff]
    %v4747 = vld [vmem:[#allocation7 + $0x228] sm:$0xff]
    %v4748 = vld [vmem:[#allocation7 + $0x260] sm:$0xff]
    %v4749 = vld [vmem:[#allocation7 + $0x268] sm:$0xff]
    %v4750 = vld [vmem:[#allocation7 + $0x2a0] sm:$0xff]
    %v4751 = vld [vmem:[#allocation7 + $0x2a8] sm:$0xff]
    %v4752 = vld [vmem:[#allocation7 + $0x2e0] sm:$0xff]
    %v4753 = vld [vmem:[#allocation7 + $0x2e8] sm:$0xff]
    %v4754 = vld [vmem:[#allocation7 + $0x320] sm:$0xff]
    %v4755 = vld [vmem:[#allocation7 + $0x328] sm:$0xff]
    %v4756 = vld [vmem:[#allocation7 + $0x360] sm:$0xff]
    %v4757 = vld [vmem:[#allocation7 + $0x368] sm:$0xff]
    %v4758 = vld [vmem:[#allocation7 + $0x3a0] sm:$0xff]
    %v4759 = vld [vmem:[#allocation7 + $0x3a8] sm:$0xff]
    %v4760 = vld [vmem:[#allocation7 + $0x3e0] sm:$0xff]
    %v4761 = vld [vmem:[#allocation7 + $0x3e8] sm:$0xff]
    %v4762 = vld [vmem:[#allocation7 + $0x420] sm:$0xff]
    %v4763 = vld [vmem:[#allocation7 + $0x428] sm:$0xff]
    %v4764 = vld [vmem:[#allocation7 + $0x460] sm:$0xff]
    %v4765 = vld [vmem:[#allocation7 + $0x468] sm:$0xff]
    %v4766 = vld [vmem:[#allocation7 + $0x4a0] sm:$0xff]
    %v4767 = vld [vmem:[#allocation7 + $0x4a8] sm:$0xff]
    %v4768 = vld [vmem:[#allocation7 + $0x4e0] sm:$0xff]
    %v4769 = vld [vmem:[#allocation7 + $0x4e8] sm:$0xff]
    %v4770 = vld [vmem:[#allocation7 + $0x520] sm:$0xff]
    %v4771 = vld [vmem:[#allocation7 + $0x528] sm:$0xff]
    %v4772 = vld [vmem:[#allocation7 + $0x560] sm:$0xff]
    %v4773 = vld [vmem:[#allocation7 + $0x568] sm:$0xff]
    %v4774 = vld [vmem:[#allocation7 + $0x5a0] sm:$0xff]
    %v4775 = vld [vmem:[#allocation7 + $0x5a8] sm:$0xff]
    %v4776 = vld [vmem:[#allocation7 + $0x5e0] sm:$0xff]
    %v4777 = vld [vmem:[#allocation7 + $0x5e8] sm:$0xff]
    %v4778 = vld [vmem:[#allocation7 + $0x620] sm:$0xff]
    %v4779 = vld [vmem:[#allocation7 + $0x628] sm:$0xff]
    %v4780 = vld [vmem:[#allocation7 + $0x660] sm:$0xff]
    %v4781 = vld [vmem:[#allocation7 + $0x668] sm:$0xff]
    %v4782 = vld [vmem:[#allocation7 + $0x6a0] sm:$0xff]
    %v4783 = vld [vmem:[#allocation7 + $0x6a8] sm:$0xff]
    %v4784 = vld [vmem:[#allocation7 + $0x6e0] sm:$0xff]
    %v4785 = vld [vmem:[#allocation7 + $0x6e8] sm:$0xff]
    %v4786 = vld [vmem:[#allocation7 + $0x720] sm:$0xff]
    %v4787 = vld [vmem:[#allocation7 + $0x728] sm:$0xff]
    %v4788 = vld [vmem:[#allocation7 + $0x760] sm:$0xff]
    %v4789 = vld [vmem:[#allocation7 + $0x768] sm:$0xff]
    %v4790 = vld [vmem:[#allocation7 + $0x7a0] sm:$0xff]
    %v4791 = vld [vmem:[#allocation7 + $0x7a8] sm:$0xff]
    %v4792 = vld [vmem:[#allocation7 + $0x7e0] sm:$0xff]
    %v4793 = vld [vmem:[#allocation7 + $0x7e8] sm:$0xff]
    %v4794 = vld [vmem:[#allocation7 + $0x820] sm:$0xff]
    %v4795 = vld [vmem:[#allocation7 + $0x828] sm:$0xff]
    %v4796 = vld [vmem:[#allocation7 + $0x860] sm:$0xff]
    %v4797 = vld [vmem:[#allocation7 + $0x868] sm:$0xff]
    %v4798 = vld [vmem:[#allocation7 + $0x8a0] sm:$0xff]
    %v4799 = vld [vmem:[#allocation7 + $0x8a8] sm:$0xff]
    %v4800 = vld [vmem:[#allocation7 + $0x8e0] sm:$0xff]
    %v4801 = vld [vmem:[#allocation7 + $0x8e8] sm:$0xff]
    %v4802 = vld [vmem:[#allocation7 + $0x920] sm:$0xff]
    %v4803 = vld [vmem:[#allocation7 + $0x928] sm:$0xff]
    %v4804 = vld [vmem:[#allocation7 + $0x960] sm:$0xff]
    %v4805 = vld [vmem:[#allocation7 + $0x968] sm:$0xff]
    %v4806 = vld [vmem:[#allocation7 + $0x9a0] sm:$0xff]
    %v4807 = vld [vmem:[#allocation7 + $0x9a8] sm:$0xff]
    %v4808 = vld [vmem:[#allocation7 + $0x9e0] sm:$0xff]
    %v4809 = vld [vmem:[#allocation7 + $0x9e8] sm:$0xff]
    %v4810 = vld [vmem:[#allocation7 + $0xa20] sm:$0xff]
    %v4811 = vld [vmem:[#allocation7 + $0xa28] sm:$0xff]
    %v4812 = vld [vmem:[#allocation7 + $0xa60] sm:$0xff]
    %v4813 = vld [vmem:[#allocation7 + $0xa68] sm:$0xff]
    %v4814 = vld [vmem:[#allocation7 + $0xaa0] sm:$0xff]
    %v4815 = vld [vmem:[#allocation7 + $0xaa8] sm:$0xff]
    %v4816 = vld [vmem:[#allocation7 + $0xae0] sm:$0xff]
    %v4817 = vld [vmem:[#allocation7 + $0xae8] sm:$0xff]
    %v4818 = vld [vmem:[#allocation7 + $0xb20] sm:$0xff]
    %v4819 = vld [vmem:[#allocation7 + $0xb28] sm:$0xff]
    %v4820 = vld [vmem:[#allocation7 + $0xb60] sm:$0xff]
    %v4821 = vld [vmem:[#allocation7 + $0xb68] sm:$0xff]
    %v4822 = vld [vmem:[#allocation7 + $0xba0] sm:$0xff]
    %v4823 = vld [vmem:[#allocation7 + $0xba8] sm:$0xff]
    %v4824 = vld [vmem:[#allocation7 + $0xbe0] sm:$0xff]
    %v4825 = vld [vmem:[#allocation7 + $0xbe8] sm:$0xff]
    %v4826 = vld [vmem:[#allocation7 + $0xc20] sm:$0xff]
    %v4827 = vld [vmem:[#allocation7 + $0xc28] sm:$0xff]
    %v4828 = vld [vmem:[#allocation7 + $0xc60] sm:$0xff]
    %v4829 = vld [vmem:[#allocation7 + $0xc68] sm:$0xff]
    %v4830 = vld [vmem:[#allocation7 + $0xca0] sm:$0xff]
    %v4831 = vld [vmem:[#allocation7 + $0xca8] sm:$0xff]
    %v4832 = vld [vmem:[#allocation7 + $0xce0] sm:$0xff]
    %v4833 = vld [vmem:[#allocation7 + $0xce8] sm:$0xff]
    %v4834 = vld [vmem:[#allocation7 + $0xd20] sm:$0xff]
    %v4835 = vld [vmem:[#allocation7 + $0xd28] sm:$0xff]
    %v4836 = vld [vmem:[#allocation7 + $0xd60] sm:$0xff]
    %v4837 = vld [vmem:[#allocation7 + $0xd68] sm:$0xff]
    %v4838 = vld [vmem:[#allocation7 + $0xda0] sm:$0xff]
    %v4839 = vld [vmem:[#allocation7 + $0xda8] sm:$0xff]
    %v4840 = vld [vmem:[#allocation7 + $0xde0] sm:$0xff]
    %v4841 = vld [vmem:[#allocation7 + $0xde8] sm:$0xff]
    %v4842 = vld [vmem:[#allocation7 + $0xe20] sm:$0xff]
    %v4843 = vld [vmem:[#allocation7 + $0xe28] sm:$0xff]
    %v4844 = vld [vmem:[#allocation7 + $0xe60] sm:$0xff]
    %v4845 = vld [vmem:[#allocation7 + $0xe68] sm:$0xff]
    %v4846 = vld [vmem:[#allocation7 + $0xea0] sm:$0xff]
    %v4847 = vld [vmem:[#allocation7 + $0xea8] sm:$0xff]
    %v4848 = vld [vmem:[#allocation7 + $0xee0] sm:$0xff]
    %v4849 = vld [vmem:[#allocation7 + $0xee8] sm:$0xff]
    %v4850 = vld [vmem:[#allocation7 + $0xf20] sm:$0xff]
    %v4851 = vld [vmem:[#allocation7 + $0xf28] sm:$0xff]
    %v4852 = vld [vmem:[#allocation7 + $0xf60] sm:$0xff]
    %v4853 = vld [vmem:[#allocation7 + $0xf68] sm:$0xff]
    %v4854 = vld [vmem:[#allocation7 + $0xfa0] sm:$0xff]
    %v4855 = vld [vmem:[#allocation7 + $0xfa8] sm:$0xff]
    %v4856 = vld [vmem:[#allocation7 + $0xfe0] sm:$0xff]
    %v4857 = vld [vmem:[#allocation7 + $0xfe8] sm:$0xff]
    %v4858 = vld [vmem:[#allocation8 + $0x8] sm:$0xf]
    %v4860 = vperm.slane %v4858, 0
    %v4861 = vperm.slane %v4858, 1
    %v4862 = vperm.slane %v4858, 2
    %v4863 = vperm.slane %v4858, 3
    %v4996 = vunpack.c.l.b16 %v4730
    %v4997 = vunpack.c.h.b16 %v4730
    %v4998 = vunpack.c.l.b16 %v4731
    %v4999 = vunpack.c.h.b16 %v4731
    %v5000 = vunpack.c.l.b16 %v4732
    %v5001 = vunpack.c.h.b16 %v4732
    %v5002 = vunpack.c.l.b16 %v4733
    %v5003 = vunpack.c.h.b16 %v4733
    %v5004 = vunpack.c.l.b16 %v4734
    %v5005 = vunpack.c.h.b16 %v4734
    %v5006 = vunpack.c.l.b16 %v4735
    %v5007 = vunpack.c.h.b16 %v4735
    %v5008 = vunpack.c.l.b16 %v4736
    %v5009 = vunpack.c.h.b16 %v4736
    %v5010 = vunpack.c.l.b16 %v4737
    %v5011 = vunpack.c.h.b16 %v4737
    %v5012 = vunpack.c.l.b16 %v4738
    %v5013 = vunpack.c.h.b16 %v4738
    %v5014 = vunpack.c.l.b16 %v4739
    %v5015 = vunpack.c.h.b16 %v4739
    %v5016 = vunpack.c.l.b16 %v4740
    %v5017 = vunpack.c.h.b16 %v4740
    %v5018 = vunpack.c.l.b16 %v4741
    %v5019 = vunpack.c.h.b16 %v4741
    %v5020 = vunpack.c.l.b16 %v4742
    %v5021 = vunpack.c.h.b16 %v4742
    %v5022 = vunpack.c.l.b16 %v4743
    %v5023 = vunpack.c.h.b16 %v4743
    %v5024 = vunpack.c.l.b16 %v4744
    %v5025 = vunpack.c.h.b16 %v4744
    %v5026 = vunpack.c.l.b16 %v4745
    %v5027 = vunpack.c.h.b16 %v4745
    %v5028 = vunpack.c.l.b16 %v4746
    %v5029 = vunpack.c.h.b16 %v4746
    %v5030 = vunpack.c.l.b16 %v4747
    %v5031 = vunpack.c.h.b16 %v4747
    %v5032 = vunpack.c.l.b16 %v4748
    %v5033 = vunpack.c.h.b16 %v4748
    %v5034 = vunpack.c.l.b16 %v4749
    %v5035 = vunpack.c.h.b16 %v4749
    %v5036 = vunpack.c.l.b16 %v4750
    %v5037 = vunpack.c.h.b16 %v4750
    %v5038 = vunpack.c.l.b16 %v4751
    %v5039 = vunpack.c.h.b16 %v4751
    %v5040 = vunpack.c.l.b16 %v4752
    %v5041 = vunpack.c.h.b16 %v4752
    %v5042 = vunpack.c.l.b16 %v4753
    %v5043 = vunpack.c.h.b16 %v4753
    %v5044 = vunpack.c.l.b16 %v4754
    %v5045 = vunpack.c.h.b16 %v4754
    %v5046 = vunpack.c.l.b16 %v4755
    %v5047 = vunpack.c.h.b16 %v4755
    %v5048 = vunpack.c.l.b16 %v4756
    %v5049 = vunpack.c.h.b16 %v4756
    %v5050 = vunpack.c.l.b16 %v4757
    %v5051 = vunpack.c.h.b16 %v4757
    %v5052 = vunpack.c.l.b16 %v4758
    %v5053 = vunpack.c.h.b16 %v4758
    %v5054 = vunpack.c.l.b16 %v4759
    %v5055 = vunpack.c.h.b16 %v4759
    %v5056 = vunpack.c.l.b16 %v4760
    %v5057 = vunpack.c.h.b16 %v4760
    %v5058 = vunpack.c.l.b16 %v4761
    %v5059 = vunpack.c.h.b16 %v4761
    %v5060 = vunpack.c.l.b16 %v4762
    %v5061 = vunpack.c.h.b16 %v4762
    %v5062 = vunpack.c.l.b16 %v4763
    %v5063 = vunpack.c.h.b16 %v4763
    %v5064 = vunpack.c.l.b16 %v4764
    %v5065 = vunpack.c.h.b16 %v4764
    %v5066 = vunpack.c.l.b16 %v4765
    %v5067 = vunpack.c.h.b16 %v4765
    %v5068 = vunpack.c.l.b16 %v4766
    %v5069 = vunpack.c.h.b16 %v4766
    %v5070 = vunpack.c.l.b16 %v4767
    %v5071 = vunpack.c.h.b16 %v4767
    %v5072 = vunpack.c.l.b16 %v4768
    %v5073 = vunpack.c.h.b16 %v4768
    %v5074 = vunpack.c.l.b16 %v4769
    %v5075 = vunpack.c.h.b16 %v4769
    %v5076 = vunpack.c.l.b16 %v4770
    %v5077 = vunpack.c.h.b16 %v4770
    %v5078 = vunpack.c.l.b16 %v4771
    %v5079 = vunpack.c.h.b16 %v4771
    %v5080 = vunpack.c.l.b16 %v4772
    %v5081 = vunpack.c.h.b16 %v4772
    %v5082 = vunpack.c.l.b16 %v4773
    %v5083 = vunpack.c.h.b16 %v4773
    %v5084 = vunpack.c.l.b16 %v4774
    %v5085 = vunpack.c.h.b16 %v4774
    %v5086 = vunpack.c.l.b16 %v4775
    %v5087 = vunpack.c.h.b16 %v4775
    %v5088 = vunpack.c.l.b16 %v4776
    %v5089 = vunpack.c.h.b16 %v4776
    %v5090 = vunpack.c.l.b16 %v4777
    %v5091 = vunpack.c.h.b16 %v4777
    %v5092 = vunpack.c.l.b16 %v4778
    %v5093 = vunpack.c.h.b16 %v4778
    %v5094 = vunpack.c.l.b16 %v4779
    %v5095 = vunpack.c.h.b16 %v4779
    %v5096 = vunpack.c.l.b16 %v4780
    %v5097 = vunpack.c.h.b16 %v4780
    %v5098 = vunpack.c.l.b16 %v4781
    %v5099 = vunpack.c.h.b16 %v4781
    %v5100 = vunpack.c.l.b16 %v4782
    %v5101 = vunpack.c.h.b16 %v4782
    %v5102 = vunpack.c.l.b16 %v4783
    %v5103 = vunpack.c.h.b16 %v4783
    %v5104 = vunpack.c.l.b16 %v4784
    %v5105 = vunpack.c.h.b16 %v4784
    %v5106 = vunpack.c.l.b16 %v4785
    %v5107 = vunpack.c.h.b16 %v4785
    %v5108 = vunpack.c.l.b16 %v4786
    %v5109 = vunpack.c.h.b16 %v4786
    %v5110 = vunpack.c.l.b16 %v4787
    %v5111 = vunpack.c.h.b16 %v4787
    %v5112 = vunpack.c.l.b16 %v4788
    %v5113 = vunpack.c.h.b16 %v4788
    %v5114 = vunpack.c.l.b16 %v4789
    %v5115 = vunpack.c.h.b16 %v4789
    %v5116 = vunpack.c.l.b16 %v4790
    %v5117 = vunpack.c.h.b16 %v4790
    %v5118 = vunpack.c.l.b16 %v4791
    %v5119 = vunpack.c.h.b16 %v4791
    %v5120 = vunpack.c.l.b16 %v4792
    %v5121 = vunpack.c.h.b16 %v4792
    %v5122 = vunpack.c.l.b16 %v4793
    %v5123 = vunpack.c.h.b16 %v4793
    %v5124 = vunpack.c.l.b16 %v4794
    %v5125 = vunpack.c.h.b16 %v4794
    %v5126 = vunpack.c.l.b16 %v4795
    %v5127 = vunpack.c.h.b16 %v4795
    %v5128 = vunpack.c.l.b16 %v4796
    %v5129 = vunpack.c.h.b16 %v4796
    %v5130 = vunpack.c.l.b16 %v4797
    %v5131 = vunpack.c.h.b16 %v4797
    %v5132 = vunpack.c.l.b16 %v4798
    %v5133 = vunpack.c.h.b16 %v4798
    %v5134 = vunpack.c.l.b16 %v4799
    %v5135 = vunpack.c.h.b16 %v4799
    %v5136 = vunpack.c.l.b16 %v4800
    %v5137 = vunpack.c.h.b16 %v4800
    %v5138 = vunpack.c.l.b16 %v4801
    %v5139 = vunpack.c.h.b16 %v4801
    %v5140 = vunpack.c.l.b16 %v4802
    %v5141 = vunpack.c.h.b16 %v4802
    %v5142 = vunpack.c.l.b16 %v4803
    %v5143 = vunpack.c.h.b16 %v4803
    %v5144 = vunpack.c.l.b16 %v4804
    %v5145 = vunpack.c.h.b16 %v4804
    %v5146 = vunpack.c.l.b16 %v4805
    %v5147 = vunpack.c.h.b16 %v4805
    %v5148 = vunpack.c.l.b16 %v4806
    %v5149 = vunpack.c.h.b16 %v4806
    %v5150 = vunpack.c.l.b16 %v4807
    %v5151 = vunpack.c.h.b16 %v4807
    %v5152 = vunpack.c.l.b16 %v4808
    %v5153 = vunpack.c.h.b16 %v4808
    %v5154 = vunpack.c.l.b16 %v4809
    %v5155 = vunpack.c.h.b16 %v4809
    %v5156 = vunpack.c.l.b16 %v4810
    %v5157 = vunpack.c.h.b16 %v4810
    %v5158 = vunpack.c.l.b16 %v4811
    %v5159 = vunpack.c.h.b16 %v4811
    %v5160 = vunpack.c.l.b16 %v4812
    %v5161 = vunpack.c.h.b16 %v4812
    %v5162 = vunpack.c.l.b16 %v4813
    %v5163 = vunpack.c.h.b16 %v4813
    %v5164 = vunpack.c.l.b16 %v4814
    %v5165 = vunpack.c.h.b16 %v4814
    %v5166 = vunpack.c.l.b16 %v4815
    %v5167 = vunpack.c.h.b16 %v4815
    %v5168 = vunpack.c.l.b16 %v4816
    %v5169 = vunpack.c.h.b16 %v4816
    %v5170 = vunpack.c.l.b16 %v4817
    %v5171 = vunpack.c.h.b16 %v4817
    %v5172 = vunpack.c.l.b16 %v4818
    %v5173 = vunpack.c.h.b16 %v4818
    %v5174 = vunpack.c.l.b16 %v4819
    %v5175 = vunpack.c.h.b16 %v4819
    %v5176 = vunpack.c.l.b16 %v4820
    %v5177 = vunpack.c.h.b16 %v4820
    %v5178 = vunpack.c.l.b16 %v4821
    %v5179 = vunpack.c.h.b16 %v4821
    %v5180 = vunpack.c.l.b16 %v4822
    %v5181 = vunpack.c.h.b16 %v4822
    %v5182 = vunpack.c.l.b16 %v4823
    %v5183 = vunpack.c.h.b16 %v4823
    %v5184 = vunpack.c.l.b16 %v4824
    %v5185 = vunpack.c.h.b16 %v4824
    %v5186 = vunpack.c.l.b16 %v4825
    %v5187 = vunpack.c.h.b16 %v4825
    %v5188 = vunpack.c.l.b16 %v4826
    %v5189 = vunpack.c.h.b16 %v4826
    %v5190 = vunpack.c.l.b16 %v4827
    %v5191 = vunpack.c.h.b16 %v4827
    %v5192 = vunpack.c.l.b16 %v4828
    %v5193 = vunpack.c.h.b16 %v4828
    %v5194 = vunpack.c.l.b16 %v4829
    %v5195 = vunpack.c.h.b16 %v4829
    %v5196 = vunpack.c.l.b16 %v4830
    %v5197 = vunpack.c.h.b16 %v4830
    %v5198 = vunpack.c.l.b16 %v4831
    %v5199 = vunpack.c.h.b16 %v4831
    %v5200 = vunpack.c.l.b16 %v4832
    %v5201 = vunpack.c.h.b16 %v4832
    %v5202 = vunpack.c.l.b16 %v4833
    %v5203 = vunpack.c.h.b16 %v4833
    %v5204 = vunpack.c.l.b16 %v4834
    %v5205 = vunpack.c.h.b16 %v4834
    %v5206 = vunpack.c.l.b16 %v4835
    %v5207 = vunpack.c.h.b16 %v4835
    %v5208 = vunpack.c.l.b16 %v4836
    %v5209 = vunpack.c.h.b16 %v4836
    %v5210 = vunpack.c.l.b16 %v4837
    %v5211 = vunpack.c.h.b16 %v4837
    %v5212 = vunpack.c.l.b16 %v4838
    %v5213 = vunpack.c.h.b16 %v4838
    %v5214 = vunpack.c.l.b16 %v4839
    %v5215 = vunpack.c.h.b16 %v4839
    %v5216 = vunpack.c.l.b16 %v4840
    %v5217 = vunpack.c.h.b16 %v4840
    %v5218 = vunpack.c.l.b16 %v4841
    %v5219 = vunpack.c.h.b16 %v4841
    %v5220 = vunpack.c.l.b16 %v4842
    %v5221 = vunpack.c.h.b16 %v4842
    %v5222 = vunpack.c.l.b16 %v4843
    %v5223 = vunpack.c.h.b16 %v4843
    %v5224 = vunpack.c.l.b16 %v4844
    %v5225 = vunpack.c.h.b16 %v4844
    %v5226 = vunpack.c.l.b16 %v4845
    %v5227 = vunpack.c.h.b16 %v4845
    %v5228 = vunpack.c.l.b16 %v4846
    %v5229 = vunpack.c.h.b16 %v4846
    %v5230 = vunpack.c.l.b16 %v4847
    %v5231 = vunpack.c.h.b16 %v4847
    %v5232 = vunpack.c.l.b16 %v4848
    %v5233 = vunpack.c.h.b16 %v4848
    %v5234 = vunpack.c.l.b16 %v4849
    %v5235 = vunpack.c.h.b16 %v4849
    %v5236 = vunpack.c.l.b16 %v4850
    %v5237 = vunpack.c.h.b16 %v4850
    %v5238 = vunpack.c.l.b16 %v4851
    %v5239 = vunpack.c.h.b16 %v4851
    %v5240 = vunpack.c.l.b16 %v4852
    %v5241 = vunpack.c.h.b16 %v4852
    %v5242 = vunpack.c.l.b16 %v4853
    %v5243 = vunpack.c.h.b16 %v4853
    %v5244 = vunpack.c.l.b16 %v4854
    %v5245 = vunpack.c.h.b16 %v4854
    %v5246 = vunpack.c.l.b16 %v4855
    %v5247 = vunpack.c.h.b16 %v4855
    %v5248 = vunpack.c.l.b16 %v4856
    %v5249 = vunpack.c.h.b16 %v4856
    %v5250 = vunpack.c.l.b16 %v4857
    %v5251 = vunpack.c.h.b16 %v4857
    %v5252 = vpack.c.b16 %v5000, %v4996
    %v5253 = vpack.c.b16 %v5001, %v4997
    %v5254 = vpack.c.b16 %v5002, %v4998
    %v5255 = vpack.c.b16 %v5003, %v4999
    %v5256 = vpack.c.b16 %v5008, %v5004
    %v5257 = vpack.c.b16 %v5009, %v5005
    %v5258 = vpack.c.b16 %v5010, %v5006
    %v5259 = vpack.c.b16 %v5011, %v5007
    %v5260 = vpack.c.b16 %v5016, %v5012
    %v5261 = vpack.c.b16 %v5017, %v5013
    %v5262 = vpack.c.b16 %v5018, %v5014
    %v5263 = vpack.c.b16 %v5019, %v5015
    %v5264 = vpack.c.b16 %v5024, %v5020
    %v5265 = vpack.c.b16 %v5025, %v5021
    %v5266 = vpack.c.b16 %v5026, %v5022
    %v5267 = vpack.c.b16 %v5027, %v5023
    %v5268 = vpack.c.b16 %v5032, %v5028
    %v5269 = vpack.c.b16 %v5033, %v5029
    %v5270 = vpack.c.b16 %v5034, %v5030
    %v5271 = vpack.c.b16 %v5035, %v5031
    %v5272 = vpack.c.b16 %v5040, %v5036
    %v5273 = vpack.c.b16 %v5041, %v5037
    %v5274 = vpack.c.b16 %v5042, %v5038
    %v5275 = vpack.c.b16 %v5043, %v5039
    %v5276 = vpack.c.b16 %v5048, %v5044
    %v5277 = vpack.c.b16 %v5049, %v5045
    %v5278 = vpack.c.b16 %v5050, %v5046
    %v5279 = vpack.c.b16 %v5051, %v5047
    %v5280 = vpack.c.b16 %v5056, %v5052
    %v5281 = vpack.c.b16 %v5057, %v5053
    %v5282 = vpack.c.b16 %v5058, %v5054
    %v5283 = vpack.c.b16 %v5059, %v5055
    %v5284 = vpack.c.b16 %v5064, %v5060
    %v5285 = vpack.c.b16 %v5065, %v5061
    %v5286 = vpack.c.b16 %v5066, %v5062
    %v5287 = vpack.c.b16 %v5067, %v5063
    %v5288 = vpack.c.b16 %v5072, %v5068
    %v5289 = vpack.c.b16 %v5073, %v5069
    %v5290 = vpack.c.b16 %v5074, %v5070
    %v5291 = vpack.c.b16 %v5075, %v5071
    %v5292 = vpack.c.b16 %v5080, %v5076
    %v5293 = vpack.c.b16 %v5081, %v5077
    %v5294 = vpack.c.b16 %v5082, %v5078
    %v5295 = vpack.c.b16 %v5083, %v5079
    %v5296 = vpack.c.b16 %v5088, %v5084
    %v5297 = vpack.c.b16 %v5089, %v5085
    %v5298 = vpack.c.b16 %v5090, %v5086
    %v5299 = vpack.c.b16 %v5091, %v5087
    %v5300 = vpack.c.b16 %v5096, %v5092
    %v5301 = vpack.c.b16 %v5097, %v5093
    %v5302 = vpack.c.b16 %v5098, %v5094
    %v5303 = vpack.c.b16 %v5099, %v5095
    %v5304 = vpack.c.b16 %v5104, %v5100
    %v5305 = vpack.c.b16 %v5105, %v5101
    %v5306 = vpack.c.b16 %v5106, %v5102
    %v5307 = vpack.c.b16 %v5107, %v5103
    %v5308 = vpack.c.b16 %v5112, %v5108
    %v5309 = vpack.c.b16 %v5113, %v5109
    %v5310 = vpack.c.b16 %v5114, %v5110
    %v5311 = vpack.c.b16 %v5115, %v5111
    %v5312 = vpack.c.b16 %v5120, %v5116
    %v5313 = vpack.c.b16 %v5121, %v5117
    %v5314 = vpack.c.b16 %v5122, %v5118
    %v5315 = vpack.c.b16 %v5123, %v5119
    %v5316 = vpack.c.b16 %v5128, %v5124
    %v5317 = vpack.c.b16 %v5129, %v5125
    %v5318 = vpack.c.b16 %v5130, %v5126
    %v5319 = vpack.c.b16 %v5131, %v5127
    %v5320 = vpack.c.b16 %v5136, %v5132
    %v5321 = vpack.c.b16 %v5137, %v5133
    %v5322 = vpack.c.b16 %v5138, %v5134
    %v5323 = vpack.c.b16 %v5139, %v5135
    %v5324 = vpack.c.b16 %v5144, %v5140
    %v5325 = vpack.c.b16 %v5145, %v5141
    %v5326 = vpack.c.b16 %v5146, %v5142
    %v5327 = vpack.c.b16 %v5147, %v5143
    %v5328 = vpack.c.b16 %v5152, %v5148
    %v5329 = vpack.c.b16 %v5153, %v5149
    %v5330 = vpack.c.b16 %v5154, %v5150
    %v5331 = vpack.c.b16 %v5155, %v5151
    %v5332 = vpack.c.b16 %v5160, %v5156
    %v5333 = vpack.c.b16 %v5161, %v5157
    %v5334 = vpack.c.b16 %v5162, %v5158
    %v5335 = vpack.c.b16 %v5163, %v5159
    %v5336 = vpack.c.b16 %v5168, %v5164
    %v5337 = vpack.c.b16 %v5169, %v5165
    %v5338 = vpack.c.b16 %v5170, %v5166
    %v5339 = vpack.c.b16 %v5171, %v5167
    %v5340 = vpack.c.b16 %v5176, %v5172
    %v5341 = vpack.c.b16 %v5177, %v5173
    %v5342 = vpack.c.b16 %v5178, %v5174
    %v5343 = vpack.c.b16 %v5179, %v5175
    %v5344 = vpack.c.b16 %v5184, %v5180
    %v5345 = vpack.c.b16 %v5185, %v5181
    %v5346 = vpack.c.b16 %v5186, %v5182
    %v5347 = vpack.c.b16 %v5187, %v5183
    %v5348 = vpack.c.b16 %v5192, %v5188
    %v5349 = vpack.c.b16 %v5193, %v5189
    %v5350 = vpack.c.b16 %v5194, %v5190
    %v5351 = vpack.c.b16 %v5195, %v5191
    %v5352 = vpack.c.b16 %v5200, %v5196
    %v5353 = vpack.c.b16 %v5201, %v5197
    %v5354 = vpack.c.b16 %v5202, %v5198
    %v5355 = vpack.c.b16 %v5203, %v5199
    %v5356 = vpack.c.b16 %v5208, %v5204
    %v5357 = vpack.c.b16 %v5209, %v5205
    %v5358 = vpack.c.b16 %v5210, %v5206
    %v5359 = vpack.c.b16 %v5211, %v5207
    %v5360 = vpack.c.b16 %v5216, %v5212
    %v5361 = vpack.c.b16 %v5217, %v5213
    %v5362 = vpack.c.b16 %v5218, %v5214
    %v5363 = vpack.c.b16 %v5219, %v5215
    %v5364 = vpack.c.b16 %v5224, %v5220
    %v5365 = vpack.c.b16 %v5225, %v5221
    %v5366 = vpack.c.b16 %v5226, %v5222
    %v5367 = vpack.c.b16 %v5227, %v5223
    %v5368 = vpack.c.b16 %v5232, %v5228
    %v5369 = vpack.c.b16 %v5233, %v5229
    %v5370 = vpack.c.b16 %v5234, %v5230
    %v5371 = vpack.c.b16 %v5235, %v5231
    %v5372 = vpack.c.b16 %v5240, %v5236
    %v5373 = vpack.c.b16 %v5241, %v5237
    %v5374 = vpack.c.b16 %v5242, %v5238
    %v5375 = vpack.c.b16 %v5243, %v5239
    %v5376 = vpack.c.b16 %v5248, %v5244
    %v5377 = vpack.c.b16 %v5249, %v5245
    %v5378 = vpack.c.b16 %v5250, %v5246
    %v5379 = vpack.c.b16 %v5251, %v5247
    %5508 = vmatpush.bf16.msra.mxu0 %v5280
    %5509 = vmatpush.bf16.msra.mxu0 %v5276
    %5510 = vmatpush.bf16.msra.mxu0 %v5272
    %5511 = vmatpush.bf16.msra.mxu0 %v5268
    %5512 = vmatpush.bf16.msra.mxu0 %v5264
    %5513 = vmatpush.bf16.msra.mxu0 %v5260
    %5514 = vmatpush.bf16.msra.mxu0 %v5256
    %5515 = vmatpush.bf16.msra.mxu0 %v5252
    %5516 = vmatmul.bf16.gmra.mxu0 %v366
    %v5517 = vpop.f32.mrf.mxu0
    %v5518 = vadd.f32 %v4860, %v5517
    %v5519 = vpop.f32.mrf.mxu0
    %v5520 = vadd.f32 %v4860, %v5519
    %5521 = vmatmul.bf16.gmra.mxu0 %v370
    %v5522 = vpop.f32.mrf.mxu0
    %v5523 = vadd.f32 %v4860, %v5522
    %v5524 = vpop.f32.mrf.mxu0
    %v5525 = vadd.f32 %v4860, %v5524
    %5526 = vdwg.mxu0
    %5527 = vmatpush.bf16.msra.mxu0 %v5312
    %5528 = vmatpush.bf16.msra.mxu0 %v5308
    %5529 = vmatpush.bf16.msra.mxu0 %v5304
    %5530 = vmatpush.bf16.msra.mxu0 %v5300
    %5531 = vmatpush.bf16.msra.mxu0 %v5296
    %5532 = vmatpush.bf16.msra.mxu0 %v5292
    %5533 = vmatpush.bf16.msra.mxu0 %v5288
    %5534 = vmatpush.bf16.msra.mxu0 %v5284
    %5535 = vmatmul.bf16.gmra.mxu0 %v367
    %v5536 = vpop.f32.mrf.mxu0
    %v5537 = vadd.f32 %v5518, %v5536
    %v5538 = vpop.f32.mrf.mxu0
    %v5539 = vadd.f32 %v5520, %v5538
    %5540 = vmatmul.bf16.gmra.mxu0 %v371
    %v5541 = vpop.f32.mrf.mxu0
    %v5542 = vadd.f32 %v5523, %v5541
    %v5543 = vpop.f32.mrf.mxu0
    %v5544 = vadd.f32 %v5525, %v5543
    %5545 = vdwg.mxu0
    %5546 = vmatpush.bf16.msra.mxu0 %v5344
    %5547 = vmatpush.bf16.msra.mxu0 %v5340
    %5548 = vmatpush.bf16.msra.mxu0 %v5336
    %5549 = vmatpush.bf16.msra.mxu0 %v5332
    %5550 = vmatpush.bf16.msra.mxu0 %v5328
    %5551 = vmatpush.bf16.msra.mxu0 %v5324
    %5552 = vmatpush.bf16.msra.mxu0 %v5320
    %5553 = vmatpush.bf16.msra.mxu0 %v5316
    %5554 = vmatmul.bf16.gmra.mxu0 %v368
    %v5555 = vpop.f32.mrf.mxu0
    %v5556 = vadd.f32 %v5537, %v5555
    %v5557 = vpop.f32.mrf.mxu0
    %v5558 = vadd.f32 %v5539, %v5557
    %5559 = vmatmul.bf16.gmra.mxu0 %v372
    %v5560 = vpop.f32.mrf.mxu0
    %v5561 = vadd.f32 %v5542, %v5560
    %v5562 = vpop.f32.mrf.mxu0
    %v5563 = vadd.f32 %v5544, %v5562
    %5564 = vdwg.mxu0
    %5565 = vmatpush.bf16.msra.mxu0 %v5376
    %5566 = vmatpush.bf16.msra.mxu0 %v5372
    %5567 = vmatpush.bf16.msra.mxu0 %v5368
    %5568 = vmatpush.bf16.msra.mxu0 %v5364
    %5569 = vmatpush.bf16.msra.mxu0 %v5360
    %5570 = vmatpush.bf16.msra.mxu0 %v5356
    %5571 = vmatpush.bf16.msra.mxu0 %v5352
    %5572 = vmatpush.bf16.msra.mxu0 %v5348
    %5573 = vmatmul.bf16.gmra.mxu0 %v369
    %v5574 = vpop.f32.mrf.mxu0
    %v5575 = vadd.f32 %v5556, %v5574
    %v5576 = vpop.f32.mrf.mxu0
    %v5577 = vadd.f32 %v5558, %v5576
    %5578 = vmatmul.bf16.gmra.mxu0 %v373
    %v5579 = vpop.f32.mrf.mxu0
    %v5580 = vadd.f32 %v5561, %v5579
    %v5581 = vpop.f32.mrf.mxu0
    %v5582 = vadd.f32 %v5563, %v5581
    %5583 = vdwg.mxu0
    %5584 = vmatpush.bf16.msra.mxu0 %v5281
    %5585 = vmatpush.bf16.msra.mxu0 %v5277
    %5586 = vmatpush.bf16.msra.mxu0 %v5273
    %5587 = vmatpush.bf16.msra.mxu0 %v5269
    %5588 = vmatpush.bf16.msra.mxu0 %v5265
    %5589 = vmatpush.bf16.msra.mxu0 %v5261
    %5590 = vmatpush.bf16.msra.mxu0 %v5257
    %5591 = vmatpush.bf16.msra.mxu0 %v5253
    %5592 = vmatmul.bf16.gmra.mxu0 %v366
    %v5593 = vpop.f32.mrf.mxu0
    %v5594 = vadd.f32 %v4861, %v5593
    %v5595 = vpop.f32.mrf.mxu0
    %v5596 = vadd.f32 %v4861, %v5595
    %5597 = vmatmul.bf16.gmra.mxu0 %v370
    %v5598 = vpop.f32.mrf.mxu0
    %v5599 = vadd.f32 %v4861, %v5598
    %v5600 = vpop.f32.mrf.mxu0
    %v5601 = vadd.f32 %v4861, %v5600
    %5602 = vdwg.mxu0
    %5603 = vmatpush.bf16.msra.mxu0 %v5313
    %5604 = vmatpush.bf16.msra.mxu0 %v5309
    %5605 = vmatpush.bf16.msra.mxu0 %v5305
    %5606 = vmatpush.bf16.msra.mxu0 %v5301
    %5607 = vmatpush.bf16.msra.mxu0 %v5297
    %5608 = vmatpush.bf16.msra.mxu0 %v5293
    %5609 = vmatpush.bf16.msra.mxu0 %v5289
    %5610 = vmatpush.bf16.msra.mxu0 %v5285
    %5611 = vmatmul.bf16.gmra.mxu0 %v367
    %v5612 = vpop.f32.mrf.mxu0
    %v5613 = vadd.f32 %v5594, %v5612
    %v5614 = vpop.f32.mrf.mxu0
    %v5615 = vadd.f32 %v5596, %v5614
    %5616 = vmatmul.bf16.gmra.mxu0 %v371
    %v5617 = vpop.f32.mrf.mxu0
    %v5618 = vadd.f32 %v5599, %v5617
    %v5619 = vpop.f32.mrf.mxu0
    %v5620 = vadd.f32 %v5601, %v5619
    %5621 = vdwg.mxu0
    %5622 = vmatpush.bf16.msra.mxu0 %v5345
    %5623 = vmatpush.bf16.msra.mxu0 %v5341
    %5624 = vmatpush.bf16.msra.mxu0 %v5337
    %5625 = vmatpush.bf16.msra.mxu0 %v5333
    %5626 = vmatpush.bf16.msra.mxu0 %v5329
    %5627 = vmatpush.bf16.msra.mxu0 %v5325
    %5628 = vmatpush.bf16.msra.mxu0 %v5321
    %5629 = vmatpush.bf16.msra.mxu0 %v5317
    %5630 = vmatmul.bf16.gmra.mxu0 %v368
    %v5631 = vpop.f32.mrf.mxu0
    %v5632 = vadd.f32 %v5613, %v5631
    %v5633 = vpop.f32.mrf.mxu0
    %v5634 = vadd.f32 %v5615, %v5633
    %5635 = vmatmul.bf16.gmra.mxu0 %v372
    %v5636 = vpop.f32.mrf.mxu0
    %v5637 = vadd.f32 %v5618, %v5636
    %v5638 = vpop.f32.mrf.mxu0
    %v5639 = vadd.f32 %v5620, %v5638
    %5640 = vdwg.mxu0
    %5641 = vmatpush.bf16.msra.mxu0 %v5377
    %5642 = vmatpush.bf16.msra.mxu0 %v5373
    %5643 = vmatpush.bf16.msra.mxu0 %v5369
    %5644 = vmatpush.bf16.msra.mxu0 %v5365
    %5645 = vmatpush.bf16.msra.mxu0 %v5361
    %5646 = vmatpush.bf16.msra.mxu0 %v5357
    %5647 = vmatpush.bf16.msra.mxu0 %v5353
    %5648 = vmatpush.bf16.msra.mxu0 %v5349
    %5649 = vmatmul.bf16.gmra.mxu0 %v369
    %v5650 = vpop.f32.mrf.mxu0
    %v5651 = vadd.f32 %v5632, %v5650
    %v5652 = vpop.f32.mrf.mxu0
    %v5653 = vadd.f32 %v5634, %v5652
    %5654 = vmatmul.bf16.gmra.mxu0 %v373
    %v5655 = vpop.f32.mrf.mxu0
    %v5656 = vadd.f32 %v5637, %v5655
    %v5657 = vpop.f32.mrf.mxu0
    %v5658 = vadd.f32 %v5639, %v5657
    %5659 = vdwg.mxu0
    %5660 = vmatpush.bf16.msra.mxu0 %v5282
    %5661 = vmatpush.bf16.msra.mxu0 %v5278
    %5662 = vmatpush.bf16.msra.mxu0 %v5274
    %5663 = vmatpush.bf16.msra.mxu0 %v5270
    %5664 = vmatpush.bf16.msra.mxu0 %v5266
    %5665 = vmatpush.bf16.msra.mxu0 %v5262
    %5666 = vmatpush.bf16.msra.mxu0 %v5258
    %5667 = vmatpush.bf16.msra.mxu0 %v5254
    %5668 = vmatmul.bf16.gmra.mxu0 %v366
    %v5669 = vpop.f32.mrf.mxu0
    %v5670 = vadd.f32 %v4862, %v5669
    %v5671 = vpop.f32.mrf.mxu0
    %v5672 = vadd.f32 %v4862, %v5671
    %5673 = vmatmul.bf16.gmra.mxu0 %v370
    %v5674 = vpop.f32.mrf.mxu0
    %v5675 = vadd.f32 %v4862, %v5674
    %v5676 = vpop.f32.mrf.mxu0
    %v5677 = vadd.f32 %v4862, %v5676
    %5678 = vdwg.mxu0
    %5679 = vmatpush.bf16.msra.mxu0 %v5314
    %5680 = vmatpush.bf16.msra.mxu0 %v5310
    %5681 = vmatpush.bf16.msra.mxu0 %v5306
    %5682 = vmatpush.bf16.msra.mxu0 %v5302
    %5683 = vmatpush.bf16.msra.mxu0 %v5298
    %5684 = vmatpush.bf16.msra.mxu0 %v5294
    %5685 = vmatpush.bf16.msra.mxu0 %v5290
    %5686 = vmatpush.bf16.msra.mxu0 %v5286
    %5687 = vmatmul.bf16.gmra.mxu0 %v367
    %v5688 = vpop.f32.mrf.mxu0
    %v5689 = vadd.f32 %v5670, %v5688
    %v5690 = vpop.f32.mrf.mxu0
    %v5691 = vadd.f32 %v5672, %v5690
    %5692 = vmatmul.bf16.gmra.mxu0 %v371
    %v5693 = vpop.f32.mrf.mxu0
    %v5694 = vadd.f32 %v5675, %v5693
    %v5695 = vpop.f32.mrf.mxu0
    %v5696 = vadd.f32 %v5677, %v5695
    %5697 = vdwg.mxu0
    %5698 = vmatpush.bf16.msra.mxu0 %v5346
    %5699 = vmatpush.bf16.msra.mxu0 %v5342
    %5700 = vmatpush.bf16.msra.mxu0 %v5338
    %5701 = vmatpush.bf16.msra.mxu0 %v5334
    %5702 = vmatpush.bf16.msra.mxu0 %v5330
    %5703 = vmatpush.bf16.msra.mxu0 %v5326
    %5704 = vmatpush.bf16.msra.mxu0 %v5322
    %5705 = vmatpush.bf16.msra.mxu0 %v5318
    %5706 = vmatmul.bf16.gmra.mxu0 %v368
    %v5707 = vpop.f32.mrf.mxu0
    %v5708 = vadd.f32 %v5689, %v5707
    %v5709 = vpop.f32.mrf.mxu0
    %v5710 = vadd.f32 %v5691, %v5709
    %5711 = vmatmul.bf16.gmra.mxu0 %v372
    %v5712 = vpop.f32.mrf.mxu0
    %v5713 = vadd.f32 %v5694, %v5712
    %v5714 = vpop.f32.mrf.mxu0
    %v5715 = vadd.f32 %v5696, %v5714
    %5716 = vdwg.mxu0
    %5717 = vmatpush.bf16.msra.mxu0 %v5378
    %5718 = vmatpush.bf16.msra.mxu0 %v5374
    %5719 = vmatpush.bf16.msra.mxu0 %v5370
    %5720 = vmatpush.bf16.msra.mxu0 %v5366
    %5721 = vmatpush.bf16.msra.mxu0 %v5362
    %5722 = vmatpush.bf16.msra.mxu0 %v5358
    %5723 = vmatpush.bf16.msra.mxu0 %v5354
    %5724 = vmatpush.bf16.msra.mxu0 %v5350
    %5725 = vmatmul.bf16.gmra.mxu0 %v369
    %v5726 = vpop.f32.mrf.mxu0
    %v5727 = vadd.f32 %v5708, %v5726
    %v5728 = vpop.f32.mrf.mxu0
    %v5729 = vadd.f32 %v5710, %v5728
    %5730 = vmatmul.bf16.gmra.mxu0 %v373
    %v5731 = vpop.f32.mrf.mxu0
    %v5732 = vadd.f32 %v5713, %v5731
    %v5733 = vpop.f32.mrf.mxu0
    %v5734 = vadd.f32 %v5715, %v5733
    %5735 = vdwg.mxu0
    %5736 = vmatpush.bf16.msra.mxu0 %v5283
    %5737 = vmatpush.bf16.msra.mxu0 %v5279
    %5738 = vmatpush.bf16.msra.mxu0 %v5275
    %5739 = vmatpush.bf16.msra.mxu0 %v5271
    %5740 = vmatpush.bf16.msra.mxu0 %v5267
    %5741 = vmatpush.bf16.msra.mxu0 %v5263
    %5742 = vmatpush.bf16.msra.mxu0 %v5259
    %5743 = vmatpush.bf16.msra.mxu0 %v5255
    %5744 = vmatmul.bf16.gmra.mxu0 %v366
    %v5745 = vpop.f32.mrf.mxu0
    %v5746 = vadd.f32 %v4863, %v5745
    %v5747 = vpop.f32.mrf.mxu0
    %v5748 = vadd.f32 %v4863, %v5747
    %5749 = vmatmul.bf16.gmra.mxu0 %v370
    %v5750 = vpop.f32.mrf.mxu0
    %v5751 = vadd.f32 %v4863, %v5750
    %v5752 = vpop.f32.mrf.mxu0
    %v5753 = vadd.f32 %v4863, %v5752
    %5754 = vdwg.mxu0
    %5755 = vmatpush.bf16.msra.mxu0 %v5315
    %5756 = vmatpush.bf16.msra.mxu0 %v5311
    %5757 = vmatpush.bf16.msra.mxu0 %v5307
    %5758 = vmatpush.bf16.msra.mxu0 %v5303
    %5759 = vmatpush.bf16.msra.mxu0 %v5299
    %5760 = vmatpush.bf16.msra.mxu0 %v5295
    %5761 = vmatpush.bf16.msra.mxu0 %v5291
    %5762 = vmatpush.bf16.msra.mxu0 %v5287
    %5763 = vmatmul.bf16.gmra.mxu0 %v367
    %v5764 = vpop.f32.mrf.mxu0
    %v5765 = vadd.f32 %v5746, %v5764
    %v5766 = vpop.f32.mrf.mxu0
    %v5767 = vadd.f32 %v5748, %v5766
    %5768 = vmatmul.bf16.gmra.mxu0 %v371
    %v5769 = vpop.f32.mrf.mxu0
    %v5770 = vadd.f32 %v5751, %v5769
    %v5771 = vpop.f32.mrf.mxu0
    %v5772 = vadd.f32 %v5753, %v5771
    %5773 = vdwg.mxu0
    %5774 = vmatpush.bf16.msra.mxu0 %v5347
    %5775 = vmatpush.bf16.msra.mxu0 %v5343
    %5776 = vmatpush.bf16.msra.mxu0 %v5339
    %5777 = vmatpush.bf16.msra.mxu0 %v5335
    %5778 = vmatpush.bf16.msra.mxu0 %v5331
    %5779 = vmatpush.bf16.msra.mxu0 %v5327
    %5780 = vmatpush.bf16.msra.mxu0 %v5323
    %5781 = vmatpush.bf16.msra.mxu0 %v5319
    %5782 = vmatmul.bf16.gmra.mxu0 %v368
    %v5783 = vpop.f32.mrf.mxu0
    %v5784 = vadd.f32 %v5765, %v5783
    %v5785 = vpop.f32.mrf.mxu0
    %v5786 = vadd.f32 %v5767, %v5785
    %5787 = vmatmul.bf16.gmra.mxu0 %v372
    %v5788 = vpop.f32.mrf.mxu0
    %v5789 = vadd.f32 %v5770, %v5788
    %v5790 = vpop.f32.mrf.mxu0
    %v5791 = vadd.f32 %v5772, %v5790
    %5792 = vdwg.mxu0
    %5793 = vmatpush.bf16.msra.mxu0 %v5379
    %5794 = vmatpush.bf16.msra.mxu0 %v5375
    %5795 = vmatpush.bf16.msra.mxu0 %v5371
    %5796 = vmatpush.bf16.msra.mxu0 %v5367
    %5797 = vmatpush.bf16.msra.mxu0 %v5363
    %5798 = vmatpush.bf16.msra.mxu0 %v5359
    %5799 = vmatpush.bf16.msra.mxu0 %v5355
    %5800 = vmatpush.bf16.msra.mxu0 %v5351
    %5801 = vmatmul.bf16.gmra.mxu0 %v369
    %v5802 = vpop.f32.mrf.mxu0
    %v5803 = vadd.f32 %v5784, %v5802
    %v5804 = vpop.f32.mrf.mxu0
    %v5805 = vadd.f32 %v5786, %v5804
    %5806 = vmatmul.bf16.gmra.mxu0 %v373
    %v5807 = vpop.f32.mrf.mxu0
    %v5808 = vadd.f32 %v5789, %v5807
    %v5809 = vpop.f32.mrf.mxu0
    %v5810 = vadd.f32 %v5791, %v5809
    %5811 = vdwg.mxu0
    %v5812 = vmax.f32 %v5575, 0.0
    %v5813 = vmax.f32 %v5651, 0.0
    %v5814 = vmax.f32 %v5727, 0.0
    %v5815 = vmax.f32 %v5803, 0.0
    %v5816 = vmax.f32 %v5577, 0.0
    %v5817 = vmax.f32 %v5653, 0.0
    %v5818 = vmax.f32 %v5729, 0.0
    %v5819 = vmax.f32 %v5805, 0.0
    %v5820 = vmax.f32 %v5580, 0.0
    %v5821 = vmax.f32 %v5656, 0.0
    %v5822 = vmax.f32 %v5732, 0.0
    %v5823 = vmax.f32 %v5808, 0.0
    %v5824 = vmax.f32 %v5582, 0.0
    %v5825 = vmax.f32 %v5658, 0.0
    %v5826 = vmax.f32 %v5734, 0.0
    %v5827 = vmax.f32 %v5810, 0.0
    %v5828 = vpack.c.bf16 %v5816, %v5812
    %v5829 = vpack.c.bf16 %v5817, %v5813
    %v5830 = vpack.c.bf16 %v5818, %v5814
    %v5831 = vpack.c.bf16 %v5819, %v5815
    %v5832 = vpack.c.bf16 %v5824, %v5820
    %v5833 = vpack.c.bf16 %v5825, %v5821
    %v5834 = vpack.c.bf16 %v5826, %v5822
    %v5835 = vpack.c.bf16 %v5827, %v5823
    %v5836 = vld [vmem:[#allocation10 + $0x800] sm:$0xff]
    %v5837 = vld [vmem:[#allocation10 + $0x808] sm:$0xff]
    %v5838 = vld [vmem:[#allocation10 + $0x810] sm:$0xff]
    %v5839 = vld [vmem:[#allocation10 + $0x818] sm:$0xff]
    %v5840 = vld [vmem:[#allocation10 + $0x820] sm:$0xff]
    %v5841 = vld [vmem:[#allocation10 + $0x828] sm:$0xff]
    %v5842 = vld [vmem:[#allocation10 + $0x830] sm:$0xff]
    %v5843 = vld [vmem:[#allocation10 + $0x838] sm:$0xff]
    %v5844 = vld [vmem:[#allocation10 + $0x840] sm:$0xff]
    %v5845 = vld [vmem:[#allocation10 + $0x848] sm:$0xff]
    %v5846 = vld [vmem:[#allocation10 + $0x850] sm:$0xff]
    %v5847 = vld [vmem:[#allocation10 + $0x858] sm:$0xff]
    %v5848 = vld [vmem:[#allocation10 + $0x860] sm:$0xff]
    %v5849 = vld [vmem:[#allocation10 + $0x868] sm:$0xff]
    %v5850 = vld [vmem:[#allocation10 + $0x870] sm:$0xff]
    %v5851 = vld [vmem:[#allocation10 + $0x878] sm:$0xff]
    %v5852 = vld [vmem:[#allocation10 + $0x880] sm:$0xff]
    %v5853 = vld [vmem:[#allocation10 + $0x888] sm:$0xff]
    %v5854 = vld [vmem:[#allocation10 + $0x890] sm:$0xff]
    %v5855 = vld [vmem:[#allocation10 + $0x898] sm:$0xff]
    %v5856 = vld [vmem:[#allocation10 + $0x8a0] sm:$0xff]
    %v5857 = vld [vmem:[#allocation10 + $0x8a8] sm:$0xff]
    %v5858 = vld [vmem:[#allocation10 + $0x8b0] sm:$0xff]
    %v5859 = vld [vmem:[#allocation10 + $0x8b8] sm:$0xff]
    %v5860 = vld [vmem:[#allocation10 + $0x8c0] sm:$0xff]
    %v5861 = vld [vmem:[#allocation10 + $0x8c8] sm:$0xff]
    %v5862 = vld [vmem:[#allocation10 + $0x8d0] sm:$0xff]
    %v5863 = vld [vmem:[#allocation10 + $0x8d8] sm:$0xff]
    %v5864 = vld [vmem:[#allocation10 + $0x8e0] sm:$0xff]
    %v5865 = vld [vmem:[#allocation10 + $0x8e8] sm:$0xff]
    %v5866 = vld [vmem:[#allocation10 + $0x8f0] sm:$0xff]
    %v5867 = vld [vmem:[#allocation10 + $0x8f8] sm:$0xff]
    %v5868 = vld [vmem:[#allocation10 + $0x900] sm:$0xff]
    %v5869 = vld [vmem:[#allocation10 + $0x908] sm:$0xff]
    %v5870 = vld [vmem:[#allocation10 + $0x910] sm:$0xff]
    %v5871 = vld [vmem:[#allocation10 + $0x918] sm:$0xff]
    %v5872 = vld [vmem:[#allocation10 + $0x920] sm:$0xff]
    %v5873 = vld [vmem:[#allocation10 + $0x928] sm:$0xff]
    %v5874 = vld [vmem:[#allocation10 + $0x930] sm:$0xff]
    %v5875 = vld [vmem:[#allocation10 + $0x938] sm:$0xff]
    %v5876 = vld [vmem:[#allocation10 + $0x940] sm:$0xff]
    %v5877 = vld [vmem:[#allocation10 + $0x948] sm:$0xff]
    %v5878 = vld [vmem:[#allocation10 + $0x950] sm:$0xff]
    %v5879 = vld [vmem:[#allocation10 + $0x958] sm:$0xff]
    %v5880 = vld [vmem:[#allocation10 + $0x960] sm:$0xff]
    %v5881 = vld [vmem:[#allocation10 + $0x968] sm:$0xff]
    %v5882 = vld [vmem:[#allocation10 + $0x970] sm:$0xff]
    %v5883 = vld [vmem:[#allocation10 + $0x978] sm:$0xff]
    %v5884 = vld [vmem:[#allocation10 + $0x980] sm:$0xff]
    %v5885 = vld [vmem:[#allocation10 + $0x988] sm:$0xff]
    %v5886 = vld [vmem:[#allocation10 + $0x990] sm:$0xff]
    %v5887 = vld [vmem:[#allocation10 + $0x998] sm:$0xff]
    %v5888 = vld [vmem:[#allocation10 + $0x9a0] sm:$0xff]
    %v5889 = vld [vmem:[#allocation10 + $0x9a8] sm:$0xff]
    %v5890 = vld [vmem:[#allocation10 + $0x9b0] sm:$0xff]
    %v5891 = vld [vmem:[#allocation10 + $0x9b8] sm:$0xff]
    %v5892 = vld [vmem:[#allocation10 + $0x9c0] sm:$0xff]
    %v5893 = vld [vmem:[#allocation10 + $0x9c8] sm:$0xff]
    %v5894 = vld [vmem:[#allocation10 + $0x9d0] sm:$0xff]
    %v5895 = vld [vmem:[#allocation10 + $0x9d8] sm:$0xff]
    %v5896 = vld [vmem:[#allocation10 + $0x9e0] sm:$0xff]
    %v5897 = vld [vmem:[#allocation10 + $0x9e8] sm:$0xff]
    %v5898 = vld [vmem:[#allocation10 + $0x9f0] sm:$0xff]
    %v5899 = vld [vmem:[#allocation10 + $0x9f8] sm:$0xff]
    %v5900 = vld [vmem:[#allocation10 + $0xa00] sm:$0xff]
    %v5901 = vld [vmem:[#allocation10 + $0xa08] sm:$0xff]
    %v5902 = vld [vmem:[#allocation10 + $0xa10] sm:$0xff]
    %v5903 = vld [vmem:[#allocation10 + $0xa18] sm:$0xff]
    %v5904 = vld [vmem:[#allocation10 + $0xa20] sm:$0xff]
    %v5905 = vld [vmem:[#allocation10 + $0xa28] sm:$0xff]
    %v5906 = vld [vmem:[#allocation10 + $0xa30] sm:$0xff]
    %v5907 = vld [vmem:[#allocation10 + $0xa38] sm:$0xff]
    %v5908 = vld [vmem:[#allocation10 + $0xa40] sm:$0xff]
    %v5909 = vld [vmem:[#allocation10 + $0xa48] sm:$0xff]
    %v5910 = vld [vmem:[#allocation10 + $0xa50] sm:$0xff]
    %v5911 = vld [vmem:[#allocation10 + $0xa58] sm:$0xff]
    %v5912 = vld [vmem:[#allocation10 + $0xa60] sm:$0xff]
    %v5913 = vld [vmem:[#allocation10 + $0xa68] sm:$0xff]
    %v5914 = vld [vmem:[#allocation10 + $0xa70] sm:$0xff]
    %v5915 = vld [vmem:[#allocation10 + $0xa78] sm:$0xff]
    %v5916 = vld [vmem:[#allocation10 + $0xa80] sm:$0xff]
    %v5917 = vld [vmem:[#allocation10 + $0xa88] sm:$0xff]
    %v5918 = vld [vmem:[#allocation10 + $0xa90] sm:$0xff]
    %v5919 = vld [vmem:[#allocation10 + $0xa98] sm:$0xff]
    %v5920 = vld [vmem:[#allocation10 + $0xaa0] sm:$0xff]
    %v5921 = vld [vmem:[#allocation10 + $0xaa8] sm:$0xff]
    %v5922 = vld [vmem:[#allocation10 + $0xab0] sm:$0xff]
    %v5923 = vld [vmem:[#allocation10 + $0xab8] sm:$0xff]
    %v5924 = vld [vmem:[#allocation10 + $0xac0] sm:$0xff]
    %v5925 = vld [vmem:[#allocation10 + $0xac8] sm:$0xff]
    %v5926 = vld [vmem:[#allocation10 + $0xad0] sm:$0xff]
    %v5927 = vld [vmem:[#allocation10 + $0xad8] sm:$0xff]
    %v5928 = vld [vmem:[#allocation10 + $0xae0] sm:$0xff]
    %v5929 = vld [vmem:[#allocation10 + $0xae8] sm:$0xff]
    %v5930 = vld [vmem:[#allocation10 + $0xaf0] sm:$0xff]
    %v5931 = vld [vmem:[#allocation10 + $0xaf8] sm:$0xff]
    %v5932 = vld [vmem:[#allocation10 + $0xb00] sm:$0xff]
    %v5933 = vld [vmem:[#allocation10 + $0xb08] sm:$0xff]
    %v5934 = vld [vmem:[#allocation10 + $0xb10] sm:$0xff]
    %v5935 = vld [vmem:[#allocation10 + $0xb18] sm:$0xff]
    %v5936 = vld [vmem:[#allocation10 + $0xb20] sm:$0xff]
    %v5937 = vld [vmem:[#allocation10 + $0xb28] sm:$0xff]
    %v5938 = vld [vmem:[#allocation10 + $0xb30] sm:$0xff]
    %v5939 = vld [vmem:[#allocation10 + $0xb38] sm:$0xff]
    %v5940 = vld [vmem:[#allocation10 + $0xb40] sm:$0xff]
    %v5941 = vld [vmem:[#allocation10 + $0xb48] sm:$0xff]
    %v5942 = vld [vmem:[#allocation10 + $0xb50] sm:$0xff]
    %v5943 = vld [vmem:[#allocation10 + $0xb58] sm:$0xff]
    %v5944 = vld [vmem:[#allocation10 + $0xb60] sm:$0xff]
    %v5945 = vld [vmem:[#allocation10 + $0xb68] sm:$0xff]
    %v5946 = vld [vmem:[#allocation10 + $0xb70] sm:$0xff]
    %v5947 = vld [vmem:[#allocation10 + $0xb78] sm:$0xff]
    %v5948 = vld [vmem:[#allocation10 + $0xb80] sm:$0xff]
    %v5949 = vld [vmem:[#allocation10 + $0xb88] sm:$0xff]
    %v5950 = vld [vmem:[#allocation10 + $0xb90] sm:$0xff]
    %v5951 = vld [vmem:[#allocation10 + $0xb98] sm:$0xff]
    %v5952 = vld [vmem:[#allocation10 + $0xba0] sm:$0xff]
    %v5953 = vld [vmem:[#allocation10 + $0xba8] sm:$0xff]
    %v5954 = vld [vmem:[#allocation10 + $0xbb0] sm:$0xff]
    %v5955 = vld [vmem:[#allocation10 + $0xbb8] sm:$0xff]
    %v5956 = vld [vmem:[#allocation10 + $0xbc0] sm:$0xff]
    %v5957 = vld [vmem:[#allocation10 + $0xbc8] sm:$0xff]
    %v5958 = vld [vmem:[#allocation10 + $0xbd0] sm:$0xff]
    %v5959 = vld [vmem:[#allocation10 + $0xbd8] sm:$0xff]
    %v5960 = vld [vmem:[#allocation10 + $0xbe0] sm:$0xff]
    %v5961 = vld [vmem:[#allocation10 + $0xbe8] sm:$0xff]
    %v5962 = vld [vmem:[#allocation10 + $0xbf0] sm:$0xff]
    %v5963 = vld [vmem:[#allocation10 + $0xbf8] sm:$0xff]
    %v6092 = vunpack.c.l.b16 %v5836
    %v6093 = vunpack.c.h.b16 %v5836
    %v6094 = vunpack.c.l.b16 %v5837
    %v6095 = vunpack.c.h.b16 %v5837
    %v6096 = vunpack.c.l.b16 %v5838
    %v6097 = vunpack.c.h.b16 %v5838
    %v6098 = vunpack.c.l.b16 %v5839
    %v6099 = vunpack.c.h.b16 %v5839
    %v6100 = vunpack.c.l.b16 %v5840
    %v6101 = vunpack.c.h.b16 %v5840
    %v6102 = vunpack.c.l.b16 %v5841
    %v6103 = vunpack.c.h.b16 %v5841
    %v6104 = vunpack.c.l.b16 %v5842
    %v6105 = vunpack.c.h.b16 %v5842
    %v6106 = vunpack.c.l.b16 %v5843
    %v6107 = vunpack.c.h.b16 %v5843
    %v6108 = vunpack.c.l.b16 %v5844
    %v6109 = vunpack.c.h.b16 %v5844
    %v6110 = vunpack.c.l.b16 %v5845
    %v6111 = vunpack.c.h.b16 %v5845
    %v6112 = vunpack.c.l.b16 %v5846
    %v6113 = vunpack.c.h.b16 %v5846
    %v6114 = vunpack.c.l.b16 %v5847
    %v6115 = vunpack.c.h.b16 %v5847
    %v6116 = vunpack.c.l.b16 %v5848
    %v6117 = vunpack.c.h.b16 %v5848
    %v6118 = vunpack.c.l.b16 %v5849
    %v6119 = vunpack.c.h.b16 %v5849
    %v6120 = vunpack.c.l.b16 %v5850
    %v6121 = vunpack.c.h.b16 %v5850
    %v6122 = vunpack.c.l.b16 %v5851
    %v6123 = vunpack.c.h.b16 %v5851
    %v6124 = vunpack.c.l.b16 %v5852
    %v6125 = vunpack.c.h.b16 %v5852
    %v6126 = vunpack.c.l.b16 %v5853
    %v6127 = vunpack.c.h.b16 %v5853
    %v6128 = vunpack.c.l.b16 %v5854
    %v6129 = vunpack.c.h.b16 %v5854
    %v6130 = vunpack.c.l.b16 %v5855
    %v6131 = vunpack.c.h.b16 %v5855
    %v6132 = vunpack.c.l.b16 %v5856
    %v6133 = vunpack.c.h.b16 %v5856
    %v6134 = vunpack.c.l.b16 %v5857
    %v6135 = vunpack.c.h.b16 %v5857
    %v6136 = vunpack.c.l.b16 %v5858
    %v6137 = vunpack.c.h.b16 %v5858
    %v6138 = vunpack.c.l.b16 %v5859
    %v6139 = vunpack.c.h.b16 %v5859
    %v6140 = vunpack.c.l.b16 %v5860
    %v6141 = vunpack.c.h.b16 %v5860
    %v6142 = vunpack.c.l.b16 %v5861
    %v6143 = vunpack.c.h.b16 %v5861
    %v6144 = vunpack.c.l.b16 %v5862
    %v6145 = vunpack.c.h.b16 %v5862
    %v6146 = vunpack.c.l.b16 %v5863
    %v6147 = vunpack.c.h.b16 %v5863
    %v6148 = vunpack.c.l.b16 %v5864
    %v6149 = vunpack.c.h.b16 %v5864
    %v6150 = vunpack.c.l.b16 %v5865
    %v6151 = vunpack.c.h.b16 %v5865
    %v6152 = vunpack.c.l.b16 %v5866
    %v6153 = vunpack.c.h.b16 %v5866
    %v6154 = vunpack.c.l.b16 %v5867
    %v6155 = vunpack.c.h.b16 %v5867
    %v6156 = vunpack.c.l.b16 %v5868
    %v6157 = vunpack.c.h.b16 %v5868
    %v6158 = vunpack.c.l.b16 %v5869
    %v6159 = vunpack.c.h.b16 %v5869
    %v6160 = vunpack.c.l.b16 %v5870
    %v6161 = vunpack.c.h.b16 %v5870
    %v6162 = vunpack.c.l.b16 %v5871
    %v6163 = vunpack.c.h.b16 %v5871
    %v6164 = vunpack.c.l.b16 %v5872
    %v6165 = vunpack.c.h.b16 %v5872
    %v6166 = vunpack.c.l.b16 %v5873
    %v6167 = vunpack.c.h.b16 %v5873
    %v6168 = vunpack.c.l.b16 %v5874
    %v6169 = vunpack.c.h.b16 %v5874
    %v6170 = vunpack.c.l.b16 %v5875
    %v6171 = vunpack.c.h.b16 %v5875
    %v6172 = vunpack.c.l.b16 %v5876
    %v6173 = vunpack.c.h.b16 %v5876
    %v6174 = vunpack.c.l.b16 %v5877
    %v6175 = vunpack.c.h.b16 %v5877
    %v6176 = vunpack.c.l.b16 %v5878
    %v6177 = vunpack.c.h.b16 %v5878
    %v6178 = vunpack.c.l.b16 %v5879
    %v6179 = vunpack.c.h.b16 %v5879
    %v6180 = vunpack.c.l.b16 %v5880
    %v6181 = vunpack.c.h.b16 %v5880
    %v6182 = vunpack.c.l.b16 %v5881
    %v6183 = vunpack.c.h.b16 %v5881
    %v6184 = vunpack.c.l.b16 %v5882
    %v6185 = vunpack.c.h.b16 %v5882
    %v6186 = vunpack.c.l.b16 %v5883
    %v6187 = vunpack.c.h.b16 %v5883
    %v6188 = vunpack.c.l.b16 %v5884
    %v6189 = vunpack.c.h.b16 %v5884
    %v6190 = vunpack.c.l.b16 %v5885
    %v6191 = vunpack.c.h.b16 %v5885
    %v6192 = vunpack.c.l.b16 %v5886
    %v6193 = vunpack.c.h.b16 %v5886
    %v6194 = vunpack.c.l.b16 %v5887
    %v6195 = vunpack.c.h.b16 %v5887
    %v6196 = vunpack.c.l.b16 %v5888
    %v6197 = vunpack.c.h.b16 %v5888
    %v6198 = vunpack.c.l.b16 %v5889
    %v6199 = vunpack.c.h.b16 %v5889
    %v6200 = vunpack.c.l.b16 %v5890
    %v6201 = vunpack.c.h.b16 %v5890
    %v6202 = vunpack.c.l.b16 %v5891
    %v6203 = vunpack.c.h.b16 %v5891
    %v6204 = vunpack.c.l.b16 %v5892
    %v6205 = vunpack.c.h.b16 %v5892
    %v6206 = vunpack.c.l.b16 %v5893
    %v6207 = vunpack.c.h.b16 %v5893
    %v6208 = vunpack.c.l.b16 %v5894
    %v6209 = vunpack.c.h.b16 %v5894
    %v6210 = vunpack.c.l.b16 %v5895
    %v6211 = vunpack.c.h.b16 %v5895
    %v6212 = vunpack.c.l.b16 %v5896
    %v6213 = vunpack.c.h.b16 %v5896
    %v6214 = vunpack.c.l.b16 %v5897
    %v6215 = vunpack.c.h.b16 %v5897
    %v6216 = vunpack.c.l.b16 %v5898
    %v6217 = vunpack.c.h.b16 %v5898
    %v6218 = vunpack.c.l.b16 %v5899
    %v6219 = vunpack.c.h.b16 %v5899
    %v6220 = vunpack.c.l.b16 %v5900
    %v6221 = vunpack.c.h.b16 %v5900
    %v6222 = vunpack.c.l.b16 %v5901
    %v6223 = vunpack.c.h.b16 %v5901
    %v6224 = vunpack.c.l.b16 %v5902
    %v6225 = vunpack.c.h.b16 %v5902
    %v6226 = vunpack.c.l.b16 %v5903
    %v6227 = vunpack.c.h.b16 %v5903
    %v6228 = vunpack.c.l.b16 %v5904
    %v6229 = vunpack.c.h.b16 %v5904
    %v6230 = vunpack.c.l.b16 %v5905
    %v6231 = vunpack.c.h.b16 %v5905
    %v6232 = vunpack.c.l.b16 %v5906
    %v6233 = vunpack.c.h.b16 %v5906
    %v6234 = vunpack.c.l.b16 %v5907
    %v6235 = vunpack.c.h.b16 %v5907
    %v6236 = vunpack.c.l.b16 %v5908
    %v6237 = vunpack.c.h.b16 %v5908
    %v6238 = vunpack.c.l.b16 %v5909
    %v6239 = vunpack.c.h.b16 %v5909
    %v6240 = vunpack.c.l.b16 %v5910
    %v6241 = vunpack.c.h.b16 %v5910
    %v6242 = vunpack.c.l.b16 %v5911
    %v6243 = vunpack.c.h.b16 %v5911
    %v6244 = vunpack.c.l.b16 %v5912
    %v6245 = vunpack.c.h.b16 %v5912
    %v6246 = vunpack.c.l.b16 %v5913
    %v6247 = vunpack.c.h.b16 %v5913
    %v6248 = vunpack.c.l.b16 %v5914
    %v6249 = vunpack.c.h.b16 %v5914
    %v6250 = vunpack.c.l.b16 %v5915
    %v6251 = vunpack.c.h.b16 %v5915
    %v6252 = vunpack.c.l.b16 %v5916
    %v6253 = vunpack.c.h.b16 %v5916
    %v6254 = vunpack.c.l.b16 %v5917
    %v6255 = vunpack.c.h.b16 %v5917
    %v6256 = vunpack.c.l.b16 %v5918
    %v6257 = vunpack.c.h.b16 %v5918
    %v6258 = vunpack.c.l.b16 %v5919
    %v6259 = vunpack.c.h.b16 %v5919
    %v6260 = vunpack.c.l.b16 %v5920
    %v6261 = vunpack.c.h.b16 %v5920
    %v6262 = vunpack.c.l.b16 %v5921
    %v6263 = vunpack.c.h.b16 %v5921
    %v6264 = vunpack.c.l.b16 %v5922
    %v6265 = vunpack.c.h.b16 %v5922
    %v6266 = vunpack.c.l.b16 %v5923
    %v6267 = vunpack.c.h.b16 %v5923
    %v6268 = vunpack.c.l.b16 %v5924
    %v6269 = vunpack.c.h.b16 %v5924
    %v6270 = vunpack.c.l.b16 %v5925
    %v6271 = vunpack.c.h.b16 %v5925
    %v6272 = vunpack.c.l.b16 %v5926
    %v6273 = vunpack.c.h.b16 %v5926
    %v6274 = vunpack.c.l.b16 %v5927
    %v6275 = vunpack.c.h.b16 %v5927
    %v6276 = vunpack.c.l.b16 %v5928
    %v6277 = vunpack.c.h.b16 %v5928
    %v6278 = vunpack.c.l.b16 %v5929
    %v6279 = vunpack.c.h.b16 %v5929
    %v6280 = vunpack.c.l.b16 %v5930
    %v6281 = vunpack.c.h.b16 %v5930
    %v6282 = vunpack.c.l.b16 %v5931
    %v6283 = vunpack.c.h.b16 %v5931
    %v6284 = vunpack.c.l.b16 %v5932
    %v6285 = vunpack.c.h.b16 %v5932
    %v6286 = vunpack.c.l.b16 %v5933
    %v6287 = vunpack.c.h.b16 %v5933
    %v6288 = vunpack.c.l.b16 %v5934
    %v6289 = vunpack.c.h.b16 %v5934
    %v6290 = vunpack.c.l.b16 %v5935
    %v6291 = vunpack.c.h.b16 %v5935
    %v6292 = vunpack.c.l.b16 %v5936
    %v6293 = vunpack.c.h.b16 %v5936
    %v6294 = vunpack.c.l.b16 %v5937
    %v6295 = vunpack.c.h.b16 %v5937
    %v6296 = vunpack.c.l.b16 %v5938
    %v6297 = vunpack.c.h.b16 %v5938
    %v6298 = vunpack.c.l.b16 %v5939
    %v6299 = vunpack.c.h.b16 %v5939
    %v6300 = vunpack.c.l.b16 %v5940
    %v6301 = vunpack.c.h.b16 %v5940
    %v6302 = vunpack.c.l.b16 %v5941
    %v6303 = vunpack.c.h.b16 %v5941
    %v6304 = vunpack.c.l.b16 %v5942
    %v6305 = vunpack.c.h.b16 %v5942
    %v6306 = vunpack.c.l.b16 %v5943
    %v6307 = vunpack.c.h.b16 %v5943
    %v6308 = vunpack.c.l.b16 %v5944
    %v6309 = vunpack.c.h.b16 %v5944
    %v6310 = vunpack.c.l.b16 %v5945
    %v6311 = vunpack.c.h.b16 %v5945
    %v6312 = vunpack.c.l.b16 %v5946
    %v6313 = vunpack.c.h.b16 %v5946
    %v6314 = vunpack.c.l.b16 %v5947
    %v6315 = vunpack.c.h.b16 %v5947
    %v6316 = vunpack.c.l.b16 %v5948
    %v6317 = vunpack.c.h.b16 %v5948
    %v6318 = vunpack.c.l.b16 %v5949
    %v6319 = vunpack.c.h.b16 %v5949
    %v6320 = vunpack.c.l.b16 %v5950
    %v6321 = vunpack.c.h.b16 %v5950
    %v6322 = vunpack.c.l.b16 %v5951
    %v6323 = vunpack.c.h.b16 %v5951
    %v6324 = vunpack.c.l.b16 %v5952
    %v6325 = vunpack.c.h.b16 %v5952
    %v6326 = vunpack.c.l.b16 %v5953
    %v6327 = vunpack.c.h.b16 %v5953
    %v6328 = vunpack.c.l.b16 %v5954
    %v6329 = vunpack.c.h.b16 %v5954
    %v6330 = vunpack.c.l.b16 %v5955
    %v6331 = vunpack.c.h.b16 %v5955
    %v6332 = vunpack.c.l.b16 %v5956
    %v6333 = vunpack.c.h.b16 %v5956
    %v6334 = vunpack.c.l.b16 %v5957
    %v6335 = vunpack.c.h.b16 %v5957
    %v6336 = vunpack.c.l.b16 %v5958
    %v6337 = vunpack.c.h.b16 %v5958
    %v6338 = vunpack.c.l.b16 %v5959
    %v6339 = vunpack.c.h.b16 %v5959
    %v6340 = vunpack.c.l.b16 %v5960
    %v6341 = vunpack.c.h.b16 %v5960
    %v6342 = vunpack.c.l.b16 %v5961
    %v6343 = vunpack.c.h.b16 %v5961
    %v6344 = vunpack.c.l.b16 %v5962
    %v6345 = vunpack.c.h.b16 %v5962
    %v6346 = vunpack.c.l.b16 %v5963
    %v6347 = vunpack.c.h.b16 %v5963
    %v6348 = vpack.c.b16 %v6096, %v6092
    %v6349 = vpack.c.b16 %v6097, %v6093
    %v6350 = vpack.c.b16 %v6098, %v6094
    %v6351 = vpack.c.b16 %v6099, %v6095
    %v6352 = vpack.c.b16 %v6104, %v6100
    %v6353 = vpack.c.b16 %v6105, %v6101
    %v6354 = vpack.c.b16 %v6106, %v6102
    %v6355 = vpack.c.b16 %v6107, %v6103
    %v6356 = vpack.c.b16 %v6112, %v6108
    %v6357 = vpack.c.b16 %v6113, %v6109
    %v6358 = vpack.c.b16 %v6114, %v6110
    %v6359 = vpack.c.b16 %v6115, %v6111
    %v6360 = vpack.c.b16 %v6120, %v6116
    %v6361 = vpack.c.b16 %v6121, %v6117
    %v6362 = vpack.c.b16 %v6122, %v6118
    %v6363 = vpack.c.b16 %v6123, %v6119
    %v6364 = vpack.c.b16 %v6128, %v6124
    %v6365 = vpack.c.b16 %v6129, %v6125
    %v6366 = vpack.c.b16 %v6130, %v6126
    %v6367 = vpack.c.b16 %v6131, %v6127
    %v6368 = vpack.c.b16 %v6136, %v6132
    %v6369 = vpack.c.b16 %v6137, %v6133
    %v6370 = vpack.c.b16 %v6138, %v6134
    %v6371 = vpack.c.b16 %v6139, %v6135
    %v6372 = vpack.c.b16 %v6144, %v6140
    %v6373 = vpack.c.b16 %v6145, %v6141
    %v6374 = vpack.c.b16 %v6146, %v6142
    %v6375 = vpack.c.b16 %v6147, %v6143
    %v6376 = vpack.c.b16 %v6152, %v6148
    %v6377 = vpack.c.b16 %v6153, %v6149
    %v6378 = vpack.c.b16 %v6154, %v6150
    %v6379 = vpack.c.b16 %v6155, %v6151
    %v6380 = vpack.c.b16 %v6160, %v6156
    %v6381 = vpack.c.b16 %v6161, %v6157
    %v6382 = vpack.c.b16 %v6162, %v6158
    %v6383 = vpack.c.b16 %v6163, %v6159
    %v6384 = vpack.c.b16 %v6168, %v6164
    %v6385 = vpack.c.b16 %v6169, %v6165
    %v6386 = vpack.c.b16 %v6170, %v6166
    %v6387 = vpack.c.b16 %v6171, %v6167
    %v6388 = vpack.c.b16 %v6176, %v6172
    %v6389 = vpack.c.b16 %v6177, %v6173
    %v6390 = vpack.c.b16 %v6178, %v6174
    %v6391 = vpack.c.b16 %v6179, %v6175
    %v6392 = vpack.c.b16 %v6184, %v6180
    %v6393 = vpack.c.b16 %v6185, %v6181
    %v6394 = vpack.c.b16 %v6186, %v6182
    %v6395 = vpack.c.b16 %v6187, %v6183
    %v6396 = vpack.c.b16 %v6192, %v6188
    %v6397 = vpack.c.b16 %v6193, %v6189
    %v6398 = vpack.c.b16 %v6194, %v6190
    %v6399 = vpack.c.b16 %v6195, %v6191
    %v6400 = vpack.c.b16 %v6200, %v6196
    %v6401 = vpack.c.b16 %v6201, %v6197
    %v6402 = vpack.c.b16 %v6202, %v6198
    %v6403 = vpack.c.b16 %v6203, %v6199
    %v6404 = vpack.c.b16 %v6208, %v6204
    %v6405 = vpack.c.b16 %v6209, %v6205
    %v6406 = vpack.c.b16 %v6210, %v6206
    %v6407 = vpack.c.b16 %v6211, %v6207
    %v6408 = vpack.c.b16 %v6216, %v6212
    %v6409 = vpack.c.b16 %v6217, %v6213
    %v6410 = vpack.c.b16 %v6218, %v6214
    %v6411 = vpack.c.b16 %v6219, %v6215
    %v6412 = vpack.c.b16 %v6224, %v6220
    %v6413 = vpack.c.b16 %v6225, %v6221
    %v6414 = vpack.c.b16 %v6226, %v6222
    %v6415 = vpack.c.b16 %v6227, %v6223
    %v6416 = vpack.c.b16 %v6232, %v6228
    %v6417 = vpack.c.b16 %v6233, %v6229
    %v6418 = vpack.c.b16 %v6234, %v6230
    %v6419 = vpack.c.b16 %v6235, %v6231
    %v6420 = vpack.c.b16 %v6240, %v6236
    %v6421 = vpack.c.b16 %v6241, %v6237
    %v6422 = vpack.c.b16 %v6242, %v6238
    %v6423 = vpack.c.b16 %v6243, %v6239
    %v6424 = vpack.c.b16 %v6248, %v6244
    %v6425 = vpack.c.b16 %v6249, %v6245
    %v6426 = vpack.c.b16 %v6250, %v6246
    %v6427 = vpack.c.b16 %v6251, %v6247
    %v6428 = vpack.c.b16 %v6256, %v6252
    %v6429 = vpack.c.b16 %v6257, %v6253
    %v6430 = vpack.c.b16 %v6258, %v6254
    %v6431 = vpack.c.b16 %v6259, %v6255
    %v6432 = vpack.c.b16 %v6264, %v6260
    %v6433 = vpack.c.b16 %v6265, %v6261
    %v6434 = vpack.c.b16 %v6266, %v6262
    %v6435 = vpack.c.b16 %v6267, %v6263
    %v6436 = vpack.c.b16 %v6272, %v6268
    %v6437 = vpack.c.b16 %v6273, %v6269
    %v6438 = vpack.c.b16 %v6274, %v6270
    %v6439 = vpack.c.b16 %v6275, %v6271
    %v6440 = vpack.c.b16 %v6280, %v6276
    %v6441 = vpack.c.b16 %v6281, %v6277
    %v6442 = vpack.c.b16 %v6282, %v6278
    %v6443 = vpack.c.b16 %v6283, %v6279
    %v6444 = vpack.c.b16 %v6288, %v6284
    %v6445 = vpack.c.b16 %v6289, %v6285
    %v6446 = vpack.c.b16 %v6290, %v6286
    %v6447 = vpack.c.b16 %v6291, %v6287
    %v6448 = vpack.c.b16 %v6296, %v6292
    %v6449 = vpack.c.b16 %v6297, %v6293
    %v6450 = vpack.c.b16 %v6298, %v6294
    %v6451 = vpack.c.b16 %v6299, %v6295
    %v6452 = vpack.c.b16 %v6304, %v6300
    %v6453 = vpack.c.b16 %v6305, %v6301
    %v6454 = vpack.c.b16 %v6306, %v6302
    %v6455 = vpack.c.b16 %v6307, %v6303
    %v6456 = vpack.c.b16 %v6312, %v6308
    %v6457 = vpack.c.b16 %v6313, %v6309
    %v6458 = vpack.c.b16 %v6314, %v6310
    %v6459 = vpack.c.b16 %v6315, %v6311
    %v6460 = vpack.c.b16 %v6320, %v6316
    %v6461 = vpack.c.b16 %v6321, %v6317
    %v6462 = vpack.c.b16 %v6322, %v6318
    %v6463 = vpack.c.b16 %v6323, %v6319
    %v6464 = vpack.c.b16 %v6328, %v6324
    %v6465 = vpack.c.b16 %v6329, %v6325
    %v6466 = vpack.c.b16 %v6330, %v6326
    %v6467 = vpack.c.b16 %v6331, %v6327
    %v6468 = vpack.c.b16 %v6336, %v6332
    %v6469 = vpack.c.b16 %v6337, %v6333
    %v6470 = vpack.c.b16 %v6338, %v6334
    %v6471 = vpack.c.b16 %v6339, %v6335
    %v6472 = vpack.c.b16 %v6344, %v6340
    %v6473 = vpack.c.b16 %v6345, %v6341
    %v6474 = vpack.c.b16 %v6346, %v6342
    %v6475 = vpack.c.b16 %v6347, %v6343
    %6604 = vmatpush.bf16.msra.mxu0 %v6376
    %6605 = vmatpush.bf16.msra.mxu0 %v6372
    %6606 = vmatpush.bf16.msra.mxu0 %v6368
    %6607 = vmatpush.bf16.msra.mxu0 %v6364
    %6608 = vmatpush.bf16.msra.mxu0 %v6360
    %6609 = vmatpush.bf16.msra.mxu0 %v6356
    %6610 = vmatpush.bf16.msra.mxu0 %v6352
    %6611 = vmatpush.bf16.msra.mxu0 %v6348
    %6612 = vmatmul.bf16.gmra.mxu0 %v5828
    %v6613 = vpop.f32.mrf.mxu0
    %v6614 = vadd.f32 0.0, %v6613
    %v6615 = vpop.f32.mrf.mxu0
    %v6616 = vadd.f32 0.0, %v6615
    %6617 = vmatmul.bf16.gmra.mxu0 %v5832
    %v6618 = vpop.f32.mrf.mxu0
    %v6619 = vadd.f32 0.0, %v6618
    %v6620 = vpop.f32.mrf.mxu0
    %v6621 = vadd.f32 0.0, %v6620
    %6622 = vdwg.mxu0
    %6623 = vmatpush.bf16.msra.mxu0 %v6408
    %6624 = vmatpush.bf16.msra.mxu0 %v6404
    %6625 = vmatpush.bf16.msra.mxu0 %v6400
    %6626 = vmatpush.bf16.msra.mxu0 %v6396
    %6627 = vmatpush.bf16.msra.mxu0 %v6392
    %6628 = vmatpush.bf16.msra.mxu0 %v6388
    %6629 = vmatpush.bf16.msra.mxu0 %v6384
    %6630 = vmatpush.bf16.msra.mxu0 %v6380
    %6631 = vmatmul.bf16.gmra.mxu0 %v5829
    %v6632 = vpop.f32.mrf.mxu0
    %v6633 = vadd.f32 %v6614, %v6632
    %v6634 = vpop.f32.mrf.mxu0
    %v6635 = vadd.f32 %v6616, %v6634
    %6636 = vmatmul.bf16.gmra.mxu0 %v5833
    %v6637 = vpop.f32.mrf.mxu0
    %v6638 = vadd.f32 %v6619, %v6637
    %v6639 = vpop.f32.mrf.mxu0
    %v6640 = vadd.f32 %v6621, %v6639
    %6641 = vdwg.mxu0
    %6642 = vmatpush.bf16.msra.mxu0 %v6440
    %6643 = vmatpush.bf16.msra.mxu0 %v6436
    %6644 = vmatpush.bf16.msra.mxu0 %v6432
    %6645 = vmatpush.bf16.msra.mxu0 %v6428
    %6646 = vmatpush.bf16.msra.mxu0 %v6424
    %6647 = vmatpush.bf16.msra.mxu0 %v6420
    %6648 = vmatpush.bf16.msra.mxu0 %v6416
    %6649 = vmatpush.bf16.msra.mxu0 %v6412
    %6650 = vmatmul.bf16.gmra.mxu0 %v5830
    %v6651 = vpop.f32.mrf.mxu0
    %v6652 = vadd.f32 %v6633, %v6651
    %v6653 = vpop.f32.mrf.mxu0
    %v6654 = vadd.f32 %v6635, %v6653
    %6655 = vmatmul.bf16.gmra.mxu0 %v5834
    %v6656 = vpop.f32.mrf.mxu0
    %v6657 = vadd.f32 %v6638, %v6656
    %v6658 = vpop.f32.mrf.mxu0
    %v6659 = vadd.f32 %v6640, %v6658
    %6660 = vdwg.mxu0
    %6661 = vmatpush.bf16.msra.mxu0 %v6472
    %6662 = vmatpush.bf16.msra.mxu0 %v6468
    %6663 = vmatpush.bf16.msra.mxu0 %v6464
    %6664 = vmatpush.bf16.msra.mxu0 %v6460
    %6665 = vmatpush.bf16.msra.mxu0 %v6456
    %6666 = vmatpush.bf16.msra.mxu0 %v6452
    %6667 = vmatpush.bf16.msra.mxu0 %v6448
    %6668 = vmatpush.bf16.msra.mxu0 %v6444
    %6669 = vmatmul.bf16.gmra.mxu0 %v5831
    %v6670 = vpop.f32.mrf.mxu0
    %v6671 = vadd.f32 %v6652, %v6670
    %v6672 = vpop.f32.mrf.mxu0
    %v6673 = vadd.f32 %v6654, %v6672
    %6674 = vmatmul.bf16.gmra.mxu0 %v5835
    %v6675 = vpop.f32.mrf.mxu0
    %v6676 = vadd.f32 %v6657, %v6675
    %v6677 = vpop.f32.mrf.mxu0
    %v6678 = vadd.f32 %v6659, %v6677
    %6679 = vdwg.mxu0
    %6680 = vmatpush.bf16.msra.mxu0 %v6377
    %6681 = vmatpush.bf16.msra.mxu0 %v6373
    %6682 = vmatpush.bf16.msra.mxu0 %v6369
    %6683 = vmatpush.bf16.msra.mxu0 %v6365
    %6684 = vmatpush.bf16.msra.mxu0 %v6361
    %6685 = vmatpush.bf16.msra.mxu0 %v6357
    %6686 = vmatpush.bf16.msra.mxu0 %v6353
    %6687 = vmatpush.bf16.msra.mxu0 %v6349
    %6688 = vmatmul.bf16.gmra.mxu0 %v5828
    %v6689 = vpop.f32.mrf.mxu0
    %v6690 = vadd.f32 0.0, %v6689
    %v6691 = vpop.f32.mrf.mxu0
    %v6692 = vadd.f32 0.0, %v6691
    %6693 = vmatmul.bf16.gmra.mxu0 %v5832
    %v6694 = vpop.f32.mrf.mxu0
    %v6695 = vadd.f32 0.0, %v6694
    %v6696 = vpop.f32.mrf.mxu0
    %v6697 = vadd.f32 0.0, %v6696
    %6698 = vdwg.mxu0
    %6699 = vmatpush.bf16.msra.mxu0 %v6409
    %6700 = vmatpush.bf16.msra.mxu0 %v6405
    %6701 = vmatpush.bf16.msra.mxu0 %v6401
    %6702 = vmatpush.bf16.msra.mxu0 %v6397
    %6703 = vmatpush.bf16.msra.mxu0 %v6393
    %6704 = vmatpush.bf16.msra.mxu0 %v6389
    %6705 = vmatpush.bf16.msra.mxu0 %v6385
    %6706 = vmatpush.bf16.msra.mxu0 %v6381
    %6707 = vmatmul.bf16.gmra.mxu0 %v5829
    %v6708 = vpop.f32.mrf.mxu0
    %v6709 = vadd.f32 %v6690, %v6708
    %v6710 = vpop.f32.mrf.mxu0
    %v6711 = vadd.f32 %v6692, %v6710
    %6712 = vmatmul.bf16.gmra.mxu0 %v5833
    %v6713 = vpop.f32.mrf.mxu0
    %v6714 = vadd.f32 %v6695, %v6713
    %v6715 = vpop.f32.mrf.mxu0
    %v6716 = vadd.f32 %v6697, %v6715
    %6717 = vdwg.mxu0
    %6718 = vmatpush.bf16.msra.mxu0 %v6441
    %6719 = vmatpush.bf16.msra.mxu0 %v6437
    %6720 = vmatpush.bf16.msra.mxu0 %v6433
    %6721 = vmatpush.bf16.msra.mxu0 %v6429
    %6722 = vmatpush.bf16.msra.mxu0 %v6425
    %6723 = vmatpush.bf16.msra.mxu0 %v6421
    %6724 = vmatpush.bf16.msra.mxu0 %v6417
    %6725 = vmatpush.bf16.msra.mxu0 %v6413
    %6726 = vmatmul.bf16.gmra.mxu0 %v5830
    %v6727 = vpop.f32.mrf.mxu0
    %v6728 = vadd.f32 %v6709, %v6727
    %v6729 = vpop.f32.mrf.mxu0
    %v6730 = vadd.f32 %v6711, %v6729
    %6731 = vmatmul.bf16.gmra.mxu0 %v5834
    %v6732 = vpop.f32.mrf.mxu0
    %v6733 = vadd.f32 %v6714, %v6732
    %v6734 = vpop.f32.mrf.mxu0
    %v6735 = vadd.f32 %v6716, %v6734
    %6736 = vdwg.mxu0
    %6737 = vmatpush.bf16.msra.mxu0 %v6473
    %6738 = vmatpush.bf16.msra.mxu0 %v6469
    %6739 = vmatpush.bf16.msra.mxu0 %v6465
    %6740 = vmatpush.bf16.msra.mxu0 %v6461
    %6741 = vmatpush.bf16.msra.mxu0 %v6457
    %6742 = vmatpush.bf16.msra.mxu0 %v6453
    %6743 = vmatpush.bf16.msra.mxu0 %v6449
    %6744 = vmatpush.bf16.msra.mxu0 %v6445
    %6745 = vmatmul.bf16.gmra.mxu0 %v5831
    %v6746 = vpop.f32.mrf.mxu0
    %v6747 = vadd.f32 %v6728, %v6746
    %v6748 = vpop.f32.mrf.mxu0
    %v6749 = vadd.f32 %v6730, %v6748
    %6750 = vmatmul.bf16.gmra.mxu0 %v5835
    %v6751 = vpop.f32.mrf.mxu0
    %v6752 = vadd.f32 %v6733, %v6751
    %v6753 = vpop.f32.mrf.mxu0
    %v6754 = vadd.f32 %v6735, %v6753
    %6755 = vdwg.mxu0
    %6756 = vmatpush.bf16.msra.mxu0 %v6378
    %6757 = vmatpush.bf16.msra.mxu0 %v6374
    %6758 = vmatpush.bf16.msra.mxu0 %v6370
    %6759 = vmatpush.bf16.msra.mxu0 %v6366
    %6760 = vmatpush.bf16.msra.mxu0 %v6362
    %6761 = vmatpush.bf16.msra.mxu0 %v6358
    %6762 = vmatpush.bf16.msra.mxu0 %v6354
    %6763 = vmatpush.bf16.msra.mxu0 %v6350
    %6764 = vmatmul.bf16.gmra.mxu0 %v5828
    %v6765 = vpop.f32.mrf.mxu0
    %v6766 = vadd.f32 0.0, %v6765
    %v6767 = vpop.f32.mrf.mxu0
    %v6768 = vadd.f32 0.0, %v6767
    %6769 = vmatmul.bf16.gmra.mxu0 %v5832
    %v6770 = vpop.f32.mrf.mxu0
    %v6771 = vadd.f32 0.0, %v6770
    %v6772 = vpop.f32.mrf.mxu0
    %v6773 = vadd.f32 0.0, %v6772
    %6774 = vdwg.mxu0
    %6775 = vmatpush.bf16.msra.mxu0 %v6410
    %6776 = vmatpush.bf16.msra.mxu0 %v6406
    %6777 = vmatpush.bf16.msra.mxu0 %v6402
    %6778 = vmatpush.bf16.msra.mxu0 %v6398
    %6779 = vmatpush.bf16.msra.mxu0 %v6394
    %6780 = vmatpush.bf16.msra.mxu0 %v6390
    %6781 = vmatpush.bf16.msra.mxu0 %v6386
    %6782 = vmatpush.bf16.msra.mxu0 %v6382
    %6783 = vmatmul.bf16.gmra.mxu0 %v5829
    %v6784 = vpop.f32.mrf.mxu0
    %v6785 = vadd.f32 %v6766, %v6784
    %v6786 = vpop.f32.mrf.mxu0
    %v6787 = vadd.f32 %v6768, %v6786
    %6788 = vmatmul.bf16.gmra.mxu0 %v5833
    %v6789 = vpop.f32.mrf.mxu0
    %v6790 = vadd.f32 %v6771, %v6789
    %v6791 = vpop.f32.mrf.mxu0
    %v6792 = vadd.f32 %v6773, %v6791
    %6793 = vdwg.mxu0
    %6794 = vmatpush.bf16.msra.mxu0 %v6442
    %6795 = vmatpush.bf16.msra.mxu0 %v6438
    %6796 = vmatpush.bf16.msra.mxu0 %v6434
    %6797 = vmatpush.bf16.msra.mxu0 %v6430
    %6798 = vmatpush.bf16.msra.mxu0 %v6426
    %6799 = vmatpush.bf16.msra.mxu0 %v6422
    %6800 = vmatpush.bf16.msra.mxu0 %v6418
    %6801 = vmatpush.bf16.msra.mxu0 %v6414
    %6802 = vmatmul.bf16.gmra.mxu0 %v5830
    %v6803 = vpop.f32.mrf.mxu0
    %v6804 = vadd.f32 %v6785, %v6803
    %v6805 = vpop.f32.mrf.mxu0
    %v6806 = vadd.f32 %v6787, %v6805
    %6807 = vmatmul.bf16.gmra.mxu0 %v5834
    %v6808 = vpop.f32.mrf.mxu0
    %v6809 = vadd.f32 %v6790, %v6808
    %v6810 = vpop.f32.mrf.mxu0
    %v6811 = vadd.f32 %v6792, %v6810
    %6812 = vdwg.mxu0
    %6813 = vmatpush.bf16.msra.mxu0 %v6474
    %6814 = vmatpush.bf16.msra.mxu0 %v6470
    %6815 = vmatpush.bf16.msra.mxu0 %v6466
    %6816 = vmatpush.bf16.msra.mxu0 %v6462
    %6817 = vmatpush.bf16.msra.mxu0 %v6458
    %6818 = vmatpush.bf16.msra.mxu0 %v6454
    %6819 = vmatpush.bf16.msra.mxu0 %v6450
    %6820 = vmatpush.bf16.msra.mxu0 %v6446
    %6821 = vmatmul.bf16.gmra.mxu0 %v5831
    %v6822 = vpop.f32.mrf.mxu0
    %v6823 = vadd.f32 %v6804, %v6822
    %v6824 = vpop.f32.mrf.mxu0
    %v6825 = vadd.f32 %v6806, %v6824
    %6826 = vmatmul.bf16.gmra.mxu0 %v5835
    %v6827 = vpop.f32.mrf.mxu0
    %v6828 = vadd.f32 %v6809, %v6827
    %v6829 = vpop.f32.mrf.mxu0
    %v6830 = vadd.f32 %v6811, %v6829
    %6831 = vdwg.mxu0
    %6832 = vmatpush.bf16.msra.mxu0 %v6379
    %6833 = vmatpush.bf16.msra.mxu0 %v6375
    %6834 = vmatpush.bf16.msra.mxu0 %v6371
    %6835 = vmatpush.bf16.msra.mxu0 %v6367
    %6836 = vmatpush.bf16.msra.mxu0 %v6363
    %6837 = vmatpush.bf16.msra.mxu0 %v6359
    %6838 = vmatpush.bf16.msra.mxu0 %v6355
    %6839 = vmatpush.bf16.msra.mxu0 %v6351
    %6840 = vmatmul.bf16.gmra.mxu0 %v5828
    %v6841 = vpop.f32.mrf.mxu0
    %v6842 = vadd.f32 0.0, %v6841
    %v6843 = vpop.f32.mrf.mxu0
    %v6844 = vadd.f32 0.0, %v6843
    %6845 = vmatmul.bf16.gmra.mxu0 %v5832
    %v6846 = vpop.f32.mrf.mxu0
    %v6847 = vadd.f32 0.0, %v6846
    %v6848 = vpop.f32.mrf.mxu0
    %v6849 = vadd.f32 0.0, %v6848
    %6850 = vdwg.mxu0
    %6851 = vmatpush.bf16.msra.mxu0 %v6411
    %6852 = vmatpush.bf16.msra.mxu0 %v6407
    %6853 = vmatpush.bf16.msra.mxu0 %v6403
    %6854 = vmatpush.bf16.msra.mxu0 %v6399
    %6855 = vmatpush.bf16.msra.mxu0 %v6395
    %6856 = vmatpush.bf16.msra.mxu0 %v6391
    %6857 = vmatpush.bf16.msra.mxu0 %v6387
    %6858 = vmatpush.bf16.msra.mxu0 %v6383
    %6859 = vmatmul.bf16.gmra.mxu0 %v5829
    %v6860 = vpop.f32.mrf.mxu0
    %v6861 = vadd.f32 %v6842, %v6860
    %v6862 = vpop.f32.mrf.mxu0
    %v6863 = vadd.f32 %v6844, %v6862
    %6864 = vmatmul.bf16.gmra.mxu0 %v5833
    %v6865 = vpop.f32.mrf.mxu0
    %v6866 = vadd.f32 %v6847, %v6865
    %v6867 = vpop.f32.mrf.mxu0
    %v6868 = vadd.f32 %v6849, %v6867
    %6869 = vdwg.mxu0
    %6870 = vmatpush.bf16.msra.mxu0 %v6443
    %6871 = vmatpush.bf16.msra.mxu0 %v6439
    %6872 = vmatpush.bf16.msra.mxu0 %v6435
    %6873 = vmatpush.bf16.msra.mxu0 %v6431
    %6874 = vmatpush.bf16.msra.mxu0 %v6427
    %6875 = vmatpush.bf16.msra.mxu0 %v6423
    %6876 = vmatpush.bf16.msra.mxu0 %v6419
    %6877 = vmatpush.bf16.msra.mxu0 %v6415
    %6878 = vmatmul.bf16.gmra.mxu0 %v5830
    %v6879 = vpop.f32.mrf.mxu0
    %v6880 = vadd.f32 %v6861, %v6879
    %v6881 = vpop.f32.mrf.mxu0
    %v6882 = vadd.f32 %v6863, %v6881
    %6883 = vmatmul.bf16.gmra.mxu0 %v5834
    %v6884 = vpop.f32.mrf.mxu0
    %v6885 = vadd.f32 %v6866, %v6884
    %v6886 = vpop.f32.mrf.mxu0
    %v6887 = vadd.f32 %v6868, %v6886
    %6888 = vdwg.mxu0
    %6889 = vmatpush.bf16.msra.mxu0 %v6475
    %6890 = vmatpush.bf16.msra.mxu0 %v6471
    %6891 = vmatpush.bf16.msra.mxu0 %v6467
    %6892 = vmatpush.bf16.msra.mxu0 %v6463
    %6893 = vmatpush.bf16.msra.mxu0 %v6459
    %6894 = vmatpush.bf16.msra.mxu0 %v6455
    %6895 = vmatpush.bf16.msra.mxu0 %v6451
    %6896 = vmatpush.bf16.msra.mxu0 %v6447
    %6897 = vmatmul.bf16.gmra.mxu0 %v5831
    %v6898 = vpop.f32.mrf.mxu0
    %v6899 = vadd.f32 %v6880, %v6898
    %v6900 = vpop.f32.mrf.mxu0
    %v6901 = vadd.f32 %v6882, %v6900
    %6902 = vmatmul.bf16.gmra.mxu0 %v5835
    %v6903 = vpop.f32.mrf.mxu0
    %v6904 = vadd.f32 %v6885, %v6903
    %v6905 = vpop.f32.mrf.mxu0
    %v6906 = vadd.f32 %v6887, %v6905
    %6907 = vdwg.mxu0
    %v6908 = vadd.f32 %v4493, %v6671
    %v6909 = vadd.f32 %v4569, %v6747
    %v6910 = vadd.f32 %v4645, %v6823
    %v6911 = vadd.f32 %v4721, %v6899
    %v6912 = vadd.f32 %v4495, %v6673
    %v6913 = vadd.f32 %v4571, %v6749
    %v6914 = vadd.f32 %v4647, %v6825
    %v6915 = vadd.f32 %v4723, %v6901
    %v6916 = vadd.f32 %v4498, %v6676
    %v6917 = vadd.f32 %v4574, %v6752
    %v6918 = vadd.f32 %v4650, %v6828
    %v6919 = vadd.f32 %v4726, %v6904
    %v6920 = vadd.f32 %v4500, %v6678
    %v6921 = vadd.f32 %v4576, %v6754
    %v6922 = vadd.f32 %v4652, %v6830
    %v6923 = vadd.f32 %v4728, %v6906
    %v6924 = vld [vmem:[#allocation7 + $0x30] sm:$0xff]
    %v6925 = vld [vmem:[#allocation7 + $0x38] sm:$0xff]
    %v6926 = vld [vmem:[#allocation7 + $0x70] sm:$0xff]
    %v6927 = vld [vmem:[#allocation7 + $0x78] sm:$0xff]
    %v6928 = vld [vmem:[#allocation7 + $0xb0] sm:$0xff]
    %v6929 = vld [vmem:[#allocation7 + $0xb8] sm:$0xff]
    %v6930 = vld [vmem:[#allocation7 + $0xf0] sm:$0xff]
    %v6931 = vld [vmem:[#allocation7 + $0xf8] sm:$0xff]
    %v6932 = vld [vmem:[#allocation7 + $0x130] sm:$0xff]
    %v6933 = vld [vmem:[#allocation7 + $0x138] sm:$0xff]
    %v6934 = vld [vmem:[#allocation7 + $0x170] sm:$0xff]
    %v6935 = vld [vmem:[#allocation7 + $0x178] sm:$0xff]
    %v6936 = vld [vmem:[#allocation7 + $0x1b0] sm:$0xff]
    %v6937 = vld [vmem:[#allocation7 + $0x1b8] sm:$0xff]
    %v6938 = vld [vmem:[#allocation7 + $0x1f0] sm:$0xff]
    %v6939 = vld [vmem:[#allocation7 + $0x1f8] sm:$0xff]
    %v6940 = vld [vmem:[#allocation7 + $0x230] sm:$0xff]
    %v6941 = vld [vmem:[#allocation7 + $0x238] sm:$0xff]
    %v6942 = vld [vmem:[#allocation7 + $0x270] sm:$0xff]
    %v6943 = vld [vmem:[#allocation7 + $0x278] sm:$0xff]
    %v6944 = vld [vmem:[#allocation7 + $0x2b0] sm:$0xff]
    %v6945 = vld [vmem:[#allocation7 + $0x2b8] sm:$0xff]
    %v6946 = vld [vmem:[#allocation7 + $0x2f0] sm:$0xff]
    %v6947 = vld [vmem:[#allocation7 + $0x2f8] sm:$0xff]
    %v6948 = vld [vmem:[#allocation7 + $0x330] sm:$0xff]
    %v6949 = vld [vmem:[#allocation7 + $0x338] sm:$0xff]
    %v6950 = vld [vmem:[#allocation7 + $0x370] sm:$0xff]
    %v6951 = vld [vmem:[#allocation7 + $0x378] sm:$0xff]
    %v6952 = vld [vmem:[#allocation7 + $0x3b0] sm:$0xff]
    %v6953 = vld [vmem:[#allocation7 + $0x3b8] sm:$0xff]
    %v6954 = vld [vmem:[#allocation7 + $0x3f0] sm:$0xff]
    %v6955 = vld [vmem:[#allocation7 + $0x3f8] sm:$0xff]
    %v6956 = vld [vmem:[#allocation7 + $0x430] sm:$0xff]
    %v6957 = vld [vmem:[#allocation7 + $0x438] sm:$0xff]
    %v6958 = vld [vmem:[#allocation7 + $0x470] sm:$0xff]
    %v6959 = vld [vmem:[#allocation7 + $0x478] sm:$0xff]
    %v6960 = vld [vmem:[#allocation7 + $0x4b0] sm:$0xff]
    %v6961 = vld [vmem:[#allocation7 + $0x4b8] sm:$0xff]
    %v6962 = vld [vmem:[#allocation7 + $0x4f0] sm:$0xff]
    %v6963 = vld [vmem:[#allocation7 + $0x4f8] sm:$0xff]
    %v6964 = vld [vmem:[#allocation7 + $0x530] sm:$0xff]
    %v6965 = vld [vmem:[#allocation7 + $0x538] sm:$0xff]
    %v6966 = vld [vmem:[#allocation7 + $0x570] sm:$0xff]
    %v6967 = vld [vmem:[#allocation7 + $0x578] sm:$0xff]
    %v6968 = vld [vmem:[#allocation7 + $0x5b0] sm:$0xff]
    %v6969 = vld [vmem:[#allocation7 + $0x5b8] sm:$0xff]
    %v6970 = vld [vmem:[#allocation7 + $0x5f0] sm:$0xff]
    %v6971 = vld [vmem:[#allocation7 + $0x5f8] sm:$0xff]
    %v6972 = vld [vmem:[#allocation7 + $0x630] sm:$0xff]
    %v6973 = vld [vmem:[#allocation7 + $0x638] sm:$0xff]
    %v6974 = vld [vmem:[#allocation7 + $0x670] sm:$0xff]
    %v6975 = vld [vmem:[#allocation7 + $0x678] sm:$0xff]
    %v6976 = vld [vmem:[#allocation7 + $0x6b0] sm:$0xff]
    %v6977 = vld [vmem:[#allocation7 + $0x6b8] sm:$0xff]
    %v6978 = vld [vmem:[#allocation7 + $0x6f0] sm:$0xff]
    %v6979 = vld [vmem:[#allocation7 + $0x6f8] sm:$0xff]
    %v6980 = vld [vmem:[#allocation7 + $0x730] sm:$0xff]
    %v6981 = vld [vmem:[#allocation7 + $0x738] sm:$0xff]
    %v6982 = vld [vmem:[#allocation7 + $0x770] sm:$0xff]
    %v6983 = vld [vmem:[#allocation7 + $0x778] sm:$0xff]
    %v6984 = vld [vmem:[#allocation7 + $0x7b0] sm:$0xff]
    %v6985 = vld [vmem:[#allocation7 + $0x7b8] sm:$0xff]
    %v6986 = vld [vmem:[#allocation7 + $0x7f0] sm:$0xff]
    %v6987 = vld [vmem:[#allocation7 + $0x7f8] sm:$0xff]
    %v6988 = vld [vmem:[#allocation7 + $0x830] sm:$0xff]
    %v6989 = vld [vmem:[#allocation7 + $0x838] sm:$0xff]
    %v6990 = vld [vmem:[#allocation7 + $0x870] sm:$0xff]
    %v6991 = vld [vmem:[#allocation7 + $0x878] sm:$0xff]
    %v6992 = vld [vmem:[#allocation7 + $0x8b0] sm:$0xff]
    %v6993 = vld [vmem:[#allocation7 + $0x8b8] sm:$0xff]
    %v6994 = vld [vmem:[#allocation7 + $0x8f0] sm:$0xff]
    %v6995 = vld [vmem:[#allocation7 + $0x8f8] sm:$0xff]
    %v6996 = vld [vmem:[#allocation7 + $0x930] sm:$0xff]
    %v6997 = vld [vmem:[#allocation7 + $0x938] sm:$0xff]
    %v6998 = vld [vmem:[#allocation7 + $0x970] sm:$0xff]
    %v6999 = vld [vmem:[#allocation7 + $0x978] sm:$0xff]
    %v7000 = vld [vmem:[#allocation7 + $0x9b0] sm:$0xff]
    %v7001 = vld [vmem:[#allocation7 + $0x9b8] sm:$0xff]
    %v7002 = vld [vmem:[#allocation7 + $0x9f0] sm:$0xff]
    %v7003 = vld [vmem:[#allocation7 + $0x9f8] sm:$0xff]
    %v7004 = vld [vmem:[#allocation7 + $0xa30] sm:$0xff]
    %v7005 = vld [vmem:[#allocation7 + $0xa38] sm:$0xff]
    %v7006 = vld [vmem:[#allocation7 + $0xa70] sm:$0xff]
    %v7007 = vld [vmem:[#allocation7 + $0xa78] sm:$0xff]
    %v7008 = vld [vmem:[#allocation7 + $0xab0] sm:$0xff]
    %v7009 = vld [vmem:[#allocation7 + $0xab8] sm:$0xff]
    %v7010 = vld [vmem:[#allocation7 + $0xaf0] sm:$0xff]
    %v7011 = vld [vmem:[#allocation7 + $0xaf8] sm:$0xff]
    %v7012 = vld [vmem:[#allocation7 + $0xb30] sm:$0xff]
    %v7013 = vld [vmem:[#allocation7 + $0xb38] sm:$0xff]
    %v7014 = vld [vmem:[#allocation7 + $0xb70] sm:$0xff]
    %v7015 = vld [vmem:[#allocation7 + $0xb78] sm:$0xff]
    %v7016 = vld [vmem:[#allocation7 + $0xbb0] sm:$0xff]
    %v7017 = vld [vmem:[#allocation7 + $0xbb8] sm:$0xff]
    %v7018 = vld [vmem:[#allocation7 + $0xbf0] sm:$0xff]
    %v7019 = vld [vmem:[#allocation7 + $0xbf8] sm:$0xff]
    %v7020 = vld [vmem:[#allocation7 + $0xc30] sm:$0xff]
    %v7021 = vld [vmem:[#allocation7 + $0xc38] sm:$0xff]
    %v7022 = vld [vmem:[#allocation7 + $0xc70] sm:$0xff]
    %v7023 = vld [vmem:[#allocation7 + $0xc78] sm:$0xff]
    %v7024 = vld [vmem:[#allocation7 + $0xcb0] sm:$0xff]
    %v7025 = vld [vmem:[#allocation7 + $0xcb8] sm:$0xff]
    %v7026 = vld [vmem:[#allocation7 + $0xcf0] sm:$0xff]
    %v7027 = vld [vmem:[#allocation7 + $0xcf8] sm:$0xff]
    %v7028 = vld [vmem:[#allocation7 + $0xd30] sm:$0xff]
    %v7029 = vld [vmem:[#allocation7 + $0xd38] sm:$0xff]
    %v7030 = vld [vmem:[#allocation7 + $0xd70] sm:$0xff]
    %v7031 = vld [vmem:[#allocation7 + $0xd78] sm:$0xff]
    %v7032 = vld [vmem:[#allocation7 + $0xdb0] sm:$0xff]
    %v7033 = vld [vmem:[#allocation7 + $0xdb8] sm:$0xff]
    %v7034 = vld [vmem:[#allocation7 + $0xdf0] sm:$0xff]
    %v7035 = vld [vmem:[#allocation7 + $0xdf8] sm:$0xff]
    %v7036 = vld [vmem:[#allocation7 + $0xe30] sm:$0xff]
    %v7037 = vld [vmem:[#allocation7 + $0xe38] sm:$0xff]
    %v7038 = vld [vmem:[#allocation7 + $0xe70] sm:$0xff]
    %v7039 = vld [vmem:[#allocation7 + $0xe78] sm:$0xff]
    %v7040 = vld [vmem:[#allocation7 + $0xeb0] sm:$0xff]
    %v7041 = vld [vmem:[#allocation7 + $0xeb8] sm:$0xff]
    %v7042 = vld [vmem:[#allocation7 + $0xef0] sm:$0xff]
    %v7043 = vld [vmem:[#allocation7 + $0xef8] sm:$0xff]
    %v7044 = vld [vmem:[#allocation7 + $0xf30] sm:$0xff]
    %v7045 = vld [vmem:[#allocation7 + $0xf38] sm:$0xff]
    %v7046 = vld [vmem:[#allocation7 + $0xf70] sm:$0xff]
    %v7047 = vld [vmem:[#allocation7 + $0xf78] sm:$0xff]
    %v7048 = vld [vmem:[#allocation7 + $0xfb0] sm:$0xff]
    %v7049 = vld [vmem:[#allocation7 + $0xfb8] sm:$0xff]
    %v7050 = vld [vmem:[#allocation7 + $0xff0] sm:$0xff]
    %v7051 = vld [vmem:[#allocation7 + $0xff8] sm:$0xff]
    %v7052 = vld [vmem:[#allocation8 + $0xc] sm:$0xf]
    %v7054 = vperm.slane %v7052, 0
    %v7055 = vperm.slane %v7052, 1
    %v7056 = vperm.slane %v7052, 2
    %v7057 = vperm.slane %v7052, 3
    %v7190 = vunpack.c.l.b16 %v6924
    %v7191 = vunpack.c.h.b16 %v6924
    %v7192 = vunpack.c.l.b16 %v6925
    %v7193 = vunpack.c.h.b16 %v6925
    %v7194 = vunpack.c.l.b16 %v6926
    %v7195 = vunpack.c.h.b16 %v6926
    %v7196 = vunpack.c.l.b16 %v6927
    %v7197 = vunpack.c.h.b16 %v6927
    %v7198 = vunpack.c.l.b16 %v6928
    %v7199 = vunpack.c.h.b16 %v6928
    %v7200 = vunpack.c.l.b16 %v6929
    %v7201 = vunpack.c.h.b16 %v6929
    %v7202 = vunpack.c.l.b16 %v6930
    %v7203 = vunpack.c.h.b16 %v6930
    %v7204 = vunpack.c.l.b16 %v6931
    %v7205 = vunpack.c.h.b16 %v6931
    %v7206 = vunpack.c.l.b16 %v6932
    %v7207 = vunpack.c.h.b16 %v6932
    %v7208 = vunpack.c.l.b16 %v6933
    %v7209 = vunpack.c.h.b16 %v6933
    %v7210 = vunpack.c.l.b16 %v6934
    %v7211 = vunpack.c.h.b16 %v6934
    %v7212 = vunpack.c.l.b16 %v6935
    %v7213 = vunpack.c.h.b16 %v6935
    %v7214 = vunpack.c.l.b16 %v6936
    %v7215 = vunpack.c.h.b16 %v6936
    %v7216 = vunpack.c.l.b16 %v6937
    %v7217 = vunpack.c.h.b16 %v6937
    %v7218 = vunpack.c.l.b16 %v6938
    %v7219 = vunpack.c.h.b16 %v6938
    %v7220 = vunpack.c.l.b16 %v6939
    %v7221 = vunpack.c.h.b16 %v6939
    %v7222 = vunpack.c.l.b16 %v6940
    %v7223 = vunpack.c.h.b16 %v6940
    %v7224 = vunpack.c.l.b16 %v6941
    %v7225 = vunpack.c.h.b16 %v6941
    %v7226 = vunpack.c.l.b16 %v6942
    %v7227 = vunpack.c.h.b16 %v6942
    %v7228 = vunpack.c.l.b16 %v6943
    %v7229 = vunpack.c.h.b16 %v6943
    %v7230 = vunpack.c.l.b16 %v6944
    %v7231 = vunpack.c.h.b16 %v6944
    %v7232 = vunpack.c.l.b16 %v6945
    %v7233 = vunpack.c.h.b16 %v6945
    %v7234 = vunpack.c.l.b16 %v6946
    %v7235 = vunpack.c.h.b16 %v6946
    %v7236 = vunpack.c.l.b16 %v6947
    %v7237 = vunpack.c.h.b16 %v6947
    %v7238 = vunpack.c.l.b16 %v6948
    %v7239 = vunpack.c.h.b16 %v6948
    %v7240 = vunpack.c.l.b16 %v6949
    %v7241 = vunpack.c.h.b16 %v6949
    %v7242 = vunpack.c.l.b16 %v6950
    %v7243 = vunpack.c.h.b16 %v6950
    %v7244 = vunpack.c.l.b16 %v6951
    %v7245 = vunpack.c.h.b16 %v6951
    %v7246 = vunpack.c.l.b16 %v6952
    %v7247 = vunpack.c.h.b16 %v6952
    %v7248 = vunpack.c.l.b16 %v6953
    %v7249 = vunpack.c.h.b16 %v6953
    %v7250 = vunpack.c.l.b16 %v6954
    %v7251 = vunpack.c.h.b16 %v6954
    %v7252 = vunpack.c.l.b16 %v6955
    %v7253 = vunpack.c.h.b16 %v6955
    %v7254 = vunpack.c.l.b16 %v6956
    %v7255 = vunpack.c.h.b16 %v6956
    %v7256 = vunpack.c.l.b16 %v6957
    %v7257 = vunpack.c.h.b16 %v6957
    %v7258 = vunpack.c.l.b16 %v6958
    %v7259 = vunpack.c.h.b16 %v6958
    %v7260 = vunpack.c.l.b16 %v6959
    %v7261 = vunpack.c.h.b16 %v6959
    %v7262 = vunpack.c.l.b16 %v6960
    %v7263 = vunpack.c.h.b16 %v6960
    %v7264 = vunpack.c.l.b16 %v6961
    %v7265 = vunpack.c.h.b16 %v6961
    %v7266 = vunpack.c.l.b16 %v6962
    %v7267 = vunpack.c.h.b16 %v6962
    %v7268 = vunpack.c.l.b16 %v6963
    %v7269 = vunpack.c.h.b16 %v6963
    %v7270 = vunpack.c.l.b16 %v6964
    %v7271 = vunpack.c.h.b16 %v6964
    %v7272 = vunpack.c.l.b16 %v6965
    %v7273 = vunpack.c.h.b16 %v6965
    %v7274 = vunpack.c.l.b16 %v6966
    %v7275 = vunpack.c.h.b16 %v6966
    %v7276 = vunpack.c.l.b16 %v6967
    %v7277 = vunpack.c.h.b16 %v6967
    %v7278 = vunpack.c.l.b16 %v6968
    %v7279 = vunpack.c.h.b16 %v6968
    %v7280 = vunpack.c.l.b16 %v6969
    %v7281 = vunpack.c.h.b16 %v6969
    %v7282 = vunpack.c.l.b16 %v6970
    %v7283 = vunpack.c.h.b16 %v6970
    %v7284 = vunpack.c.l.b16 %v6971
    %v7285 = vunpack.c.h.b16 %v6971
    %v7286 = vunpack.c.l.b16 %v6972
    %v7287 = vunpack.c.h.b16 %v6972
    %v7288 = vunpack.c.l.b16 %v6973
    %v7289 = vunpack.c.h.b16 %v6973
    %v7290 = vunpack.c.l.b16 %v6974
    %v7291 = vunpack.c.h.b16 %v6974
    %v7292 = vunpack.c.l.b16 %v6975
    %v7293 = vunpack.c.h.b16 %v6975
    %v7294 = vunpack.c.l.b16 %v6976
    %v7295 = vunpack.c.h.b16 %v6976
    %v7296 = vunpack.c.l.b16 %v6977
    %v7297 = vunpack.c.h.b16 %v6977
    %v7298 = vunpack.c.l.b16 %v6978
    %v7299 = vunpack.c.h.b16 %v6978
    %v7300 = vunpack.c.l.b16 %v6979
    %v7301 = vunpack.c.h.b16 %v6979
    %v7302 = vunpack.c.l.b16 %v6980
    %v7303 = vunpack.c.h.b16 %v6980
    %v7304 = vunpack.c.l.b16 %v6981
    %v7305 = vunpack.c.h.b16 %v6981
    %v7306 = vunpack.c.l.b16 %v6982
    %v7307 = vunpack.c.h.b16 %v6982
    %v7308 = vunpack.c.l.b16 %v6983
    %v7309 = vunpack.c.h.b16 %v6983
    %v7310 = vunpack.c.l.b16 %v6984
    %v7311 = vunpack.c.h.b16 %v6984
    %v7312 = vunpack.c.l.b16 %v6985
    %v7313 = vunpack.c.h.b16 %v6985
    %v7314 = vunpack.c.l.b16 %v6986
    %v7315 = vunpack.c.h.b16 %v6986
    %v7316 = vunpack.c.l.b16 %v6987
    %v7317 = vunpack.c.h.b16 %v6987
    %v7318 = vunpack.c.l.b16 %v6988
    %v7319 = vunpack.c.h.b16 %v6988
    %v7320 = vunpack.c.l.b16 %v6989
    %v7321 = vunpack.c.h.b16 %v6989
    %v7322 = vunpack.c.l.b16 %v6990
    %v7323 = vunpack.c.h.b16 %v6990
    %v7324 = vunpack.c.l.b16 %v6991
    %v7325 = vunpack.c.h.b16 %v6991
    %v7326 = vunpack.c.l.b16 %v6992
    %v7327 = vunpack.c.h.b16 %v6992
    %v7328 = vunpack.c.l.b16 %v6993
    %v7329 = vunpack.c.h.b16 %v6993
    %v7330 = vunpack.c.l.b16 %v6994
    %v7331 = vunpack.c.h.b16 %v6994
    %v7332 = vunpack.c.l.b16 %v6995
    %v7333 = vunpack.c.h.b16 %v6995
    %v7334 = vunpack.c.l.b16 %v6996
    %v7335 = vunpack.c.h.b16 %v6996
    %v7336 = vunpack.c.l.b16 %v6997
    %v7337 = vunpack.c.h.b16 %v6997
    %v7338 = vunpack.c.l.b16 %v6998
    %v7339 = vunpack.c.h.b16 %v6998
    %v7340 = vunpack.c.l.b16 %v6999
    %v7341 = vunpack.c.h.b16 %v6999
    %v7342 = vunpack.c.l.b16 %v7000
    %v7343 = vunpack.c.h.b16 %v7000
    %v7344 = vunpack.c.l.b16 %v7001
    %v7345 = vunpack.c.h.b16 %v7001
    %v7346 = vunpack.c.l.b16 %v7002
    %v7347 = vunpack.c.h.b16 %v7002
    %v7348 = vunpack.c.l.b16 %v7003
    %v7349 = vunpack.c.h.b16 %v7003
    %v7350 = vunpack.c.l.b16 %v7004
    %v7351 = vunpack.c.h.b16 %v7004
    %v7352 = vunpack.c.l.b16 %v7005
    %v7353 = vunpack.c.h.b16 %v7005
    %v7354 = vunpack.c.l.b16 %v7006
    %v7355 = vunpack.c.h.b16 %v7006
    %v7356 = vunpack.c.l.b16 %v7007
    %v7357 = vunpack.c.h.b16 %v7007
    %v7358 = vunpack.c.l.b16 %v7008
    %v7359 = vunpack.c.h.b16 %v7008
    %v7360 = vunpack.c.l.b16 %v7009
    %v7361 = vunpack.c.h.b16 %v7009
    %v7362 = vunpack.c.l.b16 %v7010
    %v7363 = vunpack.c.h.b16 %v7010
    %v7364 = vunpack.c.l.b16 %v7011
    %v7365 = vunpack.c.h.b16 %v7011
    %v7366 = vunpack.c.l.b16 %v7012
    %v7367 = vunpack.c.h.b16 %v7012
    %v7368 = vunpack.c.l.b16 %v7013
    %v7369 = vunpack.c.h.b16 %v7013
    %v7370 = vunpack.c.l.b16 %v7014
    %v7371 = vunpack.c.h.b16 %v7014
    %v7372 = vunpack.c.l.b16 %v7015
    %v7373 = vunpack.c.h.b16 %v7015
    %v7374 = vunpack.c.l.b16 %v7016
    %v7375 = vunpack.c.h.b16 %v7016
    %v7376 = vunpack.c.l.b16 %v7017
    %v7377 = vunpack.c.h.b16 %v7017
    %v7378 = vunpack.c.l.b16 %v7018
    %v7379 = vunpack.c.h.b16 %v7018
    %v7380 = vunpack.c.l.b16 %v7019
    %v7381 = vunpack.c.h.b16 %v7019
    %v7382 = vunpack.c.l.b16 %v7020
    %v7383 = vunpack.c.h.b16 %v7020
    %v7384 = vunpack.c.l.b16 %v7021
    %v7385 = vunpack.c.h.b16 %v7021
    %v7386 = vunpack.c.l.b16 %v7022
    %v7387 = vunpack.c.h.b16 %v7022
    %v7388 = vunpack.c.l.b16 %v7023
    %v7389 = vunpack.c.h.b16 %v7023
    %v7390 = vunpack.c.l.b16 %v7024
    %v7391 = vunpack.c.h.b16 %v7024
    %v7392 = vunpack.c.l.b16 %v7025
    %v7393 = vunpack.c.h.b16 %v7025
    %v7394 = vunpack.c.l.b16 %v7026
    %v7395 = vunpack.c.h.b16 %v7026
    %v7396 = vunpack.c.l.b16 %v7027
    %v7397 = vunpack.c.h.b16 %v7027
    %v7398 = vunpack.c.l.b16 %v7028
    %v7399 = vunpack.c.h.b16 %v7028
    %v7400 = vunpack.c.l.b16 %v7029
    %v7401 = vunpack.c.h.b16 %v7029
    %v7402 = vunpack.c.l.b16 %v7030
    %v7403 = vunpack.c.h.b16 %v7030
    %v7404 = vunpack.c.l.b16 %v7031
    %v7405 = vunpack.c.h.b16 %v7031
    %v7406 = vunpack.c.l.b16 %v7032
    %v7407 = vunpack.c.h.b16 %v7032
    %v7408 = vunpack.c.l.b16 %v7033
    %v7409 = vunpack.c.h.b16 %v7033
    %v7410 = vunpack.c.l.b16 %v7034
    %v7411 = vunpack.c.h.b16 %v7034
    %v7412 = vunpack.c.l.b16 %v7035
    %v7413 = vunpack.c.h.b16 %v7035
    %v7414 = vunpack.c.l.b16 %v7036
    %v7415 = vunpack.c.h.b16 %v7036
    %v7416 = vunpack.c.l.b16 %v7037
    %v7417 = vunpack.c.h.b16 %v7037
    %v7418 = vunpack.c.l.b16 %v7038
    %v7419 = vunpack.c.h.b16 %v7038
    %v7420 = vunpack.c.l.b16 %v7039
    %v7421 = vunpack.c.h.b16 %v7039
    %v7422 = vunpack.c.l.b16 %v7040
    %v7423 = vunpack.c.h.b16 %v7040
    %v7424 = vunpack.c.l.b16 %v7041
    %v7425 = vunpack.c.h.b16 %v7041
    %v7426 = vunpack.c.l.b16 %v7042
    %v7427 = vunpack.c.h.b16 %v7042
    %v7428 = vunpack.c.l.b16 %v7043
    %v7429 = vunpack.c.h.b16 %v7043
    %v7430 = vunpack.c.l.b16 %v7044
    %v7431 = vunpack.c.h.b16 %v7044
    %v7432 = vunpack.c.l.b16 %v7045
    %v7433 = vunpack.c.h.b16 %v7045
    %v7434 = vunpack.c.l.b16 %v7046
    %v7435 = vunpack.c.h.b16 %v7046
    %v7436 = vunpack.c.l.b16 %v7047
    %v7437 = vunpack.c.h.b16 %v7047
    %v7438 = vunpack.c.l.b16 %v7048
    %v7439 = vunpack.c.h.b16 %v7048
    %v7440 = vunpack.c.l.b16 %v7049
    %v7441 = vunpack.c.h.b16 %v7049
    %v7442 = vunpack.c.l.b16 %v7050
    %v7443 = vunpack.c.h.b16 %v7050
    %v7444 = vunpack.c.l.b16 %v7051
    %v7445 = vunpack.c.h.b16 %v7051
    %v7446 = vpack.c.b16 %v7194, %v7190
    %v7447 = vpack.c.b16 %v7195, %v7191
    %v7448 = vpack.c.b16 %v7196, %v7192
    %v7449 = vpack.c.b16 %v7197, %v7193
    %v7450 = vpack.c.b16 %v7202, %v7198
    %v7451 = vpack.c.b16 %v7203, %v7199
    %v7452 = vpack.c.b16 %v7204, %v7200
    %v7453 = vpack.c.b16 %v7205, %v7201
    %v7454 = vpack.c.b16 %v7210, %v7206
    %v7455 = vpack.c.b16 %v7211, %v7207
    %v7456 = vpack.c.b16 %v7212, %v7208
    %v7457 = vpack.c.b16 %v7213, %v7209
    %v7458 = vpack.c.b16 %v7218, %v7214
    %v7459 = vpack.c.b16 %v7219, %v7215
    %v7460 = vpack.c.b16 %v7220, %v7216
    %v7461 = vpack.c.b16 %v7221, %v7217
    %v7462 = vpack.c.b16 %v7226, %v7222
    %v7463 = vpack.c.b16 %v7227, %v7223
    %v7464 = vpack.c.b16 %v7228, %v7224
    %v7465 = vpack.c.b16 %v7229, %v7225
    %v7466 = vpack.c.b16 %v7234, %v7230
    %v7467 = vpack.c.b16 %v7235, %v7231
    %v7468 = vpack.c.b16 %v7236, %v7232
    %v7469 = vpack.c.b16 %v7237, %v7233
    %v7470 = vpack.c.b16 %v7242, %v7238
    %v7471 = vpack.c.b16 %v7243, %v7239
    %v7472 = vpack.c.b16 %v7244, %v7240
    %v7473 = vpack.c.b16 %v7245, %v7241
    %v7474 = vpack.c.b16 %v7250, %v7246
    %v7475 = vpack.c.b16 %v7251, %v7247
    %v7476 = vpack.c.b16 %v7252, %v7248
    %v7477 = vpack.c.b16 %v7253, %v7249
    %v7478 = vpack.c.b16 %v7258, %v7254
    %v7479 = vpack.c.b16 %v7259, %v7255
    %v7480 = vpack.c.b16 %v7260, %v7256
    %v7481 = vpack.c.b16 %v7261, %v7257
    %v7482 = vpack.c.b16 %v7266, %v7262
    %v7483 = vpack.c.b16 %v7267, %v7263
    %v7484 = vpack.c.b16 %v7268, %v7264
    %v7485 = vpack.c.b16 %v7269, %v7265
    %v7486 = vpack.c.b16 %v7274, %v7270
    %v7487 = vpack.c.b16 %v7275, %v7271
    %v7488 = vpack.c.b16 %v7276, %v7272
    %v7489 = vpack.c.b16 %v7277, %v7273
    %v7490 = vpack.c.b16 %v7282, %v7278
    %v7491 = vpack.c.b16 %v7283, %v7279
    %v7492 = vpack.c.b16 %v7284, %v7280
    %v7493 = vpack.c.b16 %v7285, %v7281
    %v7494 = vpack.c.b16 %v7290, %v7286
    %v7495 = vpack.c.b16 %v7291, %v7287
    %v7496 = vpack.c.b16 %v7292, %v7288
    %v7497 = vpack.c.b16 %v7293, %v7289
    %v7498 = vpack.c.b16 %v7298, %v7294
    %v7499 = vpack.c.b16 %v7299, %v7295
    %v7500 = vpack.c.b16 %v7300, %v7296
    %v7501 = vpack.c.b16 %v7301, %v7297
    %v7502 = vpack.c.b16 %v7306, %v7302
    %v7503 = vpack.c.b16 %v7307, %v7303
    %v7504 = vpack.c.b16 %v7308, %v7304
    %v7505 = vpack.c.b16 %v7309, %v7305
    %v7506 = vpack.c.b16 %v7314, %v7310
    %v7507 = vpack.c.b16 %v7315, %v7311
    %v7508 = vpack.c.b16 %v7316, %v7312
    %v7509 = vpack.c.b16 %v7317, %v7313
    %v7510 = vpack.c.b16 %v7322, %v7318
    %v7511 = vpack.c.b16 %v7323, %v7319
    %v7512 = vpack.c.b16 %v7324, %v7320
    %v7513 = vpack.c.b16 %v7325, %v7321
    %v7514 = vpack.c.b16 %v7330, %v7326
    %v7515 = vpack.c.b16 %v7331, %v7327
    %v7516 = vpack.c.b16 %v7332, %v7328
    %v7517 = vpack.c.b16 %v7333, %v7329
    %v7518 = vpack.c.b16 %v7338, %v7334
    %v7519 = vpack.c.b16 %v7339, %v7335
    %v7520 = vpack.c.b16 %v7340, %v7336
    %v7521 = vpack.c.b16 %v7341, %v7337
    %v7522 = vpack.c.b16 %v7346, %v7342
    %v7523 = vpack.c.b16 %v7347, %v7343
    %v7524 = vpack.c.b16 %v7348, %v7344
    %v7525 = vpack.c.b16 %v7349, %v7345
    %v7526 = vpack.c.b16 %v7354, %v7350
    %v7527 = vpack.c.b16 %v7355, %v7351
    %v7528 = vpack.c.b16 %v7356, %v7352
    %v7529 = vpack.c.b16 %v7357, %v7353
    %v7530 = vpack.c.b16 %v7362, %v7358
    %v7531 = vpack.c.b16 %v7363, %v7359
    %v7532 = vpack.c.b16 %v7364, %v7360
    %v7533 = vpack.c.b16 %v7365, %v7361
    %v7534 = vpack.c.b16 %v7370, %v7366
    %v7535 = vpack.c.b16 %v7371, %v7367
    %v7536 = vpack.c.b16 %v7372, %v7368
    %v7537 = vpack.c.b16 %v7373, %v7369
    %v7538 = vpack.c.b16 %v7378, %v7374
    %v7539 = vpack.c.b16 %v7379, %v7375
    %v7540 = vpack.c.b16 %v7380, %v7376
    %v7541 = vpack.c.b16 %v7381, %v7377
    %v7542 = vpack.c.b16 %v7386, %v7382
    %v7543 = vpack.c.b16 %v7387, %v7383
    %v7544 = vpack.c.b16 %v7388, %v7384
    %v7545 = vpack.c.b16 %v7389, %v7385
    %v7546 = vpack.c.b16 %v7394, %v7390
    %v7547 = vpack.c.b16 %v7395, %v7391
    %v7548 = vpack.c.b16 %v7396, %v7392
    %v7549 = vpack.c.b16 %v7397, %v7393
    %v7550 = vpack.c.b16 %v7402, %v7398
    %v7551 = vpack.c.b16 %v7403, %v7399
    %v7552 = vpack.c.b16 %v7404, %v7400
    %v7553 = vpack.c.b16 %v7405, %v7401
    %v7554 = vpack.c.b16 %v7410, %v7406
    %v7555 = vpack.c.b16 %v7411, %v7407
    %v7556 = vpack.c.b16 %v7412, %v7408
    %v7557 = vpack.c.b16 %v7413, %v7409
    %v7558 = vpack.c.b16 %v7418, %v7414
    %v7559 = vpack.c.b16 %v7419, %v7415
    %v7560 = vpack.c.b16 %v7420, %v7416
    %v7561 = vpack.c.b16 %v7421, %v7417
    %v7562 = vpack.c.b16 %v7426, %v7422
    %v7563 = vpack.c.b16 %v7427, %v7423
    %v7564 = vpack.c.b16 %v7428, %v7424
    %v7565 = vpack.c.b16 %v7429, %v7425
    %v7566 = vpack.c.b16 %v7434, %v7430
    %v7567 = vpack.c.b16 %v7435, %v7431
    %v7568 = vpack.c.b16 %v7436, %v7432
    %v7569 = vpack.c.b16 %v7437, %v7433
    %v7570 = vpack.c.b16 %v7442, %v7438
    %v7571 = vpack.c.b16 %v7443, %v7439
    %v7572 = vpack.c.b16 %v7444, %v7440
    %v7573 = vpack.c.b16 %v7445, %v7441
    %7702 = vmatpush.bf16.msra.mxu0 %v7474
    %7703 = vmatpush.bf16.msra.mxu0 %v7470
    %7704 = vmatpush.bf16.msra.mxu0 %v7466
    %7705 = vmatpush.bf16.msra.mxu0 %v7462
    %7706 = vmatpush.bf16.msra.mxu0 %v7458
    %7707 = vmatpush.bf16.msra.mxu0 %v7454
    %7708 = vmatpush.bf16.msra.mxu0 %v7450
    %7709 = vmatpush.bf16.msra.mxu0 %v7446
    %7710 = vmatmul.bf16.gmra.mxu0 %v366
    %v7711 = vpop.f32.mrf.mxu0
    %v7712 = vadd.f32 %v7054, %v7711
    %v7713 = vpop.f32.mrf.mxu0
    %v7714 = vadd.f32 %v7054, %v7713
    %7715 = vmatmul.bf16.gmra.mxu0 %v370
    %v7716 = vpop.f32.mrf.mxu0
    %v7717 = vadd.f32 %v7054, %v7716
    %v7718 = vpop.f32.mrf.mxu0
    %v7719 = vadd.f32 %v7054, %v7718
    %7720 = vdwg.mxu0
    %7721 = vmatpush.bf16.msra.mxu0 %v7506
    %7722 = vmatpush.bf16.msra.mxu0 %v7502
    %7723 = vmatpush.bf16.msra.mxu0 %v7498
    %7724 = vmatpush.bf16.msra.mxu0 %v7494
    %7725 = vmatpush.bf16.msra.mxu0 %v7490
    %7726 = vmatpush.bf16.msra.mxu0 %v7486
    %7727 = vmatpush.bf16.msra.mxu0 %v7482
    %7728 = vmatpush.bf16.msra.mxu0 %v7478
    %7729 = vmatmul.bf16.gmra.mxu0 %v367
    %v7730 = vpop.f32.mrf.mxu0
    %v7731 = vadd.f32 %v7712, %v7730
    %v7732 = vpop.f32.mrf.mxu0
    %v7733 = vadd.f32 %v7714, %v7732
    %7734 = vmatmul.bf16.gmra.mxu0 %v371
    %v7735 = vpop.f32.mrf.mxu0
    %v7736 = vadd.f32 %v7717, %v7735
    %v7737 = vpop.f32.mrf.mxu0
    %v7738 = vadd.f32 %v7719, %v7737
    %7739 = vdwg.mxu0
    %7740 = vmatpush.bf16.msra.mxu0 %v7538
    %7741 = vmatpush.bf16.msra.mxu0 %v7534
    %7742 = vmatpush.bf16.msra.mxu0 %v7530
    %7743 = vmatpush.bf16.msra.mxu0 %v7526
    %7744 = vmatpush.bf16.msra.mxu0 %v7522
    %7745 = vmatpush.bf16.msra.mxu0 %v7518
    %7746 = vmatpush.bf16.msra.mxu0 %v7514
    %7747 = vmatpush.bf16.msra.mxu0 %v7510
    %7748 = vmatmul.bf16.gmra.mxu0 %v368
    %v7749 = vpop.f32.mrf.mxu0
    %v7750 = vadd.f32 %v7731, %v7749
    %v7751 = vpop.f32.mrf.mxu0
    %v7752 = vadd.f32 %v7733, %v7751
    %7753 = vmatmul.bf16.gmra.mxu0 %v372
    %v7754 = vpop.f32.mrf.mxu0
    %v7755 = vadd.f32 %v7736, %v7754
    %v7756 = vpop.f32.mrf.mxu0
    %v7757 = vadd.f32 %v7738, %v7756
    %7758 = vdwg.mxu0
    %7759 = vmatpush.bf16.msra.mxu0 %v7570
    %7760 = vmatpush.bf16.msra.mxu0 %v7566
    %7761 = vmatpush.bf16.msra.mxu0 %v7562
    %7762 = vmatpush.bf16.msra.mxu0 %v7558
    %7763 = vmatpush.bf16.msra.mxu0 %v7554
    %7764 = vmatpush.bf16.msra.mxu0 %v7550
    %7765 = vmatpush.bf16.msra.mxu0 %v7546
    %7766 = vmatpush.bf16.msra.mxu0 %v7542
    %7767 = vmatmul.bf16.gmra.mxu0 %v369
    %v7768 = vpop.f32.mrf.mxu0
    %v7769 = vadd.f32 %v7750, %v7768
    %v7770 = vpop.f32.mrf.mxu0
    %v7771 = vadd.f32 %v7752, %v7770
    %7772 = vmatmul.bf16.gmra.mxu0 %v373
    %v7773 = vpop.f32.mrf.mxu0
    %v7774 = vadd.f32 %v7755, %v7773
    %v7775 = vpop.f32.mrf.mxu0
    %v7776 = vadd.f32 %v7757, %v7775
    %7777 = vdwg.mxu0
    %7778 = vmatpush.bf16.msra.mxu0 %v7475
    %7779 = vmatpush.bf16.msra.mxu0 %v7471
    %7780 = vmatpush.bf16.msra.mxu0 %v7467
    %7781 = vmatpush.bf16.msra.mxu0 %v7463
    %7782 = vmatpush.bf16.msra.mxu0 %v7459
    %7783 = vmatpush.bf16.msra.mxu0 %v7455
    %7784 = vmatpush.bf16.msra.mxu0 %v7451
    %7785 = vmatpush.bf16.msra.mxu0 %v7447
    %7786 = vmatmul.bf16.gmra.mxu0 %v366
    %v7787 = vpop.f32.mrf.mxu0
    %v7788 = vadd.f32 %v7055, %v7787
    %v7789 = vpop.f32.mrf.mxu0
    %v7790 = vadd.f32 %v7055, %v7789
    %7791 = vmatmul.bf16.gmra.mxu0 %v370
    %v7792 = vpop.f32.mrf.mxu0
    %v7793 = vadd.f32 %v7055, %v7792
    %v7794 = vpop.f32.mrf.mxu0
    %v7795 = vadd.f32 %v7055, %v7794
    %7796 = vdwg.mxu0
    %7797 = vmatpush.bf16.msra.mxu0 %v7507
    %7798 = vmatpush.bf16.msra.mxu0 %v7503
    %7799 = vmatpush.bf16.msra.mxu0 %v7499
    %7800 = vmatpush.bf16.msra.mxu0 %v7495
    %7801 = vmatpush.bf16.msra.mxu0 %v7491
    %7802 = vmatpush.bf16.msra.mxu0 %v7487
    %7803 = vmatpush.bf16.msra.mxu0 %v7483
    %7804 = vmatpush.bf16.msra.mxu0 %v7479
    %7805 = vmatmul.bf16.gmra.mxu0 %v367
    %v7806 = vpop.f32.mrf.mxu0
    %v7807 = vadd.f32 %v7788, %v7806
    %v7808 = vpop.f32.mrf.mxu0
    %v7809 = vadd.f32 %v7790, %v7808
    %7810 = vmatmul.bf16.gmra.mxu0 %v371
    %v7811 = vpop.f32.mrf.mxu0
    %v7812 = vadd.f32 %v7793, %v7811
    %v7813 = vpop.f32.mrf.mxu0
    %v7814 = vadd.f32 %v7795, %v7813
    %7815 = vdwg.mxu0
    %7816 = vmatpush.bf16.msra.mxu0 %v7539
    %7817 = vmatpush.bf16.msra.mxu0 %v7535
    %7818 = vmatpush.bf16.msra.mxu0 %v7531
    %7819 = vmatpush.bf16.msra.mxu0 %v7527
    %7820 = vmatpush.bf16.msra.mxu0 %v7523
    %7821 = vmatpush.bf16.msra.mxu0 %v7519
    %7822 = vmatpush.bf16.msra.mxu0 %v7515
    %7823 = vmatpush.bf16.msra.mxu0 %v7511
    %7824 = vmatmul.bf16.gmra.mxu0 %v368
    %v7825 = vpop.f32.mrf.mxu0
    %v7826 = vadd.f32 %v7807, %v7825
    %v7827 = vpop.f32.mrf.mxu0
    %v7828 = vadd.f32 %v7809, %v7827
    %7829 = vmatmul.bf16.gmra.mxu0 %v372
    %v7830 = vpop.f32.mrf.mxu0
    %v7831 = vadd.f32 %v7812, %v7830
    %v7832 = vpop.f32.mrf.mxu0
    %v7833 = vadd.f32 %v7814, %v7832
    %7834 = vdwg.mxu0
    %7835 = vmatpush.bf16.msra.mxu0 %v7571
    %7836 = vmatpush.bf16.msra.mxu0 %v7567
    %7837 = vmatpush.bf16.msra.mxu0 %v7563
    %7838 = vmatpush.bf16.msra.mxu0 %v7559
    %7839 = vmatpush.bf16.msra.mxu0 %v7555
    %7840 = vmatpush.bf16.msra.mxu0 %v7551
    %7841 = vmatpush.bf16.msra.mxu0 %v7547
    %7842 = vmatpush.bf16.msra.mxu0 %v7543
    %7843 = vmatmul.bf16.gmra.mxu0 %v369
    %v7844 = vpop.f32.mrf.mxu0
    %v7845 = vadd.f32 %v7826, %v7844
    %v7846 = vpop.f32.mrf.mxu0
    %v7847 = vadd.f32 %v7828, %v7846
    %7848 = vmatmul.bf16.gmra.mxu0 %v373
    %v7849 = vpop.f32.mrf.mxu0
    %v7850 = vadd.f32 %v7831, %v7849
    %v7851 = vpop.f32.mrf.mxu0
    %v7852 = vadd.f32 %v7833, %v7851
    %7853 = vdwg.mxu0
    %7854 = vmatpush.bf16.msra.mxu0 %v7476
    %7855 = vmatpush.bf16.msra.mxu0 %v7472
    %7856 = vmatpush.bf16.msra.mxu0 %v7468
    %7857 = vmatpush.bf16.msra.mxu0 %v7464
    %7858 = vmatpush.bf16.msra.mxu0 %v7460
    %7859 = vmatpush.bf16.msra.mxu0 %v7456
    %7860 = vmatpush.bf16.msra.mxu0 %v7452
    %7861 = vmatpush.bf16.msra.mxu0 %v7448
    %7862 = vmatmul.bf16.gmra.mxu0 %v366
    %v7863 = vpop.f32.mrf.mxu0
    %v7864 = vadd.f32 %v7056, %v7863
    %v7865 = vpop.f32.mrf.mxu0
    %v7866 = vadd.f32 %v7056, %v7865
    %7867 = vmatmul.bf16.gmra.mxu0 %v370
    %v7868 = vpop.f32.mrf.mxu0
    %v7869 = vadd.f32 %v7056, %v7868
    %v7870 = vpop.f32.mrf.mxu0
    %v7871 = vadd.f32 %v7056, %v7870
    %7872 = vdwg.mxu0
    %7873 = vmatpush.bf16.msra.mxu0 %v7508
    %7874 = vmatpush.bf16.msra.mxu0 %v7504
    %7875 = vmatpush.bf16.msra.mxu0 %v7500
    %7876 = vmatpush.bf16.msra.mxu0 %v7496
    %7877 = vmatpush.bf16.msra.mxu0 %v7492
    %7878 = vmatpush.bf16.msra.mxu0 %v7488
    %7879 = vmatpush.bf16.msra.mxu0 %v7484
    %7880 = vmatpush.bf16.msra.mxu0 %v7480
    %7881 = vmatmul.bf16.gmra.mxu0 %v367
    %v7882 = vpop.f32.mrf.mxu0
    %v7883 = vadd.f32 %v7864, %v7882
    %v7884 = vpop.f32.mrf.mxu0
    %v7885 = vadd.f32 %v7866, %v7884
    %7886 = vmatmul.bf16.gmra.mxu0 %v371
    %v7887 = vpop.f32.mrf.mxu0
    %v7888 = vadd.f32 %v7869, %v7887
    %v7889 = vpop.f32.mrf.mxu0
    %v7890 = vadd.f32 %v7871, %v7889
    %7891 = vdwg.mxu0
    %7892 = vmatpush.bf16.msra.mxu0 %v7540
    %7893 = vmatpush.bf16.msra.mxu0 %v7536
    %7894 = vmatpush.bf16.msra.mxu0 %v7532
    %7895 = vmatpush.bf16.msra.mxu0 %v7528
    %7896 = vmatpush.bf16.msra.mxu0 %v7524
    %7897 = vmatpush.bf16.msra.mxu0 %v7520
    %7898 = vmatpush.bf16.msra.mxu0 %v7516
    %7899 = vmatpush.bf16.msra.mxu0 %v7512
    %7900 = vmatmul.bf16.gmra.mxu0 %v368
    %v7901 = vpop.f32.mrf.mxu0
    %v7902 = vadd.f32 %v7883, %v7901
    %v7903 = vpop.f32.mrf.mxu0
    %v7904 = vadd.f32 %v7885, %v7903
    %7905 = vmatmul.bf16.gmra.mxu0 %v372
    %v7906 = vpop.f32.mrf.mxu0
    %v7907 = vadd.f32 %v7888, %v7906
    %v7908 = vpop.f32.mrf.mxu0
    %v7909 = vadd.f32 %v7890, %v7908
    %7910 = vdwg.mxu0
    %7911 = vmatpush.bf16.msra.mxu0 %v7572
    %7912 = vmatpush.bf16.msra.mxu0 %v7568
    %7913 = vmatpush.bf16.msra.mxu0 %v7564
    %7914 = vmatpush.bf16.msra.mxu0 %v7560
    %7915 = vmatpush.bf16.msra.mxu0 %v7556
    %7916 = vmatpush.bf16.msra.mxu0 %v7552
    %7917 = vmatpush.bf16.msra.mxu0 %v7548
    %7918 = vmatpush.bf16.msra.mxu0 %v7544
    %7919 = vmatmul.bf16.gmra.mxu0 %v369
    %v7920 = vpop.f32.mrf.mxu0
    %v7921 = vadd.f32 %v7902, %v7920
    %v7922 = vpop.f32.mrf.mxu0
    %v7923 = vadd.f32 %v7904, %v7922
    %7924 = vmatmul.bf16.gmra.mxu0 %v373
    %v7925 = vpop.f32.mrf.mxu0
    %v7926 = vadd.f32 %v7907, %v7925
    %v7927 = vpop.f32.mrf.mxu0
    %v7928 = vadd.f32 %v7909, %v7927
    %7929 = vdwg.mxu0
    %7930 = vmatpush.bf16.msra.mxu0 %v7477
    %7931 = vmatpush.bf16.msra.mxu0 %v7473
    %7932 = vmatpush.bf16.msra.mxu0 %v7469
    %7933 = vmatpush.bf16.msra.mxu0 %v7465
    %7934 = vmatpush.bf16.msra.mxu0 %v7461
    %7935 = vmatpush.bf16.msra.mxu0 %v7457
    %7936 = vmatpush.bf16.msra.mxu0 %v7453
    %7937 = vmatpush.bf16.msra.mxu0 %v7449
    %7938 = vmatmul.bf16.gmra.mxu0 %v366
    %v7939 = vpop.f32.mrf.mxu0
    %v7940 = vadd.f32 %v7057, %v7939
    %v7941 = vpop.f32.mrf.mxu0
    %v7942 = vadd.f32 %v7057, %v7941
    %7943 = vmatmul.bf16.gmra.mxu0 %v370
    %v7944 = vpop.f32.mrf.mxu0
    %v7945 = vadd.f32 %v7057, %v7944
    %v7946 = vpop.f32.mrf.mxu0
    %v7947 = vadd.f32 %v7057, %v7946
    %7948 = vdwg.mxu0
    %7949 = vmatpush.bf16.msra.mxu0 %v7509
    %7950 = vmatpush.bf16.msra.mxu0 %v7505
    %7951 = vmatpush.bf16.msra.mxu0 %v7501
    %7952 = vmatpush.bf16.msra.mxu0 %v7497
    %7953 = vmatpush.bf16.msra.mxu0 %v7493
    %7954 = vmatpush.bf16.msra.mxu0 %v7489
    %7955 = vmatpush.bf16.msra.mxu0 %v7485
    %7956 = vmatpush.bf16.msra.mxu0 %v7481
    %7957 = vmatmul.bf16.gmra.mxu0 %v367
    %v7958 = vpop.f32.mrf.mxu0
    %v7959 = vadd.f32 %v7940, %v7958
    %v7960 = vpop.f32.mrf.mxu0
    %v7961 = vadd.f32 %v7942, %v7960
    %7962 = vmatmul.bf16.gmra.mxu0 %v371
    %v7963 = vpop.f32.mrf.mxu0
    %v7964 = vadd.f32 %v7945, %v7963
    %v7965 = vpop.f32.mrf.mxu0
    %v7966 = vadd.f32 %v7947, %v7965
    %7967 = vdwg.mxu0
    %7968 = vmatpush.bf16.msra.mxu0 %v7541
    %7969 = vmatpush.bf16.msra.mxu0 %v7537
    %7970 = vmatpush.bf16.msra.mxu0 %v7533
    %7971 = vmatpush.bf16.msra.mxu0 %v7529
    %7972 = vmatpush.bf16.msra.mxu0 %v7525
    %7973 = vmatpush.bf16.msra.mxu0 %v7521
    %7974 = vmatpush.bf16.msra.mxu0 %v7517
    %7975 = vmatpush.bf16.msra.mxu0 %v7513
    %7976 = vmatmul.bf16.gmra.mxu0 %v368
    %v7977 = vpop.f32.mrf.mxu0
    %v7978 = vadd.f32 %v7959, %v7977
    %v7979 = vpop.f32.mrf.mxu0
    %v7980 = vadd.f32 %v7961, %v7979
    %7981 = vmatmul.bf16.gmra.mxu0 %v372
    %v7982 = vpop.f32.mrf.mxu0
    %v7983 = vadd.f32 %v7964, %v7982
    %v7984 = vpop.f32.mrf.mxu0
    %v7985 = vadd.f32 %v7966, %v7984
    %7986 = vdwg.mxu0
    %7987 = vmatpush.bf16.msra.mxu0 %v7573
    %7988 = vmatpush.bf16.msra.mxu0 %v7569
    %7989 = vmatpush.bf16.msra.mxu0 %v7565
    %7990 = vmatpush.bf16.msra.mxu0 %v7561
    %7991 = vmatpush.bf16.msra.mxu0 %v7557
    %7992 = vmatpush.bf16.msra.mxu0 %v7553
    %7993 = vmatpush.bf16.msra.mxu0 %v7549
    %7994 = vmatpush.bf16.msra.mxu0 %v7545
    %7995 = vmatmul.bf16.gmra.mxu0 %v369
    %v7996 = vpop.f32.mrf.mxu0
    %v7997 = vadd.f32 %v7978, %v7996
    %v7998 = vpop.f32.mrf.mxu0
    %v7999 = vadd.f32 %v7980, %v7998
    %8000 = vmatmul.bf16.gmra.mxu0 %v373
    %v8001 = vpop.f32.mrf.mxu0
    %v8002 = vadd.f32 %v7983, %v8001
    %v8003 = vpop.f32.mrf.mxu0
    %v8004 = vadd.f32 %v7985, %v8003
    %8005 = vdwg.mxu0
    %v8006 = vmax.f32 %v7769, 0.0
    %v8007 = vmax.f32 %v7845, 0.0
    %v8008 = vmax.f32 %v7921, 0.0
    %v8009 = vmax.f32 %v7997, 0.0
    %v8010 = vmax.f32 %v7771, 0.0
    %v8011 = vmax.f32 %v7847, 0.0
    %v8012 = vmax.f32 %v7923, 0.0
    %v8013 = vmax.f32 %v7999, 0.0
    %v8014 = vmax.f32 %v7774, 0.0
    %v8015 = vmax.f32 %v7850, 0.0
    %v8016 = vmax.f32 %v7926, 0.0
    %v8017 = vmax.f32 %v8002, 0.0
    %v8018 = vmax.f32 %v7776, 0.0
    %v8019 = vmax.f32 %v7852, 0.0
    %v8020 = vmax.f32 %v7928, 0.0
    %v8021 = vmax.f32 %v8004, 0.0
    %v8022 = vpack.c.bf16 %v8010, %v8006
    %v8023 = vpack.c.bf16 %v8011, %v8007
    %v8024 = vpack.c.bf16 %v8012, %v8008
    %v8025 = vpack.c.bf16 %v8013, %v8009
    %v8026 = vpack.c.bf16 %v8018, %v8014
    %v8027 = vpack.c.bf16 %v8019, %v8015
    %v8028 = vpack.c.bf16 %v8020, %v8016
    %v8029 = vpack.c.bf16 %v8021, %v8017
    %v8030 = vld [vmem:[#allocation10 + $0xc00] sm:$0xff]
    %v8031 = vld [vmem:[#allocation10 + $0xc08] sm:$0xff]
    %v8032 = vld [vmem:[#allocation10 + $0xc10] sm:$0xff]
    %v8033 = vld [vmem:[#allocation10 + $0xc18] sm:$0xff]
    %v8034 = vld [vmem:[#allocation10 + $0xc20] sm:$0xff]
    %v8035 = vld [vmem:[#allocation10 + $0xc28] sm:$0xff]
    %v8036 = vld [vmem:[#allocation10 + $0xc30] sm:$0xff]
    %v8037 = vld [vmem:[#allocation10 + $0xc38] sm:$0xff]
    %v8038 = vld [vmem:[#allocation10 + $0xc40] sm:$0xff]
    %v8039 = vld [vmem:[#allocation10 + $0xc48] sm:$0xff]
    %v8040 = vld [vmem:[#allocation10 + $0xc50] sm:$0xff]
    %v8041 = vld [vmem:[#allocation10 + $0xc58] sm:$0xff]
    %v8042 = vld [vmem:[#allocation10 + $0xc60] sm:$0xff]
    %v8043 = vld [vmem:[#allocation10 + $0xc68] sm:$0xff]
    %v8044 = vld [vmem:[#allocation10 + $0xc70] sm:$0xff]
    %v8045 = vld [vmem:[#allocation10 + $0xc78] sm:$0xff]
    %v8046 = vld [vmem:[#allocation10 + $0xc80] sm:$0xff]
    %v8047 = vld [vmem:[#allocation10 + $0xc88] sm:$0xff]
    %v8048 = vld [vmem:[#allocation10 + $0xc90] sm:$0xff]
    %v8049 = vld [vmem:[#allocation10 + $0xc98] sm:$0xff]
    %v8050 = vld [vmem:[#allocation10 + $0xca0] sm:$0xff]
    %v8051 = vld [vmem:[#allocation10 + $0xca8] sm:$0xff]
    %v8052 = vld [vmem:[#allocation10 + $0xcb0] sm:$0xff]
    %v8053 = vld [vmem:[#allocation10 + $0xcb8] sm:$0xff]
    %v8054 = vld [vmem:[#allocation10 + $0xcc0] sm:$0xff]
    %v8055 = vld [vmem:[#allocation10 + $0xcc8] sm:$0xff]
    %v8056 = vld [vmem:[#allocation10 + $0xcd0] sm:$0xff]
    %v8057 = vld [vmem:[#allocation10 + $0xcd8] sm:$0xff]
    %v8058 = vld [vmem:[#allocation10 + $0xce0] sm:$0xff]
    %v8059 = vld [vmem:[#allocation10 + $0xce8] sm:$0xff]
    %v8060 = vld [vmem:[#allocation10 + $0xcf0] sm:$0xff]
    %v8061 = vld [vmem:[#allocation10 + $0xcf8] sm:$0xff]
    %v8062 = vld [vmem:[#allocation10 + $0xd00] sm:$0xff]
    %v8063 = vld [vmem:[#allocation10 + $0xd08] sm:$0xff]
    %v8064 = vld [vmem:[#allocation10 + $0xd10] sm:$0xff]
    %v8065 = vld [vmem:[#allocation10 + $0xd18] sm:$0xff]
    %v8066 = vld [vmem:[#allocation10 + $0xd20] sm:$0xff]
    %v8067 = vld [vmem:[#allocation10 + $0xd28] sm:$0xff]
    %v8068 = vld [vmem:[#allocation10 + $0xd30] sm:$0xff]
    %v8069 = vld [vmem:[#allocation10 + $0xd38] sm:$0xff]
    %v8070 = vld [vmem:[#allocation10 + $0xd40] sm:$0xff]
    %v8071 = vld [vmem:[#allocation10 + $0xd48] sm:$0xff]
    %v8072 = vld [vmem:[#allocation10 + $0xd50] sm:$0xff]
    %v8073 = vld [vmem:[#allocation10 + $0xd58] sm:$0xff]
    %v8074 = vld [vmem:[#allocation10 + $0xd60] sm:$0xff]
    %v8075 = vld [vmem:[#allocation10 + $0xd68] sm:$0xff]
    %v8076 = vld [vmem:[#allocation10 + $0xd70] sm:$0xff]
    %v8077 = vld [vmem:[#allocation10 + $0xd78] sm:$0xff]
    %v8078 = vld [vmem:[#allocation10 + $0xd80] sm:$0xff]
    %v8079 = vld [vmem:[#allocation10 + $0xd88] sm:$0xff]
    %v8080 = vld [vmem:[#allocation10 + $0xd90] sm:$0xff]
    %v8081 = vld [vmem:[#allocation10 + $0xd98] sm:$0xff]
    %v8082 = vld [vmem:[#allocation10 + $0xda0] sm:$0xff]
    %v8083 = vld [vmem:[#allocation10 + $0xda8] sm:$0xff]
    %v8084 = vld [vmem:[#allocation10 + $0xdb0] sm:$0xff]
    %v8085 = vld [vmem:[#allocation10 + $0xdb8] sm:$0xff]
    %v8086 = vld [vmem:[#allocation10 + $0xdc0] sm:$0xff]
    %v8087 = vld [vmem:[#allocation10 + $0xdc8] sm:$0xff]
    %v8088 = vld [vmem:[#allocation10 + $0xdd0] sm:$0xff]
    %v8089 = vld [vmem:[#allocation10 + $0xdd8] sm:$0xff]
    %v8090 = vld [vmem:[#allocation10 + $0xde0] sm:$0xff]
    %v8091 = vld [vmem:[#allocation10 + $0xde8] sm:$0xff]
    %v8092 = vld [vmem:[#allocation10 + $0xdf0] sm:$0xff]
    %v8093 = vld [vmem:[#allocation10 + $0xdf8] sm:$0xff]
    %v8094 = vld [vmem:[#allocation10 + $0xe00] sm:$0xff]
    %v8095 = vld [vmem:[#allocation10 + $0xe08] sm:$0xff]
    %v8096 = vld [vmem:[#allocation10 + $0xe10] sm:$0xff]
    %v8097 = vld [vmem:[#allocation10 + $0xe18] sm:$0xff]
    %v8098 = vld [vmem:[#allocation10 + $0xe20] sm:$0xff]
    %v8099 = vld [vmem:[#allocation10 + $0xe28] sm:$0xff]
    %v8100 = vld [vmem:[#allocation10 + $0xe30] sm:$0xff]
    %v8101 = vld [vmem:[#allocation10 + $0xe38] sm:$0xff]
    %v8102 = vld [vmem:[#allocation10 + $0xe40] sm:$0xff]
    %v8103 = vld [vmem:[#allocation10 + $0xe48] sm:$0xff]
    %v8104 = vld [vmem:[#allocation10 + $0xe50] sm:$0xff]
    %v8105 = vld [vmem:[#allocation10 + $0xe58] sm:$0xff]
    %v8106 = vld [vmem:[#allocation10 + $0xe60] sm:$0xff]
    %v8107 = vld [vmem:[#allocation10 + $0xe68] sm:$0xff]
    %v8108 = vld [vmem:[#allocation10 + $0xe70] sm:$0xff]
    %v8109 = vld [vmem:[#allocation10 + $0xe78] sm:$0xff]
    %v8110 = vld [vmem:[#allocation10 + $0xe80] sm:$0xff]
    %v8111 = vld [vmem:[#allocation10 + $0xe88] sm:$0xff]
    %v8112 = vld [vmem:[#allocation10 + $0xe90] sm:$0xff]
    %v8113 = vld [vmem:[#allocation10 + $0xe98] sm:$0xff]
    %v8114 = vld [vmem:[#allocation10 + $0xea0] sm:$0xff]
    %v8115 = vld [vmem:[#allocation10 + $0xea8] sm:$0xff]
    %v8116 = vld [vmem:[#allocation10 + $0xeb0] sm:$0xff]
    %v8117 = vld [vmem:[#allocation10 + $0xeb8] sm:$0xff]
    %v8118 = vld [vmem:[#allocation10 + $0xec0] sm:$0xff]
    %v8119 = vld [vmem:[#allocation10 + $0xec8] sm:$0xff]
    %v8120 = vld [vmem:[#allocation10 + $0xed0] sm:$0xff]
    %v8121 = vld [vmem:[#allocation10 + $0xed8] sm:$0xff]
    %v8122 = vld [vmem:[#allocation10 + $0xee0] sm:$0xff]
    %v8123 = vld [vmem:[#allocation10 + $0xee8] sm:$0xff]
    %v8124 = vld [vmem:[#allocation10 + $0xef0] sm:$0xff]
    %v8125 = vld [vmem:[#allocation10 + $0xef8] sm:$0xff]
    %v8126 = vld [vmem:[#allocation10 + $0xf00] sm:$0xff]
    %v8127 = vld [vmem:[#allocation10 + $0xf08] sm:$0xff]
    %v8128 = vld [vmem:[#allocation10 + $0xf10] sm:$0xff]
    %v8129 = vld [vmem:[#allocation10 + $0xf18] sm:$0xff]
    %v8130 = vld [vmem:[#allocation10 + $0xf20] sm:$0xff]
    %v8131 = vld [vmem:[#allocation10 + $0xf28] sm:$0xff]
    %v8132 = vld [vmem:[#allocation10 + $0xf30] sm:$0xff]
    %v8133 = vld [vmem:[#allocation10 + $0xf38] sm:$0xff]
    %v8134 = vld [vmem:[#allocation10 + $0xf40] sm:$0xff]
    %v8135 = vld [vmem:[#allocation10 + $0xf48] sm:$0xff]
    %v8136 = vld [vmem:[#allocation10 + $0xf50] sm:$0xff]
    %v8137 = vld [vmem:[#allocation10 + $0xf58] sm:$0xff]
    %v8138 = vld [vmem:[#allocation10 + $0xf60] sm:$0xff]
    %v8139 = vld [vmem:[#allocation10 + $0xf68] sm:$0xff]
    %v8140 = vld [vmem:[#allocation10 + $0xf70] sm:$0xff]
    %v8141 = vld [vmem:[#allocation10 + $0xf78] sm:$0xff]
    %v8142 = vld [vmem:[#allocation10 + $0xf80] sm:$0xff]
    %v8143 = vld [vmem:[#allocation10 + $0xf88] sm:$0xff]
    %v8144 = vld [vmem:[#allocation10 + $0xf90] sm:$0xff]
    %v8145 = vld [vmem:[#allocation10 + $0xf98] sm:$0xff]
    %v8146 = vld [vmem:[#allocation10 + $0xfa0] sm:$0xff]
    %v8147 = vld [vmem:[#allocation10 + $0xfa8] sm:$0xff]
    %v8148 = vld [vmem:[#allocation10 + $0xfb0] sm:$0xff]
    %v8149 = vld [vmem:[#allocation10 + $0xfb8] sm:$0xff]
    %v8150 = vld [vmem:[#allocation10 + $0xfc0] sm:$0xff]
    %v8151 = vld [vmem:[#allocation10 + $0xfc8] sm:$0xff]
    %v8152 = vld [vmem:[#allocation10 + $0xfd0] sm:$0xff]
    %v8153 = vld [vmem:[#allocation10 + $0xfd8] sm:$0xff]
    %v8154 = vld [vmem:[#allocation10 + $0xfe0] sm:$0xff]
    %v8155 = vld [vmem:[#allocation10 + $0xfe8] sm:$0xff]
    %v8156 = vld [vmem:[#allocation10 + $0xff0] sm:$0xff]
    %v8157 = vld [vmem:[#allocation10 + $0xff8] sm:$0xff]
    %v8286 = vunpack.c.l.b16 %v8030
    %v8287 = vunpack.c.h.b16 %v8030
    %v8288 = vunpack.c.l.b16 %v8031
    %v8289 = vunpack.c.h.b16 %v8031
    %v8290 = vunpack.c.l.b16 %v8032
    %v8291 = vunpack.c.h.b16 %v8032
    %v8292 = vunpack.c.l.b16 %v8033
    %v8293 = vunpack.c.h.b16 %v8033
    %v8294 = vunpack.c.l.b16 %v8034
    %v8295 = vunpack.c.h.b16 %v8034
    %v8296 = vunpack.c.l.b16 %v8035
    %v8297 = vunpack.c.h.b16 %v8035
    %v8298 = vunpack.c.l.b16 %v8036
    %v8299 = vunpack.c.h.b16 %v8036
    %v8300 = vunpack.c.l.b16 %v8037
    %v8301 = vunpack.c.h.b16 %v8037
    %v8302 = vunpack.c.l.b16 %v8038
    %v8303 = vunpack.c.h.b16 %v8038
    %v8304 = vunpack.c.l.b16 %v8039
    %v8305 = vunpack.c.h.b16 %v8039
    %v8306 = vunpack.c.l.b16 %v8040
    %v8307 = vunpack.c.h.b16 %v8040
    %v8308 = vunpack.c.l.b16 %v8041
    %v8309 = vunpack.c.h.b16 %v8041
    %v8310 = vunpack.c.l.b16 %v8042
    %v8311 = vunpack.c.h.b16 %v8042
    %v8312 = vunpack.c.l.b16 %v8043
    %v8313 = vunpack.c.h.b16 %v8043
    %v8314 = vunpack.c.l.b16 %v8044
    %v8315 = vunpack.c.h.b16 %v8044
    %v8316 = vunpack.c.l.b16 %v8045
    %v8317 = vunpack.c.h.b16 %v8045
    %v8318 = vunpack.c.l.b16 %v8046
    %v8319 = vunpack.c.h.b16 %v8046
    %v8320 = vunpack.c.l.b16 %v8047
    %v8321 = vunpack.c.h.b16 %v8047
    %v8322 = vunpack.c.l.b16 %v8048
    %v8323 = vunpack.c.h.b16 %v8048
    %v8324 = vunpack.c.l.b16 %v8049
    %v8325 = vunpack.c.h.b16 %v8049
    %v8326 = vunpack.c.l.b16 %v8050
    %v8327 = vunpack.c.h.b16 %v8050
    %v8328 = vunpack.c.l.b16 %v8051
    %v8329 = vunpack.c.h.b16 %v8051
    %v8330 = vunpack.c.l.b16 %v8052
    %v8331 = vunpack.c.h.b16 %v8052
    %v8332 = vunpack.c.l.b16 %v8053
    %v8333 = vunpack.c.h.b16 %v8053
    %v8334 = vunpack.c.l.b16 %v8054
    %v8335 = vunpack.c.h.b16 %v8054
    %v8336 = vunpack.c.l.b16 %v8055
    %v8337 = vunpack.c.h.b16 %v8055
    %v8338 = vunpack.c.l.b16 %v8056
    %v8339 = vunpack.c.h.b16 %v8056
    %v8340 = vunpack.c.l.b16 %v8057
    %v8341 = vunpack.c.h.b16 %v8057
    %v8342 = vunpack.c.l.b16 %v8058
    %v8343 = vunpack.c.h.b16 %v8058
    %v8344 = vunpack.c.l.b16 %v8059
    %v8345 = vunpack.c.h.b16 %v8059
    %v8346 = vunpack.c.l.b16 %v8060
    %v8347 = vunpack.c.h.b16 %v8060
    %v8348 = vunpack.c.l.b16 %v8061
    %v8349 = vunpack.c.h.b16 %v8061
    %v8350 = vunpack.c.l.b16 %v8062
    %v8351 = vunpack.c.h.b16 %v8062
    %v8352 = vunpack.c.l.b16 %v8063
    %v8353 = vunpack.c.h.b16 %v8063
    %v8354 = vunpack.c.l.b16 %v8064
    %v8355 = vunpack.c.h.b16 %v8064
    %v8356 = vunpack.c.l.b16 %v8065
    %v8357 = vunpack.c.h.b16 %v8065
    %v8358 = vunpack.c.l.b16 %v8066
    %v8359 = vunpack.c.h.b16 %v8066
    %v8360 = vunpack.c.l.b16 %v8067
    %v8361 = vunpack.c.h.b16 %v8067
    %v8362 = vunpack.c.l.b16 %v8068
    %v8363 = vunpack.c.h.b16 %v8068
    %v8364 = vunpack.c.l.b16 %v8069
    %v8365 = vunpack.c.h.b16 %v8069
    %v8366 = vunpack.c.l.b16 %v8070
    %v8367 = vunpack.c.h.b16 %v8070
    %v8368 = vunpack.c.l.b16 %v8071
    %v8369 = vunpack.c.h.b16 %v8071
    %v8370 = vunpack.c.l.b16 %v8072
    %v8371 = vunpack.c.h.b16 %v8072
    %v8372 = vunpack.c.l.b16 %v8073
    %v8373 = vunpack.c.h.b16 %v8073
    %v8374 = vunpack.c.l.b16 %v8074
    %v8375 = vunpack.c.h.b16 %v8074
    %v8376 = vunpack.c.l.b16 %v8075
    %v8377 = vunpack.c.h.b16 %v8075
    %v8378 = vunpack.c.l.b16 %v8076
    %v8379 = vunpack.c.h.b16 %v8076
    %v8380 = vunpack.c.l.b16 %v8077
    %v8381 = vunpack.c.h.b16 %v8077
    %v8382 = vunpack.c.l.b16 %v8078
    %v8383 = vunpack.c.h.b16 %v8078
    %v8384 = vunpack.c.l.b16 %v8079
    %v8385 = vunpack.c.h.b16 %v8079
    %v8386 = vunpack.c.l.b16 %v8080
    %v8387 = vunpack.c.h.b16 %v8080
    %v8388 = vunpack.c.l.b16 %v8081
    %v8389 = vunpack.c.h.b16 %v8081
    %v8390 = vunpack.c.l.b16 %v8082
    %v8391 = vunpack.c.h.b16 %v8082
    %v8392 = vunpack.c.l.b16 %v8083
    %v8393 = vunpack.c.h.b16 %v8083
    %v8394 = vunpack.c.l.b16 %v8084
    %v8395 = vunpack.c.h.b16 %v8084
    %v8396 = vunpack.c.l.b16 %v8085
    %v8397 = vunpack.c.h.b16 %v8085
    %v8398 = vunpack.c.l.b16 %v8086
    %v8399 = vunpack.c.h.b16 %v8086
    %v8400 = vunpack.c.l.b16 %v8087
    %v8401 = vunpack.c.h.b16 %v8087
    %v8402 = vunpack.c.l.b16 %v8088
    %v8403 = vunpack.c.h.b16 %v8088
    %v8404 = vunpack.c.l.b16 %v8089
    %v8405 = vunpack.c.h.b16 %v8089
    %v8406 = vunpack.c.l.b16 %v8090
    %v8407 = vunpack.c.h.b16 %v8090
    %v8408 = vunpack.c.l.b16 %v8091
    %v8409 = vunpack.c.h.b16 %v8091
    %v8410 = vunpack.c.l.b16 %v8092
    %v8411 = vunpack.c.h.b16 %v8092
    %v8412 = vunpack.c.l.b16 %v8093
    %v8413 = vunpack.c.h.b16 %v8093
    %v8414 = vunpack.c.l.b16 %v8094
    %v8415 = vunpack.c.h.b16 %v8094
    %v8416 = vunpack.c.l.b16 %v8095
    %v8417 = vunpack.c.h.b16 %v8095
    %v8418 = vunpack.c.l.b16 %v8096
    %v8419 = vunpack.c.h.b16 %v8096
    %v8420 = vunpack.c.l.b16 %v8097
    %v8421 = vunpack.c.h.b16 %v8097
    %v8422 = vunpack.c.l.b16 %v8098
    %v8423 = vunpack.c.h.b16 %v8098
    %v8424 = vunpack.c.l.b16 %v8099
    %v8425 = vunpack.c.h.b16 %v8099
    %v8426 = vunpack.c.l.b16 %v8100
    %v8427 = vunpack.c.h.b16 %v8100
    %v8428 = vunpack.c.l.b16 %v8101
    %v8429 = vunpack.c.h.b16 %v8101
    %v8430 = vunpack.c.l.b16 %v8102
    %v8431 = vunpack.c.h.b16 %v8102
    %v8432 = vunpack.c.l.b16 %v8103
    %v8433 = vunpack.c.h.b16 %v8103
    %v8434 = vunpack.c.l.b16 %v8104
    %v8435 = vunpack.c.h.b16 %v8104
    %v8436 = vunpack.c.l.b16 %v8105
    %v8437 = vunpack.c.h.b16 %v8105
    %v8438 = vunpack.c.l.b16 %v8106
    %v8439 = vunpack.c.h.b16 %v8106
    %v8440 = vunpack.c.l.b16 %v8107
    %v8441 = vunpack.c.h.b16 %v8107
    %v8442 = vunpack.c.l.b16 %v8108
    %v8443 = vunpack.c.h.b16 %v8108
    %v8444 = vunpack.c.l.b16 %v8109
    %v8445 = vunpack.c.h.b16 %v8109
    %v8446 = vunpack.c.l.b16 %v8110
    %v8447 = vunpack.c.h.b16 %v8110
    %v8448 = vunpack.c.l.b16 %v8111
    %v8449 = vunpack.c.h.b16 %v8111
    %v8450 = vunpack.c.l.b16 %v8112
    %v8451 = vunpack.c.h.b16 %v8112
    %v8452 = vunpack.c.l.b16 %v8113
    %v8453 = vunpack.c.h.b16 %v8113
    %v8454 = vunpack.c.l.b16 %v8114
    %v8455 = vunpack.c.h.b16 %v8114
    %v8456 = vunpack.c.l.b16 %v8115
    %v8457 = vunpack.c.h.b16 %v8115
    %v8458 = vunpack.c.l.b16 %v8116
    %v8459 = vunpack.c.h.b16 %v8116
    %v8460 = vunpack.c.l.b16 %v8117
    %v8461 = vunpack.c.h.b16 %v8117
    %v8462 = vunpack.c.l.b16 %v8118
    %v8463 = vunpack.c.h.b16 %v8118
    %v8464 = vunpack.c.l.b16 %v8119
    %v8465 = vunpack.c.h.b16 %v8119
    %v8466 = vunpack.c.l.b16 %v8120
    %v8467 = vunpack.c.h.b16 %v8120
    %v8468 = vunpack.c.l.b16 %v8121
    %v8469 = vunpack.c.h.b16 %v8121
    %v8470 = vunpack.c.l.b16 %v8122
    %v8471 = vunpack.c.h.b16 %v8122
    %v8472 = vunpack.c.l.b16 %v8123
    %v8473 = vunpack.c.h.b16 %v8123
    %v8474 = vunpack.c.l.b16 %v8124
    %v8475 = vunpack.c.h.b16 %v8124
    %v8476 = vunpack.c.l.b16 %v8125
    %v8477 = vunpack.c.h.b16 %v8125
    %v8478 = vunpack.c.l.b16 %v8126
    %v8479 = vunpack.c.h.b16 %v8126
    %v8480 = vunpack.c.l.b16 %v8127
    %v8481 = vunpack.c.h.b16 %v8127
    %v8482 = vunpack.c.l.b16 %v8128
    %v8483 = vunpack.c.h.b16 %v8128
    %v8484 = vunpack.c.l.b16 %v8129
    %v8485 = vunpack.c.h.b16 %v8129
    %v8486 = vunpack.c.l.b16 %v8130
    %v8487 = vunpack.c.h.b16 %v8130
    %v8488 = vunpack.c.l.b16 %v8131
    %v8489 = vunpack.c.h.b16 %v8131
    %v8490 = vunpack.c.l.b16 %v8132
    %v8491 = vunpack.c.h.b16 %v8132
    %v8492 = vunpack.c.l.b16 %v8133
    %v8493 = vunpack.c.h.b16 %v8133
    %v8494 = vunpack.c.l.b16 %v8134
    %v8495 = vunpack.c.h.b16 %v8134
    %v8496 = vunpack.c.l.b16 %v8135
    %v8497 = vunpack.c.h.b16 %v8135
    %v8498 = vunpack.c.l.b16 %v8136
    %v8499 = vunpack.c.h.b16 %v8136
    %v8500 = vunpack.c.l.b16 %v8137
    %v8501 = vunpack.c.h.b16 %v8137
    %v8502 = vunpack.c.l.b16 %v8138
    %v8503 = vunpack.c.h.b16 %v8138
    %v8504 = vunpack.c.l.b16 %v8139
    %v8505 = vunpack.c.h.b16 %v8139
    %v8506 = vunpack.c.l.b16 %v8140
    %v8507 = vunpack.c.h.b16 %v8140
    %v8508 = vunpack.c.l.b16 %v8141
    %v8509 = vunpack.c.h.b16 %v8141
    %v8510 = vunpack.c.l.b16 %v8142
    %v8511 = vunpack.c.h.b16 %v8142
    %v8512 = vunpack.c.l.b16 %v8143
    %v8513 = vunpack.c.h.b16 %v8143
    %v8514 = vunpack.c.l.b16 %v8144
    %v8515 = vunpack.c.h.b16 %v8144
    %v8516 = vunpack.c.l.b16 %v8145
    %v8517 = vunpack.c.h.b16 %v8145
    %v8518 = vunpack.c.l.b16 %v8146
    %v8519 = vunpack.c.h.b16 %v8146
    %v8520 = vunpack.c.l.b16 %v8147
    %v8521 = vunpack.c.h.b16 %v8147
    %v8522 = vunpack.c.l.b16 %v8148
    %v8523 = vunpack.c.h.b16 %v8148
    %v8524 = vunpack.c.l.b16 %v8149
    %v8525 = vunpack.c.h.b16 %v8149
    %v8526 = vunpack.c.l.b16 %v8150
    %v8527 = vunpack.c.h.b16 %v8150
    %v8528 = vunpack.c.l.b16 %v8151
    %v8529 = vunpack.c.h.b16 %v8151
    %v8530 = vunpack.c.l.b16 %v8152
    %v8531 = vunpack.c.h.b16 %v8152
    %v8532 = vunpack.c.l.b16 %v8153
    %v8533 = vunpack.c.h.b16 %v8153
    %v8534 = vunpack.c.l.b16 %v8154
    %v8535 = vunpack.c.h.b16 %v8154
    %v8536 = vunpack.c.l.b16 %v8155
    %v8537 = vunpack.c.h.b16 %v8155
    %v8538 = vunpack.c.l.b16 %v8156
    %v8539 = vunpack.c.h.b16 %v8156
    %v8540 = vunpack.c.l.b16 %v8157
    %v8541 = vunpack.c.h.b16 %v8157
    %v8542 = vpack.c.b16 %v8290, %v8286
    %v8543 = vpack.c.b16 %v8291, %v8287
    %v8544 = vpack.c.b16 %v8292, %v8288
    %v8545 = vpack.c.b16 %v8293, %v8289
    %v8546 = vpack.c.b16 %v8298, %v8294
    %v8547 = vpack.c.b16 %v8299, %v8295
    %v8548 = vpack.c.b16 %v8300, %v8296
    %v8549 = vpack.c.b16 %v8301, %v8297
    %v8550 = vpack.c.b16 %v8306, %v8302
    %v8551 = vpack.c.b16 %v8307, %v8303
    %v8552 = vpack.c.b16 %v8308, %v8304
    %v8553 = vpack.c.b16 %v8309, %v8305
    %v8554 = vpack.c.b16 %v8314, %v8310
    %v8555 = vpack.c.b16 %v8315, %v8311
    %v8556 = vpack.c.b16 %v8316, %v8312
    %v8557 = vpack.c.b16 %v8317, %v8313
    %v8558 = vpack.c.b16 %v8322, %v8318
    %v8559 = vpack.c.b16 %v8323, %v8319
    %v8560 = vpack.c.b16 %v8324, %v8320
    %v8561 = vpack.c.b16 %v8325, %v8321
    %v8562 = vpack.c.b16 %v8330, %v8326
    %v8563 = vpack.c.b16 %v8331, %v8327
    %v8564 = vpack.c.b16 %v8332, %v8328
    %v8565 = vpack.c.b16 %v8333, %v8329
    %v8566 = vpack.c.b16 %v8338, %v8334
    %v8567 = vpack.c.b16 %v8339, %v8335
    %v8568 = vpack.c.b16 %v8340, %v8336
    %v8569 = vpack.c.b16 %v8341, %v8337
    %v8570 = vpack.c.b16 %v8346, %v8342
    %v8571 = vpack.c.b16 %v8347, %v8343
    %v8572 = vpack.c.b16 %v8348, %v8344
    %v8573 = vpack.c.b16 %v8349, %v8345
    %v8574 = vpack.c.b16 %v8354, %v8350
    %v8575 = vpack.c.b16 %v8355, %v8351
    %v8576 = vpack.c.b16 %v8356, %v8352
    %v8577 = vpack.c.b16 %v8357, %v8353
    %v8578 = vpack.c.b16 %v8362, %v8358
    %v8579 = vpack.c.b16 %v8363, %v8359
    %v8580 = vpack.c.b16 %v8364, %v8360
    %v8581 = vpack.c.b16 %v8365, %v8361
    %v8582 = vpack.c.b16 %v8370, %v8366
    %v8583 = vpack.c.b16 %v8371, %v8367
    %v8584 = vpack.c.b16 %v8372, %v8368
    %v8585 = vpack.c.b16 %v8373, %v8369
    %v8586 = vpack.c.b16 %v8378, %v8374
    %v8587 = vpack.c.b16 %v8379, %v8375
    %v8588 = vpack.c.b16 %v8380, %v8376
    %v8589 = vpack.c.b16 %v8381, %v8377
    %v8590 = vpack.c.b16 %v8386, %v8382
    %v8591 = vpack.c.b16 %v8387, %v8383
    %v8592 = vpack.c.b16 %v8388, %v8384
    %v8593 = vpack.c.b16 %v8389, %v8385
    %v8594 = vpack.c.b16 %v8394, %v8390
    %v8595 = vpack.c.b16 %v8395, %v8391
    %v8596 = vpack.c.b16 %v8396, %v8392
    %v8597 = vpack.c.b16 %v8397, %v8393
    %v8598 = vpack.c.b16 %v8402, %v8398
    %v8599 = vpack.c.b16 %v8403, %v8399
    %v8600 = vpack.c.b16 %v8404, %v8400
    %v8601 = vpack.c.b16 %v8405, %v8401
    %v8602 = vpack.c.b16 %v8410, %v8406
    %v8603 = vpack.c.b16 %v8411, %v8407
    %v8604 = vpack.c.b16 %v8412, %v8408
    %v8605 = vpack.c.b16 %v8413, %v8409
    %v8606 = vpack.c.b16 %v8418, %v8414
    %v8607 = vpack.c.b16 %v8419, %v8415
    %v8608 = vpack.c.b16 %v8420, %v8416
    %v8609 = vpack.c.b16 %v8421, %v8417
    %v8610 = vpack.c.b16 %v8426, %v8422
    %v8611 = vpack.c.b16 %v8427, %v8423
    %v8612 = vpack.c.b16 %v8428, %v8424
    %v8613 = vpack.c.b16 %v8429, %v8425
    %v8614 = vpack.c.b16 %v8434, %v8430
    %v8615 = vpack.c.b16 %v8435, %v8431
    %v8616 = vpack.c.b16 %v8436, %v8432
    %v8617 = vpack.c.b16 %v8437, %v8433
    %v8618 = vpack.c.b16 %v8442, %v8438
    %v8619 = vpack.c.b16 %v8443, %v8439
    %v8620 = vpack.c.b16 %v8444, %v8440
    %v8621 = vpack.c.b16 %v8445, %v8441
    %v8622 = vpack.c.b16 %v8450, %v8446
    %v8623 = vpack.c.b16 %v8451, %v8447
    %v8624 = vpack.c.b16 %v8452, %v8448
    %v8625 = vpack.c.b16 %v8453, %v8449
    %v8626 = vpack.c.b16 %v8458, %v8454
    %v8627 = vpack.c.b16 %v8459, %v8455
    %v8628 = vpack.c.b16 %v8460, %v8456
    %v8629 = vpack.c.b16 %v8461, %v8457
    %v8630 = vpack.c.b16 %v8466, %v8462
    %v8631 = vpack.c.b16 %v8467, %v8463
    %v8632 = vpack.c.b16 %v8468, %v8464
    %v8633 = vpack.c.b16 %v8469, %v8465
    %v8634 = vpack.c.b16 %v8474, %v8470
    %v8635 = vpack.c.b16 %v8475, %v8471
    %v8636 = vpack.c.b16 %v8476, %v8472
    %v8637 = vpack.c.b16 %v8477, %v8473
    %v8638 = vpack.c.b16 %v8482, %v8478
    %v8639 = vpack.c.b16 %v8483, %v8479
    %v8640 = vpack.c.b16 %v8484, %v8480
    %v8641 = vpack.c.b16 %v8485, %v8481
    %v8642 = vpack.c.b16 %v8490, %v8486
    %v8643 = vpack.c.b16 %v8491, %v8487
    %v8644 = vpack.c.b16 %v8492, %v8488
    %v8645 = vpack.c.b16 %v8493, %v8489
    %v8646 = vpack.c.b16 %v8498, %v8494
    %v8647 = vpack.c.b16 %v8499, %v8495
    %v8648 = vpack.c.b16 %v8500, %v8496
    %v8649 = vpack.c.b16 %v8501, %v8497
    %v8650 = vpack.c.b16 %v8506, %v8502
    %v8651 = vpack.c.b16 %v8507, %v8503
    %v8652 = vpack.c.b16 %v8508, %v8504
    %v8653 = vpack.c.b16 %v8509, %v8505
    %v8654 = vpack.c.b16 %v8514, %v8510
    %v8655 = vpack.c.b16 %v8515, %v8511
    %v8656 = vpack.c.b16 %v8516, %v8512
    %v8657 = vpack.c.b16 %v8517, %v8513
    %v8658 = vpack.c.b16 %v8522, %v8518
    %v8659 = vpack.c.b16 %v8523, %v8519
    %v8660 = vpack.c.b16 %v8524, %v8520
    %v8661 = vpack.c.b16 %v8525, %v8521
    %v8662 = vpack.c.b16 %v8530, %v8526
    %v8663 = vpack.c.b16 %v8531, %v8527
    %v8664 = vpack.c.b16 %v8532, %v8528
    %v8665 = vpack.c.b16 %v8533, %v8529
    %v8666 = vpack.c.b16 %v8538, %v8534
    %v8667 = vpack.c.b16 %v8539, %v8535
    %v8668 = vpack.c.b16 %v8540, %v8536
    %v8669 = vpack.c.b16 %v8541, %v8537
    %8798 = vmatpush.bf16.msra.mxu0 %v8570
    %8799 = vmatpush.bf16.msra.mxu0 %v8566
    %8800 = vmatpush.bf16.msra.mxu0 %v8562
    %8801 = vmatpush.bf16.msra.mxu0 %v8558
    %8802 = vmatpush.bf16.msra.mxu0 %v8554
    %8803 = vmatpush.bf16.msra.mxu0 %v8550
    %8804 = vmatpush.bf16.msra.mxu0 %v8546
    %8805 = vmatpush.bf16.msra.mxu0 %v8542
    %8806 = vmatmul.bf16.gmra.mxu0 %v8022
    %v8807 = vpop.f32.mrf.mxu0
    %v8808 = vadd.f32 0.0, %v8807
    %v8809 = vpop.f32.mrf.mxu0
    %v8810 = vadd.f32 0.0, %v8809
    %8811 = vmatmul.bf16.gmra.mxu0 %v8026
    %v8812 = vpop.f32.mrf.mxu0
    %v8813 = vadd.f32 0.0, %v8812
    %v8814 = vpop.f32.mrf.mxu0
    %v8815 = vadd.f32 0.0, %v8814
    %8816 = vdwg.mxu0
    %8817 = vmatpush.bf16.msra.mxu0 %v8602
    %8818 = vmatpush.bf16.msra.mxu0 %v8598
    %8819 = vmatpush.bf16.msra.mxu0 %v8594
    %8820 = vmatpush.bf16.msra.mxu0 %v8590
    %8821 = vmatpush.bf16.msra.mxu0 %v8586
    %8822 = vmatpush.bf16.msra.mxu0 %v8582
    %8823 = vmatpush.bf16.msra.mxu0 %v8578
    %8824 = vmatpush.bf16.msra.mxu0 %v8574
    %8825 = vmatmul.bf16.gmra.mxu0 %v8023
    %v8826 = vpop.f32.mrf.mxu0
    %v8827 = vadd.f32 %v8808, %v8826
    %v8828 = vpop.f32.mrf.mxu0
    %v8829 = vadd.f32 %v8810, %v8828
    %8830 = vmatmul.bf16.gmra.mxu0 %v8027
    %v8831 = vpop.f32.mrf.mxu0
    %v8832 = vadd.f32 %v8813, %v8831
    %v8833 = vpop.f32.mrf.mxu0
    %v8834 = vadd.f32 %v8815, %v8833
    %8835 = vdwg.mxu0
    %8836 = vmatpush.bf16.msra.mxu0 %v8634
    %8837 = vmatpush.bf16.msra.mxu0 %v8630
    %8838 = vmatpush.bf16.msra.mxu0 %v8626
    %8839 = vmatpush.bf16.msra.mxu0 %v8622
    %8840 = vmatpush.bf16.msra.mxu0 %v8618
    %8841 = vmatpush.bf16.msra.mxu0 %v8614
    %8842 = vmatpush.bf16.msra.mxu0 %v8610
    %8843 = vmatpush.bf16.msra.mxu0 %v8606
    %8844 = vmatmul.bf16.gmra.mxu0 %v8024
    %v8845 = vpop.f32.mrf.mxu0
    %v8846 = vadd.f32 %v8827, %v8845
    %v8847 = vpop.f32.mrf.mxu0
    %v8848 = vadd.f32 %v8829, %v8847
    %8849 = vmatmul.bf16.gmra.mxu0 %v8028
    %v8850 = vpop.f32.mrf.mxu0
    %v8851 = vadd.f32 %v8832, %v8850
    %v8852 = vpop.f32.mrf.mxu0
    %v8853 = vadd.f32 %v8834, %v8852
    %8854 = vdwg.mxu0
    %8855 = vmatpush.bf16.msra.mxu0 %v8666
    %8856 = vmatpush.bf16.msra.mxu0 %v8662
    %8857 = vmatpush.bf16.msra.mxu0 %v8658
    %8858 = vmatpush.bf16.msra.mxu0 %v8654
    %8859 = vmatpush.bf16.msra.mxu0 %v8650
    %8860 = vmatpush.bf16.msra.mxu0 %v8646
    %8861 = vmatpush.bf16.msra.mxu0 %v8642
    %8862 = vmatpush.bf16.msra.mxu0 %v8638
    %8863 = vmatmul.bf16.gmra.mxu0 %v8025
    %v8864 = vpop.f32.mrf.mxu0
    %v8865 = vadd.f32 %v8846, %v8864
    %v8866 = vpop.f32.mrf.mxu0
    %v8867 = vadd.f32 %v8848, %v8866
    %8868 = vmatmul.bf16.gmra.mxu0 %v8029
    %v8869 = vpop.f32.mrf.mxu0
    %v8870 = vadd.f32 %v8851, %v8869
    %v8871 = vpop.f32.mrf.mxu0
    %v8872 = vadd.f32 %v8853, %v8871
    %8873 = vdwg.mxu0
    %8874 = vmatpush.bf16.msra.mxu0 %v8571
    %8875 = vmatpush.bf16.msra.mxu0 %v8567
    %8876 = vmatpush.bf16.msra.mxu0 %v8563
    %8877 = vmatpush.bf16.msra.mxu0 %v8559
    %8878 = vmatpush.bf16.msra.mxu0 %v8555
    %8879 = vmatpush.bf16.msra.mxu0 %v8551
    %8880 = vmatpush.bf16.msra.mxu0 %v8547
    %8881 = vmatpush.bf16.msra.mxu0 %v8543
    %8882 = vmatmul.bf16.gmra.mxu0 %v8022
    %v8883 = vpop.f32.mrf.mxu0
    %v8884 = vadd.f32 0.0, %v8883
    %v8885 = vpop.f32.mrf.mxu0
    %v8886 = vadd.f32 0.0, %v8885
    %8887 = vmatmul.bf16.gmra.mxu0 %v8026
    %v8888 = vpop.f32.mrf.mxu0
    %v8889 = vadd.f32 0.0, %v8888
    %v8890 = vpop.f32.mrf.mxu0
    %v8891 = vadd.f32 0.0, %v8890
    %8892 = vdwg.mxu0
    %8893 = vmatpush.bf16.msra.mxu0 %v8603
    %8894 = vmatpush.bf16.msra.mxu0 %v8599
    %8895 = vmatpush.bf16.msra.mxu0 %v8595
    %8896 = vmatpush.bf16.msra.mxu0 %v8591
    %8897 = vmatpush.bf16.msra.mxu0 %v8587
    %8898 = vmatpush.bf16.msra.mxu0 %v8583
    %8899 = vmatpush.bf16.msra.mxu0 %v8579
    %8900 = vmatpush.bf16.msra.mxu0 %v8575
    %8901 = vmatmul.bf16.gmra.mxu0 %v8023
    %v8902 = vpop.f32.mrf.mxu0
    %v8903 = vadd.f32 %v8884, %v8902
    %v8904 = vpop.f32.mrf.mxu0
    %v8905 = vadd.f32 %v8886, %v8904
    %8906 = vmatmul.bf16.gmra.mxu0 %v8027
    %v8907 = vpop.f32.mrf.mxu0
    %v8908 = vadd.f32 %v8889, %v8907
    %v8909 = vpop.f32.mrf.mxu0
    %v8910 = vadd.f32 %v8891, %v8909
    %8911 = vdwg.mxu0
    %8912 = vmatpush.bf16.msra.mxu0 %v8635
    %8913 = vmatpush.bf16.msra.mxu0 %v8631
    %8914 = vmatpush.bf16.msra.mxu0 %v8627
    %8915 = vmatpush.bf16.msra.mxu0 %v8623
    %8916 = vmatpush.bf16.msra.mxu0 %v8619
    %8917 = vmatpush.bf16.msra.mxu0 %v8615
    %8918 = vmatpush.bf16.msra.mxu0 %v8611
    %8919 = vmatpush.bf16.msra.mxu0 %v8607
    %8920 = vmatmul.bf16.gmra.mxu0 %v8024
    %v8921 = vpop.f32.mrf.mxu0
    %v8922 = vadd.f32 %v8903, %v8921
    %v8923 = vpop.f32.mrf.mxu0
    %v8924 = vadd.f32 %v8905, %v8923
    %8925 = vmatmul.bf16.gmra.mxu0 %v8028
    %v8926 = vpop.f32.mrf.mxu0
    %v8927 = vadd.f32 %v8908, %v8926
    %v8928 = vpop.f32.mrf.mxu0
    %v8929 = vadd.f32 %v8910, %v8928
    %8930 = vdwg.mxu0
    %8931 = vmatpush.bf16.msra.mxu0 %v8667
    %8932 = vmatpush.bf16.msra.mxu0 %v8663
    %8933 = vmatpush.bf16.msra.mxu0 %v8659
    %8934 = vmatpush.bf16.msra.mxu0 %v8655
    %8935 = vmatpush.bf16.msra.mxu0 %v8651
    %8936 = vmatpush.bf16.msra.mxu0 %v8647
    %8937 = vmatpush.bf16.msra.mxu0 %v8643
    %8938 = vmatpush.bf16.msra.mxu0 %v8639
    %8939 = vmatmul.bf16.gmra.mxu0 %v8025
    %v8940 = vpop.f32.mrf.mxu0
    %v8941 = vadd.f32 %v8922, %v8940
    %v8942 = vpop.f32.mrf.mxu0
    %v8943 = vadd.f32 %v8924, %v8942
    %8944 = vmatmul.bf16.gmra.mxu0 %v8029
    %v8945 = vpop.f32.mrf.mxu0
    %v8946 = vadd.f32 %v8927, %v8945
    %v8947 = vpop.f32.mrf.mxu0
    %v8948 = vadd.f32 %v8929, %v8947
    %8949 = vdwg.mxu0
    %8950 = vmatpush.bf16.msra.mxu0 %v8572
    %8951 = vmatpush.bf16.msra.mxu0 %v8568
    %8952 = vmatpush.bf16.msra.mxu0 %v8564
    %8953 = vmatpush.bf16.msra.mxu0 %v8560
    %8954 = vmatpush.bf16.msra.mxu0 %v8556
    %8955 = vmatpush.bf16.msra.mxu0 %v8552
    %8956 = vmatpush.bf16.msra.mxu0 %v8548
    %8957 = vmatpush.bf16.msra.mxu0 %v8544
    %8958 = vmatmul.bf16.gmra.mxu0 %v8022
    %v8959 = vpop.f32.mrf.mxu0
    %v8960 = vadd.f32 0.0, %v8959
    %v8961 = vpop.f32.mrf.mxu0
    %v8962 = vadd.f32 0.0, %v8961
    %8963 = vmatmul.bf16.gmra.mxu0 %v8026
    %v8964 = vpop.f32.mrf.mxu0
    %v8965 = vadd.f32 0.0, %v8964
    %v8966 = vpop.f32.mrf.mxu0
    %v8967 = vadd.f32 0.0, %v8966
    %8968 = vdwg.mxu0
    %8969 = vmatpush.bf16.msra.mxu0 %v8604
    %8970 = vmatpush.bf16.msra.mxu0 %v8600
    %8971 = vmatpush.bf16.msra.mxu0 %v8596
    %8972 = vmatpush.bf16.msra.mxu0 %v8592
    %8973 = vmatpush.bf16.msra.mxu0 %v8588
    %8974 = vmatpush.bf16.msra.mxu0 %v8584
    %8975 = vmatpush.bf16.msra.mxu0 %v8580
    %8976 = vmatpush.bf16.msra.mxu0 %v8576
    %8977 = vmatmul.bf16.gmra.mxu0 %v8023
    %v8978 = vpop.f32.mrf.mxu0
    %v8979 = vadd.f32 %v8960, %v8978
    %v8980 = vpop.f32.mrf.mxu0
    %v8981 = vadd.f32 %v8962, %v8980
    %8982 = vmatmul.bf16.gmra.mxu0 %v8027
    %v8983 = vpop.f32.mrf.mxu0
    %v8984 = vadd.f32 %v8965, %v8983
    %v8985 = vpop.f32.mrf.mxu0
    %v8986 = vadd.f32 %v8967, %v8985
    %8987 = vdwg.mxu0
    %8988 = vmatpush.bf16.msra.mxu0 %v8636
    %8989 = vmatpush.bf16.msra.mxu0 %v8632
    %8990 = vmatpush.bf16.msra.mxu0 %v8628
    %8991 = vmatpush.bf16.msra.mxu0 %v8624
    %8992 = vmatpush.bf16.msra.mxu0 %v8620
    %8993 = vmatpush.bf16.msra.mxu0 %v8616
    %8994 = vmatpush.bf16.msra.mxu0 %v8612
    %8995 = vmatpush.bf16.msra.mxu0 %v8608
    %8996 = vmatmul.bf16.gmra.mxu0 %v8024
    %v8997 = vpop.f32.mrf.mxu0
    %v8998 = vadd.f32 %v8979, %v8997
    %v8999 = vpop.f32.mrf.mxu0
    %v9000 = vadd.f32 %v8981, %v8999
    %9001 = vmatmul.bf16.gmra.mxu0 %v8028
    %v9002 = vpop.f32.mrf.mxu0
    %v9003 = vadd.f32 %v8984, %v9002
    %v9004 = vpop.f32.mrf.mxu0
    %v9005 = vadd.f32 %v8986, %v9004
    %9006 = vdwg.mxu0
    %9007 = vmatpush.bf16.msra.mxu0 %v8668
    %9008 = vmatpush.bf16.msra.mxu0 %v8664
    %9009 = vmatpush.bf16.msra.mxu0 %v8660
    %9010 = vmatpush.bf16.msra.mxu0 %v8656
    %9011 = vmatpush.bf16.msra.mxu0 %v8652
    %9012 = vmatpush.bf16.msra.mxu0 %v8648
    %9013 = vmatpush.bf16.msra.mxu0 %v8644
    %9014 = vmatpush.bf16.msra.mxu0 %v8640
    %9015 = vmatmul.bf16.gmra.mxu0 %v8025
    %v9016 = vpop.f32.mrf.mxu0
    %v9017 = vadd.f32 %v8998, %v9016
    %v9018 = vpop.f32.mrf.mxu0
    %v9019 = vadd.f32 %v9000, %v9018
    %9020 = vmatmul.bf16.gmra.mxu0 %v8029
    %v9021 = vpop.f32.mrf.mxu0
    %v9022 = vadd.f32 %v9003, %v9021
    %v9023 = vpop.f32.mrf.mxu0
    %v9024 = vadd.f32 %v9005, %v9023
    %9025 = vdwg.mxu0
    %9026 = vmatpush.bf16.msra.mxu0 %v8573
    %9027 = vmatpush.bf16.msra.mxu0 %v8569
    %9028 = vmatpush.bf16.msra.mxu0 %v8565
    %9029 = vmatpush.bf16.msra.mxu0 %v8561
    %9030 = vmatpush.bf16.msra.mxu0 %v8557
    %9031 = vmatpush.bf16.msra.mxu0 %v8553
    %9032 = vmatpush.bf16.msra.mxu0 %v8549
    %9033 = vmatpush.bf16.msra.mxu0 %v8545
    %9034 = vmatmul.bf16.gmra.mxu0 %v8022
    %v9035 = vpop.f32.mrf.mxu0
    %v9036 = vadd.f32 0.0, %v9035
    %v9037 = vpop.f32.mrf.mxu0
    %v9038 = vadd.f32 0.0, %v9037
    %9039 = vmatmul.bf16.gmra.mxu0 %v8026
    %v9040 = vpop.f32.mrf.mxu0
    %v9041 = vadd.f32 0.0, %v9040
    %v9042 = vpop.f32.mrf.mxu0
    %v9043 = vadd.f32 0.0, %v9042
    %9044 = vdwg.mxu0
    %9045 = vmatpush.bf16.msra.mxu0 %v8605
    %9046 = vmatpush.bf16.msra.mxu0 %v8601
    %9047 = vmatpush.bf16.msra.mxu0 %v8597
    %9048 = vmatpush.bf16.msra.mxu0 %v8593
    %9049 = vmatpush.bf16.msra.mxu0 %v8589
    %9050 = vmatpush.bf16.msra.mxu0 %v8585
    %9051 = vmatpush.bf16.msra.mxu0 %v8581
    %9052 = vmatpush.bf16.msra.mxu0 %v8577
    %9053 = vmatmul.bf16.gmra.mxu0 %v8023
    %v9054 = vpop.f32.mrf.mxu0
    %v9055 = vadd.f32 %v9036, %v9054
    %v9056 = vpop.f32.mrf.mxu0
    %v9057 = vadd.f32 %v9038, %v9056
    %9058 = vmatmul.bf16.gmra.mxu0 %v8027
    %v9059 = vpop.f32.mrf.mxu0
    %v9060 = vadd.f32 %v9041, %v9059
    %v9061 = vpop.f32.mrf.mxu0
    %v9062 = vadd.f32 %v9043, %v9061
    %9063 = vdwg.mxu0
    %9064 = vmatpush.bf16.msra.mxu0 %v8637
    %9065 = vmatpush.bf16.msra.mxu0 %v8633
    %9066 = vmatpush.bf16.msra.mxu0 %v8629
    %9067 = vmatpush.bf16.msra.mxu0 %v8625
    %9068 = vmatpush.bf16.msra.mxu0 %v8621
    %9069 = vmatpush.bf16.msra.mxu0 %v8617
    %9070 = vmatpush.bf16.msra.mxu0 %v8613
    %9071 = vmatpush.bf16.msra.mxu0 %v8609
    %9072 = vmatmul.bf16.gmra.mxu0 %v8024
    %v9073 = vpop.f32.mrf.mxu0
    %v9074 = vadd.f32 %v9055, %v9073
    %v9075 = vpop.f32.mrf.mxu0
    %v9076 = vadd.f32 %v9057, %v9075
    %9077 = vmatmul.bf16.gmra.mxu0 %v8028
    %v9078 = vpop.f32.mrf.mxu0
    %v9079 = vadd.f32 %v9060, %v9078
    %v9080 = vpop.f32.mrf.mxu0
    %v9081 = vadd.f32 %v9062, %v9080
    %9082 = vdwg.mxu0
    %9083 = vmatpush.bf16.msra.mxu0 %v8669
    %9084 = vmatpush.bf16.msra.mxu0 %v8665
    %9085 = vmatpush.bf16.msra.mxu0 %v8661
    %9086 = vmatpush.bf16.msra.mxu0 %v8657
    %9087 = vmatpush.bf16.msra.mxu0 %v8653
    %9088 = vmatpush.bf16.msra.mxu0 %v8649
    %9089 = vmatpush.bf16.msra.mxu0 %v8645
    %9090 = vmatpush.bf16.msra.mxu0 %v8641
    %9091 = vmatmul.bf16.gmra.mxu0 %v8025
    %v9092 = vpop.f32.mrf.mxu0
    %v9093 = vadd.f32 %v9074, %v9092
    %v9094 = vpop.f32.mrf.mxu0
    %v9095 = vadd.f32 %v9076, %v9094
    %9096 = vmatmul.bf16.gmra.mxu0 %v8029
    %v9097 = vpop.f32.mrf.mxu0
    %v9098 = vadd.f32 %v9079, %v9097
    %v9099 = vpop.f32.mrf.mxu0
    %v9100 = vadd.f32 %v9081, %v9099
    %9101 = vdwg.mxu0
    %v9102 = vadd.f32 %v6908, %v8865
    %v9103 = vadd.f32 %v6909, %v8941
    %v9104 = vadd.f32 %v6910, %v9017
    %v9105 = vadd.f32 %v6911, %v9093
    %v9106 = vadd.f32 %v6912, %v8867
    %v9107 = vadd.f32 %v6913, %v8943
    %v9108 = vadd.f32 %v6914, %v9019
    %v9109 = vadd.f32 %v6915, %v9095
    %v9110 = vadd.f32 %v6916, %v8870
    %v9111 = vadd.f32 %v6917, %v8946
    %v9112 = vadd.f32 %v6918, %v9022
    %v9113 = vadd.f32 %v6919, %v9098
    %v9114 = vadd.f32 %v6920, %v8872
    %v9115 = vadd.f32 %v6921, %v8948
    %v9116 = vadd.f32 %v6922, %v9024
    %v9117 = vadd.f32 %v6923, %v9100
    %v9118 = vld [vmem:[#allocation11] sm:$0xf]
    %v9120 = vperm.slane %v9118, 0
    %v9121 = vperm.slane %v9118, 1
    %v9122 = vperm.slane %v9118, 2
    %v9123 = vperm.slane %v9118, 3
    %v9128 = vadd.f32 %v9102, %v9120
    %v9129 = vadd.f32 %v9103, %v9121
    %v9130 = vadd.f32 %v9104, %v9122
    %v9131 = vadd.f32 %v9105, %v9123
    %v9132 = vadd.f32 %v9106, %v9120
    %v9133 = vadd.f32 %v9107, %v9121
    %v9134 = vadd.f32 %v9108, %v9122
    %v9135 = vadd.f32 %v9109, %v9123
    %v9136 = vadd.f32 %v9110, %v9120
    %v9137 = vadd.f32 %v9111, %v9121
    %v9138 = vadd.f32 %v9112, %v9122
    %v9139 = vadd.f32 %v9113, %v9123
    %v9140 = vadd.f32 %v9114, %v9120
    %v9141 = vadd.f32 %v9115, %v9121
    %v9142 = vadd.f32 %v9116, %v9122
    %v9143 = vadd.f32 %v9117, %v9123
    %v9144 = vadd.f32 %v147, %v9128
    %v9145 = vadd.f32 %v148, %v9129
    %v9146 = vadd.f32 %v149, %v9130
    %v9147 = vadd.f32 %v150, %v9131
    %v9148 = vadd.f32 %v151, %v9132
    %v9149 = vadd.f32 %v152, %v9133
    %v9150 = vadd.f32 %v153, %v9134
    %v9151 = vadd.f32 %v154, %v9135
    %v9152 = vadd.f32 %v257, %v9136
    %v9153 = vadd.f32 %v258, %v9137
    %v9154 = vadd.f32 %v259, %v9138
    %v9155 = vadd.f32 %v260, %v9139
    %v9156 = vadd.f32 %v261, %v9140
    %v9157 = vadd.f32 %v262, %v9141
    %v9158 = vadd.f32 %v263, %v9142
    %v9159 = vadd.f32 %v264, %v9143
    %v9160 = vld [vmem:[#allocation13] sm:$0xf]
    %v9161 = vld [vmem:[#allocation14] sm:$0xf]
    %v9162 = vadd.f32 %v9144, %v9145
    %v9163 = vadd.f32 %v9162, %v9146
    %v9164 = vadd.f32 %v9163, %v9147
    %9165 = vadd.xlane.f32.xlu0 %v9164
    %v9166 = vpop.xlane.xlu0 %9165
    %v9167 = vadd.f32 %v9148, %v9149
    %v9168 = vadd.f32 %v9167, %v9150
    %v9169 = vadd.f32 %v9168, %v9151
    %9170 = vadd.xlane.f32.xlu0 %v9169
    %v9171 = vpop.xlane.xlu0 %9170
    %v9172 = vadd.f32 %v9152, %v9153
    %v9173 = vadd.f32 %v9172, %v9154
    %v9174 = vadd.f32 %v9173, %v9155
    %9175 = vadd.xlane.f32.xlu0 %v9174
    %v9176 = vpop.xlane.xlu0 %9175
    %v9177 = vadd.f32 %v9156, %v9157
    %v9178 = vadd.f32 %v9177, %v9158
    %v9179 = vadd.f32 %v9178, %v9159
    %9180 = vadd.xlane.f32.xlu0 %v9179
    %v9181 = vpop.xlane.xlu0 %9180
    %v9182 = vrcp.pop 512.0
    %v9183 = vmul.f32 512.0, %v9182
    %v9184 = vsub.f32 1.0, %v9183
    %v9185 = vmul.f32 %v9182, %v9184
    %v9186 = vadd.f32 %v9182, %v9185
    %vm9187 = vweird.f32 %v9182
    %v9188 = vsel %vm9187, %v9182, %v9186
    %v9189 = vmul.f32 %v9166, %v9188
    %v9190 = vmul.f32 %v9171, %v9188
    %v9191 = vmul.f32 %v9176, %v9188
    %v9192 = vmul.f32 %v9181, %v9188
    %v9193 = vsub.f32 %v9144, %v9189
    %v9194 = vsub.f32 %v9145, %v9189
    %v9195 = vsub.f32 %v9146, %v9189
    %v9196 = vsub.f32 %v9147, %v9189
    %v9197 = vsub.f32 %v9148, %v9190
    %v9198 = vsub.f32 %v9149, %v9190
    %v9199 = vsub.f32 %v9150, %v9190
    %v9200 = vsub.f32 %v9151, %v9190
    %v9201 = vsub.f32 %v9152, %v9191
    %v9202 = vsub.f32 %v9153, %v9191
    %v9203 = vsub.f32 %v9154, %v9191
    %v9204 = vsub.f32 %v9155, %v9191
    %v9205 = vsub.f32 %v9156, %v9192
    %v9206 = vsub.f32 %v9157, %v9192
    %v9207 = vsub.f32 %v9158, %v9192
    %v9208 = vsub.f32 %v9159, %v9192
    %v9209 = vmul.f32 %v9193, %v9193
    %v9210 = vmul.f32 %v9194, %v9194
    %v9211 = vmul.f32 %v9195, %v9195
    %v9212 = vmul.f32 %v9196, %v9196
    %v9213 = vmul.f32 %v9197, %v9197
    %v9214 = vmul.f32 %v9198, %v9198
    %v9215 = vmul.f32 %v9199, %v9199
    %v9216 = vmul.f32 %v9200, %v9200
    %v9217 = vmul.f32 %v9201, %v9201
    %v9218 = vmul.f32 %v9202, %v9202
    %v9219 = vmul.f32 %v9203, %v9203
    %v9220 = vmul.f32 %v9204, %v9204
    %v9221 = vmul.f32 %v9205, %v9205
    %v9222 = vmul.f32 %v9206, %v9206
    %v9223 = vmul.f32 %v9207, %v9207
    %v9224 = vmul.f32 %v9208, %v9208
    %v9225 = vadd.f32 %v9209, %v9210
    %v9226 = vadd.f32 %v9225, %v9211
    %v9227 = vadd.f32 %v9226, %v9212
    %9228 = vadd.xlane.f32.xlu0 %v9227
    %v9229 = vpop.xlane.xlu0 %9228
    %v9230 = vadd.f32 %v9213, %v9214
    %v9231 = vadd.f32 %v9230, %v9215
    %v9232 = vadd.f32 %v9231, %v9216
    %9233 = vadd.xlane.f32.xlu0 %v9232
    %v9234 = vpop.xlane.xlu0 %9233
    %v9235 = vadd.f32 %v9217, %v9218
    %v9236 = vadd.f32 %v9235, %v9219
    %v9237 = vadd.f32 %v9236, %v9220
    %9238 = vadd.xlane.f32.xlu0 %v9237
    %v9239 = vpop.xlane.xlu0 %9238
    %v9240 = vadd.f32 %v9221, %v9222
    %v9241 = vadd.f32 %v9240, %v9223
    %v9242 = vadd.f32 %v9241, %v9224
    %9243 = vadd.xlane.f32.xlu0 %v9242
    %v9244 = vpop.xlane.xlu0 %9243
    %v9245 = vmul.f32 %v9229, %v9188
    %v9246 = vmul.f32 %v9234, %v9188
    %v9247 = vmul.f32 %v9239, %v9188
    %v9248 = vmul.f32 %v9244, %v9188
    %v9249 = vadd.f32 %v9245, 1e-06
    %v9250 = vadd.f32 %v9246, 1e-06
    %v9251 = vadd.f32 %v9247, 1e-06
    %v9252 = vadd.f32 %v9248, 1e-06
    %v9253 = vrsqrt.pop %v9249
    %v9254 = vmul.f32 %v9253, %v9249
    %v9255 = vmul.f32 %v9254, %v9253
    %v9256 = vmul.f32 0.5, %v9255
    %v9257 = vsub.f32 1.5, %v9256
    %v9258 = vmul.f32 %v9253, %v9257
    %vm9259 = vweird.f32 %v9249
    %vm9260 = vweird.f32 %v9253
    %vm9261 = vmor %vm9259, %vm9260
    %v9262 = vsel %vm9261, %v9253, %v9258
    %v9263 = vrsqrt.pop %v9250
    %v9264 = vmul.f32 %v9263, %v9250
    %v9265 = vmul.f32 %v9264, %v9263
    %v9266 = vmul.f32 0.5, %v9265
    %v9267 = vsub.f32 1.5, %v9266
    %v9268 = vmul.f32 %v9263, %v9267
    %vm9269 = vweird.f32 %v9250
    %vm9270 = vweird.f32 %v9263
    %vm9271 = vmor %vm9269, %vm9270
    %v9272 = vsel %vm9271, %v9263, %v9268
    %v9273 = vrsqrt.pop %v9251
    %v9274 = vmul.f32 %v9273, %v9251
    %v9275 = vmul.f32 %v9274, %v9273
    %v9276 = vmul.f32 0.5, %v9275
    %v9277 = vsub.f32 1.5, %v9276
    %v9278 = vmul.f32 %v9273, %v9277
    %vm9279 = vweird.f32 %v9251
    %vm9280 = vweird.f32 %v9273
    %vm9281 = vmor %vm9279, %vm9280
    %v9282 = vsel %vm9281, %v9273, %v9278
    %v9283 = vrsqrt.pop %v9252
    %v9284 = vmul.f32 %v9283, %v9252
    %v9285 = vmul.f32 %v9284, %v9283
    %v9286 = vmul.f32 0.5, %v9285
    %v9287 = vsub.f32 1.5, %v9286
    %v9288 = vmul.f32 %v9283, %v9287
    %vm9289 = vweird.f32 %v9252
    %vm9290 = vweird.f32 %v9283
    %vm9291 = vmor %vm9289, %vm9290
    %v9292 = vsel %vm9291, %v9283, %v9288
    %v9293 = vmul.f32 %v9193, %v9262
    %v9294 = vmul.f32 %v9194, %v9262
    %v9295 = vmul.f32 %v9195, %v9262
    %v9296 = vmul.f32 %v9196, %v9262
    %v9297 = vmul.f32 %v9197, %v9272
    %v9298 = vmul.f32 %v9198, %v9272
    %v9299 = vmul.f32 %v9199, %v9272
    %v9300 = vmul.f32 %v9200, %v9272
    %v9301 = vmul.f32 %v9201, %v9282
    %v9302 = vmul.f32 %v9202, %v9282
    %v9303 = vmul.f32 %v9203, %v9282
    %v9304 = vmul.f32 %v9204, %v9282
    %v9305 = vmul.f32 %v9205, %v9292
    %v9306 = vmul.f32 %v9206, %v9292
    %v9307 = vmul.f32 %v9207, %v9292
    %v9308 = vmul.f32 %v9208, %v9292
    %v9310 = vperm.slane %v9160, 0
    %v9311 = vperm.slane %v9160, 1
    %v9312 = vperm.slane %v9160, 2
    %v9313 = vperm.slane %v9160, 3
    %v9318 = vmul.f32 %v9293, %v9310
    %v9319 = vmul.f32 %v9294, %v9311
    %v9320 = vmul.f32 %v9295, %v9312
    %v9321 = vmul.f32 %v9296, %v9313
    %v9322 = vmul.f32 %v9297, %v9310
    %v9323 = vmul.f32 %v9298, %v9311
    %v9324 = vmul.f32 %v9299, %v9312
    %v9325 = vmul.f32 %v9300, %v9313
    %v9326 = vmul.f32 %v9301, %v9310
    %v9327 = vmul.f32 %v9302, %v9311
    %v9328 = vmul.f32 %v9303, %v9312
    %v9329 = vmul.f32 %v9304, %v9313
    %v9330 = vmul.f32 %v9305, %v9310
    %v9331 = vmul.f32 %v9306, %v9311
    %v9332 = vmul.f32 %v9307, %v9312
    %v9333 = vmul.f32 %v9308, %v9313
    %v9335 = vperm.slane %v9161, 0
    %v9336 = vperm.slane %v9161, 1
    %v9337 = vperm.slane %v9161, 2
    %v9338 = vperm.slane %v9161, 3
    %v9343 = vadd.f32 %v9318, %v9335
    %v9344 = vadd.f32 %v9319, %v9336
    %v9345 = vadd.f32 %v9320, %v9337
    %v9346 = vadd.f32 %v9321, %v9338
    %v9347 = vadd.f32 %v9322, %v9335
    %v9348 = vadd.f32 %v9323, %v9336
    %v9349 = vadd.f32 %v9324, %v9337
    %v9350 = vadd.f32 %v9325, %v9338
    %v9351 = vadd.f32 %v9326, %v9335
    %v9352 = vadd.f32 %v9327, %v9336
    %v9353 = vadd.f32 %v9328, %v9337
    %v9354 = vadd.f32 %v9329, %v9338
    %v9355 = vadd.f32 %v9330, %v9335
    %v9356 = vadd.f32 %v9331, %v9336
    %v9357 = vadd.f32 %v9332, %v9337
    %v9358 = vadd.f32 %v9333, %v9338
    %9359 = vst [vmem:[#allocation16] sm:$0xff] %v9343
    %9360 = vst [vmem:[#allocation16 + $0x8] sm:$0xff] %v9344
    %9361 = vst [vmem:[#allocation16 + $0x10] sm:$0xff] %v9345
    %9362 = vst [vmem:[#allocation16 + $0x18] sm:$0xff] %v9346
    %9363 = vst [vmem:[#allocation16 + $0x20] sm:$0xff] %v9347
    %9364 = vst [vmem:[#allocation16 + $0x28] sm:$0xff] %v9348
    %9365 = vst [vmem:[#allocation16 + $0x30] sm:$0xff] %v9349
    %9366 = vst [vmem:[#allocation16 + $0x38] sm:$0xff] %v9350
    %s9367 = scalar_lea.vmem [#allocation16], 64
    %9368 = vst [vmem:[%s9367] sm:$0xff] %v9351
    %9369 = vst [vmem:[%s9367 + $0x8] sm:$0xff] %v9352
    %9370 = vst [vmem:[%s9367 + $0x10] sm:$0xff] %v9353
    %9371 = vst [vmem:[%s9367 + $0x18] sm:$0xff] %v9354
    %9372 = vst [vmem:[%s9367 + $0x20] sm:$0xff] %v9355
    %9373 = vst [vmem:[%s9367 + $0x28] sm:$0xff] %v9356
    %9374 = vst [vmem:[%s9367 + $0x30] sm:$0xff] %v9357
    %9375 = vst [vmem:[%s9367 + $0x38] sm:$0xff] %v9358
    // Predicated region
    $region66: #{my_gin_forward.1} parent=1 // pred_check
      _
    $region67: #{my_gin_forward.1} parent=1 // pred_check_branch
      %9377 = sbr.rel (0) target = $region69
    $region68: #{my_gin_forward.1} parent=1 // pred_region
      %9379 = vsyncadd [#allocation4], 0
      %s9380 = sshll.u32 [#allocation16], 4
      %s9381 = int_to_ptr.vmem [resolvable:$true] %s9380
      %s9382 = sshll.u32 %s8, 4
      %s9383 = int_to_ptr.hbm [resolvable:$true] %s9382
      %9388 = dma.vmem_to_hbm [thread:$0]  %s9381, 2048, %s9383, [#allocation4], 512, 512, 32
    $region69: #{my_gin_forward.1} parent=1 // pred_fallthru
      _
    // Predicated region
    $region70: #{my_gin_forward.1} parent=1 // pred_check
      _
    $region71: #{my_gin_forward.1} parent=1 // pred_check_branch
      %9390 = sbr.rel (0) target = $region73
    $region72: #{my_gin_forward.1} parent=1 // pred_region
      %9392 = dma.done [#allocation4], 2048
    $region73: #{my_gin_forward.1} parent=1 // pred_fallthru
      _
    %9393 = vsyncpa [#allocation3], 1
    %9394 = vsyncpa [#allocation6], 1
    %9395 = vsyncpa [#allocation9], 1
    %9396 = vsyncpa [#allocation12], 1
    %9397 = vsyncpa [#allocation15], 1
    %9398 = vsyncpa [#allocation4], 1

</llo_original>
